<compile_context>
chip_gen: v7x
topology: tpu7x:2x2x1
jax: 0.10.0
libtpu: 0.0.40
codegen_flags: <defaults>
</compile_context>

<pallas_src>
import functools

import jax
import jax.numpy as jnp
from jax import lax
from jax.experimental import pallas as pl
from jax.experimental.pallas import tpu as pltpu

_EPS = 1e-5                  # PyTorch uses 1e-5 for fp32 (both WS-conv and GroupNorm)
_CONV_DTYPE = jnp.bfloat16   # MXU operand dtype (accumulation stays f32)


def _silu(x):
    return x * (1.0 / (1.0 + jnp.exp(-x)))


def _conv3x3(xpad, w_ref, Bt, H, W, Cin):
    """3x3 'same' conv, batched over Bt in the M dim.
    xpad: (Bt, H+2, W+2, Cin) f32 value; w_ref: (3, 3*Cin, Cout) bf16 ref, rows ordered (kx, cin)
    inside each ky block (weights already standardized).
    Returns raw (Bt*H*W, Cout) float32 (bias NOT added -- it is folded into GroupNorm)."""
    acc = None
    for dy in range(3):
        # fuse the three kx taps into a single K = 3*Cin matmul (fatter MXU dot, fewer accumulates)
        patch = jnp.concatenate(
            [xpad[:, dy:dy + H, dx:dx + W, :] for dx in range(3)], axis=-1
        ).reshape(Bt * H * W, 3 * Cin).astype(_CONV_DTYPE)
        part = jnp.dot(patch, w_ref[dy], preferred_element_type=jnp.float32)
        acc = part if acc is None else acc + part
    return acc


def _gn_affine_silu(h, bias, gamma, beta, ga, gs, scale1=None, shift=None):
    """GroupNorm (+ conv bias + optional time-emb scale/shift) + SiLU on (M, C) activations.

    h: (M, C) raw conv output (bias not yet added); bias/gamma/beta/scale1/shift: (1, C) rows.
    ga: (C, Gp) group-averaging matrix; gs: (Gp, C) 0/1 membership.
    Conv bias, GN affine and (scale+1, shift) all fold into ONE (M, C) multiply-add.
    Centered two-pass variance (avoids E[x^2]-E[x]^2 cancellation)."""
    m_c = jnp.mean(h, axis=0, keepdims=True) + bias                  # per-channel mean incl. bias
    mu = jnp.dot(jnp.dot(m_c, ga, preferred_element_type=jnp.float32), gs,
                 preferred_element_type=jnp.float32)                 # per-group mean
    d = h + (bias - mu)                                              # (h + bias) - mu, one pass
    v_c = jnp.mean(d * d, axis=0, keepdims=True)                     # per-channel E[(x-mu)^2]
    var = jnp.dot(jnp.dot(v_c, ga, preferred_element_type=jnp.float32), gs,
                  preferred_element_type=jnp.float32)                # per-group var
    a = lax.rsqrt(var + _EPS) * gamma                                # fused row-wise factors
    b = beta
    if scale1 is not None:
        a = a * scale1
        b = b * scale1 + shift
    return _silu(d * a + b)                                          # single (M, C) FMA + SiLU


def _resnet_block_kernel(
    x_ref,       # (Bt, H, W, Cin)     unpadded input tile (f32)
    s1_ref,      # (Bt, 1, Cout)       precomputed (scale + 1) per batch element
    sh_ref,      # (Bt, 1, Cout)       precomputed shift
    w1_ref,      # (3, 3*Cin, Chid)    conv1 weights (pre-standardized, bf16), rows (kx, cin) per ky
    b1_ref,      # (1, Chid)
    g1_ref,      # (1, Chid)           groupnorm1 gamma
    be1_ref,     # (1, Chid)           groupnorm1 beta
    w2_ref,      # (3, 3*Chid, Cout)   bf16
    b2_ref,      # (1, Cout)
    g2_ref,      # (1, Cout)
    be2_ref,     # (1, Cout)
    ga_ref,      # (C, Gp)             group-averaging matrix
    gs_ref,      # (Gp, C)             group-membership (broadcast-back) matrix
    wr_ref,      # (Cin, Cout)         1x1 residual conv weight (bf16)
    br_ref,      # (1, Cout)
    out_ref,     # (Bt, H, W, Cout)
    xp_ref,      # VMEM scratch (Bt, H+2, W+2, Cin): padded input
    hp_ref,      # VMEM scratch (Bt, H+2, W+2, Chid): padded block1 output
    *, Bt, H, W, Cin, Chid, Cout,
):
    HW = H * W
    ga = ga_ref[...]
    gs = gs_ref[...]

    # ---- pad the input inside the kernel (no wrapper-side jnp.pad / extra HBM round trip) ----
    xp_ref[:, 0:1, :, :] = jnp.zeros((Bt, 1, W + 2, Cin), jnp.float32)
    xp_ref[:, H + 1:H + 2, :, :] = jnp.zeros((Bt, 1, W + 2, Cin), jnp.float32)
    xp_ref[:, :, 0:1, :] = jnp.zeros((Bt, H + 2, 1, Cin), jnp.float32)
    xp_ref[:, :, W + 1:W + 2, :] = jnp.zeros((Bt, H + 2, 1, Cin), jnp.float32)
    xp_ref[:, 1:H + 1, 1:W + 1, :] = x_ref[...]

    # ---- block1: WS-conv (weights pre-standardized) -> fused GN/bias/scale-shift -> SiLU ----
    h1 = _conv3x3(xp_ref[...], w1_ref, Bt, H, W, Cin)                # (Bt*HW, Chid) f32

    # pad block1 output into VMEM scratch: zero only the 1px border, overwrite the interior
    hp_ref[:, 0:1, :, :] = jnp.zeros((Bt, 1, W + 2, Chid), jnp.float32)
    hp_ref[:, H + 1:H + 2, :, :] = jnp.zeros((Bt, 1, W + 2, Chid), jnp.float32)
    hp_ref[:, :, 0:1, :] = jnp.zeros((Bt, H + 2, 1, Chid), jnp.float32)
    hp_ref[:, :, W + 1:W + 2, :] = jnp.zeros((Bt, H + 2, 1, Chid), jnp.float32)

    b1, g1, be1 = b1_ref[...], g1_ref[...], be1_ref[...]
    s1_all, sh_all = s1_ref[...], sh_ref[...]
    for bi in range(Bt):    # GroupNorm statistics are per batch element (static unroll)
        z = _gn_affine_silu(h1[bi * HW:(bi + 1) * HW, :], b1, g1, be1, ga, gs,
                            scale1=s1_all[bi], shift=sh_all[bi])
        hp_ref[bi, 1:H + 1, 1:W + 1, :] = z.reshape(H, W, Chid)

    # ---- block2: WS-conv -> fused GN/bias -> SiLU ----
    h2 = _conv3x3(hp_ref[...], w2_ref, Bt, H, W, Chid)               # (Bt*HW, Cout) f32

    # ---- residual 1x1 conv straight off the unpadded input block ----
    xin = x_ref[...].reshape(Bt * HW, Cin).astype(_CONV_DTYPE)
    res = jnp.dot(xin, wr_ref[...], preferred_element_type=jnp.float32) + br_ref[...]

    b2, g2, be2 = b2_ref[...], g2_ref[...], be2_ref[...]
    for bi in range(Bt):
        z2 = _gn_affine_silu(h2[bi * HW:(bi + 1) * HW, :], b2, g2, be2, ga, gs)
        out_ref[bi] = (z2 + res[bi * HW:(bi + 1) * HW, :]).reshape(H, W, Cout)


def _vmem_limit_bytes():
    """<= ~48 MiB on v7x (64 MiB physical VMEM), up to 96 MiB on v5e/v6e (128 MiB physical)."""
    try:
        cap = pltpu.get_tpu_info().vmem_capacity_bytes
        return int(min(96 * 1024 * 1024, (cap * 3) // 4))
    except Exception:
        return 32 * 1024 * 1024


def _pick_batch_tile(B, H, W, Cin, Chid, Cout, vmem_budget):
    """Largest divisor of B whose per-step working set fits the budget (rough estimate)."""
    HW = H * W
    best = 1
    for bt in range(1, B + 1):
        if B % bt:
            continue
        est = (
            bt * (H + 2) * (W + 2) * (Cin + Chid) * 4                       # padded f32 scratches
            + 2 * bt * HW * Cin * 4                                         # double-buffered input
            + 2 * bt * HW * Cout * 4                                        # double-buffered output
            + bt * HW * (6 * 3 * max(Cin, Chid) + 12 * max(Chid, Cout))     # live temporaries
        )
        if bt * HW <= 4096 and est <= vmem_budget:
            best = bt
    return best


def resnet_block_forward(x_nchw, temb, params, *, groups):
    """Pallas ResnetBlock forward. x_nchw: (B, Cin, H, W); temb: (B, T). Returns (B, Cout, H, W)."""
    B, Cin, H, W = x_nchw.shape
    w1 = params["w1"]            # (Chid, Cin, 3, 3)
    w2 = params["w2"]            # (Cout, Chid, 3, 3)
    Chid, Cout = w1.shape[0], w2.shape[0]
    assert Chid == Cout, "scale/shift (from mlp) requires res_hidden == out_channels"
    assert Cout % groups == 0

    f32 = jnp.float32
    row = lambda v: v.reshape(1, -1).astype(f32)

    # ---------------- grid-invariant work hoisted out of the kernel ----------------
    def conv_w_to_mat(w):        # (O, I, 3, 3) -> (9*I, O), rows ordered (ky, kx, cin)
        o, i, kh, kw = w.shape
        return jnp.transpose(w, (2, 3, 1, 0)).reshape(kh * kw * i, o).astype(f32)

    def weight_standardize(wm):  # per output channel (column), biased variance, fp32 eps
        m = jnp.mean(wm, axis=0, keepdims=True)
        v = jnp.mean((wm - m) ** 2, axis=0, keepdims=True)
        return (wm - m) * lax.rsqrt(v + _EPS)

    # standardize in f32, then cast to bf16 so the MXU gets native bf16 operands
    w1n = weight_standardize(conv_w_to_mat(w1)).reshape(3, 3 * Cin, Chid).astype(_CONV_DTYPE)
    w2n = weight_standardize(conv_w_to_mat(w2)).reshape(3, 3 * Chid, Cout).astype(_CONV_DTYPE)
    wr = params["wr"].reshape(Cout, Cin).T.astype(_CONV_DTYPE)

    # time-embedding MLP: one batched XLA matmul instead of B in-kernel M=1 matmuls
    emb = _silu(temb.astype(f32)) @ params["wm"].astype(f32) + params["bm"].astype(f32)
    scale1 = (emb[:, :Cout] + 1.0).reshape(B, 1, Cout)
    shift = emb[:, Cout:].reshape(B, 1, Cout)

    # skinny group matrices: (C, Gp) averaging + (Gp, C) membership -> O(C*G) VMEM, not O(C^2).
    # Gp pads the group axis up to a sublane multiple; padded columns/rows are zero (no effect).
    cg = Cout // groups
    Gp = ((groups + 7) // 8) * 8
    member = (jnp.arange(Cout)[:, None] // cg == jnp.arange(Gp)[None, :]).astype(f32)   # (C, Gp)
    ga = member / cg
    gs = member.T

    # NCHW -> NHWC (channels on the lane axis); spatial padding happens inside the kernel
    x = jnp.transpose(x_nchw, (0, 2, 3, 1)).astype(f32)

    vmem_limit = _vmem_limit_bytes()
    Bt = _pick_batch_tile(B, H, W, Cin, Chid, Cout, vmem_limit // 2)

    args = (
        x, scale1, shift,
        w1n, row(params["b1"]), row(params["g1"]), row(params["be1"]),
        w2n, row(params["b2"]), row(params["g2"]), row(params["be2"]),
        ga, gs, wr, row(params["br"]),
    )

    def full(a):  # whole-array block, invariant across the grid (DMA'd once)
        return pl.BlockSpec(a.shape, lambda g, _nd=a.ndim: (0,) * _nd)

    in_specs = [
        pl.BlockSpec((Bt, H, W, Cin), lambda g: (g, 0, 0, 0)),
        pl.BlockSpec((Bt, 1, Cout), lambda g: (g, 0, 0)),
        pl.BlockSpec((Bt, 1, Cout), lambda g: (g, 0, 0)),
    ] + [full(a) for a in args[3:]]

    kernel = functools.partial(
        _resnet_block_kernel, Bt=Bt, H=H, W=W, Cin=Cin, Chid=Chid, Cout=Cout)

    flops = 2 * B * H * W * (9 * Cin * Chid + 9 * Chid * Cout + Cin * Cout)
    bytes_accessed = 4 * B * H * W * (Cin + Cout) + 2 * (w1n.size + w2n.size + wr.size)

    out_nhwc = pl.pallas_call(
        kernel,
        grid=(B // Bt,),
        in_specs=in_specs,
        out_specs=pl.BlockSpec((Bt, H, W, Cout), lambda g: (g, 0, 0, 0)),
        out_shape=jax.ShapeDtypeStruct((B, H, W, Cout), jnp.float32),
        scratch_shapes=[
            pltpu.VMEM((Bt, H + 2, W + 2, Cin), jnp.float32),
            pltpu.VMEM((Bt, H + 2, W + 2, Chid), jnp.float32),
        ],
        compiler_params=pltpu.CompilerParams(
            dimension_semantics=("parallel",),      # batch-group steps are independent
            vmem_limit_bytes=vmem_limit,
        ),
        cost_estimate=pl.CostEstimate(
            flops=flops,
            transcendentals=B * H * W * (Chid + Cout),
            bytes_accessed=bytes_accessed,
        ),
    )(*args)

    return jnp.transpose(out_nhwc, (0, 3, 1, 2))


def resnet_block_reference(x, temb, p, *, groups):
    """Pure-JAX (XLA) reference mirroring the PyTorch module, NCHW, full f32."""
    eps = 1e-5
    silu = lambda v: v * (1.0 / (1.0 + jnp.exp(-v)))

    def ws_conv(h, w, b):
        m = jnp.mean(w, axis=(1, 2, 3), keepdims=True)
        v = jnp.mean((w - m) ** 2, axis=(1, 2, 3), keepdims=True)
        wn = (w - m) * lax.rsqrt(v + eps)
        y = lax.conv_general_dilated(h, wn, (1, 1), ((1, 1), (1, 1)),
                                     dimension_numbers=("NCHW", "OIHW", "NCHW"))
        return y + b[None, :, None, None]

    def gn(h, gamma, beta):
        B, C, H, W = h.shape
        hg = h.reshape(B, groups, C // groups, H, W)
        m = jnp.mean(hg, axis=(2, 3, 4), keepdims=True)
        v = jnp.mean((hg - m) ** 2, axis=(2, 3, 4), keepdims=True)
        hn = ((hg - m) * lax.rsqrt(v + eps)).reshape(B, C, H, W)
        return hn * gamma[None, :, None, None] + beta[None, :, None, None]

    Cout = p["w2"].shape[0]
    emb = silu(temb) @ p["wm"] + p["bm"]
    scale, shift = emb[:, :Cout], emb[:, Cout:]

    h = ws_conv(x, p["w1"], p["b1"])
    h = gn(h, p["g1"], p["be1"])
    h = h * (scale[:, :, None, None] + 1.0) + shift[:, :, None, None]
    h = silu(h)

    h = ws_conv(h, p["w2"], p["b2"])
    h = gn(h, p["g2"], p["be2"])
    h = silu(h)

    res = lax.conv_general_dilated(x, p["wr"], (1, 1), "VALID",
                                   dimension_numbers=("NCHW", "OIHW", "NCHW"))
    res = res + p["br"][None, :, None, None]
    return h + res


if __name__ == "__main__":
    B, Cin, H, W = 2, 4, 16, 16
    Cout = 8
    Chid = Cout          # res_hidden defaults to out_channels
    T = 16               # time_emb_dim
    groups = 4

    ks = jax.random.split(jax.random.PRNGKey(0), 12)
    p = dict(
        w1=0.2 * jax.random.normal(ks[0], (Chid, Cin, 3, 3), jnp.float32),
        b1=0.1 * jax.random.normal(ks[1], (Chid,), jnp.float32),
        g1=1.0 + 0.1 * jax.random.normal(ks[2], (Chid,), jnp.float32),
        be1=0.1 * jax.random.normal(ks[3], (Chid,), jnp.float32),
        wm=0.2 * jax.random.normal(ks[4], (T, 2 * Cout), jnp.float32),
        bm=0.1 * jax.random.normal(ks[5], (2 * Cout,), jnp.float32),
        w2=0.2 * jax.random.normal(ks[6], (Cout, Chid, 3, 3), jnp.float32),
        b2=0.1 * jax.random.normal(ks[7], (Cout,), jnp.float32),
        g2=1.0 + 0.1 * jax.random.normal(ks[8], (Cout,), jnp.float32),
        be2=0.1 * jax.random.normal(ks[9], (Cout,), jnp.float32),
        wr=0.2 * jax.random.normal(ks[10], (Cout, Cin, 1, 1), jnp.float32),
        br=0.1 * jax.random.normal(ks[11], (Cout,), jnp.float32),
    )
    kx, kt = jax.random.split(jax.random.PRNGKey(1))
    x = jax.random.normal(kx, (B, Cin, H, W), jnp.float32)
    temb = jax.random.normal(kt, (B, T), jnp.float32)

    out = jax.block_until_ready(resnet_block_forward(x, temb, p, groups=groups))
    ref = resnet_block_reference(x, temb, p, groups=groups)

    assert out.shape == (B, Cout, H, W)
    # bf16 MXU operands (f32 accumulation) -> tolerance relaxed vs. the pure-f32 reference
    max_err = float(jnp.max(jnp.abs(out - ref)))
    assert jnp.allclose(out, ref, atol=1e-1, rtol=1e-1), max_err
    print("KERNEL_OK")
</pallas_src>

<mosaic_0001>
module attributes {stable_mosaic.version = 11 : i64} {
  func.func @_resnet_block_kernel(%arg0: i32, %arg1: memref<2x16x16x4xf32, #tpu.memory_space<vmem>>, %arg2: memref<2x1x8xf32, #tpu.memory_space<vmem>>, %arg3: memref<2x1x8xf32, #tpu.memory_space<vmem>>, %arg4: memref<3x12x8xbf16, #tpu.memory_space<vmem>>, %arg5: memref<1x8xf32, #tpu.memory_space<vmem>>, %arg6: memref<1x8xf32, #tpu.memory_space<vmem>>, %arg7: memref<1x8xf32, #tpu.memory_space<vmem>>, %arg8: memref<3x24x8xbf16, #tpu.memory_space<vmem>>, %arg9: memref<1x8xf32, #tpu.memory_space<vmem>>, %arg10: memref<1x8xf32, #tpu.memory_space<vmem>>, %arg11: memref<1x8xf32, #tpu.memory_space<vmem>>, %arg12: memref<8x8xf32, #tpu.memory_space<vmem>>, %arg13: memref<8x8xf32, #tpu.memory_space<vmem>>, %arg14: memref<4x8xbf16, #tpu.memory_space<vmem>>, %arg15: memref<1x8xf32, #tpu.memory_space<vmem>>, %arg16: memref<2x16x16x8xf32, #tpu.memory_space<vmem>>, %arg17: memref<2x18x18x4xf32, #tpu.memory_space<vmem>>, %arg18: memref<2x18x18x8xf32, #tpu.memory_space<vmem>>) attributes {dimension_semantics = [#tpu.dimension_semantics<parallel>], iteration_bounds = array<i64: 1>, scalar_prefetch = 0 : i64, scratch_operands = 2 : i64, tpu.core_type = #tpu.core_type<tc>, window_params = [{transform_indices = @transform_0, window_bounds = array<i64: 2, 16, 16, 4>}, {transform_indices = @transform_1, window_bounds = array<i64: 2, 1, 8>}, {transform_indices = @transform_2, window_bounds = array<i64: 2, 1, 8>}, {pipeline_mode = #tpu.pipeline_mode<synchronous>, transform_indices = @transform_3, window_bounds = array<i64: 3, 12, 8>}, {pipeline_mode = #tpu.pipeline_mode<synchronous>, transform_indices = @transform_4, window_bounds = array<i64: 1, 8>}, {pipeline_mode = #tpu.pipeline_mode<synchronous>, transform_indices = @transform_5, window_bounds = array<i64: 1, 8>}, {pipeline_mode = #tpu.pipeline_mode<synchronous>, transform_indices = @transform_6, window_bounds = array<i64: 1, 8>}, {pipeline_mode = #tpu.pipeline_mode<synchronous>, transform_indices = @transform_7, window_bounds = array<i64: 3, 24, 8>}, {pipeline_mode = #tpu.pipeline_mode<synchronous>, transform_indices = @transform_8, window_bounds = array<i64: 1, 8>}, {pipeline_mode = #tpu.pipeline_mode<synchronous>, transform_indices = @transform_9, window_bounds = array<i64: 1, 8>}, {pipeline_mode = #tpu.pipeline_mode<synchronous>, transform_indices = @transform_10, window_bounds = array<i64: 1, 8>}, {pipeline_mode = #tpu.pipeline_mode<synchronous>, transform_indices = @transform_11, window_bounds = array<i64: 8, 8>}, {pipeline_mode = #tpu.pipeline_mode<synchronous>, transform_indices = @transform_12, window_bounds = array<i64: 8, 8>}, {pipeline_mode = #tpu.pipeline_mode<synchronous>, transform_indices = @transform_13, window_bounds = array<i64: 4, 8>}, {pipeline_mode = #tpu.pipeline_mode<synchronous>, transform_indices = @transform_14, window_bounds = array<i64: 1, 8>}, {transform_indices = @transform_15, window_bounds = array<i64: 2, 16, 16, 8>}]} {
    %c0 = arith.constant 0 : index
    %c0_0 = arith.constant 0 : index
    %0 = vector.load %arg12[%c0, %c0_0] : memref<8x8xf32, #tpu.memory_space<vmem>>, vector<8x8xf32>
    %c0_1 = arith.constant 0 : index
    %c0_2 = arith.constant 0 : index
    %1 = vector.load %arg13[%c0_1, %c0_2] : memref<8x8xf32, #tpu.memory_space<vmem>>, vector<8x8xf32>
    %cst = arith.constant 0.000000e+00 : f32
    %2 = vector.broadcast %cst : f32 to vector<2x1x18x4xf32>
    %c0_3 = arith.constant 0 : index
    %c0_4 = arith.constant 0 : index
    %c0_5 = arith.constant 0 : index
    %c0_6 = arith.constant 0 : index
    %3 = vector.load %arg17[%c0_3, %c0_4, %c0_5, %c0_6] : memref<2x18x18x4xf32, #tpu.memory_space<vmem>>, vector<2x1x18x4xf32>
    tpu.vector_store %arg17[%c0_3, %c0_4, %c0_5, %c0_6], %2 {strides = array<i32>} : memref<2x18x18x4xf32, #tpu.memory_space<vmem>>, vector<2x1x18x4xf32>,
    %cst_7 = arith.constant 0.000000e+00 : f32
    %4 = vector.broadcast %cst_7 : f32 to vector<2x1x18x4xf32>
    %c0_8 = arith.constant 0 : index
    %c17 = arith.constant 17 : index
    %c0_9 = arith.constant 0 : index
    %c0_10 = arith.constant 0 : index
    %5 = vector.load %arg17[%c0_8, %c17, %c0_9, %c0_10] : memref<2x18x18x4xf32, #tpu.memory_space<vmem>>, vector<2x1x18x4xf32>
    tpu.vector_store %arg17[%c0_8, %c17, %c0_9, %c0_10], %4 {strides = array<i32>} : memref<2x18x18x4xf32, #tpu.memory_space<vmem>>, vector<2x1x18x4xf32>,
    %cst_11 = arith.constant 0.000000e+00 : f32
    %6 = vector.broadcast %cst_11 : f32 to vector<2x18x1x4xf32>
    %c0_12 = arith.constant 0 : index
    %c0_13 = arith.constant 0 : index
    %c0_14 = arith.constant 0 : index
    %c0_15 = arith.constant 0 : index
    %7 = vector.load %arg17[%c0_12, %c0_13, %c0_14, %c0_15] : memref<2x18x18x4xf32, #tpu.memory_space<vmem>>, vector<2x18x1x4xf32>
    tpu.vector_store %arg17[%c0_12, %c0_13, %c0_14, %c0_15], %6 {strides = array<i32>} : memref<2x18x18x4xf32, #tpu.memory_space<vmem>>, vector<2x18x1x4xf32>,
    %cst_16 = arith.constant 0.000000e+00 : f32
    %8 = vector.broadcast %cst_16 : f32 to vector<2x18x1x4xf32>
    %c0_17 = arith.constant 0 : index
    %c0_18 = arith.constant 0 : index
    %c17_19 = arith.constant 17 : index
    %c0_20 = arith.constant 0 : index
    %9 = vector.load %arg17[%c0_17, %c0_18, %c17_19, %c0_20] : memref<2x18x18x4xf32, #tpu.memory_space<vmem>>, vector<2x18x1x4xf32>
    tpu.vector_store %arg17[%c0_17, %c0_18, %c17_19, %c0_20], %8 {strides = array<i32>} : memref<2x18x18x4xf32, #tpu.memory_space<vmem>>, vector<2x18x1x4xf32>,
    %c0_21 = arith.constant 0 : index
    %c0_22 = arith.constant 0 : index
    %c0_23 = arith.constant 0 : index
    %c0_24 = arith.constant 0 : index
    %10 = vector.load %arg1[%c0_21, %c0_22, %c0_23, %c0_24] : memref<2x16x16x4xf32, #tpu.memory_space<vmem>>, vector<2x16x16x4xf32>
    %c0_25 = arith.constant 0 : index
    %c1 = arith.constant 1 : index
    %c1_26 = arith.constant 1 : index
    %c0_27 = arith.constant 0 : index
    %11 = vector.load %arg17[%c0_25, %c1, %c1_26, %c0_27] : memref<2x18x18x4xf32, #tpu.memory_space<vmem>>, vector<2x16x16x4xf32>
    tpu.vector_store %arg17[%c0_25, %c1, %c1_26, %c0_27], %10 {strides = array<i32>} : memref<2x18x18x4xf32, #tpu.memory_space<vmem>>, vector<2x16x16x4xf32>,
    %c0_28 = arith.constant 0 : index
    %c0_29 = arith.constant 0 : index
    %c0_30 = arith.constant 0 : index
    %c0_31 = arith.constant 0 : index
    %12 = vector.load %arg17[%c0_28, %c0_29, %c0_30, %c0_31] : memref<2x18x18x4xf32, #tpu.memory_space<vmem>>, vector<2x18x18x4xf32>
    %13 = vector.extract_strided_slice %12 {offsets = [0, 0, 0, 0], sizes = [2, 16, 16, 4], strides = [1, 1, 1, 1]} : vector<2x18x18x4xf32> to vector<2x16x16x4xf32>
    %14 = vector.extract_strided_slice %12 {offsets = [0, 0, 1, 0], sizes = [2, 16, 16, 4], strides = [1, 1, 1, 1]} : vector<2x18x18x4xf32> to vector<2x16x16x4xf32>
    %15 = vector.extract_strided_slice %12 {offsets = [0, 0, 2, 0], sizes = [2, 16, 16, 4], strides = [1, 1, 1, 1]} : vector<2x18x18x4xf32> to vector<2x16x16x4xf32>
    %16 = tpu.concatenate %13, %14, %15 in 3 : vector<2x16x16x4xf32>, vector<2x16x16x4xf32>, vector<2x16x16x4xf32> -> vector<2x16x16x12xf32>
    %17 = vector.shape_cast %16 : vector<2x16x16x12xf32> to vector<512x12xf32>
    %18 = arith.truncf %17 : vector<512x12xf32> to vector<512x12xbf16>
    %c0_32 = arith.constant 0 : index
    %c0_33 = arith.constant 0 : index
    %c0_34 = arith.constant 0 : index
    %19 = vector.load %arg4[%c0_32, %c0_33, %c0_34] : memref<3x12x8xbf16, #tpu.memory_space<vmem>>, vector<1x12x8xbf16>
    %20 = vector.shape_cast %19 : vector<1x12x8xbf16> to vector<12x8xbf16>
    %cst_35 = arith.constant dense<0.000000e+00> : vector<512x8xf32>
    %21 = tpu.matmul %18, %20, %cst_35 {dimension_numbers = #tpu.dot_dimension_numbers<[1], [0], [0], [1], [0, 0, 1, 1], [], []>} : vector<512x12xbf16>, vector<12x8xbf16>, vector<512x8xf32> -> vector<512x8xf32>
    %22 = vector.extract_strided_slice %12 {offsets = [0, 1, 0, 0], sizes = [2, 16, 16, 4], strides = [1, 1, 1, 1]} : vector<2x18x18x4xf32> to vector<2x16x16x4xf32>
    %23 = vector.extract_strided_slice %12 {offsets = [0, 1, 1, 0], sizes = [2, 16, 16, 4], strides = [1, 1, 1, 1]} : vector<2x18x18x4xf32> to vector<2x16x16x4xf32>
    %24 = vector.extract_strided_slice %12 {offsets = [0, 1, 2, 0], sizes = [2, 16, 16, 4], strides = [1, 1, 1, 1]} : vector<2x18x18x4xf32> to vector<2x16x16x4xf32>
    %25 = tpu.concatenate %22, %23, %24 in 3 : vector<2x16x16x4xf32>, vector<2x16x16x4xf32>, vector<2x16x16x4xf32> -> vector<2x16x16x12xf32>
    %26 = vector.shape_cast %25 : vector<2x16x16x12xf32> to vector<512x12xf32>
    %27 = arith.truncf %26 : vector<512x12xf32> to vector<512x12xbf16>
    %c1_36 = arith.constant 1 : index
    %c0_37 = arith.constant 0 : index
    %c0_38 = arith.constant 0 : index
    %28 = vector.load %arg4[%c1_36, %c0_37, %c0_38] : memref<3x12x8xbf16, #tpu.memory_space<vmem>>, vector<1x12x8xbf16>
    %29 = vector.shape_cast %28 : vector<1x12x8xbf16> to vector<12x8xbf16>
    %cst_39 = arith.constant dense<0.000000e+00> : vector<512x8xf32>
    %30 = tpu.matmul %27, %29, %cst_39 {dimension_numbers = #tpu.dot_dimension_numbers<[1], [0], [0], [1], [0, 0, 1, 1], [], []>} : vector<512x12xbf16>, vector<12x8xbf16>, vector<512x8xf32> -> vector<512x8xf32>
    %31 = arith.addf %21, %30 : vector<512x8xf32>
    %32 = vector.extract_strided_slice %12 {offsets = [0, 2, 0, 0], sizes = [2, 16, 16, 4], strides = [1, 1, 1, 1]} : vector<2x18x18x4xf32> to vector<2x16x16x4xf32>
    %33 = vector.extract_strided_slice %12 {offsets = [0, 2, 1, 0], sizes = [2, 16, 16, 4], strides = [1, 1, 1, 1]} : vector<2x18x18x4xf32> to vector<2x16x16x4xf32>
    %34 = vector.extract_strided_slice %12 {offsets = [0, 2, 2, 0], sizes = [2, 16, 16, 4], strides = [1, 1, 1, 1]} : vector<2x18x18x4xf32> to vector<2x16x16x4xf32>
    %35 = tpu.concatenate %32, %33, %34 in 3 : vector<2x16x16x4xf32>, vector<2x16x16x4xf32>, vector<2x16x16x4xf32> -> vector<2x16x16x12xf32>
    %36 = vector.shape_cast %35 : vector<2x16x16x12xf32> to vector<512x12xf32>
    %37 = arith.truncf %36 : vector<512x12xf32> to vector<512x12xbf16>
    %c2 = arith.constant 2 : index
    %c0_40 = arith.constant 0 : index
    %c0_41 = arith.constant 0 : index
    %38 = vector.load %arg4[%c2, %c0_40, %c0_41] : memref<3x12x8xbf16, #tpu.memory_space<vmem>>, vector<1x12x8xbf16>
    %39 = vector.shape_cast %38 : vector<1x12x8xbf16> to vector<12x8xbf16>
    %cst_42 = arith.constant dense<0.000000e+00> : vector<512x8xf32>
    %40 = tpu.matmul %37, %39, %cst_42 {dimension_numbers = #tpu.dot_dimension_numbers<[1], [0], [0], [1], [0, 0, 1, 1], [], []>} : vector<512x12xbf16>, vector<12x8xbf16>, vector<512x8xf32> -> vector<512x8xf32>
    %41 = arith.addf %31, %40 : vector<512x8xf32>
    %cst_43 = arith.constant 0.000000e+00 : f32
    %42 = vector.broadcast %cst_43 : f32 to vector<2x1x18x8xf32>
    %c0_44 = arith.constant 0 : index
    %c0_45 = arith.constant 0 : index
    %c0_46 = arith.constant 0 : index
    %c0_47 = arith.constant 0 : index
    %43 = vector.load %arg18[%c0_44, %c0_45, %c0_46, %c0_47] : memref<2x18x18x8xf32, #tpu.memory_space<vmem>>, vector<2x1x18x8xf32>
    tpu.vector_store %arg18[%c0_44, %c0_45, %c0_46, %c0_47], %42 {strides = array<i32>} : memref<2x18x18x8xf32, #tpu.memory_space<vmem>>, vector<2x1x18x8xf32>,
    %cst_48 = arith.constant 0.000000e+00 : f32
    %44 = vector.broadcast %cst_48 : f32 to vector<2x1x18x8xf32>
    %c0_49 = arith.constant 0 : index
    %c17_50 = arith.constant 17 : index
    %c0_51 = arith.constant 0 : index
    %c0_52 = arith.constant 0 : index
    %45 = vector.load %arg18[%c0_49, %c17_50, %c0_51, %c0_52] : memref<2x18x18x8xf32, #tpu.memory_space<vmem>>, vector<2x1x18x8xf32>
    tpu.vector_store %arg18[%c0_49, %c17_50, %c0_51, %c0_52], %44 {strides = array<i32>} : memref<2x18x18x8xf32, #tpu.memory_space<vmem>>, vector<2x1x18x8xf32>,
    %cst_53 = arith.constant 0.000000e+00 : f32
    %46 = vector.broadcast %cst_53 : f32 to vector<2x18x1x8xf32>
    %c0_54 = arith.constant 0 : index
    %c0_55 = arith.constant 0 : index
    %c0_56 = arith.constant 0 : index
    %c0_57 = arith.constant 0 : index
    %47 = vector.load %arg18[%c0_54, %c0_55, %c0_56, %c0_57] : memref<2x18x18x8xf32, #tpu.memory_space<vmem>>, vector<2x18x1x8xf32>
    tpu.vector_store %arg18[%c0_54, %c0_55, %c0_56, %c0_57], %46 {strides = array<i32>} : memref<2x18x18x8xf32, #tpu.memory_space<vmem>>, vector<2x18x1x8xf32>,
    %cst_58 = arith.constant 0.000000e+00 : f32
    %48 = vector.broadcast %cst_58 : f32 to vector<2x18x1x8xf32>
    %c0_59 = arith.constant 0 : index
    %c0_60 = arith.constant 0 : index
    %c17_61 = arith.constant 17 : index
    %c0_62 = arith.constant 0 : index
    %49 = vector.load %arg18[%c0_59, %c0_60, %c17_61, %c0_62] : memref<2x18x18x8xf32, #tpu.memory_space<vmem>>, vector<2x18x1x8xf32>
    tpu.vector_store %arg18[%c0_59, %c0_60, %c17_61, %c0_62], %48 {strides = array<i32>} : memref<2x18x18x8xf32, #tpu.memory_space<vmem>>, vector<2x18x1x8xf32>,
    %c0_63 = arith.constant 0 : index
    %c0_64 = arith.constant 0 : index
    %50 = vector.load %arg5[%c0_63, %c0_64] : memref<1x8xf32, #tpu.memory_space<vmem>>, vector<1x8xf32>
    %c0_65 = arith.constant 0 : index
    %c0_66 = arith.constant 0 : index
    %51 = vector.load %arg6[%c0_65, %c0_66] : memref<1x8xf32, #tpu.memory_space<vmem>>, vector<1x8xf32>
    %c0_67 = arith.constant 0 : index
    %c0_68 = arith.constant 0 : index
    %52 = vector.load %arg7[%c0_67, %c0_68] : memref<1x8xf32, #tpu.memory_space<vmem>>, vector<1x8xf32>
    %c0_69 = arith.constant 0 : index
    %c0_70 = arith.constant 0 : index
    %c0_71 = arith.constant 0 : index
    %53 = vector.load %arg2[%c0_69, %c0_70, %c0_71] : memref<2x1x8xf32, #tpu.memory_space<vmem>>, vector<2x1x8xf32>
    %c0_72 = arith.constant 0 : index
    %c0_73 = arith.constant 0 : index
    %c0_74 = arith.constant 0 : index
    %54 = vector.load %arg3[%c0_72, %c0_73, %c0_74] : memref<2x1x8xf32, #tpu.memory_space<vmem>>, vector<2x1x8xf32>
    %55 = vector.extract_strided_slice %41 {offsets = [0, 0], sizes = [256, 8], strides = [1, 1]} : vector<512x8xf32> to vector<256x8xf32>
    %56 = vector.extract_strided_slice %53 {offsets = [0, 0, 0], sizes = [1, 1, 8], strides = [1, 1, 1]} : vector<2x1x8xf32> to vector<1x1x8xf32>
    %57 = vector.shape_cast %56 : vector<1x1x8xf32> to vector<1x8xf32>
    %58 = vector.extract_strided_slice %54 {offsets = [0, 0, 0], sizes = [1, 1, 8], strides = [1, 1, 1]} : vector<2x1x8xf32> to vector<1x1x8xf32>
    %59 = vector.shape_cast %58 : vector<1x1x8xf32> to vector<1x8xf32>
    %cst_75 = arith.constant dense<0.000000e+00> : vector<8xf32>
    %60 = vector.multi_reduction <add>, %55, %cst_75 [0] : vector<256x8xf32> to vector<8xf32>
    %61 = vector.shape_cast %60 : vector<8xf32> to vector<1x8xf32>
    %cst_76 = arith.constant 2.560000e+02 : f32
    %62 = vector.broadcast %cst_76 : f32 to vector<1x8xf32>
    %63 = arith.divf %61, %62 : vector<1x8xf32>
    %64 = arith.addf %63, %50 : vector<1x8xf32>
    %cst_77 = arith.constant dense<0.000000e+00> : vector<1x8xf32>
    %65 = tpu.matmul %64, %0, %cst_77 {dimension_numbers = #tpu.dot_dimension_numbers<[1], [0], [0], [1], [0, 0, 1, 1], [], []>} : vector<1x8xf32>, vector<8x8xf32>, vector<1x8xf32> -> vector<1x8xf32>
    %cst_78 = arith.constant dense<0.000000e+00> : vector<1x8xf32>
    %66 = tpu.matmul %65, %1, %cst_78 {dimension_numbers = #tpu.dot_dimension_numbers<[1], [0], [0], [1], [0, 0, 1, 1], [], []>} : vector<1x8xf32>, vector<8x8xf32>, vector<1x8xf32> -> vector<1x8xf32>
    %67 = arith.subf %50, %66 : vector<1x8xf32>
    %68 = vector.broadcast %67 : vector<1x8xf32> to vector<256x8xf32>
    %69 = arith.addf %55, %68 : vector<256x8xf32>
    %70 = arith.mulf %69, %69 : vector<256x8xf32>
    %cst_79 = arith.constant dense<0.000000e+00> : vector<8xf32>
    %71 = vector.multi_reduction <add>, %70, %cst_79 [0] : vector<256x8xf32> to vector<8xf32>
    %72 = vector.shape_cast %71 : vector<8xf32> to vector<1x8xf32>
    %cst_80 = arith.constant 2.560000e+02 : f32
    %73 = vector.broadcast %cst_80 : f32 to vector<1x8xf32>
    %74 = arith.divf %72, %73 : vector<1x8xf32>
    %cst_81 = arith.constant dense<0.000000e+00> : vector<1x8xf32>
    %75 = tpu.matmul %74, %0, %cst_81 {dimension_numbers = #tpu.dot_dimension_numbers<[1], [0], [0], [1], [0, 0, 1, 1], [], []>} : vector<1x8xf32>, vector<8x8xf32>, vector<1x8xf32> -> vector<1x8xf32>
    %cst_82 = arith.constant dense<0.000000e+00> : vector<1x8xf32>
    %76 = tpu.matmul %75, %1, %cst_82 {dimension_numbers = #tpu.dot_dimension_numbers<[1], [0], [0], [1], [0, 0, 1, 1], [], []>} : vector<1x8xf32>, vector<8x8xf32>, vector<1x8xf32> -> vector<1x8xf32>
    %cst_83 = arith.constant 9.99999974E-6 : f32
    %77 = vector.broadcast %cst_83 : f32 to vector<1x8xf32>
    %78 = arith.addf %76, %77 : vector<1x8xf32>
    %79 = math.rsqrt %78 : vector<1x8xf32>
    %80 = arith.mulf %79, %51 : vector<1x8xf32>
    %81 = arith.mulf %80, %57 : vector<1x8xf32>
    %82 = arith.mulf %52, %57 : vector<1x8xf32>
    %83 = arith.addf %82, %59 : vector<1x8xf32>
    %84 = vector.broadcast %81 : vector<1x8xf32> to vector<256x8xf32>
    %85 = arith.mulf %69, %84 : vector<256x8xf32>
    %86 = vector.broadcast %83 : vector<1x8xf32> to vector<256x8xf32>
    %87 = arith.addf %85, %86 : vector<256x8xf32>
    %cst_84 = arith.constant 0.000000e+00 : f32
    %88 = vector.broadcast %cst_84 : f32 to vector<256x8xf32>
    %89 = arith.subf %88, %87 : vector<256x8xf32>
    %90 = math.exp %89 : vector<256x8xf32>
    %cst_85 = arith.constant 1.000000e+00 : f32
    %91 = vector.broadcast %cst_85 : f32 to vector<256x8xf32>
    %92 = arith.addf %91, %90 : vector<256x8xf32>
    %cst_86 = arith.constant 1.000000e+00 : f32
    %93 = vector.broadcast %cst_86 : f32 to vector<256x8xf32>
    %94 = arith.divf %93, %92 : vector<256x8xf32>
    %95 = arith.mulf %87, %94 : vector<256x8xf32>
    %96 = vector.shape_cast %95 : vector<256x8xf32> to vector<16x16x8xf32>
    %c0_87 = arith.constant 0 : index
    %c1_88 = arith.constant 1 : index
    %c1_89 = arith.constant 1 : index
    %c0_90 = arith.constant 0 : index
    %97 = vector.load %arg18[%c0_87, %c1_88, %c1_89, %c0_90] : memref<2x18x18x8xf32, #tpu.memory_space<vmem>>, vector<1x16x16x8xf32>
    %98 = vector.shape_cast %97 : vector<1x16x16x8xf32> to vector<16x16x8xf32>
    %99 = vector.shape_cast %96 : vector<16x16x8xf32> to vector<1x16x16x8xf32>
    tpu.vector_store %arg18[%c0_87, %c1_88, %c1_89, %c0_90], %99 {strides = array<i32>} : memref<2x18x18x8xf32, #tpu.memory_space<vmem>>, vector<1x16x16x8xf32>,
    %100 = vector.extract_strided_slice %41 {offsets = [256, 0], sizes = [256, 8], strides = [1, 1]} : vector<512x8xf32> to vector<256x8xf32>
    %101 = vector.extract_strided_slice %53 {offsets = [1, 0, 0], sizes = [1, 1, 8], strides = [1, 1, 1]} : vector<2x1x8xf32> to vector<1x1x8xf32>
    %102 = vector.shape_cast %101 : vector<1x1x8xf32> to vector<1x8xf32>
    %103 = vector.extract_strided_slice %54 {offsets = [1, 0, 0], sizes = [1, 1, 8], strides = [1, 1, 1]} : vector<2x1x8xf32> to vector<1x1x8xf32>
    %104 = vector.shape_cast %103 : vector<1x1x8xf32> to vector<1x8xf32>
    %cst_91 = arith.constant dense<0.000000e+00> : vector<8xf32>
    %105 = vector.multi_reduction <add>, %100, %cst_91 [0] : vector<256x8xf32> to vector<8xf32>
    %106 = vector.shape_cast %105 : vector<8xf32> to vector<1x8xf32>
    %cst_92 = arith.constant 2.560000e+02 : f32
    %107 = vector.broadcast %cst_92 : f32 to vector<1x8xf32>
    %108 = arith.divf %106, %107 : vector<1x8xf32>
    %109 = arith.addf %108, %50 : vector<1x8xf32>
    %cst_93 = arith.constant dense<0.000000e+00> : vector<1x8xf32>
    %110 = tpu.matmul %109, %0, %cst_93 {dimension_numbers = #tpu.dot_dimension_numbers<[1], [0], [0], [1], [0, 0, 1, 1], [], []>} : vector<1x8xf32>, vector<8x8xf32>, vector<1x8xf32> -> vector<1x8xf32>
    %cst_94 = arith.constant dense<0.000000e+00> : vector<1x8xf32>
    %111 = tpu.matmul %110, %1, %cst_94 {dimension_numbers = #tpu.dot_dimension_numbers<[1], [0], [0], [1], [0, 0, 1, 1], [], []>} : vector<1x8xf32>, vector<8x8xf32>, vector<1x8xf32> -> vector<1x8xf32>
    %112 = arith.subf %50, %111 : vector<1x8xf32>
    %113 = vector.broadcast %112 : vector<1x8xf32> to vector<256x8xf32>
    %114 = arith.addf %100, %113 : vector<256x8xf32>
    %115 = arith.mulf %114, %114 : vector<256x8xf32>
    %cst_95 = arith.constant dense<0.000000e+00> : vector<8xf32>
    %116 = vector.multi_reduction <add>, %115, %cst_95 [0] : vector<256x8xf32> to vector<8xf32>
    %117 = vector.shape_cast %116 : vector<8xf32> to vector<1x8xf32>
    %cst_96 = arith.constant 2.560000e+02 : f32
    %118 = vector.broadcast %cst_96 : f32 to vector<1x8xf32>
    %119 = arith.divf %117, %118 : vector<1x8xf32>
    %cst_97 = arith.constant dense<0.000000e+00> : vector<1x8xf32>
    %120 = tpu.matmul %119, %0, %cst_97 {dimension_numbers = #tpu.dot_dimension_numbers<[1], [0], [0], [1], [0, 0, 1, 1], [], []>} : vector<1x8xf32>, vector<8x8xf32>, vector<1x8xf32> -> vector<1x8xf32>
    %cst_98 = arith.constant dense<0.000000e+00> : vector<1x8xf32>
    %121 = tpu.matmul %120, %1, %cst_98 {dimension_numbers = #tpu.dot_dimension_numbers<[1], [0], [0], [1], [0, 0, 1, 1], [], []>} : vector<1x8xf32>, vector<8x8xf32>, vector<1x8xf32> -> vector<1x8xf32>
    %cst_99 = arith.constant 9.99999974E-6 : f32
    %122 = vector.broadcast %cst_99 : f32 to vector<1x8xf32>
    %123 = arith.addf %121, %122 : vector<1x8xf32>
    %124 = math.rsqrt %123 : vector<1x8xf32>
    %125 = arith.mulf %124, %51 : vector<1x8xf32>
    %126 = arith.mulf %125, %102 : vector<1x8xf32>
    %127 = arith.mulf %52, %102 : vector<1x8xf32>
    %128 = arith.addf %127, %104 : vector<1x8xf32>
    %129 = vector.broadcast %126 : vector<1x8xf32> to vector<256x8xf32>
    %130 = arith.mulf %114, %129 : vector<256x8xf32>
    %131 = vector.broadcast %128 : vector<1x8xf32> to vector<256x8xf32>
    %132 = arith.addf %130, %131 : vector<256x8xf32>
    %cst_100 = arith.constant 0.000000e+00 : f32
    %133 = vector.broadcast %cst_100 : f32 to vector<256x8xf32>
    %134 = arith.subf %133, %132 : vector<256x8xf32>
    %135 = math.exp %134 : vector<256x8xf32>
    %cst_101 = arith.constant 1.000000e+00 : f32
    %136 = vector.broadcast %cst_101 : f32 to vector<256x8xf32>
    %137 = arith.addf %136, %135 : vector<256x8xf32>
    %cst_102 = arith.constant 1.000000e+00 : f32
    %138 = vector.broadcast %cst_102 : f32 to vector<256x8xf32>
    %139 = arith.divf %138, %137 : vector<256x8xf32>
    %140 = arith.mulf %132, %139 : vector<256x8xf32>
    %141 = vector.shape_cast %140 : vector<256x8xf32> to vector<16x16x8xf32>
    %c1_103 = arith.constant 1 : index
    %c1_104 = arith.constant 1 : index
    %c1_105 = arith.constant 1 : index
    %c0_106 = arith.constant 0 : index
    %142 = vector.load %arg18[%c1_103, %c1_104, %c1_105, %c0_106] : memref<2x18x18x8xf32, #tpu.memory_space<vmem>>, vector<1x16x16x8xf32>
    %143 = vector.shape_cast %142 : vector<1x16x16x8xf32> to vector<16x16x8xf32>
    %144 = vector.shape_cast %141 : vector<16x16x8xf32> to vector<1x16x16x8xf32>
    tpu.vector_store %arg18[%c1_103, %c1_104, %c1_105, %c0_106], %144 {strides = array<i32>} : memref<2x18x18x8xf32, #tpu.memory_space<vmem>>, vector<1x16x16x8xf32>,
    %c0_107 = arith.constant 0 : index
    %c0_108 = arith.constant 0 : index
    %c0_109 = arith.constant 0 : index
    %c0_110 = arith.constant 0 : index
    %145 = vector.load %arg18[%c0_107, %c0_108, %c0_109, %c0_110] : memref<2x18x18x8xf32, #tpu.memory_space<vmem>>, vector<2x18x18x8xf32>
    %146 = vector.extract_strided_slice %145 {offsets = [0, 0, 0, 0], sizes = [2, 16, 16, 8], strides = [1, 1, 1, 1]} : vector<2x18x18x8xf32> to vector<2x16x16x8xf32>
    %147 = vector.extract_strided_slice %145 {offsets = [0, 0, 1, 0], sizes = [2, 16, 16, 8], strides = [1, 1, 1, 1]} : vector<2x18x18x8xf32> to vector<2x16x16x8xf32>
    %148 = vector.extract_strided_slice %145 {offsets = [0, 0, 2, 0], sizes = [2, 16, 16, 8], strides = [1, 1, 1, 1]} : vector<2x18x18x8xf32> to vector<2x16x16x8xf32>
    %149 = tpu.concatenate %146, %147, %148 in 3 : vector<2x16x16x8xf32>, vector<2x16x16x8xf32>, vector<2x16x16x8xf32> -> vector<2x16x16x24xf32>
    %150 = vector.shape_cast %149 : vector<2x16x16x24xf32> to vector<512x24xf32>
    %151 = arith.truncf %150 : vector<512x24xf32> to vector<512x24xbf16>
    %c0_111 = arith.constant 0 : index
    %c0_112 = arith.constant 0 : index
    %c0_113 = arith.constant 0 : index
    %152 = vector.load %arg8[%c0_111, %c0_112, %c0_113] : memref<3x24x8xbf16, #tpu.memory_space<vmem>>, vector<1x24x8xbf16>
    %153 = vector.shape_cast %152 : vector<1x24x8xbf16> to vector<24x8xbf16>
    %cst_114 = arith.constant dense<0.000000e+00> : vector<512x8xf32>
    %154 = tpu.matmul %151, %153, %cst_114 {dimension_numbers = #tpu.dot_dimension_numbers<[1], [0], [0], [1], [0, 0, 1, 1], [], []>} : vector<512x24xbf16>, vector<24x8xbf16>, vector<512x8xf32> -> vector<512x8xf32>
    %155 = vector.extract_strided_slice %145 {offsets = [0, 1, 0, 0], sizes = [2, 16, 16, 8], strides = [1, 1, 1, 1]} : vector<2x18x18x8xf32> to vector<2x16x16x8xf32>
    %156 = vector.extract_strided_slice %145 {offsets = [0, 1, 1, 0], sizes = [2, 16, 16, 8], strides = [1, 1, 1, 1]} : vector<2x18x18x8xf32> to vector<2x16x16x8xf32>
    %157 = vector.extract_strided_slice %145 {offsets = [0, 1, 2, 0], sizes = [2, 16, 16, 8], strides = [1, 1, 1, 1]} : vector<2x18x18x8xf32> to vector<2x16x16x8xf32>
    %158 = tpu.concatenate %155, %156, %157 in 3 : vector<2x16x16x8xf32>, vector<2x16x16x8xf32>, vector<2x16x16x8xf32> -> vector<2x16x16x24xf32>
    %159 = vector.shape_cast %158 : vector<2x16x16x24xf32> to vector<512x24xf32>
    %160 = arith.truncf %159 : vector<512x24xf32> to vector<512x24xbf16>
    %c1_115 = arith.constant 1 : index
    %c0_116 = arith.constant 0 : index
    %c0_117 = arith.constant 0 : index
    %161 = vector.load %arg8[%c1_115, %c0_116, %c0_117] : memref<3x24x8xbf16, #tpu.memory_space<vmem>>, vector<1x24x8xbf16>
    %162 = vector.shape_cast %161 : vector<1x24x8xbf16> to vector<24x8xbf16>
    %cst_118 = arith.constant dense<0.000000e+00> : vector<512x8xf32>
    %163 = tpu.matmul %160, %162, %cst_118 {dimension_numbers = #tpu.dot_dimension_numbers<[1], [0], [0], [1], [0, 0, 1, 1], [], []>} : vector<512x24xbf16>, vector<24x8xbf16>, vector<512x8xf32> -> vector<512x8xf32>
    %164 = arith.addf %154, %163 : vector<512x8xf32>
    %165 = vector.extract_strided_slice %145 {offsets = [0, 2, 0, 0], sizes = [2, 16, 16, 8], strides = [1, 1, 1, 1]} : vector<2x18x18x8xf32> to vector<2x16x16x8xf32>
    %166 = vector.extract_strided_slice %145 {offsets = [0, 2, 1, 0], sizes = [2, 16, 16, 8], strides = [1, 1, 1, 1]} : vector<2x18x18x8xf32> to vector<2x16x16x8xf32>
    %167 = vector.extract_strided_slice %145 {offsets = [0, 2, 2, 0], sizes = [2, 16, 16, 8], strides = [1, 1, 1, 1]} : vector<2x18x18x8xf32> to vector<2x16x16x8xf32>
    %168 = tpu.concatenate %165, %166, %167 in 3 : vector<2x16x16x8xf32>, vector<2x16x16x8xf32>, vector<2x16x16x8xf32> -> vector<2x16x16x24xf32>
    %169 = vector.shape_cast %168 : vector<2x16x16x24xf32> to vector<512x24xf32>
    %170 = arith.truncf %169 : vector<512x24xf32> to vector<512x24xbf16>
    %c2_119 = arith.constant 2 : index
    %c0_120 = arith.constant 0 : index
    %c0_121 = arith.constant 0 : index
    %171 = vector.load %arg8[%c2_119, %c0_120, %c0_121] : memref<3x24x8xbf16, #tpu.memory_space<vmem>>, vector<1x24x8xbf16>
    %172 = vector.shape_cast %171 : vector<1x24x8xbf16> to vector<24x8xbf16>
    %cst_122 = arith.constant dense<0.000000e+00> : vector<512x8xf32>
    %173 = tpu.matmul %170, %172, %cst_122 {dimension_numbers = #tpu.dot_dimension_numbers<[1], [0], [0], [1], [0, 0, 1, 1], [], []>} : vector<512x24xbf16>, vector<24x8xbf16>, vector<512x8xf32> -> vector<512x8xf32>
    %174 = arith.addf %164, %173 : vector<512x8xf32>
    %c0_123 = arith.constant 0 : index
    %c0_124 = arith.constant 0 : index
    %c0_125 = arith.constant 0 : index
    %c0_126 = arith.constant 0 : index
    %175 = vector.load %arg1[%c0_123, %c0_124, %c0_125, %c0_126] : memref<2x16x16x4xf32, #tpu.memory_space<vmem>>, vector<2x16x16x4xf32>
    %176 = vector.shape_cast %175 : vector<2x16x16x4xf32> to vector<512x4xf32>
    %177 = arith.truncf %176 : vector<512x4xf32> to vector<512x4xbf16>
    %c0_127 = arith.constant 0 : index
    %c0_128 = arith.constant 0 : index
    %178 = vector.load %arg14[%c0_127, %c0_128] : memref<4x8xbf16, #tpu.memory_space<vmem>>, vector<4x8xbf16>
    %cst_129 = arith.constant dense<0.000000e+00> : vector<512x8xf32>
    %179 = tpu.matmul %177, %178, %cst_129 {dimension_numbers = #tpu.dot_dimension_numbers<[1], [0], [0], [1], [0, 0, 1, 1], [], []>} : vector<512x4xbf16>, vector<4x8xbf16>, vector<512x8xf32> -> vector<512x8xf32>
    %c0_130 = arith.constant 0 : index
    %c0_131 = arith.constant 0 : index
    %180 = vector.load %arg15[%c0_130, %c0_131] : memref<1x8xf32, #tpu.memory_space<vmem>>, vector<1x8xf32>
    %181 = vector.broadcast %180 : vector<1x8xf32> to vector<512x8xf32>
    %182 = arith.addf %179, %181 : vector<512x8xf32>
    %c0_132 = arith.constant 0 : index
    %c0_133 = arith.constant 0 : index
    %183 = vector.load %arg9[%c0_132, %c0_133] : memref<1x8xf32, #tpu.memory_space<vmem>>, vector<1x8xf32>
    %c0_134 = arith.constant 0 : index
    %c0_135 = arith.constant 0 : index
    %184 = vector.load %arg10[%c0_134, %c0_135] : memref<1x8xf32, #tpu.memory_space<vmem>>, vector<1x8xf32>
    %c0_136 = arith.constant 0 : index
    %c0_137 = arith.constant 0 : index
    %185 = vector.load %arg11[%c0_136, %c0_137] : memref<1x8xf32, #tpu.memory_space<vmem>>, vector<1x8xf32>
    %186 = vector.extract_strided_slice %174 {offsets = [0, 0], sizes = [256, 8], strides = [1, 1]} : vector<512x8xf32> to vector<256x8xf32>
    %cst_138 = arith.constant dense<0.000000e+00> : vector<8xf32>
    %187 = vector.multi_reduction <add>, %186, %cst_138 [0] : vector<256x8xf32> to vector<8xf32>
    %188 = vector.shape_cast %187 : vector<8xf32> to vector<1x8xf32>
    %cst_139 = arith.constant 2.560000e+02 : f32
    %189 = vector.broadcast %cst_139 : f32 to vector<1x8xf32>
    %190 = arith.divf %188, %189 : vector<1x8xf32>
    %191 = arith.addf %190, %183 : vector<1x8xf32>
    %cst_140 = arith.constant dense<0.000000e+00> : vector<1x8xf32>
    %192 = tpu.matmul %191, %0, %cst_140 {dimension_numbers = #tpu.dot_dimension_numbers<[1], [0], [0], [1], [0, 0, 1, 1], [], []>} : vector<1x8xf32>, vector<8x8xf32>, vector<1x8xf32> -> vector<1x8xf32>
    %cst_141 = arith.constant dense<0.000000e+00> : vector<1x8xf32>
    %193 = tpu.matmul %192, %1, %cst_141 {dimension_numbers = #tpu.dot_dimension_numbers<[1], [0], [0], [1], [0, 0, 1, 1], [], []>} : vector<1x8xf32>, vector<8x8xf32>, vector<1x8xf32> -> vector<1x8xf32>
    %194 = arith.subf %183, %193 : vector<1x8xf32>
    %195 = vector.broadcast %194 : vector<1x8xf32> to vector<256x8xf32>
    %196 = arith.addf %186, %195 : vector<256x8xf32>
    %197 = arith.mulf %196, %196 : vector<256x8xf32>
    %cst_142 = arith.constant dense<0.000000e+00> : vector<8xf32>
    %198 = vector.multi_reduction <add>, %197, %cst_142 [0] : vector<256x8xf32> to vector<8xf32>
    %199 = vector.shape_cast %198 : vector<8xf32> to vector<1x8xf32>
    %cst_143 = arith.constant 2.560000e+02 : f32
    %200 = vector.broadcast %cst_143 : f32 to vector<1x8xf32>
    %201 = arith.divf %199, %200 : vector<1x8xf32>
    %cst_144 = arith.constant dense<0.000000e+00> : vector<1x8xf32>
    %202 = tpu.matmul %201, %0, %cst_144 {dimension_numbers = #tpu.dot_dimension_numbers<[1], [0], [0], [1], [0, 0, 1, 1], [], []>} : vector<1x8xf32>, vector<8x8xf32>, vector<1x8xf32> -> vector<1x8xf32>
    %cst_145 = arith.constant dense<0.000000e+00> : vector<1x8xf32>
    %203 = tpu.matmul %202, %1, %cst_145 {dimension_numbers = #tpu.dot_dimension_numbers<[1], [0], [0], [1], [0, 0, 1, 1], [], []>} : vector<1x8xf32>, vector<8x8xf32>, vector<1x8xf32> -> vector<1x8xf32>
    %cst_146 = arith.constant 9.99999974E-6 : f32
    %204 = vector.broadcast %cst_146 : f32 to vector<1x8xf32>
    %205 = arith.addf %203, %204 : vector<1x8xf32>
    %206 = math.rsqrt %205 : vector<1x8xf32>
    %207 = arith.mulf %206, %184 : vector<1x8xf32>
    %208 = vector.broadcast %207 : vector<1x8xf32> to vector<256x8xf32>
    %209 = arith.mulf %196, %208 : vector<256x8xf32>
    %210 = vector.broadcast %185 : vector<1x8xf32> to vector<256x8xf32>
    %211 = arith.addf %209, %210 : vector<256x8xf32>
    %cst_147 = arith.constant 0.000000e+00 : f32
    %212 = vector.broadcast %cst_147 : f32 to vector<256x8xf32>
    %213 = arith.subf %212, %211 : vector<256x8xf32>
    %214 = math.exp %213 : vector<256x8xf32>
    %cst_148 = arith.constant 1.000000e+00 : f32
    %215 = vector.broadcast %cst_148 : f32 to vector<256x8xf32>
    %216 = arith.addf %215, %214 : vector<256x8xf32>
    %cst_149 = arith.constant 1.000000e+00 : f32
    %217 = vector.broadcast %cst_149 : f32 to vector<256x8xf32>
    %218 = arith.divf %217, %216 : vector<256x8xf32>
    %219 = arith.mulf %211, %218 : vector<256x8xf32>
    %220 = vector.extract_strided_slice %182 {offsets = [0, 0], sizes = [256, 8], strides = [1, 1]} : vector<512x8xf32> to vector<256x8xf32>
    %221 = arith.addf %219, %220 : vector<256x8xf32>
    %222 = vector.shape_cast %221 : vector<256x8xf32> to vector<16x16x8xf32>
    %c0_150 = arith.constant 0 : index
    %c0_151 = arith.constant 0 : index
    %c0_152 = arith.constant 0 : index
    %c0_153 = arith.constant 0 : index
    %223 = vector.load %arg16[%c0_150, %c0_151, %c0_152, %c0_153] : memref<2x16x16x8xf32, #tpu.memory_space<vmem>>, vector<1x16x16x8xf32>
    %224 = vector.shape_cast %223 : vector<1x16x16x8xf32> to vector<16x16x8xf32>
    %225 = vector.shape_cast %222 : vector<16x16x8xf32> to vector<1x16x16x8xf32>
    tpu.vector_store %arg16[%c0_150, %c0_151, %c0_152, %c0_153], %225 {strides = array<i32>} : memref<2x16x16x8xf32, #tpu.memory_space<vmem>>, vector<1x16x16x8xf32>,
    %226 = vector.extract_strided_slice %174 {offsets = [256, 0], sizes = [256, 8], strides = [1, 1]} : vector<512x8xf32> to vector<256x8xf32>
    %cst_154 = arith.constant dense<0.000000e+00> : vector<8xf32>
    %227 = vector.multi_reduction <add>, %226, %cst_154 [0] : vector<256x8xf32> to vector<8xf32>
    %228 = vector.shape_cast %227 : vector<8xf32> to vector<1x8xf32>
    %cst_155 = arith.constant 2.560000e+02 : f32
    %229 = vector.broadcast %cst_155 : f32 to vector<1x8xf32>
    %230 = arith.divf %228, %229 : vector<1x8xf32>
    %231 = arith.addf %230, %183 : vector<1x8xf32>
    %cst_156 = arith.constant dense<0.000000e+00> : vector<1x8xf32>
    %232 = tpu.matmul %231, %0, %cst_156 {dimension_numbers = #tpu.dot_dimension_numbers<[1], [0], [0], [1], [0, 0, 1, 1], [], []>} : vector<1x8xf32>, vector<8x8xf32>, vector<1x8xf32> -> vector<1x8xf32>
    %cst_157 = arith.constant dense<0.000000e+00> : vector<1x8xf32>
    %233 = tpu.matmul %232, %1, %cst_157 {dimension_numbers = #tpu.dot_dimension_numbers<[1], [0], [0], [1], [0, 0, 1, 1], [], []>} : vector<1x8xf32>, vector<8x8xf32>, vector<1x8xf32> -> vector<1x8xf32>
    %234 = arith.subf %183, %233 : vector<1x8xf32>
    %235 = vector.broadcast %234 : vector<1x8xf32> to vector<256x8xf32>
    %236 = arith.addf %226, %235 : vector<256x8xf32>
    %237 = arith.mulf %236, %236 : vector<256x8xf32>
    %cst_158 = arith.constant dense<0.000000e+00> : vector<8xf32>
    %238 = vector.multi_reduction <add>, %237, %cst_158 [0] : vector<256x8xf32> to vector<8xf32>
    %239 = vector.shape_cast %238 : vector<8xf32> to vector<1x8xf32>
    %cst_159 = arith.constant 2.560000e+02 : f32
    %240 = vector.broadcast %cst_159 : f32 to vector<1x8xf32>
    %241 = arith.divf %239, %240 : vector<1x8xf32>
    %cst_160 = arith.constant dense<0.000000e+00> : vector<1x8xf32>
    %242 = tpu.matmul %241, %0, %cst_160 {dimension_numbers = #tpu.dot_dimension_numbers<[1], [0], [0], [1], [0, 0, 1, 1], [], []>} : vector<1x8xf32>, vector<8x8xf32>, vector<1x8xf32> -> vector<1x8xf32>
    %cst_161 = arith.constant dense<0.000000e+00> : vector<1x8xf32>
    %243 = tpu.matmul %242, %1, %cst_161 {dimension_numbers = #tpu.dot_dimension_numbers<[1], [0], [0], [1], [0, 0, 1, 1], [], []>} : vector<1x8xf32>, vector<8x8xf32>, vector<1x8xf32> -> vector<1x8xf32>
    %cst_162 = arith.constant 9.99999974E-6 : f32
    %244 = vector.broadcast %cst_162 : f32 to vector<1x8xf32>
    %245 = arith.addf %243, %244 : vector<1x8xf32>
    %246 = math.rsqrt %245 : vector<1x8xf32>
    %247 = arith.mulf %246, %184 : vector<1x8xf32>
    %248 = vector.broadcast %247 : vector<1x8xf32> to vector<256x8xf32>
    %249 = arith.mulf %236, %248 : vector<256x8xf32>
    %250 = vector.broadcast %185 : vector<1x8xf32> to vector<256x8xf32>
    %251 = arith.addf %249, %250 : vector<256x8xf32>
    %cst_163 = arith.constant 0.000000e+00 : f32
    %252 = vector.broadcast %cst_163 : f32 to vector<256x8xf32>
    %253 = arith.subf %252, %251 : vector<256x8xf32>
    %254 = math.exp %253 : vector<256x8xf32>
    %cst_164 = arith.constant 1.000000e+00 : f32
    %255 = vector.broadcast %cst_164 : f32 to vector<256x8xf32>
    %256 = arith.addf %255, %254 : vector<256x8xf32>
    %cst_165 = arith.constant 1.000000e+00 : f32
    %257 = vector.broadcast %cst_165 : f32 to vector<256x8xf32>
    %258 = arith.divf %257, %256 : vector<256x8xf32>
    %259 = arith.mulf %251, %258 : vector<256x8xf32>
    %260 = vector.extract_strided_slice %182 {offsets = [256, 0], sizes = [256, 8], strides = [1, 1]} : vector<512x8xf32> to vector<256x8xf32>
    %261 = arith.addf %259, %260 : vector<256x8xf32>
    %262 = vector.shape_cast %261 : vector<256x8xf32> to vector<16x16x8xf32>
    %c1_166 = arith.constant 1 : index
    %c0_167 = arith.constant 0 : index
    %c0_168 = arith.constant 0 : index
    %c0_169 = arith.constant 0 : index
    %263 = vector.load %arg16[%c1_166, %c0_167, %c0_168, %c0_169] : memref<2x16x16x8xf32, #tpu.memory_space<vmem>>, vector<1x16x16x8xf32>
    %264 = vector.shape_cast %263 : vector<1x16x16x8xf32> to vector<16x16x8xf32>
    %265 = vector.shape_cast %262 : vector<16x16x8xf32> to vector<1x16x16x8xf32>
    tpu.vector_store %arg16[%c1_166, %c0_167, %c0_168, %c0_169], %265 {strides = array<i32>} : memref<2x16x16x8xf32, #tpu.memory_space<vmem>>, vector<1x16x16x8xf32>,
    return
  }
  func.func @transform_0(%arg0: i32) -> (i32, i32, i32, i32) {
    %c0_i32 = arith.constant 0 : i32
    %c0_i32_0 = arith.constant 0 : i32
    %c0_i32_1 = arith.constant 0 : i32
    %c0_i32_2 = arith.constant 0 : i32
    return %arg0, %c0_i32, %c0_i32_0, %c0_i32_1 : i32, i32, i32, i32
  }
  func.func @transform_1(%arg0: i32) -> (i32, i32, i32) {
    %c0_i32 = arith.constant 0 : i32
    %c0_i32_0 = arith.constant 0 : i32
    %c0_i32_1 = arith.constant 0 : i32
    return %arg0, %c0_i32, %c0_i32_0 : i32, i32, i32
  }
  func.func @transform_2(%arg0: i32) -> (i32, i32, i32) {
    %c0_i32 = arith.constant 0 : i32
    %c0_i32_0 = arith.constant 0 : i32
    %c0_i32_1 = arith.constant 0 : i32
    return %arg0, %c0_i32, %c0_i32_0 : i32, i32, i32
  }
  func.func @transform_3(%arg0: i32) -> (i32, i32, i32) {
    %c0_i32 = arith.constant 0 : i32
    %c0_i32_0 = arith.constant 0 : i32
    %c0_i32_1 = arith.constant 0 : i32
    %c0_i32_2 = arith.constant 0 : i32
    return %c0_i32, %c0_i32_0, %c0_i32_1 : i32, i32, i32
  }
  func.func @transform_4(%arg0: i32) -> (i32, i32) {
    %c0_i32 = arith.constant 0 : i32
    %c0_i32_0 = arith.constant 0 : i32
    %c0_i32_1 = arith.constant 0 : i32
    return %c0_i32, %c0_i32_0 : i32, i32
  }
  func.func @transform_5(%arg0: i32) -> (i32, i32) {
    %c0_i32 = arith.constant 0 : i32
    %c0_i32_0 = arith.constant 0 : i32
    %c0_i32_1 = arith.constant 0 : i32
    return %c0_i32, %c0_i32_0 : i32, i32
  }
  func.func @transform_6(%arg0: i32) -> (i32, i32) {
    %c0_i32 = arith.constant 0 : i32
    %c0_i32_0 = arith.constant 0 : i32
    %c0_i32_1 = arith.constant 0 : i32
    return %c0_i32, %c0_i32_0 : i32, i32
  }
  func.func @transform_7(%arg0: i32) -> (i32, i32, i32) {
    %c0_i32 = arith.constant 0 : i32
    %c0_i32_0 = arith.constant 0 : i32
    %c0_i32_1 = arith.constant 0 : i32
    %c0_i32_2 = arith.constant 0 : i32
    return %c0_i32, %c0_i32_0, %c0_i32_1 : i32, i32, i32
  }
  func.func @transform_8(%arg0: i32) -> (i32, i32) {
    %c0_i32 = arith.constant 0 : i32
    %c0_i32_0 = arith.constant 0 : i32
    %c0_i32_1 = arith.constant 0 : i32
    return %c0_i32, %c0_i32_0 : i32, i32
  }
  func.func @transform_9(%arg0: i32) -> (i32, i32) {
    %c0_i32 = arith.constant 0 : i32
    %c0_i32_0 = arith.constant 0 : i32
    %c0_i32_1 = arith.constant 0 : i32
    return %c0_i32, %c0_i32_0 : i32, i32
  }
  func.func @transform_10(%arg0: i32) -> (i32, i32) {
    %c0_i32 = arith.constant 0 : i32
    %c0_i32_0 = arith.constant 0 : i32
    %c0_i32_1 = arith.constant 0 : i32
    return %c0_i32, %c0_i32_0 : i32, i32
  }
  func.func @transform_11(%arg0: i32) -> (i32, i32) {
    %c0_i32 = arith.constant 0 : i32
    %c0_i32_0 = arith.constant 0 : i32
    %c0_i32_1 = arith.constant 0 : i32
    return %c0_i32, %c0_i32_0 : i32, i32
  }
  func.func @transform_12(%arg0: i32) -> (i32, i32) {
    %c0_i32 = arith.constant 0 : i32
    %c0_i32_0 = arith.constant 0 : i32
    %c0_i32_1 = arith.constant 0 : i32
    return %c0_i32, %c0_i32_0 : i32, i32
  }
  func.func @transform_13(%arg0: i32) -> (i32, i32) {
    %c0_i32 = arith.constant 0 : i32
    %c0_i32_0 = arith.constant 0 : i32
    %c0_i32_1 = arith.constant 0 : i32
    return %c0_i32, %c0_i32_0 : i32, i32
  }
  func.func @transform_14(%arg0: i32) -> (i32, i32) {
    %c0_i32 = arith.constant 0 : i32
    %c0_i32_0 = arith.constant 0 : i32
    %c0_i32_1 = arith.constant 0 : i32
    return %c0_i32, %c0_i32_0 : i32, i32
  }
  func.func @transform_15(%arg0: i32) -> (i32, i32, i32, i32) {
    %c0_i32 = arith.constant 0 : i32
    %c0_i32_0 = arith.constant 0 : i32
    %c0_i32_1 = arith.constant 0 : i32
    %c0_i32_2 = arith.constant 0 : i32
    return %arg0, %c0_i32, %c0_i32_0, %c0_i32_1 : i32, i32, i32, i32
  }
}

</mosaic_0001>

<llo_original>
// kernel: tpu_custom_call.1
$region0: #{tpu_custom_call.1}
  #allocation0 [shape = 'u32[]', space=smem, size = 0x4, offset = 0x4, fixed_abs, tag = 'smem constant byte address 0x4 - core index']
  #allocation1 [shape = 'u32[144,128]{1,0:T(1,128)}', space=vmem, size = 0x12000, scoped, tag = 'internal scratch']
  #allocation2 [shape = 'f32[2,18,18,4]{3,2,1,0:T(8,128)}', space=vmem, size = 0x6c000, scoped, tag = 'scratch operand']
  #allocation3 [shape = 'f32[2,18,18,8]{3,2,1,0:T(8,128)}', space=vmem, size = 0x6c000, scoped, tag = 'scratch operand']
  %s0 = inlined_call_operand.vmem [shape: f32[2,16,16,4], index: 0, kind: input, shape index: {}]
  %s1 = inlined_call_operand.vmem [shape: f32[2,1,8], index: 1, kind: input, shape index: {}]
  %s2 = inlined_call_operand.vmem [shape: f32[2,1,8], index: 2, kind: input, shape index: {}]
  %s3 = inlined_call_operand.vmem [shape: bf16[3,12,8], index: 3, kind: input, shape index: {}]
  %s4 = inlined_call_operand.vmem [shape: f32[1,8], index: 4, kind: input, shape index: {}]
  %s5 = inlined_call_operand.vmem [shape: f32[1,8], index: 5, kind: input, shape index: {}]
  %s6 = inlined_call_operand.vmem [shape: f32[1,8], index: 6, kind: input, shape index: {}]
  %s7 = inlined_call_operand.vmem [shape: bf16[3,24,8], index: 7, kind: input, shape index: {}]
  %s8 = inlined_call_operand.vmem [shape: f32[1,8], index: 8, kind: input, shape index: {}]
  %s9 = inlined_call_operand.vmem [shape: f32[1,8], index: 9, kind: input, shape index: {}]
  %s10 = inlined_call_operand.vmem [shape: f32[1,8], index: 10, kind: input, shape index: {}]
  %s11 = inlined_call_operand.vmem [shape: f32[8,8], index: 11, kind: input, shape index: {}]
  %s12 = inlined_call_operand.vmem [shape: f32[8,8], index: 12, kind: input, shape index: {}]
  %s13 = inlined_call_operand.vmem [shape: bf16[4,8], index: 13, kind: input, shape index: {}]
  %s14 = inlined_call_operand.vmem [shape: f32[1,8], index: 14, kind: input, shape index: {}]
  %s15 = inlined_call_operand.vmem [shape: f32[2,16,16,8], index: 15, kind: output, shape index: {}]
  %s16 = sld [smem:[#allocation0]]
  $region70: #{tpu_custom_call.1} parent=0
    _
  %s18 = ssub.s32 1, %s16
  %s19 = scalar_select 0, %s18, %s16
  // Predicated region
  $region2: #{tpu_custom_call.1} parent=0 // pred_check
    _
  $region3: #{tpu_custom_call.1} parent=0 // pred_check_branch
    %21 = sbr.rel (0) target = $region5
  $region4: #{tpu_custom_call.1} parent=0 // pred_region
    _
  $region5: #{tpu_custom_call.1} parent=0 // pred_fallthru
    _
  // Predicated region
  $region6: #{tpu_custom_call.1} parent=0 // pred_check
    _
  $region7: #{tpu_custom_call.1} parent=0 // pred_check_branch
    %23 = sbr.rel (0) target = $region9
  $region8: #{tpu_custom_call.1} parent=0 // pred_region
    _
  $region9: #{tpu_custom_call.1} parent=0 // pred_fallthru
    _
  // Predicated region
  $region10: #{tpu_custom_call.1} parent=0 // pred_check
    _
  $region11: #{tpu_custom_call.1} parent=0 // pred_check_branch
    %25 = sbr.rel (0) target = $region13
  $region12: #{tpu_custom_call.1} parent=0 // pred_region
    _
  $region13: #{tpu_custom_call.1} parent=0 // pred_fallthru
    _
  // Predicated region
  $region14: #{tpu_custom_call.1} parent=0 // pred_check
    _
  $region15: #{tpu_custom_call.1} parent=0 // pred_check_branch
    %27 = sbr.rel (0) target = $region17
  $region16: #{tpu_custom_call.1} parent=0 // pred_region
    _
  $region17: #{tpu_custom_call.1} parent=0 // pred_fallthru
    _
  // Predicated region
  $region18: #{tpu_custom_call.1} parent=0 // pred_check
    _
  $region19: #{tpu_custom_call.1} parent=0 // pred_check_branch
    %29 = sbr.rel (0) target = $region21
  $region20: #{tpu_custom_call.1} parent=0 // pred_region
    _
  $region21: #{tpu_custom_call.1} parent=0 // pred_fallthru
    _
  // Predicated region
  $region22: #{tpu_custom_call.1} parent=0 // pred_check
    _
  $region23: #{tpu_custom_call.1} parent=0 // pred_check_branch
    %31 = sbr.rel (0) target = $region25
  $region24: #{tpu_custom_call.1} parent=0 // pred_region
    _
  $region25: #{tpu_custom_call.1} parent=0 // pred_fallthru
    _
  // Predicated region
  $region26: #{tpu_custom_call.1} parent=0 // pred_check
    _
  $region27: #{tpu_custom_call.1} parent=0 // pred_check_branch
    %33 = sbr.rel (0) target = $region29
  $region28: #{tpu_custom_call.1} parent=0 // pred_region
    _
  $region29: #{tpu_custom_call.1} parent=0 // pred_fallthru
    _
  // Predicated region
  $region30: #{tpu_custom_call.1} parent=0 // pred_check
    _
  $region31: #{tpu_custom_call.1} parent=0 // pred_check_branch
    %35 = sbr.rel (0) target = $region33
  $region32: #{tpu_custom_call.1} parent=0 // pred_region
    _
  $region33: #{tpu_custom_call.1} parent=0 // pred_fallthru
    _
  // Predicated region
  $region34: #{tpu_custom_call.1} parent=0 // pred_check
    _
  $region35: #{tpu_custom_call.1} parent=0 // pred_check_branch
    %37 = sbr.rel (0) target = $region37
  $region36: #{tpu_custom_call.1} parent=0 // pred_region
    _
  $region37: #{tpu_custom_call.1} parent=0 // pred_fallthru
    _
  // Predicated region
  $region38: #{tpu_custom_call.1} parent=0 // pred_check
    _
  $region39: #{tpu_custom_call.1} parent=0 // pred_check_branch
    %39 = sbr.rel (0) target = $region41
  $region40: #{tpu_custom_call.1} parent=0 // pred_region
    _
  $region41: #{tpu_custom_call.1} parent=0 // pred_fallthru
    _
  // Predicated region
  $region42: #{tpu_custom_call.1} parent=0 // pred_check
    _
  $region43: #{tpu_custom_call.1} parent=0 // pred_check_branch
    %41 = sbr.rel (0) target = $region45
  $region44: #{tpu_custom_call.1} parent=0 // pred_region
    _
  $region45: #{tpu_custom_call.1} parent=0 // pred_fallthru
    _
  // Predicated region
  $region46: #{tpu_custom_call.1} parent=0 // pred_check
    _
  $region47: #{tpu_custom_call.1} parent=0 // pred_check_branch
    %43 = sbr.rel (0) target = $region49
  $region48: #{tpu_custom_call.1} parent=0 // pred_region
    _
  $region49: #{tpu_custom_call.1} parent=0 // pred_fallthru
    _
  // Predicated region
  $region50: #{tpu_custom_call.1} parent=0 // pred_check
    _
  $region51: #{tpu_custom_call.1} parent=0 // pred_check_branch
    %45 = sbr.rel (0) target = $region53
  $region52: #{tpu_custom_call.1} parent=0 // pred_region
    _
  $region53: #{tpu_custom_call.1} parent=0 // pred_fallthru
    _
  // Predicated region
  $region54: #{tpu_custom_call.1} parent=0 // pred_check
    _
  $region55: #{tpu_custom_call.1} parent=0 // pred_check_branch
    %47 = sbr.rel (0) target = $region57
  $region56: #{tpu_custom_call.1} parent=0 // pred_region
    _
  $region57: #{tpu_custom_call.1} parent=0 // pred_fallthru
    _
  // Predicated region
  $region58: #{tpu_custom_call.1} parent=0 // pred_check
    _
  $region59: #{tpu_custom_call.1} parent=0 // pred_check_branch
    %49 = sbr.rel (0) target = $region61
  $region60: #{tpu_custom_call.1} parent=0 // pred_region
    _
  $region61: #{tpu_custom_call.1} parent=0 // pred_fallthru
    _
  %v51 = vld [vmem:[%s11] sm:$0xff]
  %v52 = vld [vmem:[%s12] sm:$0xff]
  %vm53 = vcmask 31744
  %54 = vst.msk [vmem:[#allocation2] sm:$0xff] %vm53, 0.0
  %55 = vst.msk [vmem:[#allocation2 + $0x8] sm:$0xff] %vm53, 0.0
  %vm56 = vcmask 25600
  %57 = vst.msk [vmem:[#allocation2 + $0x10] sm:$0x3] %vm56, 0.0
  %58 = vst.msk [vmem:[#allocation2 + $0x1b0] sm:$0xff] %vm53, 0.0
  %59 = vst.msk [vmem:[#allocation2 + $0x1b8] sm:$0xff] %vm53, 0.0
  %60 = vst.msk [vmem:[#allocation2 + $0x1c0] sm:$0x3] %vm56, 0.0
  %s61 = scalar_lea.vmem [#allocation2], 408
  %62 = vst.msk [vmem:[%s61] sm:$0xff] %vm53, 0.0
  %63 = vst.msk [vmem:[%s61 + $0x8] sm:$0xff] %vm53, 0.0
  %64 = vst.msk [vmem:[%s61 + $0x10] sm:$0x3] %vm56, 0.0
  %65 = vst.msk [vmem:[%s61 + $0x1b0] sm:$0xff] %vm53, 0.0
  %66 = vst.msk [vmem:[%s61 + $0x1b8] sm:$0xff] %vm53, 0.0
  %67 = vst.msk [vmem:[%s61 + $0x1c0] sm:$0x3] %vm56, 0.0
  %vm68 = vcmask 24576
  %69 = vst.msk [vmem:[#allocation2] sm:$0x1] %vm68, 0.0
  %70 = vst.msk [vmem:[#allocation2 + $0x18] sm:$0x1] %vm68, 0.0
  %71 = vst.msk [vmem:[#allocation2 + $0x30] sm:$0x1] %vm68, 0.0
  %72 = vst.msk [vmem:[#allocation2 + $0x48] sm:$0x1] %vm68, 0.0
  %73 = vst.msk [vmem:[#allocation2 + $0x60] sm:$0x1] %vm68, 0.0
  %74 = vst.msk [vmem:[#allocation2 + $0x78] sm:$0x1] %vm68, 0.0
  %75 = vst.msk [vmem:[#allocation2 + $0x90] sm:$0x1] %vm68, 0.0
  %76 = vst.msk [vmem:[#allocation2 + $0xa8] sm:$0x1] %vm68, 0.0
  %77 = vst.msk [vmem:[#allocation2 + $0xc0] sm:$0x1] %vm68, 0.0
  %78 = vst.msk [vmem:[#allocation2 + $0xd8] sm:$0x1] %vm68, 0.0
  %79 = vst.msk [vmem:[#allocation2 + $0xf0] sm:$0x1] %vm68, 0.0
  %80 = vst.msk [vmem:[#allocation2 + $0x108] sm:$0x1] %vm68, 0.0
  %81 = vst.msk [vmem:[#allocation2 + $0x120] sm:$0x1] %vm68, 0.0
  %82 = vst.msk [vmem:[#allocation2 + $0x138] sm:$0x1] %vm68, 0.0
  %83 = vst.msk [vmem:[#allocation2 + $0x150] sm:$0x1] %vm68, 0.0
  %84 = vst.msk [vmem:[#allocation2 + $0x168] sm:$0x1] %vm68, 0.0
  %85 = vst.msk [vmem:[#allocation2 + $0x180] sm:$0x1] %vm68, 0.0
  %86 = vst.msk [vmem:[#allocation2 + $0x198] sm:$0x1] %vm68, 0.0
  %87 = vst.msk [vmem:[#allocation2 + $0x1b0] sm:$0x1] %vm68, 0.0
  %88 = vst.msk [vmem:[#allocation2 + $0x1c8] sm:$0x1] %vm68, 0.0
  %89 = vst.msk [vmem:[#allocation2 + $0x1e0] sm:$0x1] %vm68, 0.0
  %90 = vst.msk [vmem:[#allocation2 + $0x1f8] sm:$0x1] %vm68, 0.0
  %91 = vst.msk [vmem:[#allocation2 + $0x210] sm:$0x1] %vm68, 0.0
  %92 = vst.msk [vmem:[#allocation2 + $0x228] sm:$0x1] %vm68, 0.0
  %93 = vst.msk [vmem:[#allocation2 + $0x240] sm:$0x1] %vm68, 0.0
  %94 = vst.msk [vmem:[#allocation2 + $0x258] sm:$0x1] %vm68, 0.0
  %95 = vst.msk [vmem:[#allocation2 + $0x270] sm:$0x1] %vm68, 0.0
  %96 = vst.msk [vmem:[#allocation2 + $0x288] sm:$0x1] %vm68, 0.0
  %97 = vst.msk [vmem:[#allocation2 + $0x2a0] sm:$0x1] %vm68, 0.0
  %98 = vst.msk [vmem:[#allocation2 + $0x2b8] sm:$0x1] %vm68, 0.0
  %99 = vst.msk [vmem:[#allocation2 + $0x2d0] sm:$0x1] %vm68, 0.0
  %100 = vst.msk [vmem:[#allocation2 + $0x2e8] sm:$0x1] %vm68, 0.0
  %101 = vst.msk [vmem:[#allocation2 + $0x300] sm:$0x1] %vm68, 0.0
  %102 = vst.msk [vmem:[#allocation2 + $0x318] sm:$0x1] %vm68, 0.0
  %103 = vst.msk [vmem:[#allocation2 + $0x330] sm:$0x1] %vm68, 0.0
  %104 = vst.msk [vmem:[#allocation2 + $0x348] sm:$0x1] %vm68, 0.0
  %105 = vst.msk [vmem:[#allocation2 + $0x11] sm:$0x1] %vm68, 0.0
  %106 = vst.msk [vmem:[#allocation2 + $0x29] sm:$0x1] %vm68, 0.0
  %107 = vst.msk [vmem:[#allocation2 + $0x41] sm:$0x1] %vm68, 0.0
  %108 = vst.msk [vmem:[#allocation2 + $0x59] sm:$0x1] %vm68, 0.0
  %109 = vst.msk [vmem:[#allocation2 + $0x71] sm:$0x1] %vm68, 0.0
  %110 = vst.msk [vmem:[#allocation2 + $0x89] sm:$0x1] %vm68, 0.0
  %111 = vst.msk [vmem:[#allocation2 + $0xa1] sm:$0x1] %vm68, 0.0
  %112 = vst.msk [vmem:[#allocation2 + $0xb9] sm:$0x1] %vm68, 0.0
  %113 = vst.msk [vmem:[#allocation2 + $0xd1] sm:$0x1] %vm68, 0.0
  %114 = vst.msk [vmem:[#allocation2 + $0xe9] sm:$0x1] %vm68, 0.0
  %115 = vst.msk [vmem:[#allocation2 + $0x101] sm:$0x1] %vm68, 0.0
  %116 = vst.msk [vmem:[#allocation2 + $0x119] sm:$0x1] %vm68, 0.0
  %117 = vst.msk [vmem:[#allocation2 + $0x131] sm:$0x1] %vm68, 0.0
  %118 = vst.msk [vmem:[#allocation2 + $0x149] sm:$0x1] %vm68, 0.0
  %119 = vst.msk [vmem:[#allocation2 + $0x161] sm:$0x1] %vm68, 0.0
  %120 = vst.msk [vmem:[#allocation2 + $0x179] sm:$0x1] %vm68, 0.0
  %121 = vst.msk [vmem:[#allocation2 + $0x191] sm:$0x1] %vm68, 0.0
  %122 = vst.msk [vmem:[#allocation2 + $0x1a9] sm:$0x1] %vm68, 0.0
  %123 = vst.msk [vmem:[#allocation2 + $0x1c1] sm:$0x1] %vm68, 0.0
  %124 = vst.msk [vmem:[#allocation2 + $0x1d9] sm:$0x1] %vm68, 0.0
  %125 = vst.msk [vmem:[#allocation2 + $0x1f1] sm:$0x1] %vm68, 0.0
  %126 = vst.msk [vmem:[#allocation2 + $0x209] sm:$0x1] %vm68, 0.0
  %127 = vst.msk [vmem:[#allocation2 + $0x221] sm:$0x1] %vm68, 0.0
  %128 = vst.msk [vmem:[#allocation2 + $0x239] sm:$0x1] %vm68, 0.0
  %129 = vst.msk [vmem:[#allocation2 + $0x251] sm:$0x1] %vm68, 0.0
  %130 = vst.msk [vmem:[#allocation2 + $0x269] sm:$0x1] %vm68, 0.0
  %131 = vst.msk [vmem:[#allocation2 + $0x281] sm:$0x1] %vm68, 0.0
  %132 = vst.msk [vmem:[#allocation2 + $0x299] sm:$0x1] %vm68, 0.0
  %133 = vst.msk [vmem:[#allocation2 + $0x2b1] sm:$0x1] %vm68, 0.0
  %134 = vst.msk [vmem:[#allocation2 + $0x2c9] sm:$0x1] %vm68, 0.0
  %135 = vst.msk [vmem:[#allocation2 + $0x2e1] sm:$0x1] %vm68, 0.0
  %136 = vst.msk [vmem:[#allocation2 + $0x2f9] sm:$0x1] %vm68, 0.0
  %137 = vst.msk [vmem:[#allocation2 + $0x311] sm:$0x1] %vm68, 0.0
  %138 = vst.msk [vmem:[#allocation2 + $0x329] sm:$0x1] %vm68, 0.0
  %139 = vst.msk [vmem:[#allocation2 + $0x341] sm:$0x1] %vm68, 0.0
  %140 = vst.msk [vmem:[#allocation2 + $0x359] sm:$0x1] %vm68, 0.0
  %v141 = vld [vmem:[%s0] sm:$0xff]
  %v142 = vld [vmem:[%s0 + $0x8] sm:$0xff]
  %v143 = vld [vmem:[%s0 + $0x10] sm:$0xff]
  %v144 = vld [vmem:[%s0 + $0x18] sm:$0xff]
  %v145 = vld [vmem:[%s0 + $0x20] sm:$0xff]
  %v146 = vld [vmem:[%s0 + $0x28] sm:$0xff]
  %v147 = vld [vmem:[%s0 + $0x30] sm:$0xff]
  %v148 = vld [vmem:[%s0 + $0x38] sm:$0xff]
  %v149 = vld [vmem:[%s0 + $0x40] sm:$0xff]
  %v150 = vld [vmem:[%s0 + $0x48] sm:$0xff]
  %v151 = vld [vmem:[%s0 + $0x50] sm:$0xff]
  %v152 = vld [vmem:[%s0 + $0x58] sm:$0xff]
  %v153 = vld [vmem:[%s0 + $0x60] sm:$0xff]
  %v154 = vld [vmem:[%s0 + $0x68] sm:$0xff]
  %v155 = vld [vmem:[%s0 + $0x70] sm:$0xff]
  %v156 = vld [vmem:[%s0 + $0x78] sm:$0xff]
  %v157 = vld [vmem:[%s0 + $0x80] sm:$0xff]
  %v158 = vld [vmem:[%s0 + $0x88] sm:$0xff]
  %v159 = vld [vmem:[%s0 + $0x90] sm:$0xff]
  %v160 = vld [vmem:[%s0 + $0x98] sm:$0xff]
  %v161 = vld [vmem:[%s0 + $0xa0] sm:$0xff]
  %v162 = vld [vmem:[%s0 + $0xa8] sm:$0xff]
  %v163 = vld [vmem:[%s0 + $0xb0] sm:$0xff]
  %v164 = vld [vmem:[%s0 + $0xb8] sm:$0xff]
  %v165 = vld [vmem:[%s0 + $0xc0] sm:$0xff]
  %v166 = vld [vmem:[%s0 + $0xc8] sm:$0xff]
  %v167 = vld [vmem:[%s0 + $0xd0] sm:$0xff]
  %v168 = vld [vmem:[%s0 + $0xd8] sm:$0xff]
  %v169 = vld [vmem:[%s0 + $0xe0] sm:$0xff]
  %v170 = vld [vmem:[%s0 + $0xe8] sm:$0xff]
  %v171 = vld [vmem:[%s0 + $0xf0] sm:$0xff]
  %v172 = vld [vmem:[%s0 + $0xf8] sm:$0xff]
  %v173 = vld [vmem:[%s0 + $0x100] sm:$0xff]
  %v174 = vld [vmem:[%s0 + $0x108] sm:$0xff]
  %v175 = vld [vmem:[%s0 + $0x110] sm:$0xff]
  %v176 = vld [vmem:[%s0 + $0x118] sm:$0xff]
  %v177 = vld [vmem:[%s0 + $0x120] sm:$0xff]
  %v178 = vld [vmem:[%s0 + $0x128] sm:$0xff]
  %v179 = vld [vmem:[%s0 + $0x130] sm:$0xff]
  %v180 = vld [vmem:[%s0 + $0x138] sm:$0xff]
  %v181 = vld [vmem:[%s0 + $0x140] sm:$0xff]
  %v182 = vld [vmem:[%s0 + $0x148] sm:$0xff]
  %v183 = vld [vmem:[%s0 + $0x150] sm:$0xff]
  %v184 = vld [vmem:[%s0 + $0x158] sm:$0xff]
  %v185 = vld [vmem:[%s0 + $0x160] sm:$0xff]
  %v186 = vld [vmem:[%s0 + $0x168] sm:$0xff]
  %v187 = vld [vmem:[%s0 + $0x170] sm:$0xff]
  %v188 = vld [vmem:[%s0 + $0x178] sm:$0xff]
  %v189 = vld [vmem:[%s0 + $0x180] sm:$0xff]
  %v190 = vld [vmem:[%s0 + $0x188] sm:$0xff]
  %v191 = vld [vmem:[%s0 + $0x190] sm:$0xff]
  %v192 = vld [vmem:[%s0 + $0x198] sm:$0xff]
  %v193 = vld [vmem:[%s0 + $0x1a0] sm:$0xff]
  %v194 = vld [vmem:[%s0 + $0x1a8] sm:$0xff]
  %v195 = vld [vmem:[%s0 + $0x1b0] sm:$0xff]
  %v196 = vld [vmem:[%s0 + $0x1b8] sm:$0xff]
  %v197 = vld [vmem:[%s0 + $0x1c0] sm:$0xff]
  %v198 = vld [vmem:[%s0 + $0x1c8] sm:$0xff]
  %v199 = vld [vmem:[%s0 + $0x1d0] sm:$0xff]
  %v200 = vld [vmem:[%s0 + $0x1d8] sm:$0xff]
  %v201 = vld [vmem:[%s0 + $0x1e0] sm:$0xff]
  %v202 = vld [vmem:[%s0 + $0x1e8] sm:$0xff]
  %v203 = vld [vmem:[%s0 + $0x1f0] sm:$0xff]
  %v204 = vld [vmem:[%s0 + $0x1f8] sm:$0xff]
  %s205 = scalar_lea.vmem [#allocation2], 24
  %206 = vst.msk [vmem:[%s205 + $0x1] sm:$0xff] %vm53, %v141
  %207 = vst.msk [vmem:[%s205 + $0x9] sm:$0xff] %vm53, %v142
  %208 = vst.msk [vmem:[%s205 + $0x19] sm:$0xff] %vm53, %v143
  %209 = vst.msk [vmem:[%s205 + $0x21] sm:$0xff] %vm53, %v144
  %210 = vst.msk [vmem:[%s205 + $0x31] sm:$0xff] %vm53, %v145
  %211 = vst.msk [vmem:[%s205 + $0x39] sm:$0xff] %vm53, %v146
  %212 = vst.msk [vmem:[%s205 + $0x49] sm:$0xff] %vm53, %v147
  %213 = vst.msk [vmem:[%s205 + $0x51] sm:$0xff] %vm53, %v148
  %214 = vst.msk [vmem:[%s205 + $0x61] sm:$0xff] %vm53, %v149
  %215 = vst.msk [vmem:[%s205 + $0x69] sm:$0xff] %vm53, %v150
  %216 = vst.msk [vmem:[%s205 + $0x79] sm:$0xff] %vm53, %v151
  %217 = vst.msk [vmem:[%s205 + $0x81] sm:$0xff] %vm53, %v152
  %218 = vst.msk [vmem:[%s205 + $0x91] sm:$0xff] %vm53, %v153
  %219 = vst.msk [vmem:[%s205 + $0x99] sm:$0xff] %vm53, %v154
  %220 = vst.msk [vmem:[%s205 + $0xa9] sm:$0xff] %vm53, %v155
  %221 = vst.msk [vmem:[%s205 + $0xb1] sm:$0xff] %vm53, %v156
  %222 = vst.msk [vmem:[%s205 + $0xc1] sm:$0xff] %vm53, %v157
  %223 = vst.msk [vmem:[%s205 + $0xc9] sm:$0xff] %vm53, %v158
  %224 = vst.msk [vmem:[%s205 + $0xd9] sm:$0xff] %vm53, %v159
  %225 = vst.msk [vmem:[%s205 + $0xe1] sm:$0xff] %vm53, %v160
  %226 = vst.msk [vmem:[%s205 + $0xf1] sm:$0xff] %vm53, %v161
  %227 = vst.msk [vmem:[%s205 + $0xf9] sm:$0xff] %vm53, %v162
  %228 = vst.msk [vmem:[%s205 + $0x109] sm:$0xff] %vm53, %v163
  %229 = vst.msk [vmem:[%s205 + $0x111] sm:$0xff] %vm53, %v164
  %230 = vst.msk [vmem:[%s205 + $0x121] sm:$0xff] %vm53, %v165
  %231 = vst.msk [vmem:[%s205 + $0x129] sm:$0xff] %vm53, %v166
  %232 = vst.msk [vmem:[%s205 + $0x139] sm:$0xff] %vm53, %v167
  %233 = vst.msk [vmem:[%s205 + $0x141] sm:$0xff] %vm53, %v168
  %234 = vst.msk [vmem:[%s205 + $0x151] sm:$0xff] %vm53, %v169
  %235 = vst.msk [vmem:[%s205 + $0x159] sm:$0xff] %vm53, %v170
  %236 = vst.msk [vmem:[%s205 + $0x169] sm:$0xff] %vm53, %v171
  %237 = vst.msk [vmem:[%s205 + $0x171] sm:$0xff] %vm53, %v172
  %238 = vst.msk [vmem:[%s205 + $0x1b1] sm:$0xff] %vm53, %v173
  %239 = vst.msk [vmem:[%s205 + $0x1b9] sm:$0xff] %vm53, %v174
  %240 = vst.msk [vmem:[%s205 + $0x1c9] sm:$0xff] %vm53, %v175
  %241 = vst.msk [vmem:[%s205 + $0x1d1] sm:$0xff] %vm53, %v176
  %242 = vst.msk [vmem:[%s205 + $0x1e1] sm:$0xff] %vm53, %v177
  %243 = vst.msk [vmem:[%s205 + $0x1e9] sm:$0xff] %vm53, %v178
  %244 = vst.msk [vmem:[%s205 + $0x1f9] sm:$0xff] %vm53, %v179
  %245 = vst.msk [vmem:[%s205 + $0x201] sm:$0xff] %vm53, %v180
  %246 = vst.msk [vmem:[%s205 + $0x211] sm:$0xff] %vm53, %v181
  %247 = vst.msk [vmem:[%s205 + $0x219] sm:$0xff] %vm53, %v182
  %248 = vst.msk [vmem:[%s205 + $0x229] sm:$0xff] %vm53, %v183
  %249 = vst.msk [vmem:[%s205 + $0x231] sm:$0xff] %vm53, %v184
  %250 = vst.msk [vmem:[%s205 + $0x241] sm:$0xff] %vm53, %v185
  %251 = vst.msk [vmem:[%s205 + $0x249] sm:$0xff] %vm53, %v186
  %252 = vst.msk [vmem:[%s205 + $0x259] sm:$0xff] %vm53, %v187
  %253 = vst.msk [vmem:[%s205 + $0x261] sm:$0xff] %vm53, %v188
  %254 = vst.msk [vmem:[%s205 + $0x271] sm:$0xff] %vm53, %v189
  %255 = vst.msk [vmem:[%s205 + $0x279] sm:$0xff] %vm53, %v190
  %256 = vst.msk [vmem:[%s205 + $0x289] sm:$0xff] %vm53, %v191
  %257 = vst.msk [vmem:[%s205 + $0x291] sm:$0xff] %vm53, %v192
  %258 = vst.msk [vmem:[%s205 + $0x2a1] sm:$0xff] %vm53, %v193
  %259 = vst.msk [vmem:[%s205 + $0x2a9] sm:$0xff] %vm53, %v194
  %260 = vst.msk [vmem:[%s205 + $0x2b9] sm:$0xff] %vm53, %v195
  %261 = vst.msk [vmem:[%s205 + $0x2c1] sm:$0xff] %vm53, %v196
  %262 = vst.msk [vmem:[%s205 + $0x2d1] sm:$0xff] %vm53, %v197
  %263 = vst.msk [vmem:[%s205 + $0x2d9] sm:$0xff] %vm53, %v198
  %264 = vst.msk [vmem:[%s205 + $0x2e9] sm:$0xff] %vm53, %v199
  %265 = vst.msk [vmem:[%s205 + $0x2f1] sm:$0xff] %vm53, %v200
  %266 = vst.msk [vmem:[%s205 + $0x301] sm:$0xff] %vm53, %v201
  %267 = vst.msk [vmem:[%s205 + $0x309] sm:$0xff] %vm53, %v202
  %268 = vst.msk [vmem:[%s205 + $0x319] sm:$0xff] %vm53, %v203
  %269 = vst.msk [vmem:[%s205 + $0x321] sm:$0xff] %vm53, %v204
  %v270 = vld [vmem:[#allocation2] sm:$0xff]
  %v271 = vld [vmem:[#allocation2 + $0x8] sm:$0xff]
  %v272 = vld [vmem:[#allocation2 + $0x10] sm:$0x3]
  %v273 = vld [vmem:[#allocation2 + $0x18] sm:$0xff]
  %v274 = vld [vmem:[#allocation2 + $0x20] sm:$0xff]
  %v275 = vld [vmem:[#allocation2 + $0x28] sm:$0x3]
  %v276 = vld [vmem:[#allocation2 + $0x30] sm:$0xff]
  %v277 = vld [vmem:[#allocation2 + $0x38] sm:$0xff]
  %v278 = vld [vmem:[#allocation2 + $0x40] sm:$0x3]
  %v279 = vld [vmem:[#allocation2 + $0x48] sm:$0xff]
  %v280 = vld [vmem:[#allocation2 + $0x50] sm:$0xff]
  %v281 = vld [vmem:[#allocation2 + $0x58] sm:$0x3]
  %v282 = vld [vmem:[#allocation2 + $0x60] sm:$0xff]
  %v283 = vld [vmem:[#allocation2 + $0x68] sm:$0xff]
  %v284 = vld [vmem:[#allocation2 + $0x70] sm:$0x3]
  %v285 = vld [vmem:[#allocation2 + $0x78] sm:$0xff]
  %v286 = vld [vmem:[#allocation2 + $0x80] sm:$0xff]
  %v287 = vld [vmem:[#allocation2 + $0x88] sm:$0x3]
  %v288 = vld [vmem:[#allocation2 + $0x90] sm:$0xff]
  %v289 = vld [vmem:[#allocation2 + $0x98] sm:$0xff]
  %v290 = vld [vmem:[#allocation2 + $0xa0] sm:$0x3]
  %v291 = vld [vmem:[#allocation2 + $0xa8] sm:$0xff]
  %v292 = vld [vmem:[#allocation2 + $0xb0] sm:$0xff]
  %v293 = vld [vmem:[#allocation2 + $0xb8] sm:$0x3]
  %v294 = vld [vmem:[#allocation2 + $0xc0] sm:$0xff]
  %v295 = vld [vmem:[#allocation2 + $0xc8] sm:$0xff]
  %v296 = vld [vmem:[#allocation2 + $0xd0] sm:$0x3]
  %v297 = vld [vmem:[#allocation2 + $0xd8] sm:$0xff]
  %v298 = vld [vmem:[#allocation2 + $0xe0] sm:$0xff]
  %v299 = vld [vmem:[#allocation2 + $0xe8] sm:$0x3]
  %v300 = vld [vmem:[#allocation2 + $0xf0] sm:$0xff]
  %v301 = vld [vmem:[#allocation2 + $0xf8] sm:$0xff]
  %v302 = vld [vmem:[#allocation2 + $0x100] sm:$0x3]
  %v303 = vld [vmem:[#allocation2 + $0x108] sm:$0xff]
  %v304 = vld [vmem:[#allocation2 + $0x110] sm:$0xff]
  %v305 = vld [vmem:[#allocation2 + $0x118] sm:$0x3]
  %v306 = vld [vmem:[#allocation2 + $0x120] sm:$0xff]
  %v307 = vld [vmem:[#allocation2 + $0x128] sm:$0xff]
  %v308 = vld [vmem:[#allocation2 + $0x130] sm:$0x3]
  %v309 = vld [vmem:[#allocation2 + $0x138] sm:$0xff]
  %v310 = vld [vmem:[#allocation2 + $0x140] sm:$0xff]
  %v311 = vld [vmem:[#allocation2 + $0x148] sm:$0x3]
  %v312 = vld [vmem:[#allocation2 + $0x150] sm:$0xff]
  %v313 = vld [vmem:[#allocation2 + $0x158] sm:$0xff]
  %v314 = vld [vmem:[#allocation2 + $0x160] sm:$0x3]
  %v315 = vld [vmem:[#allocation2 + $0x168] sm:$0xff]
  %v316 = vld [vmem:[#allocation2 + $0x170] sm:$0xff]
  %v317 = vld [vmem:[#allocation2 + $0x178] sm:$0x3]
  %v318 = vld [vmem:[#allocation2 + $0x180] sm:$0xff]
  %v319 = vld [vmem:[#allocation2 + $0x188] sm:$0xff]
  %v320 = vld [vmem:[#allocation2 + $0x190] sm:$0x3]
  %v321 = vld [vmem:[#allocation2 + $0x198] sm:$0xff]
  %v322 = vld [vmem:[#allocation2 + $0x1a0] sm:$0xff]
  %v323 = vld [vmem:[#allocation2 + $0x1a8] sm:$0x3]
  %v324 = vld [vmem:[#allocation2 + $0x1b0] sm:$0xff]
  %v325 = vld [vmem:[#allocation2 + $0x1b8] sm:$0xff]
  %v326 = vld [vmem:[#allocation2 + $0x1c0] sm:$0x3]
  %v327 = vld [vmem:[#allocation2 + $0x1c8] sm:$0xff]
  %v328 = vld [vmem:[#allocation2 + $0x1d0] sm:$0xff]
  %v329 = vld [vmem:[#allocation2 + $0x1d8] sm:$0x3]
  %v330 = vld [vmem:[#allocation2 + $0x1e0] sm:$0xff]
  %v331 = vld [vmem:[#allocation2 + $0x1e8] sm:$0xff]
  %v332 = vld [vmem:[#allocation2 + $0x1f0] sm:$0x3]
  %v333 = vld [vmem:[#allocation2 + $0x1f8] sm:$0xff]
  %v334 = vld [vmem:[#allocation2 + $0x200] sm:$0xff]
  %v335 = vld [vmem:[#allocation2 + $0x208] sm:$0x3]
  %v336 = vld [vmem:[#allocation2 + $0x210] sm:$0xff]
  %v337 = vld [vmem:[#allocation2 + $0x218] sm:$0xff]
  %v338 = vld [vmem:[#allocation2 + $0x220] sm:$0x3]
  %v339 = vld [vmem:[#allocation2 + $0x228] sm:$0xff]
  %v340 = vld [vmem:[#allocation2 + $0x230] sm:$0xff]
  %v341 = vld [vmem:[#allocation2 + $0x238] sm:$0x3]
  %v342 = vld [vmem:[#allocation2 + $0x240] sm:$0xff]
  %v343 = vld [vmem:[#allocation2 + $0x248] sm:$0xff]
  %v344 = vld [vmem:[#allocation2 + $0x250] sm:$0x3]
  %v345 = vld [vmem:[#allocation2 + $0x258] sm:$0xff]
  %v346 = vld [vmem:[#allocation2 + $0x260] sm:$0xff]
  %v347 = vld [vmem:[#allocation2 + $0x268] sm:$0x3]
  %v348 = vld [vmem:[#allocation2 + $0x270] sm:$0xff]
  %v349 = vld [vmem:[#allocation2 + $0x278] sm:$0xff]
  %v350 = vld [vmem:[#allocation2 + $0x280] sm:$0x3]
  %v351 = vld [vmem:[#allocation2 + $0x288] sm:$0xff]
  %v352 = vld [vmem:[#allocation2 + $0x290] sm:$0xff]
  %v353 = vld [vmem:[#allocation2 + $0x298] sm:$0x3]
  %v354 = vld [vmem:[#allocation2 + $0x2a0] sm:$0xff]
  %v355 = vld [vmem:[#allocation2 + $0x2a8] sm:$0xff]
  %v356 = vld [vmem:[#allocation2 + $0x2b0] sm:$0x3]
  %v357 = vld [vmem:[#allocation2 + $0x2b8] sm:$0xff]
  %v358 = vld [vmem:[#allocation2 + $0x2c0] sm:$0xff]
  %v359 = vld [vmem:[#allocation2 + $0x2c8] sm:$0x3]
  %v360 = vld [vmem:[#allocation2 + $0x2d0] sm:$0xff]
  %v361 = vld [vmem:[#allocation2 + $0x2d8] sm:$0xff]
  %v362 = vld [vmem:[#allocation2 + $0x2e0] sm:$0x3]
  %v363 = vld [vmem:[#allocation2 + $0x2e8] sm:$0xff]
  %v364 = vld [vmem:[#allocation2 + $0x2f0] sm:$0xff]
  %v365 = vld [vmem:[#allocation2 + $0x2f8] sm:$0x3]
  %v366 = vld [vmem:[#allocation2 + $0x300] sm:$0xff]
  %v367 = vld [vmem:[#allocation2 + $0x308] sm:$0xff]
  %v368 = vld [vmem:[#allocation2 + $0x310] sm:$0x3]
  %v369 = vld [vmem:[#allocation2 + $0x318] sm:$0xff]
  %v370 = vld [vmem:[#allocation2 + $0x320] sm:$0xff]
  %v371 = vld [vmem:[#allocation2 + $0x328] sm:$0x3]
  %v372 = vld [vmem:[#allocation2 + $0x330] sm:$0xff]
  %v373 = vld [vmem:[#allocation2 + $0x338] sm:$0xff]
  %v374 = vld [vmem:[#allocation2 + $0x340] sm:$0x3]
  %v375 = vld [vmem:[#allocation2 + $0x348] sm:$0xff]
  %v376 = vld [vmem:[#allocation2 + $0x350] sm:$0xff]
  %v377 = vld [vmem:[#allocation2 + $0x358] sm:$0x3]
  %vm474 = vcmask 1046528
  %v475 = vrot.slane %v270, 1
  %v476 = vrot.slane %v271, 1
  %v477 = vsel %vm474, %v475, %v476
  %v478 = vrot.slane %v272, 1
  %v479 = vsel %vm474, %v476, %v478
  %v480 = vrot.slane %v273, 1
  %v481 = vrot.slane %v274, 1
  %v482 = vsel %vm474, %v480, %v481
  %v483 = vrot.slane %v275, 1
  %v484 = vsel %vm474, %v481, %v483
  %v485 = vrot.slane %v276, 1
  %v486 = vrot.slane %v277, 1
  %v487 = vsel %vm474, %v485, %v486
  %v488 = vrot.slane %v278, 1
  %v489 = vsel %vm474, %v486, %v488
  %v490 = vrot.slane %v279, 1
  %v491 = vrot.slane %v280, 1
  %v492 = vsel %vm474, %v490, %v491
  %v493 = vrot.slane %v281, 1
  %v494 = vsel %vm474, %v491, %v493
  %v495 = vrot.slane %v282, 1
  %v496 = vrot.slane %v283, 1
  %v497 = vsel %vm474, %v495, %v496
  %v498 = vrot.slane %v284, 1
  %v499 = vsel %vm474, %v496, %v498
  %v500 = vrot.slane %v285, 1
  %v501 = vrot.slane %v286, 1
  %v502 = vsel %vm474, %v500, %v501
  %v503 = vrot.slane %v287, 1
  %v504 = vsel %vm474, %v501, %v503
  %v505 = vrot.slane %v288, 1
  %v506 = vrot.slane %v289, 1
  %v507 = vsel %vm474, %v505, %v506
  %v508 = vrot.slane %v290, 1
  %v509 = vsel %vm474, %v506, %v508
  %v510 = vrot.slane %v291, 1
  %v511 = vrot.slane %v292, 1
  %v512 = vsel %vm474, %v510, %v511
  %v513 = vrot.slane %v293, 1
  %v514 = vsel %vm474, %v511, %v513
  %v515 = vrot.slane %v294, 1
  %v516 = vrot.slane %v295, 1
  %v517 = vsel %vm474, %v515, %v516
  %v518 = vrot.slane %v296, 1
  %v519 = vsel %vm474, %v516, %v518
  %v520 = vrot.slane %v297, 1
  %v521 = vrot.slane %v298, 1
  %v522 = vsel %vm474, %v520, %v521
  %v523 = vrot.slane %v299, 1
  %v524 = vsel %vm474, %v521, %v523
  %v525 = vrot.slane %v300, 1
  %v526 = vrot.slane %v301, 1
  %v527 = vsel %vm474, %v525, %v526
  %v528 = vrot.slane %v302, 1
  %v529 = vsel %vm474, %v526, %v528
  %v530 = vrot.slane %v303, 1
  %v531 = vrot.slane %v304, 1
  %v532 = vsel %vm474, %v530, %v531
  %v533 = vrot.slane %v305, 1
  %v534 = vsel %vm474, %v531, %v533
  %v535 = vrot.slane %v306, 1
  %v536 = vrot.slane %v307, 1
  %v537 = vsel %vm474, %v535, %v536
  %v538 = vrot.slane %v308, 1
  %v539 = vsel %vm474, %v536, %v538
  %v540 = vrot.slane %v309, 1
  %v541 = vrot.slane %v310, 1
  %v542 = vsel %vm474, %v540, %v541
  %v543 = vrot.slane %v311, 1
  %v544 = vsel %vm474, %v541, %v543
  %v545 = vrot.slane %v312, 1
  %v546 = vrot.slane %v313, 1
  %v547 = vsel %vm474, %v545, %v546
  %v548 = vrot.slane %v314, 1
  %v549 = vsel %vm474, %v546, %v548
  %v550 = vrot.slane %v315, 1
  %v551 = vrot.slane %v316, 1
  %v552 = vsel %vm474, %v550, %v551
  %v553 = vrot.slane %v317, 1
  %v554 = vsel %vm474, %v551, %v553
  %v555 = vrot.slane %v324, 1
  %v556 = vrot.slane %v325, 1
  %v557 = vsel %vm474, %v555, %v556
  %v558 = vrot.slane %v326, 1
  %v559 = vsel %vm474, %v556, %v558
  %v560 = vrot.slane %v327, 1
  %v561 = vrot.slane %v328, 1
  %v562 = vsel %vm474, %v560, %v561
  %v563 = vrot.slane %v329, 1
  %v564 = vsel %vm474, %v561, %v563
  %v565 = vrot.slane %v330, 1
  %v566 = vrot.slane %v331, 1
  %v567 = vsel %vm474, %v565, %v566
  %v568 = vrot.slane %v332, 1
  %v569 = vsel %vm474, %v566, %v568
  %v570 = vrot.slane %v333, 1
  %v571 = vrot.slane %v334, 1
  %v572 = vsel %vm474, %v570, %v571
  %v573 = vrot.slane %v335, 1
  %v574 = vsel %vm474, %v571, %v573
  %v575 = vrot.slane %v336, 1
  %v576 = vrot.slane %v337, 1
  %v577 = vsel %vm474, %v575, %v576
  %v578 = vrot.slane %v338, 1
  %v579 = vsel %vm474, %v576, %v578
  %v580 = vrot.slane %v339, 1
  %v581 = vrot.slane %v340, 1
  %v582 = vsel %vm474, %v580, %v581
  %v583 = vrot.slane %v341, 1
  %v584 = vsel %vm474, %v581, %v583
  %v585 = vrot.slane %v342, 1
  %v586 = vrot.slane %v343, 1
  %v587 = vsel %vm474, %v585, %v586
  %v588 = vrot.slane %v344, 1
  %v589 = vsel %vm474, %v586, %v588
  %v590 = vrot.slane %v345, 1
  %v591 = vrot.slane %v346, 1
  %v592 = vsel %vm474, %v590, %v591
  %v593 = vrot.slane %v347, 1
  %v594 = vsel %vm474, %v591, %v593
  %v595 = vrot.slane %v348, 1
  %v596 = vrot.slane %v349, 1
  %v597 = vsel %vm474, %v595, %v596
  %v598 = vrot.slane %v350, 1
  %v599 = vsel %vm474, %v596, %v598
  %v600 = vrot.slane %v351, 1
  %v601 = vrot.slane %v352, 1
  %v602 = vsel %vm474, %v600, %v601
  %v603 = vrot.slane %v353, 1
  %v604 = vsel %vm474, %v601, %v603
  %v605 = vrot.slane %v354, 1
  %v606 = vrot.slane %v355, 1
  %v607 = vsel %vm474, %v605, %v606
  %v608 = vrot.slane %v356, 1
  %v609 = vsel %vm474, %v606, %v608
  %v610 = vrot.slane %v357, 1
  %v611 = vrot.slane %v358, 1
  %v612 = vsel %vm474, %v610, %v611
  %v613 = vrot.slane %v359, 1
  %v614 = vsel %vm474, %v611, %v613
  %v615 = vrot.slane %v360, 1
  %v616 = vrot.slane %v361, 1
  %v617 = vsel %vm474, %v615, %v616
  %v618 = vrot.slane %v362, 1
  %v619 = vsel %vm474, %v616, %v618
  %v620 = vrot.slane %v363, 1
  %v621 = vrot.slane %v364, 1
  %v622 = vsel %vm474, %v620, %v621
  %v623 = vrot.slane %v365, 1
  %v624 = vsel %vm474, %v621, %v623
  %v625 = vrot.slane %v366, 1
  %v626 = vrot.slane %v367, 1
  %v627 = vsel %vm474, %v625, %v626
  %v628 = vrot.slane %v368, 1
  %v629 = vsel %vm474, %v626, %v628
  %v630 = vrot.slane %v369, 1
  %v631 = vrot.slane %v370, 1
  %v632 = vsel %vm474, %v630, %v631
  %v633 = vrot.slane %v371, 1
  %v634 = vsel %vm474, %v631, %v633
  %635 = vrot.lane.b32.xlu0 %v477, 4
  %v636 = vpop.permute.xlu0 %635
  %637 = vrot.lane.b32.xlu0 %v479, 4
  %v638 = vpop.permute.xlu0 %637
  %639 = vrot.lane.b32.xlu0 %v482, 4
  %v640 = vpop.permute.xlu0 %639
  %641 = vrot.lane.b32.xlu0 %v484, 4
  %v642 = vpop.permute.xlu0 %641
  %643 = vrot.lane.b32.xlu0 %v487, 4
  %v644 = vpop.permute.xlu0 %643
  %645 = vrot.lane.b32.xlu0 %v489, 4
  %v646 = vpop.permute.xlu0 %645
  %647 = vrot.lane.b32.xlu0 %v492, 4
  %v648 = vpop.permute.xlu0 %647
  %649 = vrot.lane.b32.xlu0 %v494, 4
  %v650 = vpop.permute.xlu0 %649
  %651 = vrot.lane.b32.xlu0 %v497, 4
  %v652 = vpop.permute.xlu0 %651
  %653 = vrot.lane.b32.xlu0 %v499, 4
  %v654 = vpop.permute.xlu0 %653
  %655 = vrot.lane.b32.xlu0 %v502, 4
  %v656 = vpop.permute.xlu0 %655
  %657 = vrot.lane.b32.xlu0 %v504, 4
  %v658 = vpop.permute.xlu0 %657
  %659 = vrot.lane.b32.xlu0 %v507, 4
  %v660 = vpop.permute.xlu0 %659
  %661 = vrot.lane.b32.xlu0 %v509, 4
  %v662 = vpop.permute.xlu0 %661
  %663 = vrot.lane.b32.xlu0 %v512, 4
  %v664 = vpop.permute.xlu0 %663
  %665 = vrot.lane.b32.xlu0 %v514, 4
  %v666 = vpop.permute.xlu0 %665
  %667 = vrot.lane.b32.xlu0 %v517, 4
  %v668 = vpop.permute.xlu0 %667
  %669 = vrot.lane.b32.xlu0 %v519, 4
  %v670 = vpop.permute.xlu0 %669
  %671 = vrot.lane.b32.xlu0 %v522, 4
  %v672 = vpop.permute.xlu0 %671
  %673 = vrot.lane.b32.xlu0 %v524, 4
  %v674 = vpop.permute.xlu0 %673
  %675 = vrot.lane.b32.xlu0 %v527, 4
  %v676 = vpop.permute.xlu0 %675
  %677 = vrot.lane.b32.xlu0 %v529, 4
  %v678 = vpop.permute.xlu0 %677
  %679 = vrot.lane.b32.xlu0 %v532, 4
  %v680 = vpop.permute.xlu0 %679
  %681 = vrot.lane.b32.xlu0 %v534, 4
  %v682 = vpop.permute.xlu0 %681
  %683 = vrot.lane.b32.xlu0 %v537, 4
  %v684 = vpop.permute.xlu0 %683
  %685 = vrot.lane.b32.xlu0 %v539, 4
  %v686 = vpop.permute.xlu0 %685
  %687 = vrot.lane.b32.xlu0 %v542, 4
  %v688 = vpop.permute.xlu0 %687
  %689 = vrot.lane.b32.xlu0 %v544, 4
  %v690 = vpop.permute.xlu0 %689
  %691 = vrot.lane.b32.xlu0 %v547, 4
  %v692 = vpop.permute.xlu0 %691
  %693 = vrot.lane.b32.xlu0 %v549, 4
  %v694 = vpop.permute.xlu0 %693
  %695 = vrot.lane.b32.xlu0 %v552, 4
  %v696 = vpop.permute.xlu0 %695
  %697 = vrot.lane.b32.xlu0 %v554, 4
  %v698 = vpop.permute.xlu0 %697
  %699 = vrot.lane.b32.xlu0 %v557, 4
  %v700 = vpop.permute.xlu0 %699
  %701 = vrot.lane.b32.xlu0 %v559, 4
  %v702 = vpop.permute.xlu0 %701
  %703 = vrot.lane.b32.xlu0 %v562, 4
  %v704 = vpop.permute.xlu0 %703
  %705 = vrot.lane.b32.xlu0 %v564, 4
  %v706 = vpop.permute.xlu0 %705
  %707 = vrot.lane.b32.xlu0 %v567, 4
  %v708 = vpop.permute.xlu0 %707
  %709 = vrot.lane.b32.xlu0 %v569, 4
  %v710 = vpop.permute.xlu0 %709
  %711 = vrot.lane.b32.xlu0 %v572, 4
  %v712 = vpop.permute.xlu0 %711
  %713 = vrot.lane.b32.xlu0 %v574, 4
  %v714 = vpop.permute.xlu0 %713
  %715 = vrot.lane.b32.xlu0 %v577, 4
  %v716 = vpop.permute.xlu0 %715
  %717 = vrot.lane.b32.xlu0 %v579, 4
  %v718 = vpop.permute.xlu0 %717
  %719 = vrot.lane.b32.xlu0 %v582, 4
  %v720 = vpop.permute.xlu0 %719
  %721 = vrot.lane.b32.xlu0 %v584, 4
  %v722 = vpop.permute.xlu0 %721
  %723 = vrot.lane.b32.xlu0 %v587, 4
  %v724 = vpop.permute.xlu0 %723
  %725 = vrot.lane.b32.xlu0 %v589, 4
  %v726 = vpop.permute.xlu0 %725
  %727 = vrot.lane.b32.xlu0 %v592, 4
  %v728 = vpop.permute.xlu0 %727
  %729 = vrot.lane.b32.xlu0 %v594, 4
  %v730 = vpop.permute.xlu0 %729
  %731 = vrot.lane.b32.xlu0 %v597, 4
  %v732 = vpop.permute.xlu0 %731
  %733 = vrot.lane.b32.xlu0 %v599, 4
  %v734 = vpop.permute.xlu0 %733
  %735 = vrot.lane.b32.xlu0 %v602, 4
  %v736 = vpop.permute.xlu0 %735
  %737 = vrot.lane.b32.xlu0 %v604, 4
  %v738 = vpop.permute.xlu0 %737
  %739 = vrot.lane.b32.xlu0 %v607, 4
  %v740 = vpop.permute.xlu0 %739
  %741 = vrot.lane.b32.xlu0 %v609, 4
  %v742 = vpop.permute.xlu0 %741
  %743 = vrot.lane.b32.xlu0 %v612, 4
  %v744 = vpop.permute.xlu0 %743
  %745 = vrot.lane.b32.xlu0 %v614, 4
  %v746 = vpop.permute.xlu0 %745
  %747 = vrot.lane.b32.xlu0 %v617, 4
  %v748 = vpop.permute.xlu0 %747
  %749 = vrot.lane.b32.xlu0 %v619, 4
  %v750 = vpop.permute.xlu0 %749
  %751 = vrot.lane.b32.xlu0 %v622, 4
  %v752 = vpop.permute.xlu0 %751
  %753 = vrot.lane.b32.xlu0 %v624, 4
  %v754 = vpop.permute.xlu0 %753
  %755 = vrot.lane.b32.xlu0 %v627, 4
  %v756 = vpop.permute.xlu0 %755
  %757 = vrot.lane.b32.xlu0 %v629, 4
  %v758 = vpop.permute.xlu0 %757
  %759 = vrot.lane.b32.xlu0 %v632, 4
  %v760 = vpop.permute.xlu0 %759
  %761 = vrot.lane.b32.xlu0 %v634, 4
  %v762 = vpop.permute.xlu0 %761
  %vm827 = vcmask 1045504
  %v828 = vrot.slane %v270, 2
  %v829 = vrot.slane %v271, 2
  %v830 = vsel %vm827, %v828, %v829
  %v831 = vrot.slane %v272, 2
  %v832 = vsel %vm827, %v829, %v831
  %v833 = vrot.slane %v273, 2
  %v834 = vrot.slane %v274, 2
  %v835 = vsel %vm827, %v833, %v834
  %v836 = vrot.slane %v275, 2
  %v837 = vsel %vm827, %v834, %v836
  %v838 = vrot.slane %v276, 2
  %v839 = vrot.slane %v277, 2
  %v840 = vsel %vm827, %v838, %v839
  %v841 = vrot.slane %v278, 2
  %v842 = vsel %vm827, %v839, %v841
  %v843 = vrot.slane %v279, 2
  %v844 = vrot.slane %v280, 2
  %v845 = vsel %vm827, %v843, %v844
  %v846 = vrot.slane %v281, 2
  %v847 = vsel %vm827, %v844, %v846
  %v848 = vrot.slane %v282, 2
  %v849 = vrot.slane %v283, 2
  %v850 = vsel %vm827, %v848, %v849
  %v851 = vrot.slane %v284, 2
  %v852 = vsel %vm827, %v849, %v851
  %v853 = vrot.slane %v285, 2
  %v854 = vrot.slane %v286, 2
  %v855 = vsel %vm827, %v853, %v854
  %v856 = vrot.slane %v287, 2
  %v857 = vsel %vm827, %v854, %v856
  %v858 = vrot.slane %v288, 2
  %v859 = vrot.slane %v289, 2
  %v860 = vsel %vm827, %v858, %v859
  %v861 = vrot.slane %v290, 2
  %v862 = vsel %vm827, %v859, %v861
  %v863 = vrot.slane %v291, 2
  %v864 = vrot.slane %v292, 2
  %v865 = vsel %vm827, %v863, %v864
  %v866 = vrot.slane %v293, 2
  %v867 = vsel %vm827, %v864, %v866
  %v868 = vrot.slane %v294, 2
  %v869 = vrot.slane %v295, 2
  %v870 = vsel %vm827, %v868, %v869
  %v871 = vrot.slane %v296, 2
  %v872 = vsel %vm827, %v869, %v871
  %v873 = vrot.slane %v297, 2
  %v874 = vrot.slane %v298, 2
  %v875 = vsel %vm827, %v873, %v874
  %v876 = vrot.slane %v299, 2
  %v877 = vsel %vm827, %v874, %v876
  %v878 = vrot.slane %v300, 2
  %v879 = vrot.slane %v301, 2
  %v880 = vsel %vm827, %v878, %v879
  %v881 = vrot.slane %v302, 2
  %v882 = vsel %vm827, %v879, %v881
  %v883 = vrot.slane %v303, 2
  %v884 = vrot.slane %v304, 2
  %v885 = vsel %vm827, %v883, %v884
  %v886 = vrot.slane %v305, 2
  %v887 = vsel %vm827, %v884, %v886
  %v888 = vrot.slane %v306, 2
  %v889 = vrot.slane %v307, 2
  %v890 = vsel %vm827, %v888, %v889
  %v891 = vrot.slane %v308, 2
  %v892 = vsel %vm827, %v889, %v891
  %v893 = vrot.slane %v309, 2
  %v894 = vrot.slane %v310, 2
  %v895 = vsel %vm827, %v893, %v894
  %v896 = vrot.slane %v311, 2
  %v897 = vsel %vm827, %v894, %v896
  %v898 = vrot.slane %v312, 2
  %v899 = vrot.slane %v313, 2
  %v900 = vsel %vm827, %v898, %v899
  %v901 = vrot.slane %v314, 2
  %v902 = vsel %vm827, %v899, %v901
  %v903 = vrot.slane %v315, 2
  %v904 = vrot.slane %v316, 2
  %v905 = vsel %vm827, %v903, %v904
  %v906 = vrot.slane %v317, 2
  %v907 = vsel %vm827, %v904, %v906
  %v908 = vrot.slane %v324, 2
  %v909 = vrot.slane %v325, 2
  %v910 = vsel %vm827, %v908, %v909
  %v911 = vrot.slane %v326, 2
  %v912 = vsel %vm827, %v909, %v911
  %v913 = vrot.slane %v327, 2
  %v914 = vrot.slane %v328, 2
  %v915 = vsel %vm827, %v913, %v914
  %v916 = vrot.slane %v329, 2
  %v917 = vsel %vm827, %v914, %v916
  %v918 = vrot.slane %v330, 2
  %v919 = vrot.slane %v331, 2
  %v920 = vsel %vm827, %v918, %v919
  %v921 = vrot.slane %v332, 2
  %v922 = vsel %vm827, %v919, %v921
  %v923 = vrot.slane %v333, 2
  %v924 = vrot.slane %v334, 2
  %v925 = vsel %vm827, %v923, %v924
  %v926 = vrot.slane %v335, 2
  %v927 = vsel %vm827, %v924, %v926
  %v928 = vrot.slane %v336, 2
  %v929 = vrot.slane %v337, 2
  %v930 = vsel %vm827, %v928, %v929
  %v931 = vrot.slane %v338, 2
  %v932 = vsel %vm827, %v929, %v931
  %v933 = vrot.slane %v339, 2
  %v934 = vrot.slane %v340, 2
  %v935 = vsel %vm827, %v933, %v934
  %v936 = vrot.slane %v341, 2
  %v937 = vsel %vm827, %v934, %v936
  %v938 = vrot.slane %v342, 2
  %v939 = vrot.slane %v343, 2
  %v940 = vsel %vm827, %v938, %v939
  %v941 = vrot.slane %v344, 2
  %v942 = vsel %vm827, %v939, %v941
  %v943 = vrot.slane %v345, 2
  %v944 = vrot.slane %v346, 2
  %v945 = vsel %vm827, %v943, %v944
  %v946 = vrot.slane %v347, 2
  %v947 = vsel %vm827, %v944, %v946
  %v948 = vrot.slane %v348, 2
  %v949 = vrot.slane %v349, 2
  %v950 = vsel %vm827, %v948, %v949
  %v951 = vrot.slane %v350, 2
  %v952 = vsel %vm827, %v949, %v951
  %v953 = vrot.slane %v351, 2
  %v954 = vrot.slane %v352, 2
  %v955 = vsel %vm827, %v953, %v954
  %v956 = vrot.slane %v353, 2
  %v957 = vsel %vm827, %v954, %v956
  %v958 = vrot.slane %v354, 2
  %v959 = vrot.slane %v355, 2
  %v960 = vsel %vm827, %v958, %v959
  %v961 = vrot.slane %v356, 2
  %v962 = vsel %vm827, %v959, %v961
  %v963 = vrot.slane %v357, 2
  %v964 = vrot.slane %v358, 2
  %v965 = vsel %vm827, %v963, %v964
  %v966 = vrot.slane %v359, 2
  %v967 = vsel %vm827, %v964, %v966
  %v968 = vrot.slane %v360, 2
  %v969 = vrot.slane %v361, 2
  %v970 = vsel %vm827, %v968, %v969
  %v971 = vrot.slane %v362, 2
  %v972 = vsel %vm827, %v969, %v971
  %v973 = vrot.slane %v363, 2
  %v974 = vrot.slane %v364, 2
  %v975 = vsel %vm827, %v973, %v974
  %v976 = vrot.slane %v365, 2
  %v977 = vsel %vm827, %v974, %v976
  %v978 = vrot.slane %v366, 2
  %v979 = vrot.slane %v367, 2
  %v980 = vsel %vm827, %v978, %v979
  %v981 = vrot.slane %v368, 2
  %v982 = vsel %vm827, %v979, %v981
  %v983 = vrot.slane %v369, 2
  %v984 = vrot.slane %v370, 2
  %v985 = vsel %vm827, %v983, %v984
  %v986 = vrot.slane %v371, 2
  %v987 = vsel %vm827, %v984, %v986
  %988 = vrot.lane.b32.xlu0 %v830, 8
  %v989 = vpop.permute.xlu0 %988
  %990 = vrot.lane.b32.xlu0 %v832, 8
  %v991 = vpop.permute.xlu0 %990
  %992 = vrot.lane.b32.xlu0 %v835, 8
  %v993 = vpop.permute.xlu0 %992
  %994 = vrot.lane.b32.xlu0 %v837, 8
  %v995 = vpop.permute.xlu0 %994
  %996 = vrot.lane.b32.xlu0 %v840, 8
  %v997 = vpop.permute.xlu0 %996
  %998 = vrot.lane.b32.xlu0 %v842, 8
  %v999 = vpop.permute.xlu0 %998
  %1000 = vrot.lane.b32.xlu0 %v845, 8
  %v1001 = vpop.permute.xlu0 %1000
  %1002 = vrot.lane.b32.xlu0 %v847, 8
  %v1003 = vpop.permute.xlu0 %1002
  %1004 = vrot.lane.b32.xlu0 %v850, 8
  %v1005 = vpop.permute.xlu0 %1004
  %1006 = vrot.lane.b32.xlu0 %v852, 8
  %v1007 = vpop.permute.xlu0 %1006
  %1008 = vrot.lane.b32.xlu0 %v855, 8
  %v1009 = vpop.permute.xlu0 %1008
  %1010 = vrot.lane.b32.xlu0 %v857, 8
  %v1011 = vpop.permute.xlu0 %1010
  %1012 = vrot.lane.b32.xlu0 %v860, 8
  %v1013 = vpop.permute.xlu0 %1012
  %1014 = vrot.lane.b32.xlu0 %v862, 8
  %v1015 = vpop.permute.xlu0 %1014
  %1016 = vrot.lane.b32.xlu0 %v865, 8
  %v1017 = vpop.permute.xlu0 %1016
  %1018 = vrot.lane.b32.xlu0 %v867, 8
  %v1019 = vpop.permute.xlu0 %1018
  %1020 = vrot.lane.b32.xlu0 %v870, 8
  %v1021 = vpop.permute.xlu0 %1020
  %1022 = vrot.lane.b32.xlu0 %v872, 8
  %v1023 = vpop.permute.xlu0 %1022
  %1024 = vrot.lane.b32.xlu0 %v875, 8
  %v1025 = vpop.permute.xlu0 %1024
  %1026 = vrot.lane.b32.xlu0 %v877, 8
  %v1027 = vpop.permute.xlu0 %1026
  %1028 = vrot.lane.b32.xlu0 %v880, 8
  %v1029 = vpop.permute.xlu0 %1028
  %1030 = vrot.lane.b32.xlu0 %v882, 8
  %v1031 = vpop.permute.xlu0 %1030
  %1032 = vrot.lane.b32.xlu0 %v885, 8
  %v1033 = vpop.permute.xlu0 %1032
  %1034 = vrot.lane.b32.xlu0 %v887, 8
  %v1035 = vpop.permute.xlu0 %1034
  %1036 = vrot.lane.b32.xlu0 %v890, 8
  %v1037 = vpop.permute.xlu0 %1036
  %1038 = vrot.lane.b32.xlu0 %v892, 8
  %v1039 = vpop.permute.xlu0 %1038
  %1040 = vrot.lane.b32.xlu0 %v895, 8
  %v1041 = vpop.permute.xlu0 %1040
  %1042 = vrot.lane.b32.xlu0 %v897, 8
  %v1043 = vpop.permute.xlu0 %1042
  %1044 = vrot.lane.b32.xlu0 %v900, 8
  %v1045 = vpop.permute.xlu0 %1044
  %1046 = vrot.lane.b32.xlu0 %v902, 8
  %v1047 = vpop.permute.xlu0 %1046
  %1048 = vrot.lane.b32.xlu0 %v905, 8
  %v1049 = vpop.permute.xlu0 %1048
  %1050 = vrot.lane.b32.xlu0 %v907, 8
  %v1051 = vpop.permute.xlu0 %1050
  %1052 = vrot.lane.b32.xlu0 %v910, 8
  %v1053 = vpop.permute.xlu0 %1052
  %1054 = vrot.lane.b32.xlu0 %v912, 8
  %v1055 = vpop.permute.xlu0 %1054
  %1056 = vrot.lane.b32.xlu0 %v915, 8
  %v1057 = vpop.permute.xlu0 %1056
  %1058 = vrot.lane.b32.xlu0 %v917, 8
  %v1059 = vpop.permute.xlu0 %1058
  %1060 = vrot.lane.b32.xlu0 %v920, 8
  %v1061 = vpop.permute.xlu0 %1060
  %1062 = vrot.lane.b32.xlu0 %v922, 8
  %v1063 = vpop.permute.xlu0 %1062
  %1064 = vrot.lane.b32.xlu0 %v925, 8
  %v1065 = vpop.permute.xlu0 %1064
  %1066 = vrot.lane.b32.xlu0 %v927, 8
  %v1067 = vpop.permute.xlu0 %1066
  %1068 = vrot.lane.b32.xlu0 %v930, 8
  %v1069 = vpop.permute.xlu0 %1068
  %1070 = vrot.lane.b32.xlu0 %v932, 8
  %v1071 = vpop.permute.xlu0 %1070
  %1072 = vrot.lane.b32.xlu0 %v935, 8
  %v1073 = vpop.permute.xlu0 %1072
  %1074 = vrot.lane.b32.xlu0 %v937, 8
  %v1075 = vpop.permute.xlu0 %1074
  %1076 = vrot.lane.b32.xlu0 %v940, 8
  %v1077 = vpop.permute.xlu0 %1076
  %1078 = vrot.lane.b32.xlu0 %v942, 8
  %v1079 = vpop.permute.xlu0 %1078
  %1080 = vrot.lane.b32.xlu0 %v945, 8
  %v1081 = vpop.permute.xlu0 %1080
  %1082 = vrot.lane.b32.xlu0 %v947, 8
  %v1083 = vpop.permute.xlu0 %1082
  %1084 = vrot.lane.b32.xlu0 %v950, 8
  %v1085 = vpop.permute.xlu0 %1084
  %1086 = vrot.lane.b32.xlu0 %v952, 8
  %v1087 = vpop.permute.xlu0 %1086
  %1088 = vrot.lane.b32.xlu0 %v955, 8
  %v1089 = vpop.permute.xlu0 %1088
  %1090 = vrot.lane.b32.xlu0 %v957, 8
  %v1091 = vpop.permute.xlu0 %1090
  %1092 = vrot.lane.b32.xlu0 %v960, 8
  %v1093 = vpop.permute.xlu0 %1092
  %1094 = vrot.lane.b32.xlu0 %v962, 8
  %v1095 = vpop.permute.xlu0 %1094
  %1096 = vrot.lane.b32.xlu0 %v965, 8
  %v1097 = vpop.permute.xlu0 %1096
  %1098 = vrot.lane.b32.xlu0 %v967, 8
  %v1099 = vpop.permute.xlu0 %1098
  %1100 = vrot.lane.b32.xlu0 %v970, 8
  %v1101 = vpop.permute.xlu0 %1100
  %1102 = vrot.lane.b32.xlu0 %v972, 8
  %v1103 = vpop.permute.xlu0 %1102
  %1104 = vrot.lane.b32.xlu0 %v975, 8
  %v1105 = vpop.permute.xlu0 %1104
  %1106 = vrot.lane.b32.xlu0 %v977, 8
  %v1107 = vpop.permute.xlu0 %1106
  %1108 = vrot.lane.b32.xlu0 %v980, 8
  %v1109 = vpop.permute.xlu0 %1108
  %1110 = vrot.lane.b32.xlu0 %v982, 8
  %v1111 = vpop.permute.xlu0 %1110
  %1112 = vrot.lane.b32.xlu0 %v985, 8
  %v1113 = vpop.permute.xlu0 %1112
  %1114 = vrot.lane.b32.xlu0 %v987, 8
  %v1115 = vpop.permute.xlu0 %1114
  %v1180 = vsel %vm53, %v270, %v636
  %v1181 = vsel %vm53, %v271, %v638
  %v1182 = vsel %vm53, %v273, %v640
  %v1183 = vsel %vm53, %v274, %v642
  %v1184 = vsel %vm53, %v276, %v644
  %v1185 = vsel %vm53, %v277, %v646
  %v1186 = vsel %vm53, %v279, %v648
  %v1187 = vsel %vm53, %v280, %v650
  %v1188 = vsel %vm53, %v282, %v652
  %v1189 = vsel %vm53, %v283, %v654
  %v1190 = vsel %vm53, %v285, %v656
  %v1191 = vsel %vm53, %v286, %v658
  %v1192 = vsel %vm53, %v288, %v660
  %v1193 = vsel %vm53, %v289, %v662
  %v1194 = vsel %vm53, %v291, %v664
  %v1195 = vsel %vm53, %v292, %v666
  %v1196 = vsel %vm53, %v294, %v668
  %v1197 = vsel %vm53, %v295, %v670
  %v1198 = vsel %vm53, %v297, %v672
  %v1199 = vsel %vm53, %v298, %v674
  %v1200 = vsel %vm53, %v300, %v676
  %v1201 = vsel %vm53, %v301, %v678
  %v1202 = vsel %vm53, %v303, %v680
  %v1203 = vsel %vm53, %v304, %v682
  %v1204 = vsel %vm53, %v306, %v684
  %v1205 = vsel %vm53, %v307, %v686
  %v1206 = vsel %vm53, %v309, %v688
  %v1207 = vsel %vm53, %v310, %v690
  %v1208 = vsel %vm53, %v312, %v692
  %v1209 = vsel %vm53, %v313, %v694
  %v1210 = vsel %vm53, %v315, %v696
  %v1211 = vsel %vm53, %v316, %v698
  %v1212 = vsel %vm53, %v324, %v700
  %v1213 = vsel %vm53, %v325, %v702
  %v1214 = vsel %vm53, %v327, %v704
  %v1215 = vsel %vm53, %v328, %v706
  %v1216 = vsel %vm53, %v330, %v708
  %v1217 = vsel %vm53, %v331, %v710
  %v1218 = vsel %vm53, %v333, %v712
  %v1219 = vsel %vm53, %v334, %v714
  %v1220 = vsel %vm53, %v336, %v716
  %v1221 = vsel %vm53, %v337, %v718
  %v1222 = vsel %vm53, %v339, %v720
  %v1223 = vsel %vm53, %v340, %v722
  %v1224 = vsel %vm53, %v342, %v724
  %v1225 = vsel %vm53, %v343, %v726
  %v1226 = vsel %vm53, %v345, %v728
  %v1227 = vsel %vm53, %v346, %v730
  %v1228 = vsel %vm53, %v348, %v732
  %v1229 = vsel %vm53, %v349, %v734
  %v1230 = vsel %vm53, %v351, %v736
  %v1231 = vsel %vm53, %v352, %v738
  %v1232 = vsel %vm53, %v354, %v740
  %v1233 = vsel %vm53, %v355, %v742
  %v1234 = vsel %vm53, %v357, %v744
  %v1235 = vsel %vm53, %v358, %v746
  %v1236 = vsel %vm53, %v360, %v748
  %v1237 = vsel %vm53, %v361, %v750
  %v1238 = vsel %vm53, %v363, %v752
  %v1239 = vsel %vm53, %v364, %v754
  %v1240 = vsel %vm53, %v366, %v756
  %v1241 = vsel %vm53, %v367, %v758
  %v1242 = vsel %vm53, %v369, %v760
  %v1243 = vsel %vm53, %v370, %v762
  %vm1244 = vcmask 64512
  %v1245 = vsel %vm1244, %v1180, %v989
  %v1246 = vsel %vm1244, %v1181, %v991
  %v1247 = vsel %vm1244, %v1182, %v993
  %v1248 = vsel %vm1244, %v1183, %v995
  %v1249 = vsel %vm1244, %v1184, %v997
  %v1250 = vsel %vm1244, %v1185, %v999
  %v1251 = vsel %vm1244, %v1186, %v1001
  %v1252 = vsel %vm1244, %v1187, %v1003
  %v1253 = vsel %vm1244, %v1188, %v1005
  %v1254 = vsel %vm1244, %v1189, %v1007
  %v1255 = vsel %vm1244, %v1190, %v1009
  %v1256 = vsel %vm1244, %v1191, %v1011
  %v1257 = vsel %vm1244, %v1192, %v1013
  %v1258 = vsel %vm1244, %v1193, %v1015
  %v1259 = vsel %vm1244, %v1194, %v1017
  %v1260 = vsel %vm1244, %v1195, %v1019
  %v1261 = vsel %vm1244, %v1196, %v1021
  %v1262 = vsel %vm1244, %v1197, %v1023
  %v1263 = vsel %vm1244, %v1198, %v1025
  %v1264 = vsel %vm1244, %v1199, %v1027
  %v1265 = vsel %vm1244, %v1200, %v1029
  %v1266 = vsel %vm1244, %v1201, %v1031
  %v1267 = vsel %vm1244, %v1202, %v1033
  %v1268 = vsel %vm1244, %v1203, %v1035
  %v1269 = vsel %vm1244, %v1204, %v1037
  %v1270 = vsel %vm1244, %v1205, %v1039
  %v1271 = vsel %vm1244, %v1206, %v1041
  %v1272 = vsel %vm1244, %v1207, %v1043
  %v1273 = vsel %vm1244, %v1208, %v1045
  %v1274 = vsel %vm1244, %v1209, %v1047
  %v1275 = vsel %vm1244, %v1210, %v1049
  %v1276 = vsel %vm1244, %v1211, %v1051
  %v1277 = vsel %vm1244, %v1212, %v1053
  %v1278 = vsel %vm1244, %v1213, %v1055
  %v1279 = vsel %vm1244, %v1214, %v1057
  %v1280 = vsel %vm1244, %v1215, %v1059
  %v1281 = vsel %vm1244, %v1216, %v1061
  %v1282 = vsel %vm1244, %v1217, %v1063
  %v1283 = vsel %vm1244, %v1218, %v1065
  %v1284 = vsel %vm1244, %v1219, %v1067
  %v1285 = vsel %vm1244, %v1220, %v1069
  %v1286 = vsel %vm1244, %v1221, %v1071
  %v1287 = vsel %vm1244, %v1222, %v1073
  %v1288 = vsel %vm1244, %v1223, %v1075
  %v1289 = vsel %vm1244, %v1224, %v1077
  %v1290 = vsel %vm1244, %v1225, %v1079
  %v1291 = vsel %vm1244, %v1226, %v1081
  %v1292 = vsel %vm1244, %v1227, %v1083
  %v1293 = vsel %vm1244, %v1228, %v1085
  %v1294 = vsel %vm1244, %v1229, %v1087
  %v1295 = vsel %vm1244, %v1230, %v1089
  %v1296 = vsel %vm1244, %v1231, %v1091
  %v1297 = vsel %vm1244, %v1232, %v1093
  %v1298 = vsel %vm1244, %v1233, %v1095
  %v1299 = vsel %vm1244, %v1234, %v1097
  %v1300 = vsel %vm1244, %v1235, %v1099
  %v1301 = vsel %vm1244, %v1236, %v1101
  %v1302 = vsel %vm1244, %v1237, %v1103
  %v1303 = vsel %vm1244, %v1238, %v1105
  %v1304 = vsel %vm1244, %v1239, %v1107
  %v1305 = vsel %vm1244, %v1240, %v1109
  %v1306 = vsel %vm1244, %v1241, %v1111
  %v1307 = vsel %vm1244, %v1242, %v1113
  %v1308 = vsel %vm1244, %v1243, %v1115
  %v1309 = vpack.c.bf16 %v1246, %v1245
  %v1310 = vpack.c.bf16 %v1248, %v1247
  %v1311 = vpack.c.bf16 %v1250, %v1249
  %v1312 = vpack.c.bf16 %v1252, %v1251
  %v1313 = vpack.c.bf16 %v1254, %v1253
  %v1314 = vpack.c.bf16 %v1256, %v1255
  %v1315 = vpack.c.bf16 %v1258, %v1257
  %v1316 = vpack.c.bf16 %v1260, %v1259
  %v1317 = vpack.c.bf16 %v1262, %v1261
  %v1318 = vpack.c.bf16 %v1264, %v1263
  %v1319 = vpack.c.bf16 %v1266, %v1265
  %v1320 = vpack.c.bf16 %v1268, %v1267
  %v1321 = vpack.c.bf16 %v1270, %v1269
  %v1322 = vpack.c.bf16 %v1272, %v1271
  %v1323 = vpack.c.bf16 %v1274, %v1273
  %v1324 = vpack.c.bf16 %v1276, %v1275
  %v1325 = vpack.c.bf16 %v1278, %v1277
  %v1326 = vpack.c.bf16 %v1280, %v1279
  %v1327 = vpack.c.bf16 %v1282, %v1281
  %v1328 = vpack.c.bf16 %v1284, %v1283
  %v1329 = vpack.c.bf16 %v1286, %v1285
  %v1330 = vpack.c.bf16 %v1288, %v1287
  %v1331 = vpack.c.bf16 %v1290, %v1289
  %v1332 = vpack.c.bf16 %v1292, %v1291
  %v1333 = vpack.c.bf16 %v1294, %v1293
  %v1334 = vpack.c.bf16 %v1296, %v1295
  %v1335 = vpack.c.bf16 %v1298, %v1297
  %v1336 = vpack.c.bf16 %v1300, %v1299
  %v1337 = vpack.c.bf16 %v1302, %v1301
  %v1338 = vpack.c.bf16 %v1304, %v1303
  %v1339 = vpack.c.bf16 %v1306, %v1305
  %v1340 = vpack.c.bf16 %v1308, %v1307
  %v1341 = vld [vmem:[%s3] sm:$0xf]
  %v1342 = vld [vmem:[%s3 + $0x4] sm:$0x3]
  %v1349 = vrot.slane %v318, 1
  %v1350 = vrot.slane %v319, 1
  %v1351 = vsel %vm474, %v1349, %v1350
  %v1352 = vrot.slane %v320, 1
  %v1353 = vsel %vm474, %v1350, %v1352
  %v1354 = vrot.slane %v372, 1
  %v1355 = vrot.slane %v373, 1
  %v1356 = vsel %vm474, %v1354, %v1355
  %v1357 = vrot.slane %v374, 1
  %v1358 = vsel %vm474, %v1355, %v1357
  %1359 = vrot.lane.b32.xlu0 %v1351, 4
  %v1360 = vpop.permute.xlu0 %1359
  %1361 = vrot.lane.b32.xlu0 %v1353, 4
  %v1362 = vpop.permute.xlu0 %1361
  %1363 = vrot.lane.b32.xlu0 %v1356, 4
  %v1364 = vpop.permute.xlu0 %1363
  %1365 = vrot.lane.b32.xlu0 %v1358, 4
  %v1366 = vpop.permute.xlu0 %1365
  %v1371 = vrot.slane %v318, 2
  %v1372 = vrot.slane %v319, 2
  %v1373 = vsel %vm827, %v1371, %v1372
  %v1374 = vrot.slane %v320, 2
  %v1375 = vsel %vm827, %v1372, %v1374
  %v1376 = vrot.slane %v372, 2
  %v1377 = vrot.slane %v373, 2
  %v1378 = vsel %vm827, %v1376, %v1377
  %v1379 = vrot.slane %v374, 2
  %v1380 = vsel %vm827, %v1377, %v1379
  %1381 = vrot.lane.b32.xlu0 %v1373, 8
  %v1382 = vpop.permute.xlu0 %1381
  %1383 = vrot.lane.b32.xlu0 %v1375, 8
  %v1384 = vpop.permute.xlu0 %1383
  %1385 = vrot.lane.b32.xlu0 %v1378, 8
  %v1386 = vpop.permute.xlu0 %1385
  %1387 = vrot.lane.b32.xlu0 %v1380, 8
  %v1388 = vpop.permute.xlu0 %1387
  %v1393 = vsel %vm53, %v318, %v1360
  %v1394 = vsel %vm53, %v319, %v1362
  %v1395 = vsel %vm53, %v372, %v1364
  %v1396 = vsel %vm53, %v373, %v1366
  %v1397 = vsel %vm1244, %v1393, %v1382
  %v1398 = vsel %vm1244, %v1394, %v1384
  %v1399 = vsel %vm1244, %v1395, %v1386
  %v1400 = vsel %vm1244, %v1396, %v1388
  %v1401 = vpack.c.bf16 %v1398, %v1397
  %v1402 = vpack.c.bf16 %v1400, %v1399
  %s1403 = scalar_lea.vmem %s3, 8
  %v1404 = vld [vmem:[%s1403] sm:$0xf]
  %v1405 = vld [vmem:[%s1403 + $0x4] sm:$0x3]
  %v1408 = vunpack.c.l.b16 %v1404
  %v1409 = vunpack.c.l.b16 %v1405
  %v1410 = vpack.c.b16 %v1409, %v1408
  %vm1411 = vcmask 97280
  %v1413 = vsel %vm1411, %v1310, 0
  %v1416 = vsel %vm1411, %v1311, 0
  %v1419 = vsel %vm1411, %v1312, 0
  %v1422 = vsel %vm1411, %v1313, 0
  %v1425 = vsel %vm1411, %v1314, 0
  %v1428 = vsel %vm1411, %v1315, 0
  %v1431 = vsel %vm1411, %v1316, 0
  %v1434 = vsel %vm1411, %v1317, 0
  %v1437 = vsel %vm1411, %v1318, 0
  %v1440 = vsel %vm1411, %v1319, 0
  %v1443 = vsel %vm1411, %v1320, 0
  %v1446 = vsel %vm1411, %v1321, 0
  %v1449 = vsel %vm1411, %v1322, 0
  %v1452 = vsel %vm1411, %v1323, 0
  %v1455 = vsel %vm1411, %v1324, 0
  %v1458 = vsel %vm1411, %v1401, 0
  %v1461 = vsel %vm1411, %v1326, 0
  %v1464 = vsel %vm1411, %v1327, 0
  %v1467 = vsel %vm1411, %v1328, 0
  %v1470 = vsel %vm1411, %v1329, 0
  %v1473 = vsel %vm1411, %v1330, 0
  %v1476 = vsel %vm1411, %v1331, 0
  %v1479 = vsel %vm1411, %v1332, 0
  %v1482 = vsel %vm1411, %v1333, 0
  %v1485 = vsel %vm1411, %v1334, 0
  %v1488 = vsel %vm1411, %v1335, 0
  %v1491 = vsel %vm1411, %v1336, 0
  %v1494 = vsel %vm1411, %v1337, 0
  %v1497 = vsel %vm1411, %v1338, 0
  %v1500 = vsel %vm1411, %v1339, 0
  %v1503 = vsel %vm1411, %v1340, 0
  %v1506 = vsel %vm1411, %v1402, 0
  %v1509 = vsel %vm827, %v1410, 0
  %1511 = vmatprep.subr.bf16.mxu0 0
  %1512 = vmatpush1.bf16.msra.mxu0 %v1509
  %1513 = vmatprep.subr.bf16.mxu0 0
  %1514 = vmatpush1.bf16.msra.mxu0 0
  %1515 = vmatprep.subr.bf16.mxu0 0
  %1516 = vmatpush1.bf16.msra.mxu0 0
  %1517 = vmatprep.subr.bf16.mxu0 0
  %1518 = vmatpush1.bf16.msra.mxu0 0
  %1519 = vmatprep.subr.bf16.mxu0 0
  %1520 = vmatpush1.bf16.msra.mxu0 0
  %1521 = vmatprep.subr.bf16.mxu0 0
  %1522 = vmatpush1.bf16.msra.mxu0 0
  %1523 = vmatprep.subr.bf16.mxu0 0
  %1524 = vmatpush1.bf16.msra.mxu0 0
  %1525 = vmatprep.subr.bf16.mxu0 0
  %1526 = vmatpush1.bf16.msra.mxu0 0
  %1527 = vmatprep.subr.bf16.mxu0 0
  %1528 = vmatpush1.bf16.msra.mxu0 0
  %1529 = vmatprep.subr.bf16.mxu0 0
  %1530 = vmatpush1.bf16.msra.mxu0 0
  %1531 = vmatprep.subr.bf16.mxu0 0
  %1532 = vmatpush1.bf16.msra.mxu0 0
  %1533 = vmatprep.subr.bf16.mxu0 0
  %1534 = vmatpush1.bf16.msra.mxu0 0
  %1535 = vmatprep.subr.bf16.mxu0 0
  %1536 = vmatpush1.bf16.msra.mxu0 0
  %1537 = vmatprep.subr.bf16.mxu0 0
  %1538 = vmatpush1.bf16.msra.mxu0 0
  %1539 = vmatprep.subr.bf16.mxu0 0
  %1540 = vmatpush1.bf16.msra.mxu0 0
  %1541 = vmatprep.subr.bf16.mxu0 0
  %1542 = vmatpush1.bf16.msra.mxu0 0
  %1543 = vmatprep.mubr.bf16.mxu0 0
  %1544 = vmatmul.mubr.bf16.gmra.mrb[0].mxu0 %v1413
  %v1545 = vpop.f32.mrb[0].mxu0
  %v1546 = vadd.f32 0.0, %v1545
  %v1547 = vpop.f32.mrb[0].mxu0
  %v1548 = vpop.f32.mrb[0].mxu0
  %v1549 = vadd.f32 0.0, %v1548
  %v1550 = vpop.f32.mrb[0].mxu0
  %1551 = vmatprep.mubr.bf16.mxu0 0
  %1552 = vmatmul.mubr.bf16.gmra.mrb[0].mxu0 %v1416
  %v1553 = vpop.f32.mrb[0].mxu0
  %v1554 = vadd.f32 0.0, %v1553
  %v1555 = vpop.f32.mrb[0].mxu0
  %v1556 = vpop.f32.mrb[0].mxu0
  %v1557 = vadd.f32 0.0, %v1556
  %v1558 = vpop.f32.mrb[0].mxu0
  %1559 = vmatprep.mubr.bf16.mxu0 0
  %1560 = vmatmul.mubr.bf16.gmra.mrb[0].mxu0 %v1419
  %v1561 = vpop.f32.mrb[0].mxu0
  %v1562 = vadd.f32 0.0, %v1561
  %v1563 = vpop.f32.mrb[0].mxu0
  %v1564 = vpop.f32.mrb[0].mxu0
  %v1565 = vadd.f32 0.0, %v1564
  %v1566 = vpop.f32.mrb[0].mxu0
  %1567 = vmatprep.mubr.bf16.mxu0 0
  %1568 = vmatmul.mubr.bf16.gmra.mrb[0].mxu0 %v1422
  %v1569 = vpop.f32.mrb[0].mxu0
  %v1570 = vadd.f32 0.0, %v1569
  %v1571 = vpop.f32.mrb[0].mxu0
  %v1572 = vpop.f32.mrb[0].mxu0
  %v1573 = vadd.f32 0.0, %v1572
  %v1574 = vpop.f32.mrb[0].mxu0
  %1575 = vmatprep.mubr.bf16.mxu0 0
  %1576 = vmatmul.mubr.bf16.gmra.mrb[0].mxu0 %v1425
  %v1577 = vpop.f32.mrb[0].mxu0
  %v1578 = vadd.f32 0.0, %v1577
  %v1579 = vpop.f32.mrb[0].mxu0
  %v1580 = vpop.f32.mrb[0].mxu0
  %v1581 = vadd.f32 0.0, %v1580
  %v1582 = vpop.f32.mrb[0].mxu0
  %1583 = vmatprep.mubr.bf16.mxu0 0
  %1584 = vmatmul.mubr.bf16.gmra.mrb[0].mxu0 %v1428
  %v1585 = vpop.f32.mrb[0].mxu0
  %v1586 = vadd.f32 0.0, %v1585
  %v1587 = vpop.f32.mrb[0].mxu0
  %v1588 = vpop.f32.mrb[0].mxu0
  %v1589 = vadd.f32 0.0, %v1588
  %v1590 = vpop.f32.mrb[0].mxu0
  %1591 = vmatprep.mubr.bf16.mxu0 0
  %1592 = vmatmul.mubr.bf16.gmra.mrb[0].mxu0 %v1431
  %v1593 = vpop.f32.mrb[0].mxu0
  %v1594 = vadd.f32 0.0, %v1593
  %v1595 = vpop.f32.mrb[0].mxu0
  %v1596 = vpop.f32.mrb[0].mxu0
  %v1597 = vadd.f32 0.0, %v1596
  %v1598 = vpop.f32.mrb[0].mxu0
  %1599 = vmatprep.mubr.bf16.mxu0 0
  %1600 = vmatmul.mubr.bf16.gmra.mrb[0].mxu0 %v1434
  %v1601 = vpop.f32.mrb[0].mxu0
  %v1602 = vadd.f32 0.0, %v1601
  %v1603 = vpop.f32.mrb[0].mxu0
  %v1604 = vpop.f32.mrb[0].mxu0
  %v1605 = vadd.f32 0.0, %v1604
  %v1606 = vpop.f32.mrb[0].mxu0
  %1607 = vmatprep.mubr.bf16.mxu0 0
  %1608 = vmatmul.mubr.bf16.gmra.mrb[0].mxu0 %v1437
  %v1609 = vpop.f32.mrb[0].mxu0
  %v1610 = vadd.f32 0.0, %v1609
  %v1611 = vpop.f32.mrb[0].mxu0
  %v1612 = vpop.f32.mrb[0].mxu0
  %v1613 = vadd.f32 0.0, %v1612
  %v1614 = vpop.f32.mrb[0].mxu0
  %1615 = vmatprep.mubr.bf16.mxu0 0
  %1616 = vmatmul.mubr.bf16.gmra.mrb[0].mxu0 %v1440
  %v1617 = vpop.f32.mrb[0].mxu0
  %v1618 = vadd.f32 0.0, %v1617
  %v1619 = vpop.f32.mrb[0].mxu0
  %v1620 = vpop.f32.mrb[0].mxu0
  %v1621 = vadd.f32 0.0, %v1620
  %v1622 = vpop.f32.mrb[0].mxu0
  %1623 = vmatprep.mubr.bf16.mxu0 0
  %1624 = vmatmul.mubr.bf16.gmra.mrb[0].mxu0 %v1443
  %v1625 = vpop.f32.mrb[0].mxu0
  %v1626 = vadd.f32 0.0, %v1625
  %v1627 = vpop.f32.mrb[0].mxu0
  %v1628 = vpop.f32.mrb[0].mxu0
  %v1629 = vadd.f32 0.0, %v1628
  %v1630 = vpop.f32.mrb[0].mxu0
  %1631 = vmatprep.mubr.bf16.mxu0 0
  %1632 = vmatmul.mubr.bf16.gmra.mrb[0].mxu0 %v1446
  %v1633 = vpop.f32.mrb[0].mxu0
  %v1634 = vadd.f32 0.0, %v1633
  %v1635 = vpop.f32.mrb[0].mxu0
  %v1636 = vpop.f32.mrb[0].mxu0
  %v1637 = vadd.f32 0.0, %v1636
  %v1638 = vpop.f32.mrb[0].mxu0
  %1639 = vmatprep.mubr.bf16.mxu0 0
  %1640 = vmatmul.mubr.bf16.gmra.mrb[0].mxu0 %v1449
  %v1641 = vpop.f32.mrb[0].mxu0
  %v1642 = vadd.f32 0.0, %v1641
  %v1643 = vpop.f32.mrb[0].mxu0
  %v1644 = vpop.f32.mrb[0].mxu0
  %v1645 = vadd.f32 0.0, %v1644
  %v1646 = vpop.f32.mrb[0].mxu0
  %1647 = vmatprep.mubr.bf16.mxu0 0
  %1648 = vmatmul.mubr.bf16.gmra.mrb[0].mxu0 %v1452
  %v1649 = vpop.f32.mrb[0].mxu0
  %v1650 = vadd.f32 0.0, %v1649
  %v1651 = vpop.f32.mrb[0].mxu0
  %v1652 = vpop.f32.mrb[0].mxu0
  %v1653 = vadd.f32 0.0, %v1652
  %v1654 = vpop.f32.mrb[0].mxu0
  %1655 = vmatprep.mubr.bf16.mxu0 0
  %1656 = vmatmul.mubr.bf16.gmra.mrb[0].mxu0 %v1455
  %v1657 = vpop.f32.mrb[0].mxu0
  %v1658 = vadd.f32 0.0, %v1657
  %v1659 = vpop.f32.mrb[0].mxu0
  %v1660 = vpop.f32.mrb[0].mxu0
  %v1661 = vadd.f32 0.0, %v1660
  %v1662 = vpop.f32.mrb[0].mxu0
  %1663 = vmatprep.mubr.bf16.mxu0 0
  %1664 = vmatmul.mubr.bf16.gmra.mrb[0].mxu0 %v1458
  %v1665 = vpop.f32.mrb[0].mxu0
  %v1666 = vadd.f32 0.0, %v1665
  %v1667 = vpop.f32.mrb[0].mxu0
  %v1668 = vpop.f32.mrb[0].mxu0
  %v1669 = vadd.f32 0.0, %v1668
  %v1670 = vpop.f32.mrb[0].mxu0
  %1671 = vmatprep.mubr.bf16.mxu0 0
  %1672 = vmatmul.mubr.bf16.gmra.mrb[0].mxu0 %v1461
  %v1673 = vpop.f32.mrb[0].mxu0
  %v1674 = vadd.f32 0.0, %v1673
  %v1675 = vpop.f32.mrb[0].mxu0
  %v1676 = vpop.f32.mrb[0].mxu0
  %v1677 = vadd.f32 0.0, %v1676
  %v1678 = vpop.f32.mrb[0].mxu0
  %1679 = vmatprep.mubr.bf16.mxu0 0
  %1680 = vmatmul.mubr.bf16.gmra.mrb[0].mxu0 %v1464
  %v1681 = vpop.f32.mrb[0].mxu0
  %v1682 = vadd.f32 0.0, %v1681
  %v1683 = vpop.f32.mrb[0].mxu0
  %v1684 = vpop.f32.mrb[0].mxu0
  %v1685 = vadd.f32 0.0, %v1684
  %v1686 = vpop.f32.mrb[0].mxu0
  %1687 = vmatprep.mubr.bf16.mxu0 0
  %1688 = vmatmul.mubr.bf16.gmra.mrb[0].mxu0 %v1467
  %v1689 = vpop.f32.mrb[0].mxu0
  %v1690 = vadd.f32 0.0, %v1689
  %v1691 = vpop.f32.mrb[0].mxu0
  %v1692 = vpop.f32.mrb[0].mxu0
  %v1693 = vadd.f32 0.0, %v1692
  %v1694 = vpop.f32.mrb[0].mxu0
  %1695 = vmatprep.mubr.bf16.mxu0 0
  %1696 = vmatmul.mubr.bf16.gmra.mrb[0].mxu0 %v1470
  %v1697 = vpop.f32.mrb[0].mxu0
  %v1698 = vadd.f32 0.0, %v1697
  %v1699 = vpop.f32.mrb[0].mxu0
  %v1700 = vpop.f32.mrb[0].mxu0
  %v1701 = vadd.f32 0.0, %v1700
  %v1702 = vpop.f32.mrb[0].mxu0
  %1703 = vmatprep.mubr.bf16.mxu0 0
  %1704 = vmatmul.mubr.bf16.gmra.mrb[0].mxu0 %v1473
  %v1705 = vpop.f32.mrb[0].mxu0
  %v1706 = vadd.f32 0.0, %v1705
  %v1707 = vpop.f32.mrb[0].mxu0
  %v1708 = vpop.f32.mrb[0].mxu0
  %v1709 = vadd.f32 0.0, %v1708
  %v1710 = vpop.f32.mrb[0].mxu0
  %1711 = vmatprep.mubr.bf16.mxu0 0
  %1712 = vmatmul.mubr.bf16.gmra.mrb[0].mxu0 %v1476
  %v1713 = vpop.f32.mrb[0].mxu0
  %v1714 = vadd.f32 0.0, %v1713
  %v1715 = vpop.f32.mrb[0].mxu0
  %v1716 = vpop.f32.mrb[0].mxu0
  %v1717 = vadd.f32 0.0, %v1716
  %v1718 = vpop.f32.mrb[0].mxu0
  %1719 = vmatprep.mubr.bf16.mxu0 0
  %1720 = vmatmul.mubr.bf16.gmra.mrb[0].mxu0 %v1479
  %v1721 = vpop.f32.mrb[0].mxu0
  %v1722 = vadd.f32 0.0, %v1721
  %v1723 = vpop.f32.mrb[0].mxu0
  %v1724 = vpop.f32.mrb[0].mxu0
  %v1725 = vadd.f32 0.0, %v1724
  %v1726 = vpop.f32.mrb[0].mxu0
  %1727 = vmatprep.mubr.bf16.mxu0 0
  %1728 = vmatmul.mubr.bf16.gmra.mrb[0].mxu0 %v1482
  %v1729 = vpop.f32.mrb[0].mxu0
  %v1730 = vadd.f32 0.0, %v1729
  %v1731 = vpop.f32.mrb[0].mxu0
  %v1732 = vpop.f32.mrb[0].mxu0
  %v1733 = vadd.f32 0.0, %v1732
  %v1734 = vpop.f32.mrb[0].mxu0
  %1735 = vmatprep.mubr.bf16.mxu0 0
  %1736 = vmatmul.mubr.bf16.gmra.mrb[0].mxu0 %v1485
  %v1737 = vpop.f32.mrb[0].mxu0
  %v1738 = vadd.f32 0.0, %v1737
  %v1739 = vpop.f32.mrb[0].mxu0
  %v1740 = vpop.f32.mrb[0].mxu0
  %v1741 = vadd.f32 0.0, %v1740
  %v1742 = vpop.f32.mrb[0].mxu0
  %1743 = vmatprep.mubr.bf16.mxu0 0
  %1744 = vmatmul.mubr.bf16.gmra.mrb[0].mxu0 %v1488
  %v1745 = vpop.f32.mrb[0].mxu0
  %v1746 = vadd.f32 0.0, %v1745
  %v1747 = vpop.f32.mrb[0].mxu0
  %v1748 = vpop.f32.mrb[0].mxu0
  %v1749 = vadd.f32 0.0, %v1748
  %v1750 = vpop.f32.mrb[0].mxu0
  %1751 = vmatprep.mubr.bf16.mxu0 0
  %1752 = vmatmul.mubr.bf16.gmra.mrb[0].mxu0 %v1491
  %v1753 = vpop.f32.mrb[0].mxu0
  %v1754 = vadd.f32 0.0, %v1753
  %v1755 = vpop.f32.mrb[0].mxu0
  %v1756 = vpop.f32.mrb[0].mxu0
  %v1757 = vadd.f32 0.0, %v1756
  %v1758 = vpop.f32.mrb[0].mxu0
  %1759 = vmatprep.mubr.bf16.mxu0 0
  %1760 = vmatmul.mubr.bf16.gmra.mrb[0].mxu0 %v1494
  %v1761 = vpop.f32.mrb[0].mxu0
  %v1762 = vadd.f32 0.0, %v1761
  %v1763 = vpop.f32.mrb[0].mxu0
  %v1764 = vpop.f32.mrb[0].mxu0
  %v1765 = vadd.f32 0.0, %v1764
  %v1766 = vpop.f32.mrb[0].mxu0
  %1767 = vmatprep.mubr.bf16.mxu0 0
  %1768 = vmatmul.mubr.bf16.gmra.mrb[0].mxu0 %v1497
  %v1769 = vpop.f32.mrb[0].mxu0
  %v1770 = vadd.f32 0.0, %v1769
  %v1771 = vpop.f32.mrb[0].mxu0
  %v1772 = vpop.f32.mrb[0].mxu0
  %v1773 = vadd.f32 0.0, %v1772
  %v1774 = vpop.f32.mrb[0].mxu0
  %1775 = vmatprep.mubr.bf16.mxu0 0
  %1776 = vmatmul.mubr.bf16.gmra.mrb[0].mxu0 %v1500
  %v1777 = vpop.f32.mrb[0].mxu0
  %v1778 = vadd.f32 0.0, %v1777
  %v1779 = vpop.f32.mrb[0].mxu0
  %v1780 = vpop.f32.mrb[0].mxu0
  %v1781 = vadd.f32 0.0, %v1780
  %v1782 = vpop.f32.mrb[0].mxu0
  %1783 = vmatprep.mubr.bf16.mxu0 0
  %1784 = vmatmul.mubr.bf16.gmra.mrb[0].mxu0 %v1503
  %v1785 = vpop.f32.mrb[0].mxu0
  %v1786 = vadd.f32 0.0, %v1785
  %v1787 = vpop.f32.mrb[0].mxu0
  %v1788 = vpop.f32.mrb[0].mxu0
  %v1789 = vadd.f32 0.0, %v1788
  %v1790 = vpop.f32.mrb[0].mxu0
  %1791 = vmatprep.mubr.bf16.mxu0 0
  %1792 = vmatmul.mubr.bf16.gmra.mrb[0].mxu0 %v1506
  %v1793 = vpop.f32.mrb[0].mxu0
  %v1794 = vadd.f32 0.0, %v1793
  %v1795 = vpop.f32.mrb[0].mxu0
  %v1796 = vpop.f32.mrb[0].mxu0
  %v1797 = vadd.f32 0.0, %v1796
  %v1798 = vpop.f32.mrb[0].mxu0
  %1799 = vdwg.mxu0
  %v1802 = vunpack.c.l.b16 %v1341
  %v1803 = vunpack.c.l.b16 %v1342
  %v1804 = vpack.c.b16 %v1803, %v1802
  %v1806 = vsel %vm1411, %v1309, 0
  %v1809 = vsel %vm1411, %v1325, 0
  %v1812 = vsel %vm827, %v1804, 0
  %1814 = vmatprep.subr.bf16.mxu0 0
  %1815 = vmatpush1.bf16.msra.mxu0 %v1812
  %1816 = vmatprep.subr.bf16.mxu0 0
  %1817 = vmatpush1.bf16.msra.mxu0 0
  %1818 = vmatprep.subr.bf16.mxu0 0
  %1819 = vmatpush1.bf16.msra.mxu0 0
  %1820 = vmatprep.subr.bf16.mxu0 0
  %1821 = vmatpush1.bf16.msra.mxu0 0
  %1822 = vmatprep.subr.bf16.mxu0 0
  %1823 = vmatpush1.bf16.msra.mxu0 0
  %1824 = vmatprep.subr.bf16.mxu0 0
  %1825 = vmatpush1.bf16.msra.mxu0 0
  %1826 = vmatprep.subr.bf16.mxu0 0
  %1827 = vmatpush1.bf16.msra.mxu0 0
  %1828 = vmatprep.subr.bf16.mxu0 0
  %1829 = vmatpush1.bf16.msra.mxu0 0
  %1830 = vmatprep.subr.bf16.mxu0 0
  %1831 = vmatpush1.bf16.msra.mxu0 0
  %1832 = vmatprep.subr.bf16.mxu0 0
  %1833 = vmatpush1.bf16.msra.mxu0 0
  %1834 = vmatprep.subr.bf16.mxu0 0
  %1835 = vmatpush1.bf16.msra.mxu0 0
  %1836 = vmatprep.subr.bf16.mxu0 0
  %1837 = vmatpush1.bf16.msra.mxu0 0
  %1838 = vmatprep.subr.bf16.mxu0 0
  %1839 = vmatpush1.bf16.msra.mxu0 0
  %1840 = vmatprep.subr.bf16.mxu0 0
  %1841 = vmatpush1.bf16.msra.mxu0 0
  %1842 = vmatprep.subr.bf16.mxu0 0
  %1843 = vmatpush1.bf16.msra.mxu0 0
  %1844 = vmatprep.subr.bf16.mxu0 0
  %1845 = vmatpush1.bf16.msra.mxu0 0
  %1846 = vmatprep.mubr.bf16.mxu0 0
  %1847 = vmatmul.mubr.bf16.gmra.mrb[0].mxu0 %v1806
  %v1848 = vpop.f32.mrb[0].mxu0
  %v1849 = vadd.f32 %v1546, %v1848
  %v1850 = vpop.f32.mrb[0].mxu0
  %v1851 = vpop.f32.mrb[0].mxu0
  %v1852 = vadd.f32 %v1549, %v1851
  %v1853 = vpop.f32.mrb[0].mxu0
  %1854 = vmatprep.mubr.bf16.mxu0 0
  %1855 = vmatmul.mubr.bf16.gmra.mrb[0].mxu0 %v1413
  %v1856 = vpop.f32.mrb[0].mxu0
  %v1857 = vadd.f32 %v1554, %v1856
  %v1858 = vpop.f32.mrb[0].mxu0
  %v1859 = vpop.f32.mrb[0].mxu0
  %v1860 = vadd.f32 %v1557, %v1859
  %v1861 = vpop.f32.mrb[0].mxu0
  %1862 = vmatprep.mubr.bf16.mxu0 0
  %1863 = vmatmul.mubr.bf16.gmra.mrb[0].mxu0 %v1416
  %v1864 = vpop.f32.mrb[0].mxu0
  %v1865 = vadd.f32 %v1562, %v1864
  %v1866 = vpop.f32.mrb[0].mxu0
  %v1867 = vpop.f32.mrb[0].mxu0
  %v1868 = vadd.f32 %v1565, %v1867
  %v1869 = vpop.f32.mrb[0].mxu0
  %1870 = vmatprep.mubr.bf16.mxu0 0
  %1871 = vmatmul.mubr.bf16.gmra.mrb[0].mxu0 %v1419
  %v1872 = vpop.f32.mrb[0].mxu0
  %v1873 = vadd.f32 %v1570, %v1872
  %v1874 = vpop.f32.mrb[0].mxu0
  %v1875 = vpop.f32.mrb[0].mxu0
  %v1876 = vadd.f32 %v1573, %v1875
  %v1877 = vpop.f32.mrb[0].mxu0
  %1878 = vmatprep.mubr.bf16.mxu0 0
  %1879 = vmatmul.mubr.bf16.gmra.mrb[0].mxu0 %v1422
  %v1880 = vpop.f32.mrb[0].mxu0
  %v1881 = vadd.f32 %v1578, %v1880
  %v1882 = vpop.f32.mrb[0].mxu0
  %v1883 = vpop.f32.mrb[0].mxu0
  %v1884 = vadd.f32 %v1581, %v1883
  %v1885 = vpop.f32.mrb[0].mxu0
  %1886 = vmatprep.mubr.bf16.mxu0 0
  %1887 = vmatmul.mubr.bf16.gmra.mrb[0].mxu0 %v1425
  %v1888 = vpop.f32.mrb[0].mxu0
  %v1889 = vadd.f32 %v1586, %v1888
  %v1890 = vpop.f32.mrb[0].mxu0
  %v1891 = vpop.f32.mrb[0].mxu0
  %v1892 = vadd.f32 %v1589, %v1891
  %v1893 = vpop.f32.mrb[0].mxu0
  %1894 = vmatprep.mubr.bf16.mxu0 0
  %1895 = vmatmul.mubr.bf16.gmra.mrb[0].mxu0 %v1428
  %v1896 = vpop.f32.mrb[0].mxu0
  %v1897 = vadd.f32 %v1594, %v1896
  %v1898 = vpop.f32.mrb[0].mxu0
  %v1899 = vpop.f32.mrb[0].mxu0
  %v1900 = vadd.f32 %v1597, %v1899
  %v1901 = vpop.f32.mrb[0].mxu0
  %1902 = vmatprep.mubr.bf16.mxu0 0
  %1903 = vmatmul.mubr.bf16.gmra.mrb[0].mxu0 %v1431
  %v1904 = vpop.f32.mrb[0].mxu0
  %v1905 = vadd.f32 %v1602, %v1904
  %v1906 = vpop.f32.mrb[0].mxu0
  %v1907 = vpop.f32.mrb[0].mxu0
  %v1908 = vadd.f32 %v1605, %v1907
  %v1909 = vpop.f32.mrb[0].mxu0
  %1910 = vmatprep.mubr.bf16.mxu0 0
  %1911 = vmatmul.mubr.bf16.gmra.mrb[0].mxu0 %v1434
  %v1912 = vpop.f32.mrb[0].mxu0
  %v1913 = vadd.f32 %v1610, %v1912
  %v1914 = vpop.f32.mrb[0].mxu0
  %v1915 = vpop.f32.mrb[0].mxu0
  %v1916 = vadd.f32 %v1613, %v1915
  %v1917 = vpop.f32.mrb[0].mxu0
  %1918 = vmatprep.mubr.bf16.mxu0 0
  %1919 = vmatmul.mubr.bf16.gmra.mrb[0].mxu0 %v1437
  %v1920 = vpop.f32.mrb[0].mxu0
  %v1921 = vadd.f32 %v1618, %v1920
  %v1922 = vpop.f32.mrb[0].mxu0
  %v1923 = vpop.f32.mrb[0].mxu0
  %v1924 = vadd.f32 %v1621, %v1923
  %v1925 = vpop.f32.mrb[0].mxu0
  %1926 = vmatprep.mubr.bf16.mxu0 0
  %1927 = vmatmul.mubr.bf16.gmra.mrb[0].mxu0 %v1440
  %v1928 = vpop.f32.mrb[0].mxu0
  %v1929 = vadd.f32 %v1626, %v1928
  %v1930 = vpop.f32.mrb[0].mxu0
  %v1931 = vpop.f32.mrb[0].mxu0
  %v1932 = vadd.f32 %v1629, %v1931
  %v1933 = vpop.f32.mrb[0].mxu0
  %1934 = vmatprep.mubr.bf16.mxu0 0
  %1935 = vmatmul.mubr.bf16.gmra.mrb[0].mxu0 %v1443
  %v1936 = vpop.f32.mrb[0].mxu0
  %v1937 = vadd.f32 %v1634, %v1936
  %v1938 = vpop.f32.mrb[0].mxu0
  %v1939 = vpop.f32.mrb[0].mxu0
  %v1940 = vadd.f32 %v1637, %v1939
  %v1941 = vpop.f32.mrb[0].mxu0
  %1942 = vmatprep.mubr.bf16.mxu0 0
  %1943 = vmatmul.mubr.bf16.gmra.mrb[0].mxu0 %v1446
  %v1944 = vpop.f32.mrb[0].mxu0
  %v1945 = vadd.f32 %v1642, %v1944
  %v1946 = vpop.f32.mrb[0].mxu0
  %v1947 = vpop.f32.mrb[0].mxu0
  %v1948 = vadd.f32 %v1645, %v1947
  %v1949 = vpop.f32.mrb[0].mxu0
  %1950 = vmatprep.mubr.bf16.mxu0 0
  %1951 = vmatmul.mubr.bf16.gmra.mrb[0].mxu0 %v1449
  %v1952 = vpop.f32.mrb[0].mxu0
  %v1953 = vadd.f32 %v1650, %v1952
  %v1954 = vpop.f32.mrb[0].mxu0
  %v1955 = vpop.f32.mrb[0].mxu0
  %v1956 = vadd.f32 %v1653, %v1955
  %v1957 = vpop.f32.mrb[0].mxu0
  %1958 = vmatprep.mubr.bf16.mxu0 0
  %1959 = vmatmul.mubr.bf16.gmra.mrb[0].mxu0 %v1452
  %v1960 = vpop.f32.mrb[0].mxu0
  %v1961 = vadd.f32 %v1658, %v1960
  %v1962 = vpop.f32.mrb[0].mxu0
  %v1963 = vpop.f32.mrb[0].mxu0
  %v1964 = vadd.f32 %v1661, %v1963
  %v1965 = vpop.f32.mrb[0].mxu0
  %1966 = vmatprep.mubr.bf16.mxu0 0
  %1967 = vmatmul.mubr.bf16.gmra.mrb[0].mxu0 %v1455
  %v1968 = vpop.f32.mrb[0].mxu0
  %v1969 = vadd.f32 %v1666, %v1968
  %v1970 = vpop.f32.mrb[0].mxu0
  %v1971 = vpop.f32.mrb[0].mxu0
  %v1972 = vadd.f32 %v1669, %v1971
  %v1973 = vpop.f32.mrb[0].mxu0
  %1974 = vmatprep.mubr.bf16.mxu0 0
  %1975 = vmatmul.mubr.bf16.gmra.mrb[0].mxu0 %v1809
  %v1976 = vpop.f32.mrb[0].mxu0
  %v1977 = vadd.f32 %v1674, %v1976
  %v1978 = vpop.f32.mrb[0].mxu0
  %v1979 = vpop.f32.mrb[0].mxu0
  %v1980 = vadd.f32 %v1677, %v1979
  %v1981 = vpop.f32.mrb[0].mxu0
  %1982 = vmatprep.mubr.bf16.mxu0 0
  %1983 = vmatmul.mubr.bf16.gmra.mrb[0].mxu0 %v1461
  %v1984 = vpop.f32.mrb[0].mxu0
  %v1985 = vadd.f32 %v1682, %v1984
  %v1986 = vpop.f32.mrb[0].mxu0
  %v1987 = vpop.f32.mrb[0].mxu0
  %v1988 = vadd.f32 %v1685, %v1987
  %v1989 = vpop.f32.mrb[0].mxu0
  %1990 = vmatprep.mubr.bf16.mxu0 0
  %1991 = vmatmul.mubr.bf16.gmra.mrb[0].mxu0 %v1464
  %v1992 = vpop.f32.mrb[0].mxu0
  %v1993 = vadd.f32 %v1690, %v1992
  %v1994 = vpop.f32.mrb[0].mxu0
  %v1995 = vpop.f32.mrb[0].mxu0
  %v1996 = vadd.f32 %v1693, %v1995
  %v1997 = vpop.f32.mrb[0].mxu0
  %1998 = vmatprep.mubr.bf16.mxu0 0
  %1999 = vmatmul.mubr.bf16.gmra.mrb[0].mxu0 %v1467
  %v2000 = vpop.f32.mrb[0].mxu0
  %v2001 = vadd.f32 %v1698, %v2000
  %v2002 = vpop.f32.mrb[0].mxu0
  %v2003 = vpop.f32.mrb[0].mxu0
  %v2004 = vadd.f32 %v1701, %v2003
  %v2005 = vpop.f32.mrb[0].mxu0
  %2006 = vmatprep.mubr.bf16.mxu0 0
  %2007 = vmatmul.mubr.bf16.gmra.mrb[0].mxu0 %v1470
  %v2008 = vpop.f32.mrb[0].mxu0
  %v2009 = vadd.f32 %v1706, %v2008
  %v2010 = vpop.f32.mrb[0].mxu0
  %v2011 = vpop.f32.mrb[0].mxu0
  %v2012 = vadd.f32 %v1709, %v2011
  %v2013 = vpop.f32.mrb[0].mxu0
  %2014 = vmatprep.mubr.bf16.mxu0 0
  %2015 = vmatmul.mubr.bf16.gmra.mrb[0].mxu0 %v1473
  %v2016 = vpop.f32.mrb[0].mxu0
  %v2017 = vadd.f32 %v1714, %v2016
  %v2018 = vpop.f32.mrb[0].mxu0
  %v2019 = vpop.f32.mrb[0].mxu0
  %v2020 = vadd.f32 %v1717, %v2019
  %v2021 = vpop.f32.mrb[0].mxu0
  %2022 = vmatprep.mubr.bf16.mxu0 0
  %2023 = vmatmul.mubr.bf16.gmra.mrb[0].mxu0 %v1476
  %v2024 = vpop.f32.mrb[0].mxu0
  %v2025 = vadd.f32 %v1722, %v2024
  %v2026 = vpop.f32.mrb[0].mxu0
  %v2027 = vpop.f32.mrb[0].mxu0
  %v2028 = vadd.f32 %v1725, %v2027
  %v2029 = vpop.f32.mrb[0].mxu0
  %2030 = vmatprep.mubr.bf16.mxu0 0
  %2031 = vmatmul.mubr.bf16.gmra.mrb[0].mxu0 %v1479
  %v2032 = vpop.f32.mrb[0].mxu0
  %v2033 = vadd.f32 %v1730, %v2032
  %v2034 = vpop.f32.mrb[0].mxu0
  %v2035 = vpop.f32.mrb[0].mxu0
  %v2036 = vadd.f32 %v1733, %v2035
  %v2037 = vpop.f32.mrb[0].mxu0
  %2038 = vmatprep.mubr.bf16.mxu0 0
  %2039 = vmatmul.mubr.bf16.gmra.mrb[0].mxu0 %v1482
  %v2040 = vpop.f32.mrb[0].mxu0
  %v2041 = vadd.f32 %v1738, %v2040
  %v2042 = vpop.f32.mrb[0].mxu0
  %v2043 = vpop.f32.mrb[0].mxu0
  %v2044 = vadd.f32 %v1741, %v2043
  %v2045 = vpop.f32.mrb[0].mxu0
  %2046 = vmatprep.mubr.bf16.mxu0 0
  %2047 = vmatmul.mubr.bf16.gmra.mrb[0].mxu0 %v1485
  %v2048 = vpop.f32.mrb[0].mxu0
  %v2049 = vadd.f32 %v1746, %v2048
  %v2050 = vpop.f32.mrb[0].mxu0
  %v2051 = vpop.f32.mrb[0].mxu0
  %v2052 = vadd.f32 %v1749, %v2051
  %v2053 = vpop.f32.mrb[0].mxu0
  %2054 = vmatprep.mubr.bf16.mxu0 0
  %2055 = vmatmul.mubr.bf16.gmra.mrb[0].mxu0 %v1488
  %v2056 = vpop.f32.mrb[0].mxu0
  %v2057 = vadd.f32 %v1754, %v2056
  %v2058 = vpop.f32.mrb[0].mxu0
  %v2059 = vpop.f32.mrb[0].mxu0
  %v2060 = vadd.f32 %v1757, %v2059
  %v2061 = vpop.f32.mrb[0].mxu0
  %2062 = vmatprep.mubr.bf16.mxu0 0
  %2063 = vmatmul.mubr.bf16.gmra.mrb[0].mxu0 %v1491
  %v2064 = vpop.f32.mrb[0].mxu0
  %v2065 = vadd.f32 %v1762, %v2064
  %v2066 = vpop.f32.mrb[0].mxu0
  %v2067 = vpop.f32.mrb[0].mxu0
  %v2068 = vadd.f32 %v1765, %v2067
  %v2069 = vpop.f32.mrb[0].mxu0
  %2070 = vmatprep.mubr.bf16.mxu0 0
  %2071 = vmatmul.mubr.bf16.gmra.mrb[0].mxu0 %v1494
  %v2072 = vpop.f32.mrb[0].mxu0
  %v2073 = vadd.f32 %v1770, %v2072
  %v2074 = vpop.f32.mrb[0].mxu0
  %v2075 = vpop.f32.mrb[0].mxu0
  %v2076 = vadd.f32 %v1773, %v2075
  %v2077 = vpop.f32.mrb[0].mxu0
  %2078 = vmatprep.mubr.bf16.mxu0 0
  %2079 = vmatmul.mubr.bf16.gmra.mrb[0].mxu0 %v1497
  %v2080 = vpop.f32.mrb[0].mxu0
  %v2081 = vadd.f32 %v1778, %v2080
  %v2082 = vpop.f32.mrb[0].mxu0
  %v2083 = vpop.f32.mrb[0].mxu0
  %v2084 = vadd.f32 %v1781, %v2083
  %v2085 = vpop.f32.mrb[0].mxu0
  %2086 = vmatprep.mubr.bf16.mxu0 0
  %2087 = vmatmul.mubr.bf16.gmra.mrb[0].mxu0 %v1500
  %v2088 = vpop.f32.mrb[0].mxu0
  %v2089 = vadd.f32 %v1786, %v2088
  %v2090 = vpop.f32.mrb[0].mxu0
  %v2091 = vpop.f32.mrb[0].mxu0
  %v2092 = vadd.f32 %v1789, %v2091
  %v2093 = vpop.f32.mrb[0].mxu0
  %2094 = vmatprep.mubr.bf16.mxu0 0
  %2095 = vmatmul.mubr.bf16.gmra.mrb[0].mxu0 %v1503
  %v2096 = vpop.f32.mrb[0].mxu0
  %v2097 = vadd.f32 %v1794, %v2096
  %v2098 = vpop.f32.mrb[0].mxu0
  %v2099 = vpop.f32.mrb[0].mxu0
  %v2100 = vadd.f32 %v1797, %v2099
  %v2101 = vpop.f32.mrb[0].mxu0
  %2102 = vdwg.mxu0
  %v2109 = vrot.slane %v321, 1
  %v2110 = vrot.slane %v322, 1
  %v2111 = vsel %vm474, %v2109, %v2110
  %v2112 = vrot.slane %v323, 1
  %v2113 = vsel %vm474, %v2110, %v2112
  %v2114 = vrot.slane %v375, 1
  %v2115 = vrot.slane %v376, 1
  %v2116 = vsel %vm474, %v2114, %v2115
  %v2117 = vrot.slane %v377, 1
  %v2118 = vsel %vm474, %v2115, %v2117
  %2119 = vrot.lane.b32.xlu0 %v2111, 4
  %v2120 = vpop.permute.xlu0 %2119
  %2121 = vrot.lane.b32.xlu0 %v2113, 4
  %v2122 = vpop.permute.xlu0 %2121
  %2123 = vrot.lane.b32.xlu0 %v2116, 4
  %v2124 = vpop.permute.xlu0 %2123
  %2125 = vrot.lane.b32.xlu0 %v2118, 4
  %v2126 = vpop.permute.xlu0 %2125
  %v2131 = vrot.slane %v321, 2
  %v2132 = vrot.slane %v322, 2
  %v2133 = vsel %vm827, %v2131, %v2132
  %v2134 = vrot.slane %v323, 2
  %v2135 = vsel %vm827, %v2132, %v2134
  %v2136 = vrot.slane %v375, 2
  %v2137 = vrot.slane %v376, 2
  %v2138 = vsel %vm827, %v2136, %v2137
  %v2139 = vrot.slane %v377, 2
  %v2140 = vsel %vm827, %v2137, %v2139
  %2141 = vrot.lane.b32.xlu0 %v2133, 8
  %v2142 = vpop.permute.xlu0 %2141
  %2143 = vrot.lane.b32.xlu0 %v2135, 8
  %v2144 = vpop.permute.xlu0 %2143
  %2145 = vrot.lane.b32.xlu0 %v2138, 8
  %v2146 = vpop.permute.xlu0 %2145
  %2147 = vrot.lane.b32.xlu0 %v2140, 8
  %v2148 = vpop.permute.xlu0 %2147
  %v2153 = vsel %vm53, %v321, %v2120
  %v2154 = vsel %vm53, %v322, %v2122
  %v2155 = vsel %vm53, %v375, %v2124
  %v2156 = vsel %vm53, %v376, %v2126
  %v2157 = vsel %vm1244, %v2153, %v2142
  %v2158 = vsel %vm1244, %v2154, %v2144
  %v2159 = vsel %vm1244, %v2155, %v2146
  %v2160 = vsel %vm1244, %v2156, %v2148
  %v2161 = vpack.c.bf16 %v2158, %v2157
  %v2162 = vpack.c.bf16 %v2160, %v2159
  %s2163 = scalar_lea.vmem %s3, 16
  %v2164 = vld [vmem:[%s2163] sm:$0xf]
  %v2165 = vld [vmem:[%s2163 + $0x4] sm:$0x3]
  %v2168 = vunpack.c.l.b16 %v2164
  %v2169 = vunpack.c.l.b16 %v2165
  %v2170 = vpack.c.b16 %v2169, %v2168
  %v2172 = vsel %vm1411, %v2161, 0
  %v2175 = vsel %vm1411, %v2162, 0
  %v2178 = vsel %vm827, %v2170, 0
  %2180 = vmatprep.subr.bf16.mxu0 0
  %2181 = vmatpush1.bf16.msra.mxu0 %v2178
  %2182 = vmatprep.subr.bf16.mxu0 0
  %2183 = vmatpush1.bf16.msra.mxu0 0
  %2184 = vmatprep.subr.bf16.mxu0 0
  %2185 = vmatpush1.bf16.msra.mxu0 0
  %2186 = vmatprep.subr.bf16.mxu0 0
  %2187 = vmatpush1.bf16.msra.mxu0 0
  %2188 = vmatprep.subr.bf16.mxu0 0
  %2189 = vmatpush1.bf16.msra.mxu0 0
  %2190 = vmatprep.subr.bf16.mxu0 0
  %2191 = vmatpush1.bf16.msra.mxu0 0
  %2192 = vmatprep.subr.bf16.mxu0 0
  %2193 = vmatpush1.bf16.msra.mxu0 0
  %2194 = vmatprep.subr.bf16.mxu0 0
  %2195 = vmatpush1.bf16.msra.mxu0 0
  %2196 = vmatprep.subr.bf16.mxu0 0
  %2197 = vmatpush1.bf16.msra.mxu0 0
  %2198 = vmatprep.subr.bf16.mxu0 0
  %2199 = vmatpush1.bf16.msra.mxu0 0
  %2200 = vmatprep.subr.bf16.mxu0 0
  %2201 = vmatpush1.bf16.msra.mxu0 0
  %2202 = vmatprep.subr.bf16.mxu0 0
  %2203 = vmatpush1.bf16.msra.mxu0 0
  %2204 = vmatprep.subr.bf16.mxu0 0
  %2205 = vmatpush1.bf16.msra.mxu0 0
  %2206 = vmatprep.subr.bf16.mxu0 0
  %2207 = vmatpush1.bf16.msra.mxu0 0
  %2208 = vmatprep.subr.bf16.mxu0 0
  %2209 = vmatpush1.bf16.msra.mxu0 0
  %2210 = vmatprep.subr.bf16.mxu0 0
  %2211 = vmatpush1.bf16.msra.mxu0 0
  %2212 = vmatprep.mubr.bf16.mxu0 0
  %2213 = vmatmul.mubr.bf16.gmra.mrb[0].mxu0 %v1416
  %v2214 = vpop.f32.mrb[0].mxu0
  %v2215 = vadd.f32 0.0, %v2214
  %v2216 = vpop.f32.mrb[0].mxu0
  %v2217 = vpop.f32.mrb[0].mxu0
  %v2218 = vadd.f32 0.0, %v2217
  %v2219 = vpop.f32.mrb[0].mxu0
  %2220 = vmatprep.mubr.bf16.mxu0 0
  %2221 = vmatmul.mubr.bf16.gmra.mrb[0].mxu0 %v1419
  %v2222 = vpop.f32.mrb[0].mxu0
  %v2223 = vadd.f32 0.0, %v2222
  %v2224 = vpop.f32.mrb[0].mxu0
  %v2225 = vpop.f32.mrb[0].mxu0
  %v2226 = vadd.f32 0.0, %v2225
  %v2227 = vpop.f32.mrb[0].mxu0
  %2228 = vmatprep.mubr.bf16.mxu0 0
  %2229 = vmatmul.mubr.bf16.gmra.mrb[0].mxu0 %v1422
  %v2230 = vpop.f32.mrb[0].mxu0
  %v2231 = vadd.f32 0.0, %v2230
  %v2232 = vpop.f32.mrb[0].mxu0
  %v2233 = vpop.f32.mrb[0].mxu0
  %v2234 = vadd.f32 0.0, %v2233
  %v2235 = vpop.f32.mrb[0].mxu0
  %2236 = vmatprep.mubr.bf16.mxu0 0
  %2237 = vmatmul.mubr.bf16.gmra.mrb[0].mxu0 %v1425
  %v2238 = vpop.f32.mrb[0].mxu0
  %v2239 = vadd.f32 0.0, %v2238
  %v2240 = vpop.f32.mrb[0].mxu0
  %v2241 = vpop.f32.mrb[0].mxu0
  %v2242 = vadd.f32 0.0, %v2241
  %v2243 = vpop.f32.mrb[0].mxu0
  %2244 = vmatprep.mubr.bf16.mxu0 0
  %2245 = vmatmul.mubr.bf16.gmra.mrb[0].mxu0 %v1428
  %v2246 = vpop.f32.mrb[0].mxu0
  %v2247 = vadd.f32 0.0, %v2246
  %v2248 = vpop.f32.mrb[0].mxu0
  %v2249 = vpop.f32.mrb[0].mxu0
  %v2250 = vadd.f32 0.0, %v2249
  %v2251 = vpop.f32.mrb[0].mxu0
  %2252 = vmatprep.mubr.bf16.mxu0 0
  %2253 = vmatmul.mubr.bf16.gmra.mrb[0].mxu0 %v1431
  %v2254 = vpop.f32.mrb[0].mxu0
  %v2255 = vadd.f32 0.0, %v2254
  %v2256 = vpop.f32.mrb[0].mxu0
  %v2257 = vpop.f32.mrb[0].mxu0
  %v2258 = vadd.f32 0.0, %v2257
  %v2259 = vpop.f32.mrb[0].mxu0
  %2260 = vmatprep.mubr.bf16.mxu0 0
  %2261 = vmatmul.mubr.bf16.gmra.mrb[0].mxu0 %v1434
  %v2262 = vpop.f32.mrb[0].mxu0
  %v2263 = vadd.f32 0.0, %v2262
  %v2264 = vpop.f32.mrb[0].mxu0
  %v2265 = vpop.f32.mrb[0].mxu0
  %v2266 = vadd.f32 0.0, %v2265
  %v2267 = vpop.f32.mrb[0].mxu0
  %2268 = vmatprep.mubr.bf16.mxu0 0
  %2269 = vmatmul.mubr.bf16.gmra.mrb[0].mxu0 %v1437
  %v2270 = vpop.f32.mrb[0].mxu0
  %v2271 = vadd.f32 0.0, %v2270
  %v2272 = vpop.f32.mrb[0].mxu0
  %v2273 = vpop.f32.mrb[0].mxu0
  %v2274 = vadd.f32 0.0, %v2273
  %v2275 = vpop.f32.mrb[0].mxu0
  %2276 = vmatprep.mubr.bf16.mxu0 0
  %2277 = vmatmul.mubr.bf16.gmra.mrb[0].mxu0 %v1440
  %v2278 = vpop.f32.mrb[0].mxu0
  %v2279 = vadd.f32 0.0, %v2278
  %v2280 = vpop.f32.mrb[0].mxu0
  %v2281 = vpop.f32.mrb[0].mxu0
  %v2282 = vadd.f32 0.0, %v2281
  %v2283 = vpop.f32.mrb[0].mxu0
  %2284 = vmatprep.mubr.bf16.mxu0 0
  %2285 = vmatmul.mubr.bf16.gmra.mrb[0].mxu0 %v1443
  %v2286 = vpop.f32.mrb[0].mxu0
  %v2287 = vadd.f32 0.0, %v2286
  %v2288 = vpop.f32.mrb[0].mxu0
  %v2289 = vpop.f32.mrb[0].mxu0
  %v2290 = vadd.f32 0.0, %v2289
  %v2291 = vpop.f32.mrb[0].mxu0
  %2292 = vmatprep.mubr.bf16.mxu0 0
  %2293 = vmatmul.mubr.bf16.gmra.mrb[0].mxu0 %v1446
  %v2294 = vpop.f32.mrb[0].mxu0
  %v2295 = vadd.f32 0.0, %v2294
  %v2296 = vpop.f32.mrb[0].mxu0
  %v2297 = vpop.f32.mrb[0].mxu0
  %v2298 = vadd.f32 0.0, %v2297
  %v2299 = vpop.f32.mrb[0].mxu0
  %2300 = vmatprep.mubr.bf16.mxu0 0
  %2301 = vmatmul.mubr.bf16.gmra.mrb[0].mxu0 %v1449
  %v2302 = vpop.f32.mrb[0].mxu0
  %v2303 = vadd.f32 0.0, %v2302
  %v2304 = vpop.f32.mrb[0].mxu0
  %v2305 = vpop.f32.mrb[0].mxu0
  %v2306 = vadd.f32 0.0, %v2305
  %v2307 = vpop.f32.mrb[0].mxu0
  %2308 = vmatprep.mubr.bf16.mxu0 0
  %2309 = vmatmul.mubr.bf16.gmra.mrb[0].mxu0 %v1452
  %v2310 = vpop.f32.mrb[0].mxu0
  %v2311 = vadd.f32 0.0, %v2310
  %v2312 = vpop.f32.mrb[0].mxu0
  %v2313 = vpop.f32.mrb[0].mxu0
  %v2314 = vadd.f32 0.0, %v2313
  %v2315 = vpop.f32.mrb[0].mxu0
  %2316 = vmatprep.mubr.bf16.mxu0 0
  %2317 = vmatmul.mubr.bf16.gmra.mrb[0].mxu0 %v1455
  %v2318 = vpop.f32.mrb[0].mxu0
  %v2319 = vadd.f32 0.0, %v2318
  %v2320 = vpop.f32.mrb[0].mxu0
  %v2321 = vpop.f32.mrb[0].mxu0
  %v2322 = vadd.f32 0.0, %v2321
  %v2323 = vpop.f32.mrb[0].mxu0
  %2324 = vmatprep.mubr.bf16.mxu0 0
  %2325 = vmatmul.mubr.bf16.gmra.mrb[0].mxu0 %v1458
  %v2326 = vpop.f32.mrb[0].mxu0
  %v2327 = vadd.f32 0.0, %v2326
  %v2328 = vpop.f32.mrb[0].mxu0
  %v2329 = vpop.f32.mrb[0].mxu0
  %v2330 = vadd.f32 0.0, %v2329
  %v2331 = vpop.f32.mrb[0].mxu0
  %2332 = vmatprep.mubr.bf16.mxu0 0
  %2333 = vmatmul.mubr.bf16.gmra.mrb[0].mxu0 %v2172
  %v2334 = vpop.f32.mrb[0].mxu0
  %v2335 = vadd.f32 0.0, %v2334
  %v2336 = vpop.f32.mrb[0].mxu0
  %v2337 = vpop.f32.mrb[0].mxu0
  %v2338 = vadd.f32 0.0, %v2337
  %v2339 = vpop.f32.mrb[0].mxu0
  %2340 = vmatprep.mubr.bf16.mxu0 0
  %2341 = vmatmul.mubr.bf16.gmra.mrb[0].mxu0 %v1464
  %v2342 = vpop.f32.mrb[0].mxu0
  %v2343 = vadd.f32 0.0, %v2342
  %v2344 = vpop.f32.mrb[0].mxu0
  %v2345 = vpop.f32.mrb[0].mxu0
  %v2346 = vadd.f32 0.0, %v2345
  %v2347 = vpop.f32.mrb[0].mxu0
  %2348 = vmatprep.mubr.bf16.mxu0 0
  %2349 = vmatmul.mubr.bf16.gmra.mrb[0].mxu0 %v1467
  %v2350 = vpop.f32.mrb[0].mxu0
  %v2351 = vadd.f32 0.0, %v2350
  %v2352 = vpop.f32.mrb[0].mxu0
  %v2353 = vpop.f32.mrb[0].mxu0
  %v2354 = vadd.f32 0.0, %v2353
  %v2355 = vpop.f32.mrb[0].mxu0
  %2356 = vmatprep.mubr.bf16.mxu0 0
  %2357 = vmatmul.mubr.bf16.gmra.mrb[0].mxu0 %v1470
  %v2358 = vpop.f32.mrb[0].mxu0
  %v2359 = vadd.f32 0.0, %v2358
  %v2360 = vpop.f32.mrb[0].mxu0
  %v2361 = vpop.f32.mrb[0].mxu0
  %v2362 = vadd.f32 0.0, %v2361
  %v2363 = vpop.f32.mrb[0].mxu0
  %2364 = vmatprep.mubr.bf16.mxu0 0
  %2365 = vmatmul.mubr.bf16.gmra.mrb[0].mxu0 %v1473
  %v2366 = vpop.f32.mrb[0].mxu0
  %v2367 = vadd.f32 0.0, %v2366
  %v2368 = vpop.f32.mrb[0].mxu0
  %v2369 = vpop.f32.mrb[0].mxu0
  %v2370 = vadd.f32 0.0, %v2369
  %v2371 = vpop.f32.mrb[0].mxu0
  %2372 = vmatprep.mubr.bf16.mxu0 0
  %2373 = vmatmul.mubr.bf16.gmra.mrb[0].mxu0 %v1476
  %v2374 = vpop.f32.mrb[0].mxu0
  %v2375 = vadd.f32 0.0, %v2374
  %v2376 = vpop.f32.mrb[0].mxu0
  %v2377 = vpop.f32.mrb[0].mxu0
  %v2378 = vadd.f32 0.0, %v2377
  %v2379 = vpop.f32.mrb[0].mxu0
  %2380 = vmatprep.mubr.bf16.mxu0 0
  %2381 = vmatmul.mubr.bf16.gmra.mrb[0].mxu0 %v1479
  %v2382 = vpop.f32.mrb[0].mxu0
  %v2383 = vadd.f32 0.0, %v2382
  %v2384 = vpop.f32.mrb[0].mxu0
  %v2385 = vpop.f32.mrb[0].mxu0
  %v2386 = vadd.f32 0.0, %v2385
  %v2387 = vpop.f32.mrb[0].mxu0
  %2388 = vmatprep.mubr.bf16.mxu0 0
  %2389 = vmatmul.mubr.bf16.gmra.mrb[0].mxu0 %v1482
  %v2390 = vpop.f32.mrb[0].mxu0
  %v2391 = vadd.f32 0.0, %v2390
  %v2392 = vpop.f32.mrb[0].mxu0
  %v2393 = vpop.f32.mrb[0].mxu0
  %v2394 = vadd.f32 0.0, %v2393
  %v2395 = vpop.f32.mrb[0].mxu0
  %2396 = vmatprep.mubr.bf16.mxu0 0
  %2397 = vmatmul.mubr.bf16.gmra.mrb[0].mxu0 %v1485
  %v2398 = vpop.f32.mrb[0].mxu0
  %v2399 = vadd.f32 0.0, %v2398
  %v2400 = vpop.f32.mrb[0].mxu0
  %v2401 = vpop.f32.mrb[0].mxu0
  %v2402 = vadd.f32 0.0, %v2401
  %v2403 = vpop.f32.mrb[0].mxu0
  %2404 = vmatprep.mubr.bf16.mxu0 0
  %2405 = vmatmul.mubr.bf16.gmra.mrb[0].mxu0 %v1488
  %v2406 = vpop.f32.mrb[0].mxu0
  %v2407 = vadd.f32 0.0, %v2406
  %v2408 = vpop.f32.mrb[0].mxu0
  %v2409 = vpop.f32.mrb[0].mxu0
  %v2410 = vadd.f32 0.0, %v2409
  %v2411 = vpop.f32.mrb[0].mxu0
  %2412 = vmatprep.mubr.bf16.mxu0 0
  %2413 = vmatmul.mubr.bf16.gmra.mrb[0].mxu0 %v1491
  %v2414 = vpop.f32.mrb[0].mxu0
  %v2415 = vadd.f32 0.0, %v2414
  %v2416 = vpop.f32.mrb[0].mxu0
  %v2417 = vpop.f32.mrb[0].mxu0
  %v2418 = vadd.f32 0.0, %v2417
  %v2419 = vpop.f32.mrb[0].mxu0
  %2420 = vmatprep.mubr.bf16.mxu0 0
  %2421 = vmatmul.mubr.bf16.gmra.mrb[0].mxu0 %v1494
  %v2422 = vpop.f32.mrb[0].mxu0
  %v2423 = vadd.f32 0.0, %v2422
  %v2424 = vpop.f32.mrb[0].mxu0
  %v2425 = vpop.f32.mrb[0].mxu0
  %v2426 = vadd.f32 0.0, %v2425
  %v2427 = vpop.f32.mrb[0].mxu0
  %2428 = vmatprep.mubr.bf16.mxu0 0
  %2429 = vmatmul.mubr.bf16.gmra.mrb[0].mxu0 %v1497
  %v2430 = vpop.f32.mrb[0].mxu0
  %v2431 = vadd.f32 0.0, %v2430
  %v2432 = vpop.f32.mrb[0].mxu0
  %v2433 = vpop.f32.mrb[0].mxu0
  %v2434 = vadd.f32 0.0, %v2433
  %v2435 = vpop.f32.mrb[0].mxu0
  %2436 = vmatprep.mubr.bf16.mxu0 0
  %2437 = vmatmul.mubr.bf16.gmra.mrb[0].mxu0 %v1500
  %v2438 = vpop.f32.mrb[0].mxu0
  %v2439 = vadd.f32 0.0, %v2438
  %v2440 = vpop.f32.mrb[0].mxu0
  %v2441 = vpop.f32.mrb[0].mxu0
  %v2442 = vadd.f32 0.0, %v2441
  %v2443 = vpop.f32.mrb[0].mxu0
  %2444 = vmatprep.mubr.bf16.mxu0 0
  %2445 = vmatmul.mubr.bf16.gmra.mrb[0].mxu0 %v1503
  %v2446 = vpop.f32.mrb[0].mxu0
  %v2447 = vadd.f32 0.0, %v2446
  %v2448 = vpop.f32.mrb[0].mxu0
  %v2449 = vpop.f32.mrb[0].mxu0
  %v2450 = vadd.f32 0.0, %v2449
  %v2451 = vpop.f32.mrb[0].mxu0
  %2452 = vmatprep.mubr.bf16.mxu0 0
  %2453 = vmatmul.mubr.bf16.gmra.mrb[0].mxu0 %v1506
  %v2454 = vpop.f32.mrb[0].mxu0
  %v2455 = vadd.f32 0.0, %v2454
  %v2456 = vpop.f32.mrb[0].mxu0
  %v2457 = vpop.f32.mrb[0].mxu0
  %v2458 = vadd.f32 0.0, %v2457
  %v2459 = vpop.f32.mrb[0].mxu0
  %2460 = vmatprep.mubr.bf16.mxu0 0
  %2461 = vmatmul.mubr.bf16.gmra.mrb[0].mxu0 %v2175
  %v2462 = vpop.f32.mrb[0].mxu0
  %v2463 = vadd.f32 0.0, %v2462
  %v2464 = vpop.f32.mrb[0].mxu0
  %v2465 = vpop.f32.mrb[0].mxu0
  %v2466 = vadd.f32 0.0, %v2465
  %v2467 = vpop.f32.mrb[0].mxu0
  %2468 = vdwg.mxu0
  %v2469 = vadd.f32 %v1849, %v2215
  %v2470 = vadd.f32 %v1852, %v2218
  %v2471 = vadd.f32 %v1857, %v2223
  %v2472 = vadd.f32 %v1860, %v2226
  %v2473 = vadd.f32 %v1865, %v2231
  %v2474 = vadd.f32 %v1868, %v2234
  %v2475 = vadd.f32 %v1873, %v2239
  %v2476 = vadd.f32 %v1876, %v2242
  %v2477 = vadd.f32 %v1881, %v2247
  %v2478 = vadd.f32 %v1884, %v2250
  %v2479 = vadd.f32 %v1889, %v2255
  %v2480 = vadd.f32 %v1892, %v2258
  %v2481 = vadd.f32 %v1897, %v2263
  %v2482 = vadd.f32 %v1900, %v2266
  %v2483 = vadd.f32 %v1905, %v2271
  %v2484 = vadd.f32 %v1908, %v2274
  %v2485 = vadd.f32 %v1913, %v2279
  %v2486 = vadd.f32 %v1916, %v2282
  %v2487 = vadd.f32 %v1921, %v2287
  %v2488 = vadd.f32 %v1924, %v2290
  %v2489 = vadd.f32 %v1929, %v2295
  %v2490 = vadd.f32 %v1932, %v2298
  %v2491 = vadd.f32 %v1937, %v2303
  %v2492 = vadd.f32 %v1940, %v2306
  %v2493 = vadd.f32 %v1945, %v2311
  %v2494 = vadd.f32 %v1948, %v2314
  %v2495 = vadd.f32 %v1953, %v2319
  %v2496 = vadd.f32 %v1956, %v2322
  %v2497 = vadd.f32 %v1961, %v2327
  %v2498 = vadd.f32 %v1964, %v2330
  %v2499 = vadd.f32 %v1969, %v2335
  %v2500 = vadd.f32 %v1972, %v2338
  %v2501 = vadd.f32 %v1977, %v2343
  %v2502 = vadd.f32 %v1980, %v2346
  %v2503 = vadd.f32 %v1985, %v2351
  %v2504 = vadd.f32 %v1988, %v2354
  %v2505 = vadd.f32 %v1993, %v2359
  %v2506 = vadd.f32 %v1996, %v2362
  %v2507 = vadd.f32 %v2001, %v2367
  %v2508 = vadd.f32 %v2004, %v2370
  %v2509 = vadd.f32 %v2009, %v2375
  %v2510 = vadd.f32 %v2012, %v2378
  %v2511 = vadd.f32 %v2017, %v2383
  %v2512 = vadd.f32 %v2020, %v2386
  %v2513 = vadd.f32 %v2025, %v2391
  %v2514 = vadd.f32 %v2028, %v2394
  %v2515 = vadd.f32 %v2033, %v2399
  %v2516 = vadd.f32 %v2036, %v2402
  %v2517 = vadd.f32 %v2041, %v2407
  %v2518 = vadd.f32 %v2044, %v2410
  %v2519 = vadd.f32 %v2049, %v2415
  %v2520 = vadd.f32 %v2052, %v2418
  %v2521 = vadd.f32 %v2057, %v2423
  %v2522 = vadd.f32 %v2060, %v2426
  %v2523 = vadd.f32 %v2065, %v2431
  %v2524 = vadd.f32 %v2068, %v2434
  %v2525 = vadd.f32 %v2073, %v2439
  %v2526 = vadd.f32 %v2076, %v2442
  %v2527 = vadd.f32 %v2081, %v2447
  %v2528 = vadd.f32 %v2084, %v2450
  %v2529 = vadd.f32 %v2089, %v2455
  %v2530 = vadd.f32 %v2092, %v2458
  %v2531 = vadd.f32 %v2097, %v2463
  %v2532 = vadd.f32 %v2100, %v2466
  %2533 = vst.msk [vmem:[#allocation3] sm:$0xff] %vm1244, 0.0
  %2534 = vst.msk [vmem:[#allocation3 + $0x8] sm:$0xff] %vm1244, 0.0
  %vm2535 = vcmask 58368
  %2536 = vst.msk [vmem:[#allocation3 + $0x10] sm:$0x3] %vm2535, 0.0
  %2537 = vst.msk [vmem:[#allocation3 + $0x1b0] sm:$0xff] %vm1244, 0.0
  %2538 = vst.msk [vmem:[#allocation3 + $0x1b8] sm:$0xff] %vm1244, 0.0
  %2539 = vst.msk [vmem:[#allocation3 + $0x1c0] sm:$0x3] %vm2535, 0.0
  %s2540 = scalar_lea.vmem [#allocation3], 408
  %2541 = vst.msk [vmem:[%s2540] sm:$0xff] %vm1244, 0.0
  %2542 = vst.msk [vmem:[%s2540 + $0x8] sm:$0xff] %vm1244, 0.0
  %2543 = vst.msk [vmem:[%s2540 + $0x10] sm:$0x3] %vm2535, 0.0
  %2544 = vst.msk [vmem:[%s2540 + $0x1b0] sm:$0xff] %vm1244, 0.0
  %2545 = vst.msk [vmem:[%s2540 + $0x1b8] sm:$0xff] %vm1244, 0.0
  %2546 = vst.msk [vmem:[%s2540 + $0x1c0] sm:$0x3] %vm2535, 0.0
  %vm2547 = vcmask 57344
  %2548 = vst.msk [vmem:[#allocation3] sm:$0x1] %vm2547, 0.0
  %2549 = vst.msk [vmem:[#allocation3 + $0x18] sm:$0x1] %vm2547, 0.0
  %2550 = vst.msk [vmem:[#allocation3 + $0x30] sm:$0x1] %vm2547, 0.0
  %2551 = vst.msk [vmem:[#allocation3 + $0x48] sm:$0x1] %vm2547, 0.0
  %2552 = vst.msk [vmem:[#allocation3 + $0x60] sm:$0x1] %vm2547, 0.0
  %2553 = vst.msk [vmem:[#allocation3 + $0x78] sm:$0x1] %vm2547, 0.0
  %2554 = vst.msk [vmem:[#allocation3 + $0x90] sm:$0x1] %vm2547, 0.0
  %2555 = vst.msk [vmem:[#allocation3 + $0xa8] sm:$0x1] %vm2547, 0.0
  %2556 = vst.msk [vmem:[#allocation3 + $0xc0] sm:$0x1] %vm2547, 0.0
  %2557 = vst.msk [vmem:[#allocation3 + $0xd8] sm:$0x1] %vm2547, 0.0
  %2558 = vst.msk [vmem:[#allocation3 + $0xf0] sm:$0x1] %vm2547, 0.0
  %2559 = vst.msk [vmem:[#allocation3 + $0x108] sm:$0x1] %vm2547, 0.0
  %2560 = vst.msk [vmem:[#allocation3 + $0x120] sm:$0x1] %vm2547, 0.0
  %2561 = vst.msk [vmem:[#allocation3 + $0x138] sm:$0x1] %vm2547, 0.0
  %2562 = vst.msk [vmem:[#allocation3 + $0x150] sm:$0x1] %vm2547, 0.0
  %2563 = vst.msk [vmem:[#allocation3 + $0x168] sm:$0x1] %vm2547, 0.0
  %2564 = vst.msk [vmem:[#allocation3 + $0x180] sm:$0x1] %vm2547, 0.0
  %2565 = vst.msk [vmem:[#allocation3 + $0x198] sm:$0x1] %vm2547, 0.0
  %2566 = vst.msk [vmem:[#allocation3 + $0x1b0] sm:$0x1] %vm2547, 0.0
  %2567 = vst.msk [vmem:[#allocation3 + $0x1c8] sm:$0x1] %vm2547, 0.0
  %2568 = vst.msk [vmem:[#allocation3 + $0x1e0] sm:$0x1] %vm2547, 0.0
  %2569 = vst.msk [vmem:[#allocation3 + $0x1f8] sm:$0x1] %vm2547, 0.0
  %2570 = vst.msk [vmem:[#allocation3 + $0x210] sm:$0x1] %vm2547, 0.0
  %2571 = vst.msk [vmem:[#allocation3 + $0x228] sm:$0x1] %vm2547, 0.0
  %2572 = vst.msk [vmem:[#allocation3 + $0x240] sm:$0x1] %vm2547, 0.0
  %2573 = vst.msk [vmem:[#allocation3 + $0x258] sm:$0x1] %vm2547, 0.0
  %2574 = vst.msk [vmem:[#allocation3 + $0x270] sm:$0x1] %vm2547, 0.0
  %2575 = vst.msk [vmem:[#allocation3 + $0x288] sm:$0x1] %vm2547, 0.0
  %2576 = vst.msk [vmem:[#allocation3 + $0x2a0] sm:$0x1] %vm2547, 0.0
  %2577 = vst.msk [vmem:[#allocation3 + $0x2b8] sm:$0x1] %vm2547, 0.0
  %2578 = vst.msk [vmem:[#allocation3 + $0x2d0] sm:$0x1] %vm2547, 0.0
  %2579 = vst.msk [vmem:[#allocation3 + $0x2e8] sm:$0x1] %vm2547, 0.0
  %2580 = vst.msk [vmem:[#allocation3 + $0x300] sm:$0x1] %vm2547, 0.0
  %2581 = vst.msk [vmem:[#allocation3 + $0x318] sm:$0x1] %vm2547, 0.0
  %2582 = vst.msk [vmem:[#allocation3 + $0x330] sm:$0x1] %vm2547, 0.0
  %2583 = vst.msk [vmem:[#allocation3 + $0x348] sm:$0x1] %vm2547, 0.0
  %2584 = vst.msk [vmem:[#allocation3 + $0x11] sm:$0x1] %vm2547, 0.0
  %2585 = vst.msk [vmem:[#allocation3 + $0x29] sm:$0x1] %vm2547, 0.0
  %2586 = vst.msk [vmem:[#allocation3 + $0x41] sm:$0x1] %vm2547, 0.0
  %2587 = vst.msk [vmem:[#allocation3 + $0x59] sm:$0x1] %vm2547, 0.0
  %2588 = vst.msk [vmem:[#allocation3 + $0x71] sm:$0x1] %vm2547, 0.0
  %2589 = vst.msk [vmem:[#allocation3 + $0x89] sm:$0x1] %vm2547, 0.0
  %2590 = vst.msk [vmem:[#allocation3 + $0xa1] sm:$0x1] %vm2547, 0.0
  %2591 = vst.msk [vmem:[#allocation3 + $0xb9] sm:$0x1] %vm2547, 0.0
  %2592 = vst.msk [vmem:[#allocation3 + $0xd1] sm:$0x1] %vm2547, 0.0
  %2593 = vst.msk [vmem:[#allocation3 + $0xe9] sm:$0x1] %vm2547, 0.0
  %2594 = vst.msk [vmem:[#allocation3 + $0x101] sm:$0x1] %vm2547, 0.0
  %2595 = vst.msk [vmem:[#allocation3 + $0x119] sm:$0x1] %vm2547, 0.0
  %2596 = vst.msk [vmem:[#allocation3 + $0x131] sm:$0x1] %vm2547, 0.0
  %2597 = vst.msk [vmem:[#allocation3 + $0x149] sm:$0x1] %vm2547, 0.0
  %2598 = vst.msk [vmem:[#allocation3 + $0x161] sm:$0x1] %vm2547, 0.0
  %2599 = vst.msk [vmem:[#allocation3 + $0x179] sm:$0x1] %vm2547, 0.0
  %2600 = vst.msk [vmem:[#allocation3 + $0x191] sm:$0x1] %vm2547, 0.0
  %2601 = vst.msk [vmem:[#allocation3 + $0x1a9] sm:$0x1] %vm2547, 0.0
  %2602 = vst.msk [vmem:[#allocation3 + $0x1c1] sm:$0x1] %vm2547, 0.0
  %2603 = vst.msk [vmem:[#allocation3 + $0x1d9] sm:$0x1] %vm2547, 0.0
  %2604 = vst.msk [vmem:[#allocation3 + $0x1f1] sm:$0x1] %vm2547, 0.0
  %2605 = vst.msk [vmem:[#allocation3 + $0x209] sm:$0x1] %vm2547, 0.0
  %2606 = vst.msk [vmem:[#allocation3 + $0x221] sm:$0x1] %vm2547, 0.0
  %2607 = vst.msk [vmem:[#allocation3 + $0x239] sm:$0x1] %vm2547, 0.0
  %2608 = vst.msk [vmem:[#allocation3 + $0x251] sm:$0x1] %vm2547, 0.0
  %2609 = vst.msk [vmem:[#allocation3 + $0x269] sm:$0x1] %vm2547, 0.0
  %2610 = vst.msk [vmem:[#allocation3 + $0x281] sm:$0x1] %vm2547, 0.0
  %2611 = vst.msk [vmem:[#allocation3 + $0x299] sm:$0x1] %vm2547, 0.0
  %2612 = vst.msk [vmem:[#allocation3 + $0x2b1] sm:$0x1] %vm2547, 0.0
  %2613 = vst.msk [vmem:[#allocation3 + $0x2c9] sm:$0x1] %vm2547, 0.0
  %2614 = vst.msk [vmem:[#allocation3 + $0x2e1] sm:$0x1] %vm2547, 0.0
  %2615 = vst.msk [vmem:[#allocation3 + $0x2f9] sm:$0x1] %vm2547, 0.0
  %2616 = vst.msk [vmem:[#allocation3 + $0x311] sm:$0x1] %vm2547, 0.0
  %2617 = vst.msk [vmem:[#allocation3 + $0x329] sm:$0x1] %vm2547, 0.0
  %2618 = vst.msk [vmem:[#allocation3 + $0x341] sm:$0x1] %vm2547, 0.0
  %2619 = vst.msk [vmem:[#allocation3 + $0x359] sm:$0x1] %vm2547, 0.0
  %v2620 = vld [vmem:[%s4] sm:$0x1]
  %v2621 = vld [vmem:[%s5] sm:$0x1]
  %v2622 = vld [vmem:[%s6] sm:$0x1]
  %v2623 = vld [vmem:[%s1] sm:$0x1]
  %v2624 = vld [vmem:[%s1 + $0x1] sm:$0x1]
  %v2625 = vld [vmem:[%s2] sm:$0x1]
  %v2626 = vld [vmem:[%s2 + $0x1] sm:$0x1]
  %v2627 = vsel %vm1244, %v2469, 0.0
  %v2628 = vsel %vm1244, %v2470, 0.0
  %v2629 = vadd.f32 %v2627, %v2628
  %v2630 = vsel %vm1244, %v2471, 0.0
  %v2631 = vadd.f32 %v2629, %v2630
  %v2632 = vsel %vm1244, %v2472, 0.0
  %v2633 = vadd.f32 %v2631, %v2632
  %v2634 = vsel %vm1244, %v2473, 0.0
  %v2635 = vadd.f32 %v2633, %v2634
  %v2636 = vsel %vm1244, %v2474, 0.0
  %v2637 = vadd.f32 %v2635, %v2636
  %v2638 = vsel %vm1244, %v2475, 0.0
  %v2639 = vadd.f32 %v2637, %v2638
  %v2640 = vsel %vm1244, %v2476, 0.0
  %v2641 = vadd.f32 %v2639, %v2640
  %v2642 = vsel %vm1244, %v2477, 0.0
  %v2643 = vadd.f32 %v2641, %v2642
  %v2644 = vsel %vm1244, %v2478, 0.0
  %v2645 = vadd.f32 %v2643, %v2644
  %v2646 = vsel %vm1244, %v2479, 0.0
  %v2647 = vadd.f32 %v2645, %v2646
  %v2648 = vsel %vm1244, %v2480, 0.0
  %v2649 = vadd.f32 %v2647, %v2648
  %v2650 = vsel %vm1244, %v2481, 0.0
  %v2651 = vadd.f32 %v2649, %v2650
  %v2652 = vsel %vm1244, %v2482, 0.0
  %v2653 = vadd.f32 %v2651, %v2652
  %v2654 = vsel %vm1244, %v2483, 0.0
  %v2655 = vadd.f32 %v2653, %v2654
  %v2656 = vsel %vm1244, %v2484, 0.0
  %v2657 = vadd.f32 %v2655, %v2656
  %v2658 = vsel %vm1244, %v2485, 0.0
  %v2659 = vadd.f32 %v2657, %v2658
  %v2660 = vsel %vm1244, %v2486, 0.0
  %v2661 = vadd.f32 %v2659, %v2660
  %v2662 = vsel %vm1244, %v2487, 0.0
  %v2663 = vadd.f32 %v2661, %v2662
  %v2664 = vsel %vm1244, %v2488, 0.0
  %v2665 = vadd.f32 %v2663, %v2664
  %v2666 = vsel %vm1244, %v2489, 0.0
  %v2667 = vadd.f32 %v2665, %v2666
  %v2668 = vsel %vm1244, %v2490, 0.0
  %v2669 = vadd.f32 %v2667, %v2668
  %v2670 = vsel %vm1244, %v2491, 0.0
  %v2671 = vadd.f32 %v2669, %v2670
  %v2672 = vsel %vm1244, %v2492, 0.0
  %v2673 = vadd.f32 %v2671, %v2672
  %v2674 = vsel %vm1244, %v2493, 0.0
  %v2675 = vadd.f32 %v2673, %v2674
  %v2676 = vsel %vm1244, %v2494, 0.0
  %v2677 = vadd.f32 %v2675, %v2676
  %v2678 = vsel %vm1244, %v2495, 0.0
  %v2679 = vadd.f32 %v2677, %v2678
  %v2680 = vsel %vm1244, %v2496, 0.0
  %v2681 = vadd.f32 %v2679, %v2680
  %v2682 = vsel %vm1244, %v2497, 0.0
  %v2683 = vadd.f32 %v2681, %v2682
  %v2684 = vsel %vm1244, %v2498, 0.0
  %v2685 = vadd.f32 %v2683, %v2684
  %v2686 = vsel %vm1244, %v2499, 0.0
  %v2687 = vadd.f32 %v2685, %v2686
  %v2688 = vsel %vm1244, %v2500, 0.0
  %v2689 = vadd.f32 %v2687, %v2688
  %v2690 = vrot.slane %v2689, 4
  %v2691 = vadd.f32 %v2689, %v2690
  %v2692 = vrot.slane %v2691, 2
  %v2693 = vadd.f32 %v2691, %v2692
  %v2694 = vrot.slane %v2693, 1
  %v2695 = vadd.f32 %v2693, %v2694
  %v2696 = vrcp.pop 256.0
  %v2697 = vmul.f32 %v2695, %v2696
  %v2698 = vadd.f32 %v2697, %v2620
  %v2700 = vsel %vm1244, %v2698, 0
  %2702 = vmatprep.subr.mxu0 0.0
  %2703 = vmatpush1.msra.mxu0 %v51
  %2704 = vmatprep.subr.mxu0 0.0
  %2705 = vmatpush1.msra.mxu0 0.0
  %2706 = vmatprep.subr.mxu0 0.0
  %2707 = vmatpush1.msra.mxu0 0.0
  %2708 = vmatprep.subr.mxu0 0.0
  %2709 = vmatpush1.msra.mxu0 0.0
  %2710 = vmatprep.subr.mxu0 0.0
  %2711 = vmatpush1.msra.mxu0 0.0
  %2712 = vmatprep.subr.mxu0 0.0
  %2713 = vmatpush1.msra.mxu0 0.0
  %2714 = vmatprep.subr.mxu0 0.0
  %2715 = vmatpush1.msra.mxu0 0.0
  %2716 = vmatprep.subr.mxu0 0.0
  %2717 = vmatpush1.msra.mxu0 0.0
  %2718 = vmatprep.subr.mxu0 0.0
  %2719 = vmatpush1.msra.mxu0 0.0
  %2720 = vmatprep.subr.mxu0 0.0
  %2721 = vmatpush1.msra.mxu0 0.0
  %2722 = vmatprep.subr.mxu0 0.0
  %2723 = vmatpush1.msra.mxu0 0.0
  %2724 = vmatprep.subr.mxu0 0.0
  %2725 = vmatpush1.msra.mxu0 0.0
  %2726 = vmatprep.subr.mxu0 0.0
  %2727 = vmatpush1.msra.mxu0 0.0
  %2728 = vmatprep.subr.mxu0 0.0
  %2729 = vmatpush1.msra.mxu0 0.0
  %2730 = vmatprep.subr.mxu0 0.0
  %2731 = vmatpush1.msra.mxu0 0.0
  %2732 = vmatprep.subr.mxu0 0.0
  %2733 = vmatpush1.msra.mxu0 0.0
  %2734 = vmatprep.subr.mxu0 0.0
  %2735 = vmatpush1.msra.mxu0 0.0
  %2736 = vmatprep.subr.mxu0 0.0
  %2737 = vmatpush1.msra.mxu0 0.0
  %2738 = vmatprep.subr.mxu0 0.0
  %2739 = vmatpush1.msra.mxu0 0.0
  %2740 = vmatprep.subr.mxu0 0.0
  %2741 = vmatpush1.msra.mxu0 0.0
  %2742 = vmatprep.subr.mxu0 0.0
  %2743 = vmatpush1.msra.mxu0 0.0
  %2744 = vmatprep.subr.mxu0 0.0
  %2745 = vmatpush1.msra.mxu0 0.0
  %2746 = vmatprep.subr.mxu0 0.0
  %2747 = vmatpush1.msra.mxu0 0.0
  %2748 = vmatprep.subr.mxu0 0.0
  %2749 = vmatpush1.msra.mxu0 0.0
  %2750 = vmatprep.subr.mxu0 0.0
  %2751 = vmatpush1.msra.mxu0 0.0
  %2752 = vmatprep.subr.mxu0 0.0
  %2753 = vmatpush1.msra.mxu0 0.0
  %2754 = vmatprep.subr.mxu0 0.0
  %2755 = vmatpush1.msra.mxu0 0.0
  %2756 = vmatprep.subr.mxu0 0.0
  %2757 = vmatpush1.msra.mxu0 0.0
  %2758 = vmatprep.subr.mxu0 0.0
  %2759 = vmatpush1.msra.mxu0 0.0
  %2760 = vmatprep.subr.mxu0 0.0
  %2761 = vmatpush1.msra.mxu0 0.0
  %2762 = vmatprep.subr.mxu0 0.0
  %2763 = vmatpush1.msra.mxu0 0.0
  %2764 = vmatprep.subr.mxu0 0.0
  %2765 = vmatpush1.msra.mxu0 0.0
  %2766 = vmatprep.mubr.f32.mxu0 0.0
  %2767 = vmatmul.mubr.f32.gmra.mrb[0].mxu0 %v2700
  %v2768 = vpop.f32.mrb[0].mxu0
  %v2769 = vadd.f32 0.0, %v2768
  %v2770 = vpop.f32.mrb[0].mxu0
  %2771 = vdwg.mxu0
  %v2773 = vsel %vm1244, %v2769, 0
  %2775 = vmatprep.subr.mxu0 0.0
  %2776 = vmatpush1.msra.mxu0 %v52
  %2777 = vmatprep.subr.mxu0 0.0
  %2778 = vmatpush1.msra.mxu0 0.0
  %2779 = vmatprep.subr.mxu0 0.0
  %2780 = vmatpush1.msra.mxu0 0.0
  %2781 = vmatprep.subr.mxu0 0.0
  %2782 = vmatpush1.msra.mxu0 0.0
  %2783 = vmatprep.subr.mxu0 0.0
  %2784 = vmatpush1.msra.mxu0 0.0
  %2785 = vmatprep.subr.mxu0 0.0
  %2786 = vmatpush1.msra.mxu0 0.0
  %2787 = vmatprep.subr.mxu0 0.0
  %2788 = vmatpush1.msra.mxu0 0.0
  %2789 = vmatprep.subr.mxu0 0.0
  %2790 = vmatpush1.msra.mxu0 0.0
  %2791 = vmatprep.subr.mxu0 0.0
  %2792 = vmatpush1.msra.mxu0 0.0
  %2793 = vmatprep.subr.mxu0 0.0
  %2794 = vmatpush1.msra.mxu0 0.0
  %2795 = vmatprep.subr.mxu0 0.0
  %2796 = vmatpush1.msra.mxu0 0.0
  %2797 = vmatprep.subr.mxu0 0.0
  %2798 = vmatpush1.msra.mxu0 0.0
  %2799 = vmatprep.subr.mxu0 0.0
  %2800 = vmatpush1.msra.mxu0 0.0
  %2801 = vmatprep.subr.mxu0 0.0
  %2802 = vmatpush1.msra.mxu0 0.0
  %2803 = vmatprep.subr.mxu0 0.0
  %2804 = vmatpush1.msra.mxu0 0.0
  %2805 = vmatprep.subr.mxu0 0.0
  %2806 = vmatpush1.msra.mxu0 0.0
  %2807 = vmatprep.subr.mxu0 0.0
  %2808 = vmatpush1.msra.mxu0 0.0
  %2809 = vmatprep.subr.mxu0 0.0
  %2810 = vmatpush1.msra.mxu0 0.0
  %2811 = vmatprep.subr.mxu0 0.0
  %2812 = vmatpush1.msra.mxu0 0.0
  %2813 = vmatprep.subr.mxu0 0.0
  %2814 = vmatpush1.msra.mxu0 0.0
  %2815 = vmatprep.subr.mxu0 0.0
  %2816 = vmatpush1.msra.mxu0 0.0
  %2817 = vmatprep.subr.mxu0 0.0
  %2818 = vmatpush1.msra.mxu0 0.0
  %2819 = vmatprep.subr.mxu0 0.0
  %2820 = vmatpush1.msra.mxu0 0.0
  %2821 = vmatprep.subr.mxu0 0.0
  %2822 = vmatpush1.msra.mxu0 0.0
  %2823 = vmatprep.subr.mxu0 0.0
  %2824 = vmatpush1.msra.mxu0 0.0
  %2825 = vmatprep.subr.mxu0 0.0
  %2826 = vmatpush1.msra.mxu0 0.0
  %2827 = vmatprep.subr.mxu0 0.0
  %2828 = vmatpush1.msra.mxu0 0.0
  %2829 = vmatprep.subr.mxu0 0.0
  %2830 = vmatpush1.msra.mxu0 0.0
  %2831 = vmatprep.subr.mxu0 0.0
  %2832 = vmatpush1.msra.mxu0 0.0
  %2833 = vmatprep.subr.mxu0 0.0
  %2834 = vmatpush1.msra.mxu0 0.0
  %2835 = vmatprep.subr.mxu0 0.0
  %2836 = vmatpush1.msra.mxu0 0.0
  %2837 = vmatprep.subr.mxu0 0.0
  %2838 = vmatpush1.msra.mxu0 0.0
  %2839 = vmatprep.mubr.f32.mxu0 0.0
  %2840 = vmatmul.mubr.f32.gmra.mrb[0].mxu0 %v2773
  %v2841 = vpop.f32.mrb[0].mxu0
  %v2842 = vadd.f32 0.0, %v2841
  %v2843 = vpop.f32.mrb[0].mxu0
  %2844 = vdwg.mxu0
  %v2845 = vsub.f32 %v2620, %v2842
  %v2847 = vlaneseq
  %v2848 = vshrl.u32 %v2847, 7
  %v2849 = vsub.s32 0, %v2848
  %v2850 = vrot.slane %v2845, %v2849
  %v2852 = vadd.f32 %v2469, %v2850
  %v2853 = vadd.f32 %v2470, %v2850
  %v2854 = vadd.f32 %v2471, %v2850
  %v2855 = vadd.f32 %v2472, %v2850
  %v2856 = vadd.f32 %v2473, %v2850
  %v2857 = vadd.f32 %v2474, %v2850
  %v2858 = vadd.f32 %v2475, %v2850
  %v2859 = vadd.f32 %v2476, %v2850
  %v2860 = vadd.f32 %v2477, %v2850
  %v2861 = vadd.f32 %v2478, %v2850
  %v2862 = vadd.f32 %v2479, %v2850
  %v2863 = vadd.f32 %v2480, %v2850
  %v2864 = vadd.f32 %v2481, %v2850
  %v2865 = vadd.f32 %v2482, %v2850
  %v2866 = vadd.f32 %v2483, %v2850
  %v2867 = vadd.f32 %v2484, %v2850
  %v2868 = vadd.f32 %v2485, %v2850
  %v2869 = vadd.f32 %v2486, %v2850
  %v2870 = vadd.f32 %v2487, %v2850
  %v2871 = vadd.f32 %v2488, %v2850
  %v2872 = vadd.f32 %v2489, %v2850
  %v2873 = vadd.f32 %v2490, %v2850
  %v2874 = vadd.f32 %v2491, %v2850
  %v2875 = vadd.f32 %v2492, %v2850
  %v2876 = vadd.f32 %v2493, %v2850
  %v2877 = vadd.f32 %v2494, %v2850
  %v2878 = vadd.f32 %v2495, %v2850
  %v2879 = vadd.f32 %v2496, %v2850
  %v2880 = vadd.f32 %v2497, %v2850
  %v2881 = vadd.f32 %v2498, %v2850
  %v2882 = vadd.f32 %v2499, %v2850
  %v2883 = vadd.f32 %v2500, %v2850
  %v2884 = vmul.f32 %v2852, %v2852
  %v2885 = vmul.f32 %v2853, %v2853
  %v2886 = vmul.f32 %v2854, %v2854
  %v2887 = vmul.f32 %v2855, %v2855
  %v2888 = vmul.f32 %v2856, %v2856
  %v2889 = vmul.f32 %v2857, %v2857
  %v2890 = vmul.f32 %v2858, %v2858
  %v2891 = vmul.f32 %v2859, %v2859
  %v2892 = vmul.f32 %v2860, %v2860
  %v2893 = vmul.f32 %v2861, %v2861
  %v2894 = vmul.f32 %v2862, %v2862
  %v2895 = vmul.f32 %v2863, %v2863
  %v2896 = vmul.f32 %v2864, %v2864
  %v2897 = vmul.f32 %v2865, %v2865
  %v2898 = vmul.f32 %v2866, %v2866
  %v2899 = vmul.f32 %v2867, %v2867
  %v2900 = vmul.f32 %v2868, %v2868
  %v2901 = vmul.f32 %v2869, %v2869
  %v2902 = vmul.f32 %v2870, %v2870
  %v2903 = vmul.f32 %v2871, %v2871
  %v2904 = vmul.f32 %v2872, %v2872
  %v2905 = vmul.f32 %v2873, %v2873
  %v2906 = vmul.f32 %v2874, %v2874
  %v2907 = vmul.f32 %v2875, %v2875
  %v2908 = vmul.f32 %v2876, %v2876
  %v2909 = vmul.f32 %v2877, %v2877
  %v2910 = vmul.f32 %v2878, %v2878
  %v2911 = vmul.f32 %v2879, %v2879
  %v2912 = vmul.f32 %v2880, %v2880
  %v2913 = vmul.f32 %v2881, %v2881
  %v2914 = vmul.f32 %v2882, %v2882
  %v2915 = vmul.f32 %v2883, %v2883
  %v2916 = vsel %vm1244, %v2884, 0.0
  %v2917 = vsel %vm1244, %v2885, 0.0
  %v2918 = vadd.f32 %v2916, %v2917
  %v2919 = vsel %vm1244, %v2886, 0.0
  %v2920 = vadd.f32 %v2918, %v2919
  %v2921 = vsel %vm1244, %v2887, 0.0
  %v2922 = vadd.f32 %v2920, %v2921
  %v2923 = vsel %vm1244, %v2888, 0.0
  %v2924 = vadd.f32 %v2922, %v2923
  %v2925 = vsel %vm1244, %v2889, 0.0
  %v2926 = vadd.f32 %v2924, %v2925
  %v2927 = vsel %vm1244, %v2890, 0.0
  %v2928 = vadd.f32 %v2926, %v2927
  %v2929 = vsel %vm1244, %v2891, 0.0
  %v2930 = vadd.f32 %v2928, %v2929
  %v2931 = vsel %vm1244, %v2892, 0.0
  %v2932 = vadd.f32 %v2930, %v2931
  %v2933 = vsel %vm1244, %v2893, 0.0
  %v2934 = vadd.f32 %v2932, %v2933
  %v2935 = vsel %vm1244, %v2894, 0.0
  %v2936 = vadd.f32 %v2934, %v2935
  %v2937 = vsel %vm1244, %v2895, 0.0
  %v2938 = vadd.f32 %v2936, %v2937
  %v2939 = vsel %vm1244, %v2896, 0.0
  %v2940 = vadd.f32 %v2938, %v2939
  %v2941 = vsel %vm1244, %v2897, 0.0
  %v2942 = vadd.f32 %v2940, %v2941
  %v2943 = vsel %vm1244, %v2898, 0.0
  %v2944 = vadd.f32 %v2942, %v2943
  %v2945 = vsel %vm1244, %v2899, 0.0
  %v2946 = vadd.f32 %v2944, %v2945
  %v2947 = vsel %vm1244, %v2900, 0.0
  %v2948 = vadd.f32 %v2946, %v2947
  %v2949 = vsel %vm1244, %v2901, 0.0
  %v2950 = vadd.f32 %v2948, %v2949
  %v2951 = vsel %vm1244, %v2902, 0.0
  %v2952 = vadd.f32 %v2950, %v2951
  %v2953 = vsel %vm1244, %v2903, 0.0
  %v2954 = vadd.f32 %v2952, %v2953
  %v2955 = vsel %vm1244, %v2904, 0.0
  %v2956 = vadd.f32 %v2954, %v2955
  %v2957 = vsel %vm1244, %v2905, 0.0
  %v2958 = vadd.f32 %v2956, %v2957
  %v2959 = vsel %vm1244, %v2906, 0.0
  %v2960 = vadd.f32 %v2958, %v2959
  %v2961 = vsel %vm1244, %v2907, 0.0
  %v2962 = vadd.f32 %v2960, %v2961
  %v2963 = vsel %vm1244, %v2908, 0.0
  %v2964 = vadd.f32 %v2962, %v2963
  %v2965 = vsel %vm1244, %v2909, 0.0
  %v2966 = vadd.f32 %v2964, %v2965
  %v2967 = vsel %vm1244, %v2910, 0.0
  %v2968 = vadd.f32 %v2966, %v2967
  %v2969 = vsel %vm1244, %v2911, 0.0
  %v2970 = vadd.f32 %v2968, %v2969
  %v2971 = vsel %vm1244, %v2912, 0.0
  %v2972 = vadd.f32 %v2970, %v2971
  %v2973 = vsel %vm1244, %v2913, 0.0
  %v2974 = vadd.f32 %v2972, %v2973
  %v2975 = vsel %vm1244, %v2914, 0.0
  %v2976 = vadd.f32 %v2974, %v2975
  %v2977 = vsel %vm1244, %v2915, 0.0
  %v2978 = vadd.f32 %v2976, %v2977
  %v2979 = vrot.slane %v2978, 4
  %v2980 = vadd.f32 %v2978, %v2979
  %v2981 = vrot.slane %v2980, 2
  %v2982 = vadd.f32 %v2980, %v2981
  %v2983 = vrot.slane %v2982, 1
  %v2984 = vadd.f32 %v2982, %v2983
  %v2985 = vmul.f32 %v2984, %v2696
  %v2987 = vsel %vm1244, %v2985, 0
  %2989 = vmatprep.subr.mxu0 0.0
  %2990 = vmatpush1.msra.mxu0 %v51
  %2991 = vmatprep.subr.mxu0 0.0
  %2992 = vmatpush1.msra.mxu0 0.0
  %2993 = vmatprep.subr.mxu0 0.0
  %2994 = vmatpush1.msra.mxu0 0.0
  %2995 = vmatprep.subr.mxu0 0.0
  %2996 = vmatpush1.msra.mxu0 0.0
  %2997 = vmatprep.subr.mxu0 0.0
  %2998 = vmatpush1.msra.mxu0 0.0
  %2999 = vmatprep.subr.mxu0 0.0
  %3000 = vmatpush1.msra.mxu0 0.0
  %3001 = vmatprep.subr.mxu0 0.0
  %3002 = vmatpush1.msra.mxu0 0.0
  %3003 = vmatprep.subr.mxu0 0.0
  %3004 = vmatpush1.msra.mxu0 0.0
  %3005 = vmatprep.subr.mxu0 0.0
  %3006 = vmatpush1.msra.mxu0 0.0
  %3007 = vmatprep.subr.mxu0 0.0
  %3008 = vmatpush1.msra.mxu0 0.0
  %3009 = vmatprep.subr.mxu0 0.0
  %3010 = vmatpush1.msra.mxu0 0.0
  %3011 = vmatprep.subr.mxu0 0.0
  %3012 = vmatpush1.msra.mxu0 0.0
  %3013 = vmatprep.subr.mxu0 0.0
  %3014 = vmatpush1.msra.mxu0 0.0
  %3015 = vmatprep.subr.mxu0 0.0
  %3016 = vmatpush1.msra.mxu0 0.0
  %3017 = vmatprep.subr.mxu0 0.0
  %3018 = vmatpush1.msra.mxu0 0.0
  %3019 = vmatprep.subr.mxu0 0.0
  %3020 = vmatpush1.msra.mxu0 0.0
  %3021 = vmatprep.subr.mxu0 0.0
  %3022 = vmatpush1.msra.mxu0 0.0
  %3023 = vmatprep.subr.mxu0 0.0
  %3024 = vmatpush1.msra.mxu0 0.0
  %3025 = vmatprep.subr.mxu0 0.0
  %3026 = vmatpush1.msra.mxu0 0.0
  %3027 = vmatprep.subr.mxu0 0.0
  %3028 = vmatpush1.msra.mxu0 0.0
  %3029 = vmatprep.subr.mxu0 0.0
  %3030 = vmatpush1.msra.mxu0 0.0
  %3031 = vmatprep.subr.mxu0 0.0
  %3032 = vmatpush1.msra.mxu0 0.0
  %3033 = vmatprep.subr.mxu0 0.0
  %3034 = vmatpush1.msra.mxu0 0.0
  %3035 = vmatprep.subr.mxu0 0.0
  %3036 = vmatpush1.msra.mxu0 0.0
  %3037 = vmatprep.subr.mxu0 0.0
  %3038 = vmatpush1.msra.mxu0 0.0
  %3039 = vmatprep.subr.mxu0 0.0
  %3040 = vmatpush1.msra.mxu0 0.0
  %3041 = vmatprep.subr.mxu0 0.0
  %3042 = vmatpush1.msra.mxu0 0.0
  %3043 = vmatprep.subr.mxu0 0.0
  %3044 = vmatpush1.msra.mxu0 0.0
  %3045 = vmatprep.subr.mxu0 0.0
  %3046 = vmatpush1.msra.mxu0 0.0
  %3047 = vmatprep.subr.mxu0 0.0
  %3048 = vmatpush1.msra.mxu0 0.0
  %3049 = vmatprep.subr.mxu0 0.0
  %3050 = vmatpush1.msra.mxu0 0.0
  %3051 = vmatprep.subr.mxu0 0.0
  %3052 = vmatpush1.msra.mxu0 0.0
  %3053 = vmatprep.mubr.f32.mxu0 0.0
  %3054 = vmatmul.mubr.f32.gmra.mrb[0].mxu0 %v2987
  %v3055 = vpop.f32.mrb[0].mxu0
  %v3056 = vadd.f32 0.0, %v3055
  %v3057 = vpop.f32.mrb[0].mxu0
  %3058 = vdwg.mxu0
  %v3060 = vsel %vm1244, %v3056, 0
  %3062 = vmatprep.subr.mxu0 0.0
  %3063 = vmatpush1.msra.mxu0 %v52
  %3064 = vmatprep.subr.mxu0 0.0
  %3065 = vmatpush1.msra.mxu0 0.0
  %3066 = vmatprep.subr.mxu0 0.0
  %3067 = vmatpush1.msra.mxu0 0.0
  %3068 = vmatprep.subr.mxu0 0.0
  %3069 = vmatpush1.msra.mxu0 0.0
  %3070 = vmatprep.subr.mxu0 0.0
  %3071 = vmatpush1.msra.mxu0 0.0
  %3072 = vmatprep.subr.mxu0 0.0
  %3073 = vmatpush1.msra.mxu0 0.0
  %3074 = vmatprep.subr.mxu0 0.0
  %3075 = vmatpush1.msra.mxu0 0.0
  %3076 = vmatprep.subr.mxu0 0.0
  %3077 = vmatpush1.msra.mxu0 0.0
  %3078 = vmatprep.subr.mxu0 0.0
  %3079 = vmatpush1.msra.mxu0 0.0
  %3080 = vmatprep.subr.mxu0 0.0
  %3081 = vmatpush1.msra.mxu0 0.0
  %3082 = vmatprep.subr.mxu0 0.0
  %3083 = vmatpush1.msra.mxu0 0.0
  %3084 = vmatprep.subr.mxu0 0.0
  %3085 = vmatpush1.msra.mxu0 0.0
  %3086 = vmatprep.subr.mxu0 0.0
  %3087 = vmatpush1.msra.mxu0 0.0
  %3088 = vmatprep.subr.mxu0 0.0
  %3089 = vmatpush1.msra.mxu0 0.0
  %3090 = vmatprep.subr.mxu0 0.0
  %3091 = vmatpush1.msra.mxu0 0.0
  %3092 = vmatprep.subr.mxu0 0.0
  %3093 = vmatpush1.msra.mxu0 0.0
  %3094 = vmatprep.subr.mxu0 0.0
  %3095 = vmatpush1.msra.mxu0 0.0
  %3096 = vmatprep.subr.mxu0 0.0
  %3097 = vmatpush1.msra.mxu0 0.0
  %3098 = vmatprep.subr.mxu0 0.0
  %3099 = vmatpush1.msra.mxu0 0.0
  %3100 = vmatprep.subr.mxu0 0.0
  %3101 = vmatpush1.msra.mxu0 0.0
  %3102 = vmatprep.subr.mxu0 0.0
  %3103 = vmatpush1.msra.mxu0 0.0
  %3104 = vmatprep.subr.mxu0 0.0
  %3105 = vmatpush1.msra.mxu0 0.0
  %3106 = vmatprep.subr.mxu0 0.0
  %3107 = vmatpush1.msra.mxu0 0.0
  %3108 = vmatprep.subr.mxu0 0.0
  %3109 = vmatpush1.msra.mxu0 0.0
  %3110 = vmatprep.subr.mxu0 0.0
  %3111 = vmatpush1.msra.mxu0 0.0
  %3112 = vmatprep.subr.mxu0 0.0
  %3113 = vmatpush1.msra.mxu0 0.0
  %3114 = vmatprep.subr.mxu0 0.0
  %3115 = vmatpush1.msra.mxu0 0.0
  %3116 = vmatprep.subr.mxu0 0.0
  %3117 = vmatpush1.msra.mxu0 0.0
  %3118 = vmatprep.subr.mxu0 0.0
  %3119 = vmatpush1.msra.mxu0 0.0
  %3120 = vmatprep.subr.mxu0 0.0
  %3121 = vmatpush1.msra.mxu0 0.0
  %3122 = vmatprep.subr.mxu0 0.0
  %3123 = vmatpush1.msra.mxu0 0.0
  %3124 = vmatprep.subr.mxu0 0.0
  %3125 = vmatpush1.msra.mxu0 0.0
  %3126 = vmatprep.mubr.f32.mxu0 0.0
  %3127 = vmatmul.mubr.f32.gmra.mrb[0].mxu0 %v3060
  %v3128 = vpop.f32.mrb[0].mxu0
  %v3129 = vadd.f32 1e-05, %v3128
  %v3130 = vpop.f32.mrb[0].mxu0
  %3131 = vdwg.mxu0
  %v3132 = vrsqrt.pop %v3129
  %v3133 = vmul.f32 %v3132, %v2621
  %v3134 = vmul.f32 %v3133, %v2623
  %v3135 = vmul.f32 %v2622, %v2623
  %v3136 = vadd.f32 %v3135, %v2625
  %v3137 = vlaneseq
  %v3138 = vshrl.u32 %v3137, 7
  %v3139 = vsub.s32 0, %v3138
  %v3140 = vrot.slane %v3134, %v3139
  %v3141 = vmul.f32 %v2852, %v3140
  %v3142 = vmul.f32 %v2853, %v3140
  %v3143 = vmul.f32 %v2854, %v3140
  %v3144 = vmul.f32 %v2855, %v3140
  %v3145 = vmul.f32 %v2856, %v3140
  %v3146 = vmul.f32 %v2857, %v3140
  %v3147 = vmul.f32 %v2858, %v3140
  %v3148 = vmul.f32 %v2859, %v3140
  %v3149 = vmul.f32 %v2860, %v3140
  %v3150 = vmul.f32 %v2861, %v3140
  %v3151 = vmul.f32 %v2862, %v3140
  %v3152 = vmul.f32 %v2863, %v3140
  %v3153 = vmul.f32 %v2864, %v3140
  %v3154 = vmul.f32 %v2865, %v3140
  %v3155 = vmul.f32 %v2866, %v3140
  %v3156 = vmul.f32 %v2867, %v3140
  %v3157 = vmul.f32 %v2868, %v3140
  %v3158 = vmul.f32 %v2869, %v3140
  %v3159 = vmul.f32 %v2870, %v3140
  %v3160 = vmul.f32 %v2871, %v3140
  %v3161 = vmul.f32 %v2872, %v3140
  %v3162 = vmul.f32 %v2873, %v3140
  %v3163 = vmul.f32 %v2874, %v3140
  %v3164 = vmul.f32 %v2875, %v3140
  %v3165 = vmul.f32 %v2876, %v3140
  %v3166 = vmul.f32 %v2877, %v3140
  %v3167 = vmul.f32 %v2878, %v3140
  %v3168 = vmul.f32 %v2879, %v3140
  %v3169 = vmul.f32 %v2880, %v3140
  %v3170 = vmul.f32 %v2881, %v3140
  %v3171 = vmul.f32 %v2882, %v3140
  %v3172 = vmul.f32 %v2883, %v3140
  %v3174 = vlaneseq
  %v3175 = vshrl.u32 %v3174, 7
  %v3176 = vsub.s32 0, %v3175
  %v3177 = vrot.slane %v3136, %v3176
  %v3179 = vadd.f32 %v3141, %v3177
  %v3180 = vadd.f32 %v3142, %v3177
  %v3181 = vadd.f32 %v3143, %v3177
  %v3182 = vadd.f32 %v3144, %v3177
  %v3183 = vadd.f32 %v3145, %v3177
  %v3184 = vadd.f32 %v3146, %v3177
  %v3185 = vadd.f32 %v3147, %v3177
  %v3186 = vadd.f32 %v3148, %v3177
  %v3187 = vadd.f32 %v3149, %v3177
  %v3188 = vadd.f32 %v3150, %v3177
  %v3189 = vadd.f32 %v3151, %v3177
  %v3190 = vadd.f32 %v3152, %v3177
  %v3191 = vadd.f32 %v3153, %v3177
  %v3192 = vadd.f32 %v3154, %v3177
  %v3193 = vadd.f32 %v3155, %v3177
  %v3194 = vadd.f32 %v3156, %v3177
  %v3195 = vadd.f32 %v3157, %v3177
  %v3196 = vadd.f32 %v3158, %v3177
  %v3197 = vadd.f32 %v3159, %v3177
  %v3198 = vadd.f32 %v3160, %v3177
  %v3199 = vadd.f32 %v3161, %v3177
  %v3200 = vadd.f32 %v3162, %v3177
  %v3201 = vadd.f32 %v3163, %v3177
  %v3202 = vadd.f32 %v3164, %v3177
  %v3203 = vadd.f32 %v3165, %v3177
  %v3204 = vadd.f32 %v3166, %v3177
  %v3205 = vadd.f32 %v3167, %v3177
  %v3206 = vadd.f32 %v3168, %v3177
  %v3207 = vadd.f32 %v3169, %v3177
  %v3208 = vadd.f32 %v3170, %v3177
  %v3209 = vadd.f32 %v3171, %v3177
  %v3210 = vadd.f32 %v3172, %v3177
  %v3211 = vsub.f32 0.0, %v3179
  %v3212 = vsub.f32 0.0, %v3180
  %v3213 = vsub.f32 0.0, %v3181
  %v3214 = vsub.f32 0.0, %v3182
  %v3215 = vsub.f32 0.0, %v3183
  %v3216 = vsub.f32 0.0, %v3184
  %v3217 = vsub.f32 0.0, %v3185
  %v3218 = vsub.f32 0.0, %v3186
  %v3219 = vsub.f32 0.0, %v3187
  %v3220 = vsub.f32 0.0, %v3188
  %v3221 = vsub.f32 0.0, %v3189
  %v3222 = vsub.f32 0.0, %v3190
  %v3223 = vsub.f32 0.0, %v3191
  %v3224 = vsub.f32 0.0, %v3192
  %v3225 = vsub.f32 0.0, %v3193
  %v3226 = vsub.f32 0.0, %v3194
  %v3227 = vsub.f32 0.0, %v3195
  %v3228 = vsub.f32 0.0, %v3196
  %v3229 = vsub.f32 0.0, %v3197
  %v3230 = vsub.f32 0.0, %v3198
  %v3231 = vsub.f32 0.0, %v3199
  %v3232 = vsub.f32 0.0, %v3200
  %v3233 = vsub.f32 0.0, %v3201
  %v3234 = vsub.f32 0.0, %v3202
  %v3235 = vsub.f32 0.0, %v3203
  %v3236 = vsub.f32 0.0, %v3204
  %v3237 = vsub.f32 0.0, %v3205
  %v3238 = vsub.f32 0.0, %v3206
  %v3239 = vsub.f32 0.0, %v3207
  %v3240 = vsub.f32 0.0, %v3208
  %v3241 = vsub.f32 0.0, %v3209
  %v3242 = vsub.f32 0.0, %v3210
  %v3243 = vmul.f32 %v3211, 1.442695
  %v3244 = vpow.pop %v3243
  %v3245 = vmul.f32 %v3212, 1.442695
  %v3246 = vpow.pop %v3245
  %v3247 = vmul.f32 %v3213, 1.442695
  %v3248 = vpow.pop %v3247
  %v3249 = vmul.f32 %v3214, 1.442695
  %v3250 = vpow.pop %v3249
  %v3251 = vmul.f32 %v3215, 1.442695
  %v3252 = vpow.pop %v3251
  %v3253 = vmul.f32 %v3216, 1.442695
  %v3254 = vpow.pop %v3253
  %v3255 = vmul.f32 %v3217, 1.442695
  %v3256 = vpow.pop %v3255
  %v3257 = vmul.f32 %v3218, 1.442695
  %v3258 = vpow.pop %v3257
  %v3259 = vmul.f32 %v3219, 1.442695
  %v3260 = vpow.pop %v3259
  %v3261 = vmul.f32 %v3220, 1.442695
  %v3262 = vpow.pop %v3261
  %v3263 = vmul.f32 %v3221, 1.442695
  %v3264 = vpow.pop %v3263
  %v3265 = vmul.f32 %v3222, 1.442695
  %v3266 = vpow.pop %v3265
  %v3267 = vmul.f32 %v3223, 1.442695
  %v3268 = vpow.pop %v3267
  %v3269 = vmul.f32 %v3224, 1.442695
  %v3270 = vpow.pop %v3269
  %v3271 = vmul.f32 %v3225, 1.442695
  %v3272 = vpow.pop %v3271
  %v3273 = vmul.f32 %v3226, 1.442695
  %v3274 = vpow.pop %v3273
  %v3275 = vmul.f32 %v3227, 1.442695
  %v3276 = vpow.pop %v3275
  %v3277 = vmul.f32 %v3228, 1.442695
  %v3278 = vpow.pop %v3277
  %v3279 = vmul.f32 %v3229, 1.442695
  %v3280 = vpow.pop %v3279
  %v3281 = vmul.f32 %v3230, 1.442695
  %v3282 = vpow.pop %v3281
  %v3283 = vmul.f32 %v3231, 1.442695
  %v3284 = vpow.pop %v3283
  %v3285 = vmul.f32 %v3232, 1.442695
  %v3286 = vpow.pop %v3285
  %v3287 = vmul.f32 %v3233, 1.442695
  %v3288 = vpow.pop %v3287
  %v3289 = vmul.f32 %v3234, 1.442695
  %v3290 = vpow.pop %v3289
  %v3291 = vmul.f32 %v3235, 1.442695
  %v3292 = vpow.pop %v3291
  %v3293 = vmul.f32 %v3236, 1.442695
  %v3294 = vpow.pop %v3293
  %v3295 = vmul.f32 %v3237, 1.442695
  %v3296 = vpow.pop %v3295
  %v3297 = vmul.f32 %v3238, 1.442695
  %v3298 = vpow.pop %v3297
  %v3299 = vmul.f32 %v3239, 1.442695
  %v3300 = vpow.pop %v3299
  %v3301 = vmul.f32 %v3240, 1.442695
  %v3302 = vpow.pop %v3301
  %v3303 = vmul.f32 %v3241, 1.442695
  %v3304 = vpow.pop %v3303
  %v3305 = vmul.f32 %v3242, 1.442695
  %v3306 = vpow.pop %v3305
  %v3307 = vadd.f32 %v3244, 1.0
  %v3308 = vadd.f32 %v3246, 1.0
  %v3309 = vadd.f32 %v3248, 1.0
  %v3310 = vadd.f32 %v3250, 1.0
  %v3311 = vadd.f32 %v3252, 1.0
  %v3312 = vadd.f32 %v3254, 1.0
  %v3313 = vadd.f32 %v3256, 1.0
  %v3314 = vadd.f32 %v3258, 1.0
  %v3315 = vadd.f32 %v3260, 1.0
  %v3316 = vadd.f32 %v3262, 1.0
  %v3317 = vadd.f32 %v3264, 1.0
  %v3318 = vadd.f32 %v3266, 1.0
  %v3319 = vadd.f32 %v3268, 1.0
  %v3320 = vadd.f32 %v3270, 1.0
  %v3321 = vadd.f32 %v3272, 1.0
  %v3322 = vadd.f32 %v3274, 1.0
  %v3323 = vadd.f32 %v3276, 1.0
  %v3324 = vadd.f32 %v3278, 1.0
  %v3325 = vadd.f32 %v3280, 1.0
  %v3326 = vadd.f32 %v3282, 1.0
  %v3327 = vadd.f32 %v3284, 1.0
  %v3328 = vadd.f32 %v3286, 1.0
  %v3329 = vadd.f32 %v3288, 1.0
  %v3330 = vadd.f32 %v3290, 1.0
  %v3331 = vadd.f32 %v3292, 1.0
  %v3332 = vadd.f32 %v3294, 1.0
  %v3333 = vadd.f32 %v3296, 1.0
  %v3334 = vadd.f32 %v3298, 1.0
  %v3335 = vadd.f32 %v3300, 1.0
  %v3336 = vadd.f32 %v3302, 1.0
  %v3337 = vadd.f32 %v3304, 1.0
  %v3338 = vadd.f32 %v3306, 1.0
  %v3339 = vrcp.pop %v3307
  %v3340 = vmul.f32 1.0, %v3339
  %v3341 = vrcp.pop %v3308
  %v3342 = vmul.f32 1.0, %v3341
  %v3343 = vrcp.pop %v3309
  %v3344 = vmul.f32 1.0, %v3343
  %v3345 = vrcp.pop %v3310
  %v3346 = vmul.f32 1.0, %v3345
  %v3347 = vrcp.pop %v3311
  %v3348 = vmul.f32 1.0, %v3347
  %v3349 = vrcp.pop %v3312
  %v3350 = vmul.f32 1.0, %v3349
  %v3351 = vrcp.pop %v3313
  %v3352 = vmul.f32 1.0, %v3351
  %v3353 = vrcp.pop %v3314
  %v3354 = vmul.f32 1.0, %v3353
  %v3355 = vrcp.pop %v3315
  %v3356 = vmul.f32 1.0, %v3355
  %v3357 = vrcp.pop %v3316
  %v3358 = vmul.f32 1.0, %v3357
  %v3359 = vrcp.pop %v3317
  %v3360 = vmul.f32 1.0, %v3359
  %v3361 = vrcp.pop %v3318
  %v3362 = vmul.f32 1.0, %v3361
  %v3363 = vrcp.pop %v3319
  %v3364 = vmul.f32 1.0, %v3363
  %v3365 = vrcp.pop %v3320
  %v3366 = vmul.f32 1.0, %v3365
  %v3367 = vrcp.pop %v3321
  %v3368 = vmul.f32 1.0, %v3367
  %v3369 = vrcp.pop %v3322
  %v3370 = vmul.f32 1.0, %v3369
  %v3371 = vrcp.pop %v3323
  %v3372 = vmul.f32 1.0, %v3371
  %v3373 = vrcp.pop %v3324
  %v3374 = vmul.f32 1.0, %v3373
  %v3375 = vrcp.pop %v3325
  %v3376 = vmul.f32 1.0, %v3375
  %v3377 = vrcp.pop %v3326
  %v3378 = vmul.f32 1.0, %v3377
  %v3379 = vrcp.pop %v3327
  %v3380 = vmul.f32 1.0, %v3379
  %v3381 = vrcp.pop %v3328
  %v3382 = vmul.f32 1.0, %v3381
  %v3383 = vrcp.pop %v3329
  %v3384 = vmul.f32 1.0, %v3383
  %v3385 = vrcp.pop %v3330
  %v3386 = vmul.f32 1.0, %v3385
  %v3387 = vrcp.pop %v3331
  %v3388 = vmul.f32 1.0, %v3387
  %v3389 = vrcp.pop %v3332
  %v3390 = vmul.f32 1.0, %v3389
  %v3391 = vrcp.pop %v3333
  %v3392 = vmul.f32 1.0, %v3391
  %v3393 = vrcp.pop %v3334
  %v3394 = vmul.f32 1.0, %v3393
  %v3395 = vrcp.pop %v3335
  %v3396 = vmul.f32 1.0, %v3395
  %v3397 = vrcp.pop %v3336
  %v3398 = vmul.f32 1.0, %v3397
  %v3399 = vrcp.pop %v3337
  %v3400 = vmul.f32 1.0, %v3399
  %v3401 = vrcp.pop %v3338
  %v3402 = vmul.f32 1.0, %v3401
  %v3403 = vmul.f32 %v3179, %v3340
  %v3404 = vmul.f32 %v3180, %v3342
  %v3405 = vmul.f32 %v3181, %v3344
  %v3406 = vmul.f32 %v3182, %v3346
  %v3407 = vmul.f32 %v3183, %v3348
  %v3408 = vmul.f32 %v3184, %v3350
  %v3409 = vmul.f32 %v3185, %v3352
  %v3410 = vmul.f32 %v3186, %v3354
  %v3411 = vmul.f32 %v3187, %v3356
  %v3412 = vmul.f32 %v3188, %v3358
  %v3413 = vmul.f32 %v3189, %v3360
  %v3414 = vmul.f32 %v3190, %v3362
  %v3415 = vmul.f32 %v3191, %v3364
  %v3416 = vmul.f32 %v3192, %v3366
  %v3417 = vmul.f32 %v3193, %v3368
  %v3418 = vmul.f32 %v3194, %v3370
  %v3419 = vmul.f32 %v3195, %v3372
  %v3420 = vmul.f32 %v3196, %v3374
  %v3421 = vmul.f32 %v3197, %v3376
  %v3422 = vmul.f32 %v3198, %v3378
  %v3423 = vmul.f32 %v3199, %v3380
  %v3424 = vmul.f32 %v3200, %v3382
  %v3425 = vmul.f32 %v3201, %v3384
  %v3426 = vmul.f32 %v3202, %v3386
  %v3427 = vmul.f32 %v3203, %v3388
  %v3428 = vmul.f32 %v3204, %v3390
  %v3429 = vmul.f32 %v3205, %v3392
  %v3430 = vmul.f32 %v3206, %v3394
  %v3431 = vmul.f32 %v3207, %v3396
  %v3432 = vmul.f32 %v3208, %v3398
  %v3433 = vmul.f32 %v3209, %v3400
  %v3434 = vmul.f32 %v3210, %v3402
  %s3435 = scalar_lea.vmem [#allocation3], 24
  %3436 = vst.msk [vmem:[%s3435 + $0x1] sm:$0xff] %vm1244, %v3403
  %3437 = vst.msk [vmem:[%s3435 + $0x9] sm:$0xff] %vm1244, %v3404
  %3438 = vst.msk [vmem:[%s3435 + $0x19] sm:$0xff] %vm1244, %v3405
  %3439 = vst.msk [vmem:[%s3435 + $0x21] sm:$0xff] %vm1244, %v3406
  %3440 = vst.msk [vmem:[%s3435 + $0x31] sm:$0xff] %vm1244, %v3407
  %3441 = vst.msk [vmem:[%s3435 + $0x39] sm:$0xff] %vm1244, %v3408
  %3442 = vst.msk [vmem:[%s3435 + $0x49] sm:$0xff] %vm1244, %v3409
  %3443 = vst.msk [vmem:[%s3435 + $0x51] sm:$0xff] %vm1244, %v3410
  %3444 = vst.msk [vmem:[%s3435 + $0x61] sm:$0xff] %vm1244, %v3411
  %3445 = vst.msk [vmem:[%s3435 + $0x69] sm:$0xff] %vm1244, %v3412
  %3446 = vst.msk [vmem:[%s3435 + $0x79] sm:$0xff] %vm1244, %v3413
  %3447 = vst.msk [vmem:[%s3435 + $0x81] sm:$0xff] %vm1244, %v3414
  %3448 = vst.msk [vmem:[%s3435 + $0x91] sm:$0xff] %vm1244, %v3415
  %3449 = vst.msk [vmem:[%s3435 + $0x99] sm:$0xff] %vm1244, %v3416
  %3450 = vst.msk [vmem:[%s3435 + $0xa9] sm:$0xff] %vm1244, %v3417
  %3451 = vst.msk [vmem:[%s3435 + $0xb1] sm:$0xff] %vm1244, %v3418
  %3452 = vst.msk [vmem:[%s3435 + $0xc1] sm:$0xff] %vm1244, %v3419
  %3453 = vst.msk [vmem:[%s3435 + $0xc9] sm:$0xff] %vm1244, %v3420
  %3454 = vst.msk [vmem:[%s3435 + $0xd9] sm:$0xff] %vm1244, %v3421
  %3455 = vst.msk [vmem:[%s3435 + $0xe1] sm:$0xff] %vm1244, %v3422
  %3456 = vst.msk [vmem:[%s3435 + $0xf1] sm:$0xff] %vm1244, %v3423
  %3457 = vst.msk [vmem:[%s3435 + $0xf9] sm:$0xff] %vm1244, %v3424
  %3458 = vst.msk [vmem:[%s3435 + $0x109] sm:$0xff] %vm1244, %v3425
  %3459 = vst.msk [vmem:[%s3435 + $0x111] sm:$0xff] %vm1244, %v3426
  %3460 = vst.msk [vmem:[%s3435 + $0x121] sm:$0xff] %vm1244, %v3427
  %3461 = vst.msk [vmem:[%s3435 + $0x129] sm:$0xff] %vm1244, %v3428
  %3462 = vst.msk [vmem:[%s3435 + $0x139] sm:$0xff] %vm1244, %v3429
  %3463 = vst.msk [vmem:[%s3435 + $0x141] sm:$0xff] %vm1244, %v3430
  %3464 = vst.msk [vmem:[%s3435 + $0x151] sm:$0xff] %vm1244, %v3431
  %3465 = vst.msk [vmem:[%s3435 + $0x159] sm:$0xff] %vm1244, %v3432
  %3466 = vst.msk [vmem:[%s3435 + $0x169] sm:$0xff] %vm1244, %v3433
  %3467 = vst.msk [vmem:[%s3435 + $0x171] sm:$0xff] %vm1244, %v3434
  %v3468 = vsel %vm1244, %v2501, 0.0
  %v3469 = vsel %vm1244, %v2502, 0.0
  %v3470 = vadd.f32 %v3468, %v3469
  %v3471 = vsel %vm1244, %v2503, 0.0
  %v3472 = vadd.f32 %v3470, %v3471
  %v3473 = vsel %vm1244, %v2504, 0.0
  %v3474 = vadd.f32 %v3472, %v3473
  %v3475 = vsel %vm1244, %v2505, 0.0
  %v3476 = vadd.f32 %v3474, %v3475
  %v3477 = vsel %vm1244, %v2506, 0.0
  %v3478 = vadd.f32 %v3476, %v3477
  %v3479 = vsel %vm1244, %v2507, 0.0
  %v3480 = vadd.f32 %v3478, %v3479
  %v3481 = vsel %vm1244, %v2508, 0.0
  %v3482 = vadd.f32 %v3480, %v3481
  %v3483 = vsel %vm1244, %v2509, 0.0
  %v3484 = vadd.f32 %v3482, %v3483
  %v3485 = vsel %vm1244, %v2510, 0.0
  %v3486 = vadd.f32 %v3484, %v3485
  %v3487 = vsel %vm1244, %v2511, 0.0
  %v3488 = vadd.f32 %v3486, %v3487
  %v3489 = vsel %vm1244, %v2512, 0.0
  %v3490 = vadd.f32 %v3488, %v3489
  %v3491 = vsel %vm1244, %v2513, 0.0
  %v3492 = vadd.f32 %v3490, %v3491
  %v3493 = vsel %vm1244, %v2514, 0.0
  %v3494 = vadd.f32 %v3492, %v3493
  %v3495 = vsel %vm1244, %v2515, 0.0
  %v3496 = vadd.f32 %v3494, %v3495
  %v3497 = vsel %vm1244, %v2516, 0.0
  %v3498 = vadd.f32 %v3496, %v3497
  %v3499 = vsel %vm1244, %v2517, 0.0
  %v3500 = vadd.f32 %v3498, %v3499
  %v3501 = vsel %vm1244, %v2518, 0.0
  %v3502 = vadd.f32 %v3500, %v3501
  %v3503 = vsel %vm1244, %v2519, 0.0
  %v3504 = vadd.f32 %v3502, %v3503
  %v3505 = vsel %vm1244, %v2520, 0.0
  %v3506 = vadd.f32 %v3504, %v3505
  %v3507 = vsel %vm1244, %v2521, 0.0
  %v3508 = vadd.f32 %v3506, %v3507
  %v3509 = vsel %vm1244, %v2522, 0.0
  %v3510 = vadd.f32 %v3508, %v3509
  %v3511 = vsel %vm1244, %v2523, 0.0
  %v3512 = vadd.f32 %v3510, %v3511
  %v3513 = vsel %vm1244, %v2524, 0.0
  %v3514 = vadd.f32 %v3512, %v3513
  %v3515 = vsel %vm1244, %v2525, 0.0
  %v3516 = vadd.f32 %v3514, %v3515
  %v3517 = vsel %vm1244, %v2526, 0.0
  %v3518 = vadd.f32 %v3516, %v3517
  %v3519 = vsel %vm1244, %v2527, 0.0
  %v3520 = vadd.f32 %v3518, %v3519
  %v3521 = vsel %vm1244, %v2528, 0.0
  %v3522 = vadd.f32 %v3520, %v3521
  %v3523 = vsel %vm1244, %v2529, 0.0
  %v3524 = vadd.f32 %v3522, %v3523
  %v3525 = vsel %vm1244, %v2530, 0.0
  %v3526 = vadd.f32 %v3524, %v3525
  %v3527 = vsel %vm1244, %v2531, 0.0
  %v3528 = vadd.f32 %v3526, %v3527
  %v3529 = vsel %vm1244, %v2532, 0.0
  %v3530 = vadd.f32 %v3528, %v3529
  %v3531 = vrot.slane %v3530, 4
  %v3532 = vadd.f32 %v3530, %v3531
  %v3533 = vrot.slane %v3532, 2
  %v3534 = vadd.f32 %v3532, %v3533
  %v3535 = vrot.slane %v3534, 1
  %v3536 = vadd.f32 %v3534, %v3535
  %v3537 = vmul.f32 %v3536, %v2696
  %v3538 = vadd.f32 %v3537, %v2620
  %v3540 = vsel %vm1244, %v3538, 0
  %3542 = vmatprep.subr.mxu0 0.0
  %3543 = vmatpush1.msra.mxu0 %v51
  %3544 = vmatprep.subr.mxu0 0.0
  %3545 = vmatpush1.msra.mxu0 0.0
  %3546 = vmatprep.subr.mxu0 0.0
  %3547 = vmatpush1.msra.mxu0 0.0
  %3548 = vmatprep.subr.mxu0 0.0
  %3549 = vmatpush1.msra.mxu0 0.0
  %3550 = vmatprep.subr.mxu0 0.0
  %3551 = vmatpush1.msra.mxu0 0.0
  %3552 = vmatprep.subr.mxu0 0.0
  %3553 = vmatpush1.msra.mxu0 0.0
  %3554 = vmatprep.subr.mxu0 0.0
  %3555 = vmatpush1.msra.mxu0 0.0
  %3556 = vmatprep.subr.mxu0 0.0
  %3557 = vmatpush1.msra.mxu0 0.0
  %3558 = vmatprep.subr.mxu0 0.0
  %3559 = vmatpush1.msra.mxu0 0.0
  %3560 = vmatprep.subr.mxu0 0.0
  %3561 = vmatpush1.msra.mxu0 0.0
  %3562 = vmatprep.subr.mxu0 0.0
  %3563 = vmatpush1.msra.mxu0 0.0
  %3564 = vmatprep.subr.mxu0 0.0
  %3565 = vmatpush1.msra.mxu0 0.0
  %3566 = vmatprep.subr.mxu0 0.0
  %3567 = vmatpush1.msra.mxu0 0.0
  %3568 = vmatprep.subr.mxu0 0.0
  %3569 = vmatpush1.msra.mxu0 0.0
  %3570 = vmatprep.subr.mxu0 0.0
  %3571 = vmatpush1.msra.mxu0 0.0
  %3572 = vmatprep.subr.mxu0 0.0
  %3573 = vmatpush1.msra.mxu0 0.0
  %3574 = vmatprep.subr.mxu0 0.0
  %3575 = vmatpush1.msra.mxu0 0.0
  %3576 = vmatprep.subr.mxu0 0.0
  %3577 = vmatpush1.msra.mxu0 0.0
  %3578 = vmatprep.subr.mxu0 0.0
  %3579 = vmatpush1.msra.mxu0 0.0
  %3580 = vmatprep.subr.mxu0 0.0
  %3581 = vmatpush1.msra.mxu0 0.0
  %3582 = vmatprep.subr.mxu0 0.0
  %3583 = vmatpush1.msra.mxu0 0.0
  %3584 = vmatprep.subr.mxu0 0.0
  %3585 = vmatpush1.msra.mxu0 0.0
  %3586 = vmatprep.subr.mxu0 0.0
  %3587 = vmatpush1.msra.mxu0 0.0
  %3588 = vmatprep.subr.mxu0 0.0
  %3589 = vmatpush1.msra.mxu0 0.0
  %3590 = vmatprep.subr.mxu0 0.0
  %3591 = vmatpush1.msra.mxu0 0.0
  %3592 = vmatprep.subr.mxu0 0.0
  %3593 = vmatpush1.msra.mxu0 0.0
  %3594 = vmatprep.subr.mxu0 0.0
  %3595 = vmatpush1.msra.mxu0 0.0
  %3596 = vmatprep.subr.mxu0 0.0
  %3597 = vmatpush1.msra.mxu0 0.0
  %3598 = vmatprep.subr.mxu0 0.0
  %3599 = vmatpush1.msra.mxu0 0.0
  %3600 = vmatprep.subr.mxu0 0.0
  %3601 = vmatpush1.msra.mxu0 0.0
  %3602 = vmatprep.subr.mxu0 0.0
  %3603 = vmatpush1.msra.mxu0 0.0
  %3604 = vmatprep.subr.mxu0 0.0
  %3605 = vmatpush1.msra.mxu0 0.0
  %3606 = vmatprep.mubr.f32.mxu0 0.0
  %3607 = vmatmul.mubr.f32.gmra.mrb[0].mxu0 %v3540
  %v3608 = vpop.f32.mrb[0].mxu0
  %v3609 = vadd.f32 0.0, %v3608
  %v3610 = vpop.f32.mrb[0].mxu0
  %3611 = vdwg.mxu0
  %v3613 = vsel %vm1244, %v3609, 0
  %3615 = vmatprep.subr.mxu0 0.0
  %3616 = vmatpush1.msra.mxu0 %v52
  %3617 = vmatprep.subr.mxu0 0.0
  %3618 = vmatpush1.msra.mxu0 0.0
  %3619 = vmatprep.subr.mxu0 0.0
  %3620 = vmatpush1.msra.mxu0 0.0
  %3621 = vmatprep.subr.mxu0 0.0
  %3622 = vmatpush1.msra.mxu0 0.0
  %3623 = vmatprep.subr.mxu0 0.0
  %3624 = vmatpush1.msra.mxu0 0.0
  %3625 = vmatprep.subr.mxu0 0.0
  %3626 = vmatpush1.msra.mxu0 0.0
  %3627 = vmatprep.subr.mxu0 0.0
  %3628 = vmatpush1.msra.mxu0 0.0
  %3629 = vmatprep.subr.mxu0 0.0
  %3630 = vmatpush1.msra.mxu0 0.0
  %3631 = vmatprep.subr.mxu0 0.0
  %3632 = vmatpush1.msra.mxu0 0.0
  %3633 = vmatprep.subr.mxu0 0.0
  %3634 = vmatpush1.msra.mxu0 0.0
  %3635 = vmatprep.subr.mxu0 0.0
  %3636 = vmatpush1.msra.mxu0 0.0
  %3637 = vmatprep.subr.mxu0 0.0
  %3638 = vmatpush1.msra.mxu0 0.0
  %3639 = vmatprep.subr.mxu0 0.0
  %3640 = vmatpush1.msra.mxu0 0.0
  %3641 = vmatprep.subr.mxu0 0.0
  %3642 = vmatpush1.msra.mxu0 0.0
  %3643 = vmatprep.subr.mxu0 0.0
  %3644 = vmatpush1.msra.mxu0 0.0
  %3645 = vmatprep.subr.mxu0 0.0
  %3646 = vmatpush1.msra.mxu0 0.0
  %3647 = vmatprep.subr.mxu0 0.0
  %3648 = vmatpush1.msra.mxu0 0.0
  %3649 = vmatprep.subr.mxu0 0.0
  %3650 = vmatpush1.msra.mxu0 0.0
  %3651 = vmatprep.subr.mxu0 0.0
  %3652 = vmatpush1.msra.mxu0 0.0
  %3653 = vmatprep.subr.mxu0 0.0
  %3654 = vmatpush1.msra.mxu0 0.0
  %3655 = vmatprep.subr.mxu0 0.0
  %3656 = vmatpush1.msra.mxu0 0.0
  %3657 = vmatprep.subr.mxu0 0.0
  %3658 = vmatpush1.msra.mxu0 0.0
  %3659 = vmatprep.subr.mxu0 0.0
  %3660 = vmatpush1.msra.mxu0 0.0
  %3661 = vmatprep.subr.mxu0 0.0
  %3662 = vmatpush1.msra.mxu0 0.0
  %3663 = vmatprep.subr.mxu0 0.0
  %3664 = vmatpush1.msra.mxu0 0.0
  %3665 = vmatprep.subr.mxu0 0.0
  %3666 = vmatpush1.msra.mxu0 0.0
  %3667 = vmatprep.subr.mxu0 0.0
  %3668 = vmatpush1.msra.mxu0 0.0
  %3669 = vmatprep.subr.mxu0 0.0
  %3670 = vmatpush1.msra.mxu0 0.0
  %3671 = vmatprep.subr.mxu0 0.0
  %3672 = vmatpush1.msra.mxu0 0.0
  %3673 = vmatprep.subr.mxu0 0.0
  %3674 = vmatpush1.msra.mxu0 0.0
  %3675 = vmatprep.subr.mxu0 0.0
  %3676 = vmatpush1.msra.mxu0 0.0
  %3677 = vmatprep.subr.mxu0 0.0
  %3678 = vmatpush1.msra.mxu0 0.0
  %3679 = vmatprep.mubr.f32.mxu0 0.0
  %3680 = vmatmul.mubr.f32.gmra.mrb[0].mxu0 %v3613
  %v3681 = vpop.f32.mrb[0].mxu0
  %v3682 = vadd.f32 0.0, %v3681
  %v3683 = vpop.f32.mrb[0].mxu0
  %3684 = vdwg.mxu0
  %v3685 = vsub.f32 %v2620, %v3682
  %v3687 = vlaneseq
  %v3688 = vshrl.u32 %v3687, 7
  %v3689 = vsub.s32 0, %v3688
  %v3690 = vrot.slane %v3685, %v3689
  %v3692 = vadd.f32 %v2501, %v3690
  %v3693 = vadd.f32 %v2502, %v3690
  %v3694 = vadd.f32 %v2503, %v3690
  %v3695 = vadd.f32 %v2504, %v3690
  %v3696 = vadd.f32 %v2505, %v3690
  %v3697 = vadd.f32 %v2506, %v3690
  %v3698 = vadd.f32 %v2507, %v3690
  %v3699 = vadd.f32 %v2508, %v3690
  %v3700 = vadd.f32 %v2509, %v3690
  %v3701 = vadd.f32 %v2510, %v3690
  %v3702 = vadd.f32 %v2511, %v3690
  %v3703 = vadd.f32 %v2512, %v3690
  %v3704 = vadd.f32 %v2513, %v3690
  %v3705 = vadd.f32 %v2514, %v3690
  %v3706 = vadd.f32 %v2515, %v3690
  %v3707 = vadd.f32 %v2516, %v3690
  %v3708 = vadd.f32 %v2517, %v3690
  %v3709 = vadd.f32 %v2518, %v3690
  %v3710 = vadd.f32 %v2519, %v3690
  %v3711 = vadd.f32 %v2520, %v3690
  %v3712 = vadd.f32 %v2521, %v3690
  %v3713 = vadd.f32 %v2522, %v3690
  %v3714 = vadd.f32 %v2523, %v3690
  %v3715 = vadd.f32 %v2524, %v3690
  %v3716 = vadd.f32 %v2525, %v3690
  %v3717 = vadd.f32 %v2526, %v3690
  %v3718 = vadd.f32 %v2527, %v3690
  %v3719 = vadd.f32 %v2528, %v3690
  %v3720 = vadd.f32 %v2529, %v3690
  %v3721 = vadd.f32 %v2530, %v3690
  %v3722 = vadd.f32 %v2531, %v3690
  %v3723 = vadd.f32 %v2532, %v3690
  %v3724 = vmul.f32 %v3692, %v3692
  %v3725 = vmul.f32 %v3693, %v3693
  %v3726 = vmul.f32 %v3694, %v3694
  %v3727 = vmul.f32 %v3695, %v3695
  %v3728 = vmul.f32 %v3696, %v3696
  %v3729 = vmul.f32 %v3697, %v3697
  %v3730 = vmul.f32 %v3698, %v3698
  %v3731 = vmul.f32 %v3699, %v3699
  %v3732 = vmul.f32 %v3700, %v3700
  %v3733 = vmul.f32 %v3701, %v3701
  %v3734 = vmul.f32 %v3702, %v3702
  %v3735 = vmul.f32 %v3703, %v3703
  %v3736 = vmul.f32 %v3704, %v3704
  %v3737 = vmul.f32 %v3705, %v3705
  %v3738 = vmul.f32 %v3706, %v3706
  %v3739 = vmul.f32 %v3707, %v3707
  %v3740 = vmul.f32 %v3708, %v3708
  %v3741 = vmul.f32 %v3709, %v3709
  %v3742 = vmul.f32 %v3710, %v3710
  %v3743 = vmul.f32 %v3711, %v3711
  %v3744 = vmul.f32 %v3712, %v3712
  %v3745 = vmul.f32 %v3713, %v3713
  %v3746 = vmul.f32 %v3714, %v3714
  %v3747 = vmul.f32 %v3715, %v3715
  %v3748 = vmul.f32 %v3716, %v3716
  %v3749 = vmul.f32 %v3717, %v3717
  %v3750 = vmul.f32 %v3718, %v3718
  %v3751 = vmul.f32 %v3719, %v3719
  %v3752 = vmul.f32 %v3720, %v3720
  %v3753 = vmul.f32 %v3721, %v3721
  %v3754 = vmul.f32 %v3722, %v3722
  %v3755 = vmul.f32 %v3723, %v3723
  %v3756 = vsel %vm1244, %v3724, 0.0
  %v3757 = vsel %vm1244, %v3725, 0.0
  %v3758 = vadd.f32 %v3756, %v3757
  %v3759 = vsel %vm1244, %v3726, 0.0
  %v3760 = vadd.f32 %v3758, %v3759
  %v3761 = vsel %vm1244, %v3727, 0.0
  %v3762 = vadd.f32 %v3760, %v3761
  %v3763 = vsel %vm1244, %v3728, 0.0
  %v3764 = vadd.f32 %v3762, %v3763
  %v3765 = vsel %vm1244, %v3729, 0.0
  %v3766 = vadd.f32 %v3764, %v3765
  %v3767 = vsel %vm1244, %v3730, 0.0
  %v3768 = vadd.f32 %v3766, %v3767
  %v3769 = vsel %vm1244, %v3731, 0.0
  %v3770 = vadd.f32 %v3768, %v3769
  %v3771 = vsel %vm1244, %v3732, 0.0
  %v3772 = vadd.f32 %v3770, %v3771
  %v3773 = vsel %vm1244, %v3733, 0.0
  %v3774 = vadd.f32 %v3772, %v3773
  %v3775 = vsel %vm1244, %v3734, 0.0
  %v3776 = vadd.f32 %v3774, %v3775
  %v3777 = vsel %vm1244, %v3735, 0.0
  %v3778 = vadd.f32 %v3776, %v3777
  %v3779 = vsel %vm1244, %v3736, 0.0
  %v3780 = vadd.f32 %v3778, %v3779
  %v3781 = vsel %vm1244, %v3737, 0.0
  %v3782 = vadd.f32 %v3780, %v3781
  %v3783 = vsel %vm1244, %v3738, 0.0
  %v3784 = vadd.f32 %v3782, %v3783
  %v3785 = vsel %vm1244, %v3739, 0.0
  %v3786 = vadd.f32 %v3784, %v3785
  %v3787 = vsel %vm1244, %v3740, 0.0
  %v3788 = vadd.f32 %v3786, %v3787
  %v3789 = vsel %vm1244, %v3741, 0.0
  %v3790 = vadd.f32 %v3788, %v3789
  %v3791 = vsel %vm1244, %v3742, 0.0
  %v3792 = vadd.f32 %v3790, %v3791
  %v3793 = vsel %vm1244, %v3743, 0.0
  %v3794 = vadd.f32 %v3792, %v3793
  %v3795 = vsel %vm1244, %v3744, 0.0
  %v3796 = vadd.f32 %v3794, %v3795
  %v3797 = vsel %vm1244, %v3745, 0.0
  %v3798 = vadd.f32 %v3796, %v3797
  %v3799 = vsel %vm1244, %v3746, 0.0
  %v3800 = vadd.f32 %v3798, %v3799
  %v3801 = vsel %vm1244, %v3747, 0.0
  %v3802 = vadd.f32 %v3800, %v3801
  %v3803 = vsel %vm1244, %v3748, 0.0
  %v3804 = vadd.f32 %v3802, %v3803
  %v3805 = vsel %vm1244, %v3749, 0.0
  %v3806 = vadd.f32 %v3804, %v3805
  %v3807 = vsel %vm1244, %v3750, 0.0
  %v3808 = vadd.f32 %v3806, %v3807
  %v3809 = vsel %vm1244, %v3751, 0.0
  %v3810 = vadd.f32 %v3808, %v3809
  %v3811 = vsel %vm1244, %v3752, 0.0
  %v3812 = vadd.f32 %v3810, %v3811
  %v3813 = vsel %vm1244, %v3753, 0.0
  %v3814 = vadd.f32 %v3812, %v3813
  %v3815 = vsel %vm1244, %v3754, 0.0
  %v3816 = vadd.f32 %v3814, %v3815
  %v3817 = vsel %vm1244, %v3755, 0.0
  %v3818 = vadd.f32 %v3816, %v3817
  %v3819 = vrot.slane %v3818, 4
  %v3820 = vadd.f32 %v3818, %v3819
  %v3821 = vrot.slane %v3820, 2
  %v3822 = vadd.f32 %v3820, %v3821
  %v3823 = vrot.slane %v3822, 1
  %v3824 = vadd.f32 %v3822, %v3823
  %v3825 = vmul.f32 %v3824, %v2696
  %v3827 = vsel %vm1244, %v3825, 0
  %3829 = vmatprep.subr.mxu0 0.0
  %3830 = vmatpush1.msra.mxu0 %v51
  %3831 = vmatprep.subr.mxu0 0.0
  %3832 = vmatpush1.msra.mxu0 0.0
  %3833 = vmatprep.subr.mxu0 0.0
  %3834 = vmatpush1.msra.mxu0 0.0
  %3835 = vmatprep.subr.mxu0 0.0
  %3836 = vmatpush1.msra.mxu0 0.0
  %3837 = vmatprep.subr.mxu0 0.0
  %3838 = vmatpush1.msra.mxu0 0.0
  %3839 = vmatprep.subr.mxu0 0.0
  %3840 = vmatpush1.msra.mxu0 0.0
  %3841 = vmatprep.subr.mxu0 0.0
  %3842 = vmatpush1.msra.mxu0 0.0
  %3843 = vmatprep.subr.mxu0 0.0
  %3844 = vmatpush1.msra.mxu0 0.0
  %3845 = vmatprep.subr.mxu0 0.0
  %3846 = vmatpush1.msra.mxu0 0.0
  %3847 = vmatprep.subr.mxu0 0.0
  %3848 = vmatpush1.msra.mxu0 0.0
  %3849 = vmatprep.subr.mxu0 0.0
  %3850 = vmatpush1.msra.mxu0 0.0
  %3851 = vmatprep.subr.mxu0 0.0
  %3852 = vmatpush1.msra.mxu0 0.0
  %3853 = vmatprep.subr.mxu0 0.0
  %3854 = vmatpush1.msra.mxu0 0.0
  %3855 = vmatprep.subr.mxu0 0.0
  %3856 = vmatpush1.msra.mxu0 0.0
  %3857 = vmatprep.subr.mxu0 0.0
  %3858 = vmatpush1.msra.mxu0 0.0
  %3859 = vmatprep.subr.mxu0 0.0
  %3860 = vmatpush1.msra.mxu0 0.0
  %3861 = vmatprep.subr.mxu0 0.0
  %3862 = vmatpush1.msra.mxu0 0.0
  %3863 = vmatprep.subr.mxu0 0.0
  %3864 = vmatpush1.msra.mxu0 0.0
  %3865 = vmatprep.subr.mxu0 0.0
  %3866 = vmatpush1.msra.mxu0 0.0
  %3867 = vmatprep.subr.mxu0 0.0
  %3868 = vmatpush1.msra.mxu0 0.0
  %3869 = vmatprep.subr.mxu0 0.0
  %3870 = vmatpush1.msra.mxu0 0.0
  %3871 = vmatprep.subr.mxu0 0.0
  %3872 = vmatpush1.msra.mxu0 0.0
  %3873 = vmatprep.subr.mxu0 0.0
  %3874 = vmatpush1.msra.mxu0 0.0
  %3875 = vmatprep.subr.mxu0 0.0
  %3876 = vmatpush1.msra.mxu0 0.0
  %3877 = vmatprep.subr.mxu0 0.0
  %3878 = vmatpush1.msra.mxu0 0.0
  %3879 = vmatprep.subr.mxu0 0.0
  %3880 = vmatpush1.msra.mxu0 0.0
  %3881 = vmatprep.subr.mxu0 0.0
  %3882 = vmatpush1.msra.mxu0 0.0
  %3883 = vmatprep.subr.mxu0 0.0
  %3884 = vmatpush1.msra.mxu0 0.0
  %3885 = vmatprep.subr.mxu0 0.0
  %3886 = vmatpush1.msra.mxu0 0.0
  %3887 = vmatprep.subr.mxu0 0.0
  %3888 = vmatpush1.msra.mxu0 0.0
  %3889 = vmatprep.subr.mxu0 0.0
  %3890 = vmatpush1.msra.mxu0 0.0
  %3891 = vmatprep.subr.mxu0 0.0
  %3892 = vmatpush1.msra.mxu0 0.0
  %3893 = vmatprep.mubr.f32.mxu0 0.0
  %3894 = vmatmul.mubr.f32.gmra.mrb[0].mxu0 %v3827
  %v3895 = vpop.f32.mrb[0].mxu0
  %v3896 = vadd.f32 0.0, %v3895
  %v3897 = vpop.f32.mrb[0].mxu0
  %3898 = vdwg.mxu0
  %v3900 = vsel %vm1244, %v3896, 0
  %3902 = vmatprep.subr.mxu0 0.0
  %3903 = vmatpush1.msra.mxu0 %v52
  %3904 = vmatprep.subr.mxu0 0.0
  %3905 = vmatpush1.msra.mxu0 0.0
  %3906 = vmatprep.subr.mxu0 0.0
  %3907 = vmatpush1.msra.mxu0 0.0
  %3908 = vmatprep.subr.mxu0 0.0
  %3909 = vmatpush1.msra.mxu0 0.0
  %3910 = vmatprep.subr.mxu0 0.0
  %3911 = vmatpush1.msra.mxu0 0.0
  %3912 = vmatprep.subr.mxu0 0.0
  %3913 = vmatpush1.msra.mxu0 0.0
  %3914 = vmatprep.subr.mxu0 0.0
  %3915 = vmatpush1.msra.mxu0 0.0
  %3916 = vmatprep.subr.mxu0 0.0
  %3917 = vmatpush1.msra.mxu0 0.0
  %3918 = vmatprep.subr.mxu0 0.0
  %3919 = vmatpush1.msra.mxu0 0.0
  %3920 = vmatprep.subr.mxu0 0.0
  %3921 = vmatpush1.msra.mxu0 0.0
  %3922 = vmatprep.subr.mxu0 0.0
  %3923 = vmatpush1.msra.mxu0 0.0
  %3924 = vmatprep.subr.mxu0 0.0
  %3925 = vmatpush1.msra.mxu0 0.0
  %3926 = vmatprep.subr.mxu0 0.0
  %3927 = vmatpush1.msra.mxu0 0.0
  %3928 = vmatprep.subr.mxu0 0.0
  %3929 = vmatpush1.msra.mxu0 0.0
  %3930 = vmatprep.subr.mxu0 0.0
  %3931 = vmatpush1.msra.mxu0 0.0
  %3932 = vmatprep.subr.mxu0 0.0
  %3933 = vmatpush1.msra.mxu0 0.0
  %3934 = vmatprep.subr.mxu0 0.0
  %3935 = vmatpush1.msra.mxu0 0.0
  %3936 = vmatprep.subr.mxu0 0.0
  %3937 = vmatpush1.msra.mxu0 0.0
  %3938 = vmatprep.subr.mxu0 0.0
  %3939 = vmatpush1.msra.mxu0 0.0
  %3940 = vmatprep.subr.mxu0 0.0
  %3941 = vmatpush1.msra.mxu0 0.0
  %3942 = vmatprep.subr.mxu0 0.0
  %3943 = vmatpush1.msra.mxu0 0.0
  %3944 = vmatprep.subr.mxu0 0.0
  %3945 = vmatpush1.msra.mxu0 0.0
  %3946 = vmatprep.subr.mxu0 0.0
  %3947 = vmatpush1.msra.mxu0 0.0
  %3948 = vmatprep.subr.mxu0 0.0
  %3949 = vmatpush1.msra.mxu0 0.0
  %3950 = vmatprep.subr.mxu0 0.0
  %3951 = vmatpush1.msra.mxu0 0.0
  %3952 = vmatprep.subr.mxu0 0.0
  %3953 = vmatpush1.msra.mxu0 0.0
  %3954 = vmatprep.subr.mxu0 0.0
  %3955 = vmatpush1.msra.mxu0 0.0
  %3956 = vmatprep.subr.mxu0 0.0
  %3957 = vmatpush1.msra.mxu0 0.0
  %3958 = vmatprep.subr.mxu0 0.0
  %3959 = vmatpush1.msra.mxu0 0.0
  %3960 = vmatprep.subr.mxu0 0.0
  %3961 = vmatpush1.msra.mxu0 0.0
  %3962 = vmatprep.subr.mxu0 0.0
  %3963 = vmatpush1.msra.mxu0 0.0
  %3964 = vmatprep.subr.mxu0 0.0
  %3965 = vmatpush1.msra.mxu0 0.0
  %3966 = vmatprep.mubr.f32.mxu0 0.0
  %3967 = vmatmul.mubr.f32.gmra.mrb[0].mxu0 %v3900
  %v3968 = vpop.f32.mrb[0].mxu0
  %v3969 = vadd.f32 1e-05, %v3968
  %v3970 = vpop.f32.mrb[0].mxu0
  %3971 = vdwg.mxu0
  %v3972 = vrsqrt.pop %v3969
  %v3973 = vmul.f32 %v3972, %v2621
  %v3974 = vmul.f32 %v3973, %v2624
  %v3975 = vmul.f32 %v2622, %v2624
  %v3976 = vadd.f32 %v3975, %v2626
  %v3977 = vlaneseq
  %v3978 = vshrl.u32 %v3977, 7
  %v3979 = vsub.s32 0, %v3978
  %v3980 = vrot.slane %v3974, %v3979
  %v3981 = vmul.f32 %v3692, %v3980
  %v3982 = vmul.f32 %v3693, %v3980
  %v3983 = vmul.f32 %v3694, %v3980
  %v3984 = vmul.f32 %v3695, %v3980
  %v3985 = vmul.f32 %v3696, %v3980
  %v3986 = vmul.f32 %v3697, %v3980
  %v3987 = vmul.f32 %v3698, %v3980
  %v3988 = vmul.f32 %v3699, %v3980
  %v3989 = vmul.f32 %v3700, %v3980
  %v3990 = vmul.f32 %v3701, %v3980
  %v3991 = vmul.f32 %v3702, %v3980
  %v3992 = vmul.f32 %v3703, %v3980
  %v3993 = vmul.f32 %v3704, %v3980
  %v3994 = vmul.f32 %v3705, %v3980
  %v3995 = vmul.f32 %v3706, %v3980
  %v3996 = vmul.f32 %v3707, %v3980
  %v3997 = vmul.f32 %v3708, %v3980
  %v3998 = vmul.f32 %v3709, %v3980
  %v3999 = vmul.f32 %v3710, %v3980
  %v4000 = vmul.f32 %v3711, %v3980
  %v4001 = vmul.f32 %v3712, %v3980
  %v4002 = vmul.f32 %v3713, %v3980
  %v4003 = vmul.f32 %v3714, %v3980
  %v4004 = vmul.f32 %v3715, %v3980
  %v4005 = vmul.f32 %v3716, %v3980
  %v4006 = vmul.f32 %v3717, %v3980
  %v4007 = vmul.f32 %v3718, %v3980
  %v4008 = vmul.f32 %v3719, %v3980
  %v4009 = vmul.f32 %v3720, %v3980
  %v4010 = vmul.f32 %v3721, %v3980
  %v4011 = vmul.f32 %v3722, %v3980
  %v4012 = vmul.f32 %v3723, %v3980
  %v4014 = vlaneseq
  %v4015 = vshrl.u32 %v4014, 7
  %v4016 = vsub.s32 0, %v4015
  %v4017 = vrot.slane %v3976, %v4016
  %v4019 = vadd.f32 %v3981, %v4017
  %v4020 = vadd.f32 %v3982, %v4017
  %v4021 = vadd.f32 %v3983, %v4017
  %v4022 = vadd.f32 %v3984, %v4017
  %v4023 = vadd.f32 %v3985, %v4017
  %v4024 = vadd.f32 %v3986, %v4017
  %v4025 = vadd.f32 %v3987, %v4017
  %v4026 = vadd.f32 %v3988, %v4017
  %v4027 = vadd.f32 %v3989, %v4017
  %v4028 = vadd.f32 %v3990, %v4017
  %v4029 = vadd.f32 %v3991, %v4017
  %v4030 = vadd.f32 %v3992, %v4017
  %v4031 = vadd.f32 %v3993, %v4017
  %v4032 = vadd.f32 %v3994, %v4017
  %v4033 = vadd.f32 %v3995, %v4017
  %v4034 = vadd.f32 %v3996, %v4017
  %v4035 = vadd.f32 %v3997, %v4017
  %v4036 = vadd.f32 %v3998, %v4017
  %v4037 = vadd.f32 %v3999, %v4017
  %v4038 = vadd.f32 %v4000, %v4017
  %v4039 = vadd.f32 %v4001, %v4017
  %v4040 = vadd.f32 %v4002, %v4017
  %v4041 = vadd.f32 %v4003, %v4017
  %v4042 = vadd.f32 %v4004, %v4017
  %v4043 = vadd.f32 %v4005, %v4017
  %v4044 = vadd.f32 %v4006, %v4017
  %v4045 = vadd.f32 %v4007, %v4017
  %v4046 = vadd.f32 %v4008, %v4017
  %v4047 = vadd.f32 %v4009, %v4017
  %v4048 = vadd.f32 %v4010, %v4017
  %v4049 = vadd.f32 %v4011, %v4017
  %v4050 = vadd.f32 %v4012, %v4017
  %v4051 = vsub.f32 0.0, %v4019
  %v4052 = vsub.f32 0.0, %v4020
  %v4053 = vsub.f32 0.0, %v4021
  %v4054 = vsub.f32 0.0, %v4022
  %v4055 = vsub.f32 0.0, %v4023
  %v4056 = vsub.f32 0.0, %v4024
  %v4057 = vsub.f32 0.0, %v4025
  %v4058 = vsub.f32 0.0, %v4026
  %v4059 = vsub.f32 0.0, %v4027
  %v4060 = vsub.f32 0.0, %v4028
  %v4061 = vsub.f32 0.0, %v4029
  %v4062 = vsub.f32 0.0, %v4030
  %v4063 = vsub.f32 0.0, %v4031
  %v4064 = vsub.f32 0.0, %v4032
  %v4065 = vsub.f32 0.0, %v4033
  %v4066 = vsub.f32 0.0, %v4034
  %v4067 = vsub.f32 0.0, %v4035
  %v4068 = vsub.f32 0.0, %v4036
  %v4069 = vsub.f32 0.0, %v4037
  %v4070 = vsub.f32 0.0, %v4038
  %v4071 = vsub.f32 0.0, %v4039
  %v4072 = vsub.f32 0.0, %v4040
  %v4073 = vsub.f32 0.0, %v4041
  %v4074 = vsub.f32 0.0, %v4042
  %v4075 = vsub.f32 0.0, %v4043
  %v4076 = vsub.f32 0.0, %v4044
  %v4077 = vsub.f32 0.0, %v4045
  %v4078 = vsub.f32 0.0, %v4046
  %v4079 = vsub.f32 0.0, %v4047
  %v4080 = vsub.f32 0.0, %v4048
  %v4081 = vsub.f32 0.0, %v4049
  %v4082 = vsub.f32 0.0, %v4050
  %v4083 = vmul.f32 %v4051, 1.442695
  %v4084 = vpow.pop %v4083
  %v4085 = vmul.f32 %v4052, 1.442695
  %v4086 = vpow.pop %v4085
  %v4087 = vmul.f32 %v4053, 1.442695
  %v4088 = vpow.pop %v4087
  %v4089 = vmul.f32 %v4054, 1.442695
  %v4090 = vpow.pop %v4089
  %v4091 = vmul.f32 %v4055, 1.442695
  %v4092 = vpow.pop %v4091
  %v4093 = vmul.f32 %v4056, 1.442695
  %v4094 = vpow.pop %v4093
  %v4095 = vmul.f32 %v4057, 1.442695
  %v4096 = vpow.pop %v4095
  %v4097 = vmul.f32 %v4058, 1.442695
  %v4098 = vpow.pop %v4097
  %v4099 = vmul.f32 %v4059, 1.442695
  %v4100 = vpow.pop %v4099
  %v4101 = vmul.f32 %v4060, 1.442695
  %v4102 = vpow.pop %v4101
  %v4103 = vmul.f32 %v4061, 1.442695
  %v4104 = vpow.pop %v4103
  %v4105 = vmul.f32 %v4062, 1.442695
  %v4106 = vpow.pop %v4105
  %v4107 = vmul.f32 %v4063, 1.442695
  %v4108 = vpow.pop %v4107
  %v4109 = vmul.f32 %v4064, 1.442695
  %v4110 = vpow.pop %v4109
  %v4111 = vmul.f32 %v4065, 1.442695
  %v4112 = vpow.pop %v4111
  %v4113 = vmul.f32 %v4066, 1.442695
  %v4114 = vpow.pop %v4113
  %v4115 = vmul.f32 %v4067, 1.442695
  %v4116 = vpow.pop %v4115
  %v4117 = vmul.f32 %v4068, 1.442695
  %v4118 = vpow.pop %v4117
  %v4119 = vmul.f32 %v4069, 1.442695
  %v4120 = vpow.pop %v4119
  %v4121 = vmul.f32 %v4070, 1.442695
  %v4122 = vpow.pop %v4121
  %v4123 = vmul.f32 %v4071, 1.442695
  %v4124 = vpow.pop %v4123
  %v4125 = vmul.f32 %v4072, 1.442695
  %v4126 = vpow.pop %v4125
  %v4127 = vmul.f32 %v4073, 1.442695
  %v4128 = vpow.pop %v4127
  %v4129 = vmul.f32 %v4074, 1.442695
  %v4130 = vpow.pop %v4129
  %v4131 = vmul.f32 %v4075, 1.442695
  %v4132 = vpow.pop %v4131
  %v4133 = vmul.f32 %v4076, 1.442695
  %v4134 = vpow.pop %v4133
  %v4135 = vmul.f32 %v4077, 1.442695
  %v4136 = vpow.pop %v4135
  %v4137 = vmul.f32 %v4078, 1.442695
  %v4138 = vpow.pop %v4137
  %v4139 = vmul.f32 %v4079, 1.442695
  %v4140 = vpow.pop %v4139
  %v4141 = vmul.f32 %v4080, 1.442695
  %v4142 = vpow.pop %v4141
  %v4143 = vmul.f32 %v4081, 1.442695
  %v4144 = vpow.pop %v4143
  %v4145 = vmul.f32 %v4082, 1.442695
  %v4146 = vpow.pop %v4145
  %v4147 = vadd.f32 %v4084, 1.0
  %v4148 = vadd.f32 %v4086, 1.0
  %v4149 = vadd.f32 %v4088, 1.0
  %v4150 = vadd.f32 %v4090, 1.0
  %v4151 = vadd.f32 %v4092, 1.0
  %v4152 = vadd.f32 %v4094, 1.0
  %v4153 = vadd.f32 %v4096, 1.0
  %v4154 = vadd.f32 %v4098, 1.0
  %v4155 = vadd.f32 %v4100, 1.0
  %v4156 = vadd.f32 %v4102, 1.0
  %v4157 = vadd.f32 %v4104, 1.0
  %v4158 = vadd.f32 %v4106, 1.0
  %v4159 = vadd.f32 %v4108, 1.0
  %v4160 = vadd.f32 %v4110, 1.0
  %v4161 = vadd.f32 %v4112, 1.0
  %v4162 = vadd.f32 %v4114, 1.0
  %v4163 = vadd.f32 %v4116, 1.0
  %v4164 = vadd.f32 %v4118, 1.0
  %v4165 = vadd.f32 %v4120, 1.0
  %v4166 = vadd.f32 %v4122, 1.0
  %v4167 = vadd.f32 %v4124, 1.0
  %v4168 = vadd.f32 %v4126, 1.0
  %v4169 = vadd.f32 %v4128, 1.0
  %v4170 = vadd.f32 %v4130, 1.0
  %v4171 = vadd.f32 %v4132, 1.0
  %v4172 = vadd.f32 %v4134, 1.0
  %v4173 = vadd.f32 %v4136, 1.0
  %v4174 = vadd.f32 %v4138, 1.0
  %v4175 = vadd.f32 %v4140, 1.0
  %v4176 = vadd.f32 %v4142, 1.0
  %v4177 = vadd.f32 %v4144, 1.0
  %v4178 = vadd.f32 %v4146, 1.0
  %v4179 = vrcp.pop %v4147
  %v4180 = vmul.f32 1.0, %v4179
  %v4181 = vrcp.pop %v4148
  %v4182 = vmul.f32 1.0, %v4181
  %v4183 = vrcp.pop %v4149
  %v4184 = vmul.f32 1.0, %v4183
  %v4185 = vrcp.pop %v4150
  %v4186 = vmul.f32 1.0, %v4185
  %v4187 = vrcp.pop %v4151
  %v4188 = vmul.f32 1.0, %v4187
  %v4189 = vrcp.pop %v4152
  %v4190 = vmul.f32 1.0, %v4189
  %v4191 = vrcp.pop %v4153
  %v4192 = vmul.f32 1.0, %v4191
  %v4193 = vrcp.pop %v4154
  %v4194 = vmul.f32 1.0, %v4193
  %v4195 = vrcp.pop %v4155
  %v4196 = vmul.f32 1.0, %v4195
  %v4197 = vrcp.pop %v4156
  %v4198 = vmul.f32 1.0, %v4197
  %v4199 = vrcp.pop %v4157
  %v4200 = vmul.f32 1.0, %v4199
  %v4201 = vrcp.pop %v4158
  %v4202 = vmul.f32 1.0, %v4201
  %v4203 = vrcp.pop %v4159
  %v4204 = vmul.f32 1.0, %v4203
  %v4205 = vrcp.pop %v4160
  %v4206 = vmul.f32 1.0, %v4205
  %v4207 = vrcp.pop %v4161
  %v4208 = vmul.f32 1.0, %v4207
  %v4209 = vrcp.pop %v4162
  %v4210 = vmul.f32 1.0, %v4209
  %v4211 = vrcp.pop %v4163
  %v4212 = vmul.f32 1.0, %v4211
  %v4213 = vrcp.pop %v4164
  %v4214 = vmul.f32 1.0, %v4213
  %v4215 = vrcp.pop %v4165
  %v4216 = vmul.f32 1.0, %v4215
  %v4217 = vrcp.pop %v4166
  %v4218 = vmul.f32 1.0, %v4217
  %v4219 = vrcp.pop %v4167
  %v4220 = vmul.f32 1.0, %v4219
  %v4221 = vrcp.pop %v4168
  %v4222 = vmul.f32 1.0, %v4221
  %v4223 = vrcp.pop %v4169
  %v4224 = vmul.f32 1.0, %v4223
  %v4225 = vrcp.pop %v4170
  %v4226 = vmul.f32 1.0, %v4225
  %v4227 = vrcp.pop %v4171
  %v4228 = vmul.f32 1.0, %v4227
  %v4229 = vrcp.pop %v4172
  %v4230 = vmul.f32 1.0, %v4229
  %v4231 = vrcp.pop %v4173
  %v4232 = vmul.f32 1.0, %v4231
  %v4233 = vrcp.pop %v4174
  %v4234 = vmul.f32 1.0, %v4233
  %v4235 = vrcp.pop %v4175
  %v4236 = vmul.f32 1.0, %v4235
  %v4237 = vrcp.pop %v4176
  %v4238 = vmul.f32 1.0, %v4237
  %v4239 = vrcp.pop %v4177
  %v4240 = vmul.f32 1.0, %v4239
  %v4241 = vrcp.pop %v4178
  %v4242 = vmul.f32 1.0, %v4241
  %v4243 = vmul.f32 %v4019, %v4180
  %v4244 = vmul.f32 %v4020, %v4182
  %v4245 = vmul.f32 %v4021, %v4184
  %v4246 = vmul.f32 %v4022, %v4186
  %v4247 = vmul.f32 %v4023, %v4188
  %v4248 = vmul.f32 %v4024, %v4190
  %v4249 = vmul.f32 %v4025, %v4192
  %v4250 = vmul.f32 %v4026, %v4194
  %v4251 = vmul.f32 %v4027, %v4196
  %v4252 = vmul.f32 %v4028, %v4198
  %v4253 = vmul.f32 %v4029, %v4200
  %v4254 = vmul.f32 %v4030, %v4202
  %v4255 = vmul.f32 %v4031, %v4204
  %v4256 = vmul.f32 %v4032, %v4206
  %v4257 = vmul.f32 %v4033, %v4208
  %v4258 = vmul.f32 %v4034, %v4210
  %v4259 = vmul.f32 %v4035, %v4212
  %v4260 = vmul.f32 %v4036, %v4214
  %v4261 = vmul.f32 %v4037, %v4216
  %v4262 = vmul.f32 %v4038, %v4218
  %v4263 = vmul.f32 %v4039, %v4220
  %v4264 = vmul.f32 %v4040, %v4222
  %v4265 = vmul.f32 %v4041, %v4224
  %v4266 = vmul.f32 %v4042, %v4226
  %v4267 = vmul.f32 %v4043, %v4228
  %v4268 = vmul.f32 %v4044, %v4230
  %v4269 = vmul.f32 %v4045, %v4232
  %v4270 = vmul.f32 %v4046, %v4234
  %v4271 = vmul.f32 %v4047, %v4236
  %v4272 = vmul.f32 %v4048, %v4238
  %v4273 = vmul.f32 %v4049, %v4240
  %v4274 = vmul.f32 %v4050, %v4242
  %s4275 = scalar_lea.vmem [#allocation3], 456
  %4276 = vst.msk [vmem:[%s4275 + $0x1] sm:$0xff] %vm1244, %v4243
  %4277 = vst.msk [vmem:[%s4275 + $0x9] sm:$0xff] %vm1244, %v4244
  %4278 = vst.msk [vmem:[%s4275 + $0x19] sm:$0xff] %vm1244, %v4245
  %4279 = vst.msk [vmem:[%s4275 + $0x21] sm:$0xff] %vm1244, %v4246
  %4280 = vst.msk [vmem:[%s4275 + $0x31] sm:$0xff] %vm1244, %v4247
  %4281 = vst.msk [vmem:[%s4275 + $0x39] sm:$0xff] %vm1244, %v4248
  %4282 = vst.msk [vmem:[%s4275 + $0x49] sm:$0xff] %vm1244, %v4249
  %4283 = vst.msk [vmem:[%s4275 + $0x51] sm:$0xff] %vm1244, %v4250
  %4284 = vst.msk [vmem:[%s4275 + $0x61] sm:$0xff] %vm1244, %v4251
  %4285 = vst.msk [vmem:[%s4275 + $0x69] sm:$0xff] %vm1244, %v4252
  %4286 = vst.msk [vmem:[%s4275 + $0x79] sm:$0xff] %vm1244, %v4253
  %4287 = vst.msk [vmem:[%s4275 + $0x81] sm:$0xff] %vm1244, %v4254
  %4288 = vst.msk [vmem:[%s4275 + $0x91] sm:$0xff] %vm1244, %v4255
  %4289 = vst.msk [vmem:[%s4275 + $0x99] sm:$0xff] %vm1244, %v4256
  %4290 = vst.msk [vmem:[%s4275 + $0xa9] sm:$0xff] %vm1244, %v4257
  %4291 = vst.msk [vmem:[%s4275 + $0xb1] sm:$0xff] %vm1244, %v4258
  %4292 = vst.msk [vmem:[%s4275 + $0xc1] sm:$0xff] %vm1244, %v4259
  %4293 = vst.msk [vmem:[%s4275 + $0xc9] sm:$0xff] %vm1244, %v4260
  %4294 = vst.msk [vmem:[%s4275 + $0xd9] sm:$0xff] %vm1244, %v4261
  %4295 = vst.msk [vmem:[%s4275 + $0xe1] sm:$0xff] %vm1244, %v4262
  %4296 = vst.msk [vmem:[%s4275 + $0xf1] sm:$0xff] %vm1244, %v4263
  %4297 = vst.msk [vmem:[%s4275 + $0xf9] sm:$0xff] %vm1244, %v4264
  %4298 = vst.msk [vmem:[%s4275 + $0x109] sm:$0xff] %vm1244, %v4265
  %4299 = vst.msk [vmem:[%s4275 + $0x111] sm:$0xff] %vm1244, %v4266
  %4300 = vst.msk [vmem:[%s4275 + $0x121] sm:$0xff] %vm1244, %v4267
  %4301 = vst.msk [vmem:[%s4275 + $0x129] sm:$0xff] %vm1244, %v4268
  %4302 = vst.msk [vmem:[%s4275 + $0x139] sm:$0xff] %vm1244, %v4269
  %4303 = vst.msk [vmem:[%s4275 + $0x141] sm:$0xff] %vm1244, %v4270
  %4304 = vst.msk [vmem:[%s4275 + $0x151] sm:$0xff] %vm1244, %v4271
  %4305 = vst.msk [vmem:[%s4275 + $0x159] sm:$0xff] %vm1244, %v4272
  %4306 = vst.msk [vmem:[%s4275 + $0x169] sm:$0xff] %vm1244, %v4273
  %4307 = vst.msk [vmem:[%s4275 + $0x171] sm:$0xff] %vm1244, %v4274
  %v4308 = vld [vmem:[#allocation3] sm:$0xff]
  %v4309 = vld [vmem:[#allocation3 + $0x8] sm:$0xff]
  %v4310 = vld [vmem:[#allocation3 + $0x10] sm:$0x3]
  %v4311 = vld [vmem:[#allocation3 + $0x18] sm:$0xff]
  %v4312 = vld [vmem:[#allocation3 + $0x20] sm:$0xff]
  %v4313 = vld [vmem:[#allocation3 + $0x28] sm:$0x3]
  %v4314 = vld [vmem:[#allocation3 + $0x30] sm:$0xff]
  %v4315 = vld [vmem:[#allocation3 + $0x38] sm:$0xff]
  %v4316 = vld [vmem:[#allocation3 + $0x40] sm:$0x3]
  %v4317 = vld [vmem:[#allocation3 + $0x48] sm:$0xff]
  %v4318 = vld [vmem:[#allocation3 + $0x50] sm:$0xff]
  %v4319 = vld [vmem:[#allocation3 + $0x58] sm:$0x3]
  %v4320 = vld [vmem:[#allocation3 + $0x60] sm:$0xff]
  %v4321 = vld [vmem:[#allocation3 + $0x68] sm:$0xff]
  %v4322 = vld [vmem:[#allocation3 + $0x70] sm:$0x3]
  %v4323 = vld [vmem:[#allocation3 + $0x78] sm:$0xff]
  %v4324 = vld [vmem:[#allocation3 + $0x80] sm:$0xff]
  %v4325 = vld [vmem:[#allocation3 + $0x88] sm:$0x3]
  %v4326 = vld [vmem:[#allocation3 + $0x90] sm:$0xff]
  %v4327 = vld [vmem:[#allocation3 + $0x98] sm:$0xff]
  %v4328 = vld [vmem:[#allocation3 + $0xa0] sm:$0x3]
  %v4329 = vld [vmem:[#allocation3 + $0xa8] sm:$0xff]
  %v4330 = vld [vmem:[#allocation3 + $0xb0] sm:$0xff]
  %v4331 = vld [vmem:[#allocation3 + $0xb8] sm:$0x3]
  %v4332 = vld [vmem:[#allocation3 + $0xc0] sm:$0xff]
  %v4333 = vld [vmem:[#allocation3 + $0xc8] sm:$0xff]
  %v4334 = vld [vmem:[#allocation3 + $0xd0] sm:$0x3]
  %v4335 = vld [vmem:[#allocation3 + $0xd8] sm:$0xff]
  %v4336 = vld [vmem:[#allocation3 + $0xe0] sm:$0xff]
  %v4337 = vld [vmem:[#allocation3 + $0xe8] sm:$0x3]
  %v4338 = vld [vmem:[#allocation3 + $0xf0] sm:$0xff]
  %v4339 = vld [vmem:[#allocation3 + $0xf8] sm:$0xff]
  %v4340 = vld [vmem:[#allocation3 + $0x100] sm:$0x3]
  %v4341 = vld [vmem:[#allocation3 + $0x108] sm:$0xff]
  %v4342 = vld [vmem:[#allocation3 + $0x110] sm:$0xff]
  %v4343 = vld [vmem:[#allocation3 + $0x118] sm:$0x3]
  %v4344 = vld [vmem:[#allocation3 + $0x120] sm:$0xff]
  %v4345 = vld [vmem:[#allocation3 + $0x128] sm:$0xff]
  %v4346 = vld [vmem:[#allocation3 + $0x130] sm:$0x3]
  %v4347 = vld [vmem:[#allocation3 + $0x138] sm:$0xff]
  %v4348 = vld [vmem:[#allocation3 + $0x140] sm:$0xff]
  %v4349 = vld [vmem:[#allocation3 + $0x148] sm:$0x3]
  %v4350 = vld [vmem:[#allocation3 + $0x150] sm:$0xff]
  %v4351 = vld [vmem:[#allocation3 + $0x158] sm:$0xff]
  %v4352 = vld [vmem:[#allocation3 + $0x160] sm:$0x3]
  %v4353 = vld [vmem:[#allocation3 + $0x168] sm:$0xff]
  %v4354 = vld [vmem:[#allocation3 + $0x170] sm:$0xff]
  %v4355 = vld [vmem:[#allocation3 + $0x178] sm:$0x3]
  %v4356 = vld [vmem:[#allocation3 + $0x180] sm:$0xff]
  %v4357 = vld [vmem:[#allocation3 + $0x188] sm:$0xff]
  %v4358 = vld [vmem:[#allocation3 + $0x190] sm:$0x3]
  %v4359 = vld [vmem:[#allocation3 + $0x198] sm:$0xff]
  %v4360 = vld [vmem:[#allocation3 + $0x1a0] sm:$0xff]
  %v4361 = vld [vmem:[#allocation3 + $0x1a8] sm:$0x3]
  %v4362 = vld [vmem:[#allocation3 + $0x1b0] sm:$0xff]
  %v4363 = vld [vmem:[#allocation3 + $0x1b8] sm:$0xff]
  %v4364 = vld [vmem:[#allocation3 + $0x1c0] sm:$0x3]
  %v4365 = vld [vmem:[#allocation3 + $0x1c8] sm:$0xff]
  %v4366 = vld [vmem:[#allocation3 + $0x1d0] sm:$0xff]
  %v4367 = vld [vmem:[#allocation3 + $0x1d8] sm:$0x3]
  %v4368 = vld [vmem:[#allocation3 + $0x1e0] sm:$0xff]
  %v4369 = vld [vmem:[#allocation3 + $0x1e8] sm:$0xff]
  %v4370 = vld [vmem:[#allocation3 + $0x1f0] sm:$0x3]
  %v4371 = vld [vmem:[#allocation3 + $0x1f8] sm:$0xff]
  %v4372 = vld [vmem:[#allocation3 + $0x200] sm:$0xff]
  %v4373 = vld [vmem:[#allocation3 + $0x208] sm:$0x3]
  %v4374 = vld [vmem:[#allocation3 + $0x210] sm:$0xff]
  %v4375 = vld [vmem:[#allocation3 + $0x218] sm:$0xff]
  %v4376 = vld [vmem:[#allocation3 + $0x220] sm:$0x3]
  %v4377 = vld [vmem:[#allocation3 + $0x228] sm:$0xff]
  %v4378 = vld [vmem:[#allocation3 + $0x230] sm:$0xff]
  %v4379 = vld [vmem:[#allocation3 + $0x238] sm:$0x3]
  %v4380 = vld [vmem:[#allocation3 + $0x240] sm:$0xff]
  %v4381 = vld [vmem:[#allocation3 + $0x248] sm:$0xff]
  %v4382 = vld [vmem:[#allocation3 + $0x250] sm:$0x3]
  %v4383 = vld [vmem:[#allocation3 + $0x258] sm:$0xff]
  %v4384 = vld [vmem:[#allocation3 + $0x260] sm:$0xff]
  %v4385 = vld [vmem:[#allocation3 + $0x268] sm:$0x3]
  %v4386 = vld [vmem:[#allocation3 + $0x270] sm:$0xff]
  %v4387 = vld [vmem:[#allocation3 + $0x278] sm:$0xff]
  %v4388 = vld [vmem:[#allocation3 + $0x280] sm:$0x3]
  %v4389 = vld [vmem:[#allocation3 + $0x288] sm:$0xff]
  %v4390 = vld [vmem:[#allocation3 + $0x290] sm:$0xff]
  %v4391 = vld [vmem:[#allocation3 + $0x298] sm:$0x3]
  %v4392 = vld [vmem:[#allocation3 + $0x2a0] sm:$0xff]
  %v4393 = vld [vmem:[#allocation3 + $0x2a8] sm:$0xff]
  %v4394 = vld [vmem:[#allocation3 + $0x2b0] sm:$0x3]
  %v4395 = vld [vmem:[#allocation3 + $0x2b8] sm:$0xff]
  %v4396 = vld [vmem:[#allocation3 + $0x2c0] sm:$0xff]
  %v4397 = vld [vmem:[#allocation3 + $0x2c8] sm:$0x3]
  %v4398 = vld [vmem:[#allocation3 + $0x2d0] sm:$0xff]
  %v4399 = vld [vmem:[#allocation3 + $0x2d8] sm:$0xff]
  %v4400 = vld [vmem:[#allocation3 + $0x2e0] sm:$0x3]
  %v4401 = vld [vmem:[#allocation3 + $0x2e8] sm:$0xff]
  %v4402 = vld [vmem:[#allocation3 + $0x2f0] sm:$0xff]
  %v4403 = vld [vmem:[#allocation3 + $0x2f8] sm:$0x3]
  %v4404 = vld [vmem:[#allocation3 + $0x300] sm:$0xff]
  %v4405 = vld [vmem:[#allocation3 + $0x308] sm:$0xff]
  %v4406 = vld [vmem:[#allocation3 + $0x310] sm:$0x3]
  %v4407 = vld [vmem:[#allocation3 + $0x318] sm:$0xff]
  %v4408 = vld [vmem:[#allocation3 + $0x320] sm:$0xff]
  %v4409 = vld [vmem:[#allocation3 + $0x328] sm:$0x3]
  %v4410 = vld [vmem:[#allocation3 + $0x330] sm:$0xff]
  %v4411 = vld [vmem:[#allocation3 + $0x338] sm:$0xff]
  %v4412 = vld [vmem:[#allocation3 + $0x340] sm:$0x3]
  %v4413 = vld [vmem:[#allocation3 + $0x348] sm:$0xff]
  %v4414 = vld [vmem:[#allocation3 + $0x350] sm:$0xff]
  %v4415 = vld [vmem:[#allocation3 + $0x358] sm:$0x3]
  %v4512 = vrot.slane %v4308, 1
  %v4513 = vrot.slane %v4309, 1
  %v4514 = vsel %vm474, %v4512, %v4513
  %v4515 = vrot.slane %v4310, 1
  %v4516 = vsel %vm474, %v4513, %v4515
  %v4517 = vrot.slane %v4311, 1
  %v4518 = vrot.slane %v4312, 1
  %v4519 = vsel %vm474, %v4517, %v4518
  %v4520 = vrot.slane %v4313, 1
  %v4521 = vsel %vm474, %v4518, %v4520
  %v4522 = vrot.slane %v4314, 1
  %v4523 = vrot.slane %v4315, 1
  %v4524 = vsel %vm474, %v4522, %v4523
  %v4525 = vrot.slane %v4316, 1
  %v4526 = vsel %vm474, %v4523, %v4525
  %v4527 = vrot.slane %v4317, 1
  %v4528 = vrot.slane %v4318, 1
  %v4529 = vsel %vm474, %v4527, %v4528
  %v4530 = vrot.slane %v4319, 1
  %v4531 = vsel %vm474, %v4528, %v4530
  %v4532 = vrot.slane %v4320, 1
  %v4533 = vrot.slane %v4321, 1
  %v4534 = vsel %vm474, %v4532, %v4533
  %v4535 = vrot.slane %v4322, 1
  %v4536 = vsel %vm474, %v4533, %v4535
  %v4537 = vrot.slane %v4323, 1
  %v4538 = vrot.slane %v4324, 1
  %v4539 = vsel %vm474, %v4537, %v4538
  %v4540 = vrot.slane %v4325, 1
  %v4541 = vsel %vm474, %v4538, %v4540
  %v4542 = vrot.slane %v4326, 1
  %v4543 = vrot.slane %v4327, 1
  %v4544 = vsel %vm474, %v4542, %v4543
  %v4545 = vrot.slane %v4328, 1
  %v4546 = vsel %vm474, %v4543, %v4545
  %v4547 = vrot.slane %v4329, 1
  %v4548 = vrot.slane %v4330, 1
  %v4549 = vsel %vm474, %v4547, %v4548
  %v4550 = vrot.slane %v4331, 1
  %v4551 = vsel %vm474, %v4548, %v4550
  %v4552 = vrot.slane %v4332, 1
  %v4553 = vrot.slane %v4333, 1
  %v4554 = vsel %vm474, %v4552, %v4553
  %v4555 = vrot.slane %v4334, 1
  %v4556 = vsel %vm474, %v4553, %v4555
  %v4557 = vrot.slane %v4335, 1
  %v4558 = vrot.slane %v4336, 1
  %v4559 = vsel %vm474, %v4557, %v4558
  %v4560 = vrot.slane %v4337, 1
  %v4561 = vsel %vm474, %v4558, %v4560
  %v4562 = vrot.slane %v4338, 1
  %v4563 = vrot.slane %v4339, 1
  %v4564 = vsel %vm474, %v4562, %v4563
  %v4565 = vrot.slane %v4340, 1
  %v4566 = vsel %vm474, %v4563, %v4565
  %v4567 = vrot.slane %v4341, 1
  %v4568 = vrot.slane %v4342, 1
  %v4569 = vsel %vm474, %v4567, %v4568
  %v4570 = vrot.slane %v4343, 1
  %v4571 = vsel %vm474, %v4568, %v4570
  %v4572 = vrot.slane %v4344, 1
  %v4573 = vrot.slane %v4345, 1
  %v4574 = vsel %vm474, %v4572, %v4573
  %v4575 = vrot.slane %v4346, 1
  %v4576 = vsel %vm474, %v4573, %v4575
  %v4577 = vrot.slane %v4347, 1
  %v4578 = vrot.slane %v4348, 1
  %v4579 = vsel %vm474, %v4577, %v4578
  %v4580 = vrot.slane %v4349, 1
  %v4581 = vsel %vm474, %v4578, %v4580
  %v4582 = vrot.slane %v4350, 1
  %v4583 = vrot.slane %v4351, 1
  %v4584 = vsel %vm474, %v4582, %v4583
  %v4585 = vrot.slane %v4352, 1
  %v4586 = vsel %vm474, %v4583, %v4585
  %v4587 = vrot.slane %v4353, 1
  %v4588 = vrot.slane %v4354, 1
  %v4589 = vsel %vm474, %v4587, %v4588
  %v4590 = vrot.slane %v4355, 1
  %v4591 = vsel %vm474, %v4588, %v4590
  %v4592 = vrot.slane %v4362, 1
  %v4593 = vrot.slane %v4363, 1
  %v4594 = vsel %vm474, %v4592, %v4593
  %v4595 = vrot.slane %v4364, 1
  %v4596 = vsel %vm474, %v4593, %v4595
  %v4597 = vrot.slane %v4365, 1
  %v4598 = vrot.slane %v4366, 1
  %v4599 = vsel %vm474, %v4597, %v4598
  %v4600 = vrot.slane %v4367, 1
  %v4601 = vsel %vm474, %v4598, %v4600
  %v4602 = vrot.slane %v4368, 1
  %v4603 = vrot.slane %v4369, 1
  %v4604 = vsel %vm474, %v4602, %v4603
  %v4605 = vrot.slane %v4370, 1
  %v4606 = vsel %vm474, %v4603, %v4605
  %v4607 = vrot.slane %v4371, 1
  %v4608 = vrot.slane %v4372, 1
  %v4609 = vsel %vm474, %v4607, %v4608
  %v4610 = vrot.slane %v4373, 1
  %v4611 = vsel %vm474, %v4608, %v4610
  %v4612 = vrot.slane %v4374, 1
  %v4613 = vrot.slane %v4375, 1
  %v4614 = vsel %vm474, %v4612, %v4613
  %v4615 = vrot.slane %v4376, 1
  %v4616 = vsel %vm474, %v4613, %v4615
  %v4617 = vrot.slane %v4377, 1
  %v4618 = vrot.slane %v4378, 1
  %v4619 = vsel %vm474, %v4617, %v4618
  %v4620 = vrot.slane %v4379, 1
  %v4621 = vsel %vm474, %v4618, %v4620
  %v4622 = vrot.slane %v4380, 1
  %v4623 = vrot.slane %v4381, 1
  %v4624 = vsel %vm474, %v4622, %v4623
  %v4625 = vrot.slane %v4382, 1
  %v4626 = vsel %vm474, %v4623, %v4625
  %v4627 = vrot.slane %v4383, 1
  %v4628 = vrot.slane %v4384, 1
  %v4629 = vsel %vm474, %v4627, %v4628
  %v4630 = vrot.slane %v4385, 1
  %v4631 = vsel %vm474, %v4628, %v4630
  %v4632 = vrot.slane %v4386, 1
  %v4633 = vrot.slane %v4387, 1
  %v4634 = vsel %vm474, %v4632, %v4633
  %v4635 = vrot.slane %v4388, 1
  %v4636 = vsel %vm474, %v4633, %v4635
  %v4637 = vrot.slane %v4389, 1
  %v4638 = vrot.slane %v4390, 1
  %v4639 = vsel %vm474, %v4637, %v4638
  %v4640 = vrot.slane %v4391, 1
  %v4641 = vsel %vm474, %v4638, %v4640
  %v4642 = vrot.slane %v4392, 1
  %v4643 = vrot.slane %v4393, 1
  %v4644 = vsel %vm474, %v4642, %v4643
  %v4645 = vrot.slane %v4394, 1
  %v4646 = vsel %vm474, %v4643, %v4645
  %v4647 = vrot.slane %v4395, 1
  %v4648 = vrot.slane %v4396, 1
  %v4649 = vsel %vm474, %v4647, %v4648
  %v4650 = vrot.slane %v4397, 1
  %v4651 = vsel %vm474, %v4648, %v4650
  %v4652 = vrot.slane %v4398, 1
  %v4653 = vrot.slane %v4399, 1
  %v4654 = vsel %vm474, %v4652, %v4653
  %v4655 = vrot.slane %v4400, 1
  %v4656 = vsel %vm474, %v4653, %v4655
  %v4657 = vrot.slane %v4401, 1
  %v4658 = vrot.slane %v4402, 1
  %v4659 = vsel %vm474, %v4657, %v4658
  %v4660 = vrot.slane %v4403, 1
  %v4661 = vsel %vm474, %v4658, %v4660
  %v4662 = vrot.slane %v4404, 1
  %v4663 = vrot.slane %v4405, 1
  %v4664 = vsel %vm474, %v4662, %v4663
  %v4665 = vrot.slane %v4406, 1
  %v4666 = vsel %vm474, %v4663, %v4665
  %v4667 = vrot.slane %v4407, 1
  %v4668 = vrot.slane %v4408, 1
  %v4669 = vsel %vm474, %v4667, %v4668
  %v4670 = vrot.slane %v4409, 1
  %v4671 = vsel %vm474, %v4668, %v4670
  %4672 = vrot.lane.b32.xlu0 %v4514, 8
  %v4673 = vpop.permute.xlu0 %4672
  %4674 = vrot.lane.b32.xlu0 %v4516, 8
  %v4675 = vpop.permute.xlu0 %4674
  %4676 = vrot.lane.b32.xlu0 %v4519, 8
  %v4677 = vpop.permute.xlu0 %4676
  %4678 = vrot.lane.b32.xlu0 %v4521, 8
  %v4679 = vpop.permute.xlu0 %4678
  %4680 = vrot.lane.b32.xlu0 %v4524, 8
  %v4681 = vpop.permute.xlu0 %4680
  %4682 = vrot.lane.b32.xlu0 %v4526, 8
  %v4683 = vpop.permute.xlu0 %4682
  %4684 = vrot.lane.b32.xlu0 %v4529, 8
  %v4685 = vpop.permute.xlu0 %4684
  %4686 = vrot.lane.b32.xlu0 %v4531, 8
  %v4687 = vpop.permute.xlu0 %4686
  %4688 = vrot.lane.b32.xlu0 %v4534, 8
  %v4689 = vpop.permute.xlu0 %4688
  %4690 = vrot.lane.b32.xlu0 %v4536, 8
  %v4691 = vpop.permute.xlu0 %4690
  %4692 = vrot.lane.b32.xlu0 %v4539, 8
  %v4693 = vpop.permute.xlu0 %4692
  %4694 = vrot.lane.b32.xlu0 %v4541, 8
  %v4695 = vpop.permute.xlu0 %4694
  %4696 = vrot.lane.b32.xlu0 %v4544, 8
  %v4697 = vpop.permute.xlu0 %4696
  %4698 = vrot.lane.b32.xlu0 %v4546, 8
  %v4699 = vpop.permute.xlu0 %4698
  %4700 = vrot.lane.b32.xlu0 %v4549, 8
  %v4701 = vpop.permute.xlu0 %4700
  %4702 = vrot.lane.b32.xlu0 %v4551, 8
  %v4703 = vpop.permute.xlu0 %4702
  %4704 = vrot.lane.b32.xlu0 %v4554, 8
  %v4705 = vpop.permute.xlu0 %4704
  %4706 = vrot.lane.b32.xlu0 %v4556, 8
  %v4707 = vpop.permute.xlu0 %4706
  %4708 = vrot.lane.b32.xlu0 %v4559, 8
  %v4709 = vpop.permute.xlu0 %4708
  %4710 = vrot.lane.b32.xlu0 %v4561, 8
  %v4711 = vpop.permute.xlu0 %4710
  %4712 = vrot.lane.b32.xlu0 %v4564, 8
  %v4713 = vpop.permute.xlu0 %4712
  %4714 = vrot.lane.b32.xlu0 %v4566, 8
  %v4715 = vpop.permute.xlu0 %4714
  %4716 = vrot.lane.b32.xlu0 %v4569, 8
  %v4717 = vpop.permute.xlu0 %4716
  %4718 = vrot.lane.b32.xlu0 %v4571, 8
  %v4719 = vpop.permute.xlu0 %4718
  %4720 = vrot.lane.b32.xlu0 %v4574, 8
  %v4721 = vpop.permute.xlu0 %4720
  %4722 = vrot.lane.b32.xlu0 %v4576, 8
  %v4723 = vpop.permute.xlu0 %4722
  %4724 = vrot.lane.b32.xlu0 %v4579, 8
  %v4725 = vpop.permute.xlu0 %4724
  %4726 = vrot.lane.b32.xlu0 %v4581, 8
  %v4727 = vpop.permute.xlu0 %4726
  %4728 = vrot.lane.b32.xlu0 %v4584, 8
  %v4729 = vpop.permute.xlu0 %4728
  %4730 = vrot.lane.b32.xlu0 %v4586, 8
  %v4731 = vpop.permute.xlu0 %4730
  %4732 = vrot.lane.b32.xlu0 %v4589, 8
  %v4733 = vpop.permute.xlu0 %4732
  %4734 = vrot.lane.b32.xlu0 %v4591, 8
  %v4735 = vpop.permute.xlu0 %4734
  %4736 = vrot.lane.b32.xlu0 %v4594, 8
  %v4737 = vpop.permute.xlu0 %4736
  %4738 = vrot.lane.b32.xlu0 %v4596, 8
  %v4739 = vpop.permute.xlu0 %4738
  %4740 = vrot.lane.b32.xlu0 %v4599, 8
  %v4741 = vpop.permute.xlu0 %4740
  %4742 = vrot.lane.b32.xlu0 %v4601, 8
  %v4743 = vpop.permute.xlu0 %4742
  %4744 = vrot.lane.b32.xlu0 %v4604, 8
  %v4745 = vpop.permute.xlu0 %4744
  %4746 = vrot.lane.b32.xlu0 %v4606, 8
  %v4747 = vpop.permute.xlu0 %4746
  %4748 = vrot.lane.b32.xlu0 %v4609, 8
  %v4749 = vpop.permute.xlu0 %4748
  %4750 = vrot.lane.b32.xlu0 %v4611, 8
  %v4751 = vpop.permute.xlu0 %4750
  %4752 = vrot.lane.b32.xlu0 %v4614, 8
  %v4753 = vpop.permute.xlu0 %4752
  %4754 = vrot.lane.b32.xlu0 %v4616, 8
  %v4755 = vpop.permute.xlu0 %4754
  %4756 = vrot.lane.b32.xlu0 %v4619, 8
  %v4757 = vpop.permute.xlu0 %4756
  %4758 = vrot.lane.b32.xlu0 %v4621, 8
  %v4759 = vpop.permute.xlu0 %4758
  %4760 = vrot.lane.b32.xlu0 %v4624, 8
  %v4761 = vpop.permute.xlu0 %4760
  %4762 = vrot.lane.b32.xlu0 %v4626, 8
  %v4763 = vpop.permute.xlu0 %4762
  %4764 = vrot.lane.b32.xlu0 %v4629, 8
  %v4765 = vpop.permute.xlu0 %4764
  %4766 = vrot.lane.b32.xlu0 %v4631, 8
  %v4767 = vpop.permute.xlu0 %4766
  %4768 = vrot.lane.b32.xlu0 %v4634, 8
  %v4769 = vpop.permute.xlu0 %4768
  %4770 = vrot.lane.b32.xlu0 %v4636, 8
  %v4771 = vpop.permute.xlu0 %4770
  %4772 = vrot.lane.b32.xlu0 %v4639, 8
  %v4773 = vpop.permute.xlu0 %4772
  %4774 = vrot.lane.b32.xlu0 %v4641, 8
  %v4775 = vpop.permute.xlu0 %4774
  %4776 = vrot.lane.b32.xlu0 %v4644, 8
  %v4777 = vpop.permute.xlu0 %4776
  %4778 = vrot.lane.b32.xlu0 %v4646, 8
  %v4779 = vpop.permute.xlu0 %4778
  %4780 = vrot.lane.b32.xlu0 %v4649, 8
  %v4781 = vpop.permute.xlu0 %4780
  %4782 = vrot.lane.b32.xlu0 %v4651, 8
  %v4783 = vpop.permute.xlu0 %4782
  %4784 = vrot.lane.b32.xlu0 %v4654, 8
  %v4785 = vpop.permute.xlu0 %4784
  %4786 = vrot.lane.b32.xlu0 %v4656, 8
  %v4787 = vpop.permute.xlu0 %4786
  %4788 = vrot.lane.b32.xlu0 %v4659, 8
  %v4789 = vpop.permute.xlu0 %4788
  %4790 = vrot.lane.b32.xlu0 %v4661, 8
  %v4791 = vpop.permute.xlu0 %4790
  %4792 = vrot.lane.b32.xlu0 %v4664, 8
  %v4793 = vpop.permute.xlu0 %4792
  %4794 = vrot.lane.b32.xlu0 %v4666, 8
  %v4795 = vpop.permute.xlu0 %4794
  %4796 = vrot.lane.b32.xlu0 %v4669, 8
  %v4797 = vpop.permute.xlu0 %4796
  %4798 = vrot.lane.b32.xlu0 %v4671, 8
  %v4799 = vpop.permute.xlu0 %4798
  %v4864 = vrot.slane %v4308, 2
  %v4865 = vrot.slane %v4309, 2
  %v4866 = vsel %vm827, %v4864, %v4865
  %v4867 = vrot.slane %v4310, 2
  %v4868 = vsel %vm827, %v4865, %v4867
  %v4869 = vrot.slane %v4311, 2
  %v4870 = vrot.slane %v4312, 2
  %v4871 = vsel %vm827, %v4869, %v4870
  %v4872 = vrot.slane %v4313, 2
  %v4873 = vsel %vm827, %v4870, %v4872
  %v4874 = vrot.slane %v4314, 2
  %v4875 = vrot.slane %v4315, 2
  %v4876 = vsel %vm827, %v4874, %v4875
  %v4877 = vrot.slane %v4316, 2
  %v4878 = vsel %vm827, %v4875, %v4877
  %v4879 = vrot.slane %v4317, 2
  %v4880 = vrot.slane %v4318, 2
  %v4881 = vsel %vm827, %v4879, %v4880
  %v4882 = vrot.slane %v4319, 2
  %v4883 = vsel %vm827, %v4880, %v4882
  %v4884 = vrot.slane %v4320, 2
  %v4885 = vrot.slane %v4321, 2
  %v4886 = vsel %vm827, %v4884, %v4885
  %v4887 = vrot.slane %v4322, 2
  %v4888 = vsel %vm827, %v4885, %v4887
  %v4889 = vrot.slane %v4323, 2
  %v4890 = vrot.slane %v4324, 2
  %v4891 = vsel %vm827, %v4889, %v4890
  %v4892 = vrot.slane %v4325, 2
  %v4893 = vsel %vm827, %v4890, %v4892
  %v4894 = vrot.slane %v4326, 2
  %v4895 = vrot.slane %v4327, 2
  %v4896 = vsel %vm827, %v4894, %v4895
  %v4897 = vrot.slane %v4328, 2
  %v4898 = vsel %vm827, %v4895, %v4897
  %v4899 = vrot.slane %v4329, 2
  %v4900 = vrot.slane %v4330, 2
  %v4901 = vsel %vm827, %v4899, %v4900
  %v4902 = vrot.slane %v4331, 2
  %v4903 = vsel %vm827, %v4900, %v4902
  %v4904 = vrot.slane %v4332, 2
  %v4905 = vrot.slane %v4333, 2
  %v4906 = vsel %vm827, %v4904, %v4905
  %v4907 = vrot.slane %v4334, 2
  %v4908 = vsel %vm827, %v4905, %v4907
  %v4909 = vrot.slane %v4335, 2
  %v4910 = vrot.slane %v4336, 2
  %v4911 = vsel %vm827, %v4909, %v4910
  %v4912 = vrot.slane %v4337, 2
  %v4913 = vsel %vm827, %v4910, %v4912
  %v4914 = vrot.slane %v4338, 2
  %v4915 = vrot.slane %v4339, 2
  %v4916 = vsel %vm827, %v4914, %v4915
  %v4917 = vrot.slane %v4340, 2
  %v4918 = vsel %vm827, %v4915, %v4917
  %v4919 = vrot.slane %v4341, 2
  %v4920 = vrot.slane %v4342, 2
  %v4921 = vsel %vm827, %v4919, %v4920
  %v4922 = vrot.slane %v4343, 2
  %v4923 = vsel %vm827, %v4920, %v4922
  %v4924 = vrot.slane %v4344, 2
  %v4925 = vrot.slane %v4345, 2
  %v4926 = vsel %vm827, %v4924, %v4925
  %v4927 = vrot.slane %v4346, 2
  %v4928 = vsel %vm827, %v4925, %v4927
  %v4929 = vrot.slane %v4347, 2
  %v4930 = vrot.slane %v4348, 2
  %v4931 = vsel %vm827, %v4929, %v4930
  %v4932 = vrot.slane %v4349, 2
  %v4933 = vsel %vm827, %v4930, %v4932
  %v4934 = vrot.slane %v4350, 2
  %v4935 = vrot.slane %v4351, 2
  %v4936 = vsel %vm827, %v4934, %v4935
  %v4937 = vrot.slane %v4352, 2
  %v4938 = vsel %vm827, %v4935, %v4937
  %v4939 = vrot.slane %v4353, 2
  %v4940 = vrot.slane %v4354, 2
  %v4941 = vsel %vm827, %v4939, %v4940
  %v4942 = vrot.slane %v4355, 2
  %v4943 = vsel %vm827, %v4940, %v4942
  %v4944 = vrot.slane %v4362, 2
  %v4945 = vrot.slane %v4363, 2
  %v4946 = vsel %vm827, %v4944, %v4945
  %v4947 = vrot.slane %v4364, 2
  %v4948 = vsel %vm827, %v4945, %v4947
  %v4949 = vrot.slane %v4365, 2
  %v4950 = vrot.slane %v4366, 2
  %v4951 = vsel %vm827, %v4949, %v4950
  %v4952 = vrot.slane %v4367, 2
  %v4953 = vsel %vm827, %v4950, %v4952
  %v4954 = vrot.slane %v4368, 2
  %v4955 = vrot.slane %v4369, 2
  %v4956 = vsel %vm827, %v4954, %v4955
  %v4957 = vrot.slane %v4370, 2
  %v4958 = vsel %vm827, %v4955, %v4957
  %v4959 = vrot.slane %v4371, 2
  %v4960 = vrot.slane %v4372, 2
  %v4961 = vsel %vm827, %v4959, %v4960
  %v4962 = vrot.slane %v4373, 2
  %v4963 = vsel %vm827, %v4960, %v4962
  %v4964 = vrot.slane %v4374, 2
  %v4965 = vrot.slane %v4375, 2
  %v4966 = vsel %vm827, %v4964, %v4965
  %v4967 = vrot.slane %v4376, 2
  %v4968 = vsel %vm827, %v4965, %v4967
  %v4969 = vrot.slane %v4377, 2
  %v4970 = vrot.slane %v4378, 2
  %v4971 = vsel %vm827, %v4969, %v4970
  %v4972 = vrot.slane %v4379, 2
  %v4973 = vsel %vm827, %v4970, %v4972
  %v4974 = vrot.slane %v4380, 2
  %v4975 = vrot.slane %v4381, 2
  %v4976 = vsel %vm827, %v4974, %v4975
  %v4977 = vrot.slane %v4382, 2
  %v4978 = vsel %vm827, %v4975, %v4977
  %v4979 = vrot.slane %v4383, 2
  %v4980 = vrot.slane %v4384, 2
  %v4981 = vsel %vm827, %v4979, %v4980
  %v4982 = vrot.slane %v4385, 2
  %v4983 = vsel %vm827, %v4980, %v4982
  %v4984 = vrot.slane %v4386, 2
  %v4985 = vrot.slane %v4387, 2
  %v4986 = vsel %vm827, %v4984, %v4985
  %v4987 = vrot.slane %v4388, 2
  %v4988 = vsel %vm827, %v4985, %v4987
  %v4989 = vrot.slane %v4389, 2
  %v4990 = vrot.slane %v4390, 2
  %v4991 = vsel %vm827, %v4989, %v4990
  %v4992 = vrot.slane %v4391, 2
  %v4993 = vsel %vm827, %v4990, %v4992
  %v4994 = vrot.slane %v4392, 2
  %v4995 = vrot.slane %v4393, 2
  %v4996 = vsel %vm827, %v4994, %v4995
  %v4997 = vrot.slane %v4394, 2
  %v4998 = vsel %vm827, %v4995, %v4997
  %v4999 = vrot.slane %v4395, 2
  %v5000 = vrot.slane %v4396, 2
  %v5001 = vsel %vm827, %v4999, %v5000
  %v5002 = vrot.slane %v4397, 2
  %v5003 = vsel %vm827, %v5000, %v5002
  %v5004 = vrot.slane %v4398, 2
  %v5005 = vrot.slane %v4399, 2
  %v5006 = vsel %vm827, %v5004, %v5005
  %v5007 = vrot.slane %v4400, 2
  %v5008 = vsel %vm827, %v5005, %v5007
  %v5009 = vrot.slane %v4401, 2
  %v5010 = vrot.slane %v4402, 2
  %v5011 = vsel %vm827, %v5009, %v5010
  %v5012 = vrot.slane %v4403, 2
  %v5013 = vsel %vm827, %v5010, %v5012
  %v5014 = vrot.slane %v4404, 2
  %v5015 = vrot.slane %v4405, 2
  %v5016 = vsel %vm827, %v5014, %v5015
  %v5017 = vrot.slane %v4406, 2
  %v5018 = vsel %vm827, %v5015, %v5017
  %v5019 = vrot.slane %v4407, 2
  %v5020 = vrot.slane %v4408, 2
  %v5021 = vsel %vm827, %v5019, %v5020
  %v5022 = vrot.slane %v4409, 2
  %v5023 = vsel %vm827, %v5020, %v5022
  %5024 = vrot.lane.b32.xlu0 %v4866, 16
  %v5025 = vpop.permute.xlu0 %5024
  %5026 = vrot.lane.b32.xlu0 %v4868, 16
  %v5027 = vpop.permute.xlu0 %5026
  %5028 = vrot.lane.b32.xlu0 %v4871, 16
  %v5029 = vpop.permute.xlu0 %5028
  %5030 = vrot.lane.b32.xlu0 %v4873, 16
  %v5031 = vpop.permute.xlu0 %5030
  %5032 = vrot.lane.b32.xlu0 %v4876, 16
  %v5033 = vpop.permute.xlu0 %5032
  %5034 = vrot.lane.b32.xlu0 %v4878, 16
  %v5035 = vpop.permute.xlu0 %5034
  %5036 = vrot.lane.b32.xlu0 %v4881, 16
  %v5037 = vpop.permute.xlu0 %5036
  %5038 = vrot.lane.b32.xlu0 %v4883, 16
  %v5039 = vpop.permute.xlu0 %5038
  %5040 = vrot.lane.b32.xlu0 %v4886, 16
  %v5041 = vpop.permute.xlu0 %5040
  %5042 = vrot.lane.b32.xlu0 %v4888, 16
  %v5043 = vpop.permute.xlu0 %5042
  %5044 = vrot.lane.b32.xlu0 %v4891, 16
  %v5045 = vpop.permute.xlu0 %5044
  %5046 = vrot.lane.b32.xlu0 %v4893, 16
  %v5047 = vpop.permute.xlu0 %5046
  %5048 = vrot.lane.b32.xlu0 %v4896, 16
  %v5049 = vpop.permute.xlu0 %5048
  %5050 = vrot.lane.b32.xlu0 %v4898, 16
  %v5051 = vpop.permute.xlu0 %5050
  %5052 = vrot.lane.b32.xlu0 %v4901, 16
  %v5053 = vpop.permute.xlu0 %5052
  %5054 = vrot.lane.b32.xlu0 %v4903, 16
  %v5055 = vpop.permute.xlu0 %5054
  %5056 = vrot.lane.b32.xlu0 %v4906, 16
  %v5057 = vpop.permute.xlu0 %5056
  %5058 = vrot.lane.b32.xlu0 %v4908, 16
  %v5059 = vpop.permute.xlu0 %5058
  %5060 = vrot.lane.b32.xlu0 %v4911, 16
  %v5061 = vpop.permute.xlu0 %5060
  %5062 = vrot.lane.b32.xlu0 %v4913, 16
  %v5063 = vpop.permute.xlu0 %5062
  %5064 = vrot.lane.b32.xlu0 %v4916, 16
  %v5065 = vpop.permute.xlu0 %5064
  %5066 = vrot.lane.b32.xlu0 %v4918, 16
  %v5067 = vpop.permute.xlu0 %5066
  %5068 = vrot.lane.b32.xlu0 %v4921, 16
  %v5069 = vpop.permute.xlu0 %5068
  %5070 = vrot.lane.b32.xlu0 %v4923, 16
  %v5071 = vpop.permute.xlu0 %5070
  %5072 = vrot.lane.b32.xlu0 %v4926, 16
  %v5073 = vpop.permute.xlu0 %5072
  %5074 = vrot.lane.b32.xlu0 %v4928, 16
  %v5075 = vpop.permute.xlu0 %5074
  %5076 = vrot.lane.b32.xlu0 %v4931, 16
  %v5077 = vpop.permute.xlu0 %5076
  %5078 = vrot.lane.b32.xlu0 %v4933, 16
  %v5079 = vpop.permute.xlu0 %5078
  %5080 = vrot.lane.b32.xlu0 %v4936, 16
  %v5081 = vpop.permute.xlu0 %5080
  %5082 = vrot.lane.b32.xlu0 %v4938, 16
  %v5083 = vpop.permute.xlu0 %5082
  %5084 = vrot.lane.b32.xlu0 %v4941, 16
  %v5085 = vpop.permute.xlu0 %5084
  %5086 = vrot.lane.b32.xlu0 %v4943, 16
  %v5087 = vpop.permute.xlu0 %5086
  %5088 = vrot.lane.b32.xlu0 %v4946, 16
  %v5089 = vpop.permute.xlu0 %5088
  %5090 = vrot.lane.b32.xlu0 %v4948, 16
  %v5091 = vpop.permute.xlu0 %5090
  %5092 = vrot.lane.b32.xlu0 %v4951, 16
  %v5093 = vpop.permute.xlu0 %5092
  %5094 = vrot.lane.b32.xlu0 %v4953, 16
  %v5095 = vpop.permute.xlu0 %5094
  %5096 = vrot.lane.b32.xlu0 %v4956, 16
  %v5097 = vpop.permute.xlu0 %5096
  %5098 = vrot.lane.b32.xlu0 %v4958, 16
  %v5099 = vpop.permute.xlu0 %5098
  %5100 = vrot.lane.b32.xlu0 %v4961, 16
  %v5101 = vpop.permute.xlu0 %5100
  %5102 = vrot.lane.b32.xlu0 %v4963, 16
  %v5103 = vpop.permute.xlu0 %5102
  %5104 = vrot.lane.b32.xlu0 %v4966, 16
  %v5105 = vpop.permute.xlu0 %5104
  %5106 = vrot.lane.b32.xlu0 %v4968, 16
  %v5107 = vpop.permute.xlu0 %5106
  %5108 = vrot.lane.b32.xlu0 %v4971, 16
  %v5109 = vpop.permute.xlu0 %5108
  %5110 = vrot.lane.b32.xlu0 %v4973, 16
  %v5111 = vpop.permute.xlu0 %5110
  %5112 = vrot.lane.b32.xlu0 %v4976, 16
  %v5113 = vpop.permute.xlu0 %5112
  %5114 = vrot.lane.b32.xlu0 %v4978, 16
  %v5115 = vpop.permute.xlu0 %5114
  %5116 = vrot.lane.b32.xlu0 %v4981, 16
  %v5117 = vpop.permute.xlu0 %5116
  %5118 = vrot.lane.b32.xlu0 %v4983, 16
  %v5119 = vpop.permute.xlu0 %5118
  %5120 = vrot.lane.b32.xlu0 %v4986, 16
  %v5121 = vpop.permute.xlu0 %5120
  %5122 = vrot.lane.b32.xlu0 %v4988, 16
  %v5123 = vpop.permute.xlu0 %5122
  %5124 = vrot.lane.b32.xlu0 %v4991, 16
  %v5125 = vpop.permute.xlu0 %5124
  %5126 = vrot.lane.b32.xlu0 %v4993, 16
  %v5127 = vpop.permute.xlu0 %5126
  %5128 = vrot.lane.b32.xlu0 %v4996, 16
  %v5129 = vpop.permute.xlu0 %5128
  %5130 = vrot.lane.b32.xlu0 %v4998, 16
  %v5131 = vpop.permute.xlu0 %5130
  %5132 = vrot.lane.b32.xlu0 %v5001, 16
  %v5133 = vpop.permute.xlu0 %5132
  %5134 = vrot.lane.b32.xlu0 %v5003, 16
  %v5135 = vpop.permute.xlu0 %5134
  %5136 = vrot.lane.b32.xlu0 %v5006, 16
  %v5137 = vpop.permute.xlu0 %5136
  %5138 = vrot.lane.b32.xlu0 %v5008, 16
  %v5139 = vpop.permute.xlu0 %5138
  %5140 = vrot.lane.b32.xlu0 %v5011, 16
  %v5141 = vpop.permute.xlu0 %5140
  %5142 = vrot.lane.b32.xlu0 %v5013, 16
  %v5143 = vpop.permute.xlu0 %5142
  %5144 = vrot.lane.b32.xlu0 %v5016, 16
  %v5145 = vpop.permute.xlu0 %5144
  %5146 = vrot.lane.b32.xlu0 %v5018, 16
  %v5147 = vpop.permute.xlu0 %5146
  %5148 = vrot.lane.b32.xlu0 %v5021, 16
  %v5149 = vpop.permute.xlu0 %5148
  %5150 = vrot.lane.b32.xlu0 %v5023, 16
  %v5151 = vpop.permute.xlu0 %5150
  %v5216 = vsel %vm1244, %v4308, %v4673
  %v5217 = vsel %vm1244, %v4309, %v4675
  %v5218 = vsel %vm1244, %v4311, %v4677
  %v5219 = vsel %vm1244, %v4312, %v4679
  %v5220 = vsel %vm1244, %v4314, %v4681
  %v5221 = vsel %vm1244, %v4315, %v4683
  %v5222 = vsel %vm1244, %v4317, %v4685
  %v5223 = vsel %vm1244, %v4318, %v4687
  %v5224 = vsel %vm1244, %v4320, %v4689
  %v5225 = vsel %vm1244, %v4321, %v4691
  %v5226 = vsel %vm1244, %v4323, %v4693
  %v5227 = vsel %vm1244, %v4324, %v4695
  %v5228 = vsel %vm1244, %v4326, %v4697
  %v5229 = vsel %vm1244, %v4327, %v4699
  %v5230 = vsel %vm1244, %v4329, %v4701
  %v5231 = vsel %vm1244, %v4330, %v4703
  %v5232 = vsel %vm1244, %v4332, %v4705
  %v5233 = vsel %vm1244, %v4333, %v4707
  %v5234 = vsel %vm1244, %v4335, %v4709
  %v5235 = vsel %vm1244, %v4336, %v4711
  %v5236 = vsel %vm1244, %v4338, %v4713
  %v5237 = vsel %vm1244, %v4339, %v4715
  %v5238 = vsel %vm1244, %v4341, %v4717
  %v5239 = vsel %vm1244, %v4342, %v4719
  %v5240 = vsel %vm1244, %v4344, %v4721
  %v5241 = vsel %vm1244, %v4345, %v4723
  %v5242 = vsel %vm1244, %v4347, %v4725
  %v5243 = vsel %vm1244, %v4348, %v4727
  %v5244 = vsel %vm1244, %v4350, %v4729
  %v5245 = vsel %vm1244, %v4351, %v4731
  %v5246 = vsel %vm1244, %v4353, %v4733
  %v5247 = vsel %vm1244, %v4354, %v4735
  %v5248 = vsel %vm1244, %v4362, %v4737
  %v5249 = vsel %vm1244, %v4363, %v4739
  %v5250 = vsel %vm1244, %v4365, %v4741
  %v5251 = vsel %vm1244, %v4366, %v4743
  %v5252 = vsel %vm1244, %v4368, %v4745
  %v5253 = vsel %vm1244, %v4369, %v4747
  %v5254 = vsel %vm1244, %v4371, %v4749
  %v5255 = vsel %vm1244, %v4372, %v4751
  %v5256 = vsel %vm1244, %v4374, %v4753
  %v5257 = vsel %vm1244, %v4375, %v4755
  %v5258 = vsel %vm1244, %v4377, %v4757
  %v5259 = vsel %vm1244, %v4378, %v4759
  %v5260 = vsel %vm1244, %v4380, %v4761
  %v5261 = vsel %vm1244, %v4381, %v4763
  %v5262 = vsel %vm1244, %v4383, %v4765
  %v5263 = vsel %vm1244, %v4384, %v4767
  %v5264 = vsel %vm1244, %v4386, %v4769
  %v5265 = vsel %vm1244, %v4387, %v4771
  %v5266 = vsel %vm1244, %v4389, %v4773
  %v5267 = vsel %vm1244, %v4390, %v4775
  %v5268 = vsel %vm1244, %v4392, %v4777
  %v5269 = vsel %vm1244, %v4393, %v4779
  %v5270 = vsel %vm1244, %v4395, %v4781
  %v5271 = vsel %vm1244, %v4396, %v4783
  %v5272 = vsel %vm1244, %v4398, %v4785
  %v5273 = vsel %vm1244, %v4399, %v4787
  %v5274 = vsel %vm1244, %v4401, %v4789
  %v5275 = vsel %vm1244, %v4402, %v4791
  %v5276 = vsel %vm1244, %v4404, %v4793
  %v5277 = vsel %vm1244, %v4405, %v4795
  %v5278 = vsel %vm1244, %v4407, %v4797
  %v5279 = vsel %vm1244, %v4408, %v4799
  %vm5280 = vcmask 130048
  %v5281 = vsel %vm5280, %v5216, %v5025
  %v5282 = vsel %vm5280, %v5217, %v5027
  %v5283 = vsel %vm5280, %v5218, %v5029
  %v5284 = vsel %vm5280, %v5219, %v5031
  %v5285 = vsel %vm5280, %v5220, %v5033
  %v5286 = vsel %vm5280, %v5221, %v5035
  %v5287 = vsel %vm5280, %v5222, %v5037
  %v5288 = vsel %vm5280, %v5223, %v5039
  %v5289 = vsel %vm5280, %v5224, %v5041
  %v5290 = vsel %vm5280, %v5225, %v5043
  %v5291 = vsel %vm5280, %v5226, %v5045
  %v5292 = vsel %vm5280, %v5227, %v5047
  %v5293 = vsel %vm5280, %v5228, %v5049
  %v5294 = vsel %vm5280, %v5229, %v5051
  %v5295 = vsel %vm5280, %v5230, %v5053
  %v5296 = vsel %vm5280, %v5231, %v5055
  %v5297 = vsel %vm5280, %v5232, %v5057
  %v5298 = vsel %vm5280, %v5233, %v5059
  %v5299 = vsel %vm5280, %v5234, %v5061
  %v5300 = vsel %vm5280, %v5235, %v5063
  %v5301 = vsel %vm5280, %v5236, %v5065
  %v5302 = vsel %vm5280, %v5237, %v5067
  %v5303 = vsel %vm5280, %v5238, %v5069
  %v5304 = vsel %vm5280, %v5239, %v5071
  %v5305 = vsel %vm5280, %v5240, %v5073
  %v5306 = vsel %vm5280, %v5241, %v5075
  %v5307 = vsel %vm5280, %v5242, %v5077
  %v5308 = vsel %vm5280, %v5243, %v5079
  %v5309 = vsel %vm5280, %v5244, %v5081
  %v5310 = vsel %vm5280, %v5245, %v5083
  %v5311 = vsel %vm5280, %v5246, %v5085
  %v5312 = vsel %vm5280, %v5247, %v5087
  %v5313 = vsel %vm5280, %v5248, %v5089
  %v5314 = vsel %vm5280, %v5249, %v5091
  %v5315 = vsel %vm5280, %v5250, %v5093
  %v5316 = vsel %vm5280, %v5251, %v5095
  %v5317 = vsel %vm5280, %v5252, %v5097
  %v5318 = vsel %vm5280, %v5253, %v5099
  %v5319 = vsel %vm5280, %v5254, %v5101
  %v5320 = vsel %vm5280, %v5255, %v5103
  %v5321 = vsel %vm5280, %v5256, %v5105
  %v5322 = vsel %vm5280, %v5257, %v5107
  %v5323 = vsel %vm5280, %v5258, %v5109
  %v5324 = vsel %vm5280, %v5259, %v5111
  %v5325 = vsel %vm5280, %v5260, %v5113
  %v5326 = vsel %vm5280, %v5261, %v5115
  %v5327 = vsel %vm5280, %v5262, %v5117
  %v5328 = vsel %vm5280, %v5263, %v5119
  %v5329 = vsel %vm5280, %v5264, %v5121
  %v5330 = vsel %vm5280, %v5265, %v5123
  %v5331 = vsel %vm5280, %v5266, %v5125
  %v5332 = vsel %vm5280, %v5267, %v5127
  %v5333 = vsel %vm5280, %v5268, %v5129
  %v5334 = vsel %vm5280, %v5269, %v5131
  %v5335 = vsel %vm5280, %v5270, %v5133
  %v5336 = vsel %vm5280, %v5271, %v5135
  %v5337 = vsel %vm5280, %v5272, %v5137
  %v5338 = vsel %vm5280, %v5273, %v5139
  %v5339 = vsel %vm5280, %v5274, %v5141
  %v5340 = vsel %vm5280, %v5275, %v5143
  %v5341 = vsel %vm5280, %v5276, %v5145
  %v5342 = vsel %vm5280, %v5277, %v5147
  %v5343 = vsel %vm5280, %v5278, %v5149
  %v5344 = vsel %vm5280, %v5279, %v5151
  %v5345 = vpack.c.bf16 %v5282, %v5281
  %v5346 = vpack.c.bf16 %v5284, %v5283
  %v5347 = vpack.c.bf16 %v5286, %v5285
  %v5348 = vpack.c.bf16 %v5288, %v5287
  %v5349 = vpack.c.bf16 %v5290, %v5289
  %v5350 = vpack.c.bf16 %v5292, %v5291
  %v5351 = vpack.c.bf16 %v5294, %v5293
  %v5352 = vpack.c.bf16 %v5296, %v5295
  %v5353 = vpack.c.bf16 %v5298, %v5297
  %v5354 = vpack.c.bf16 %v5300, %v5299
  %v5355 = vpack.c.bf16 %v5302, %v5301
  %v5356 = vpack.c.bf16 %v5304, %v5303
  %v5357 = vpack.c.bf16 %v5306, %v5305
  %v5358 = vpack.c.bf16 %v5308, %v5307
  %v5359 = vpack.c.bf16 %v5310, %v5309
  %v5360 = vpack.c.bf16 %v5312, %v5311
  %v5361 = vpack.c.bf16 %v5314, %v5313
  %v5362 = vpack.c.bf16 %v5316, %v5315
  %v5363 = vpack.c.bf16 %v5318, %v5317
  %v5364 = vpack.c.bf16 %v5320, %v5319
  %v5365 = vpack.c.bf16 %v5322, %v5321
  %v5366 = vpack.c.bf16 %v5324, %v5323
  %v5367 = vpack.c.bf16 %v5326, %v5325
  %v5368 = vpack.c.bf16 %v5328, %v5327
  %v5369 = vpack.c.bf16 %v5330, %v5329
  %v5370 = vpack.c.bf16 %v5332, %v5331
  %v5371 = vpack.c.bf16 %v5334, %v5333
  %v5372 = vpack.c.bf16 %v5336, %v5335
  %v5373 = vpack.c.bf16 %v5338, %v5337
  %v5374 = vpack.c.bf16 %v5340, %v5339
  %v5375 = vpack.c.bf16 %v5342, %v5341
  %v5376 = vpack.c.bf16 %v5344, %v5343
  %v5377 = vld [vmem:[%s7] sm:$0xf]
  %v5378 = vld [vmem:[%s7 + $0x4] sm:$0xf]
  %v5379 = vld [vmem:[%s7 + $0x8] sm:$0xf]
  %v5386 = vrot.slane %v4356, 1
  %v5387 = vrot.slane %v4357, 1
  %v5388 = vsel %vm474, %v5386, %v5387
  %v5389 = vrot.slane %v4358, 1
  %v5390 = vsel %vm474, %v5387, %v5389
  %v5391 = vrot.slane %v4410, 1
  %v5392 = vrot.slane %v4411, 1
  %v5393 = vsel %vm474, %v5391, %v5392
  %v5394 = vrot.slane %v4412, 1
  %v5395 = vsel %vm474, %v5392, %v5394
  %5396 = vrot.lane.b32.xlu0 %v5388, 8
  %v5397 = vpop.permute.xlu0 %5396
  %5398 = vrot.lane.b32.xlu0 %v5390, 8
  %v5399 = vpop.permute.xlu0 %5398
  %5400 = vrot.lane.b32.xlu0 %v5393, 8
  %v5401 = vpop.permute.xlu0 %5400
  %5402 = vrot.lane.b32.xlu0 %v5395, 8
  %v5403 = vpop.permute.xlu0 %5402
  %v5408 = vrot.slane %v4356, 2
  %v5409 = vrot.slane %v4357, 2
  %v5410 = vsel %vm827, %v5408, %v5409
  %v5411 = vrot.slane %v4358, 2
  %v5412 = vsel %vm827, %v5409, %v5411
  %v5413 = vrot.slane %v4410, 2
  %v5414 = vrot.slane %v4411, 2
  %v5415 = vsel %vm827, %v5413, %v5414
  %v5416 = vrot.slane %v4412, 2
  %v5417 = vsel %vm827, %v5414, %v5416
  %5418 = vrot.lane.b32.xlu0 %v5410, 16
  %v5419 = vpop.permute.xlu0 %5418
  %5420 = vrot.lane.b32.xlu0 %v5412, 16
  %v5421 = vpop.permute.xlu0 %5420
  %5422 = vrot.lane.b32.xlu0 %v5415, 16
  %v5423 = vpop.permute.xlu0 %5422
  %5424 = vrot.lane.b32.xlu0 %v5417, 16
  %v5425 = vpop.permute.xlu0 %5424
  %v5430 = vsel %vm1244, %v4356, %v5397
  %v5431 = vsel %vm1244, %v4357, %v5399
  %v5432 = vsel %vm1244, %v4410, %v5401
  %v5433 = vsel %vm1244, %v4411, %v5403
  %v5434 = vsel %vm5280, %v5430, %v5419
  %v5435 = vsel %vm5280, %v5431, %v5421
  %v5436 = vsel %vm5280, %v5432, %v5423
  %v5437 = vsel %vm5280, %v5433, %v5425
  %v5438 = vpack.c.bf16 %v5435, %v5434
  %v5439 = vpack.c.bf16 %v5437, %v5436
  %s5440 = scalar_lea.vmem %s7, 12
  %v5441 = vld [vmem:[%s5440] sm:$0xf]
  %v5442 = vld [vmem:[%s5440 + $0x4] sm:$0xf]
  %v5443 = vld [vmem:[%s5440 + $0x8] sm:$0xf]
  %v5447 = vunpack.c.l.b16 %v5441
  %v5448 = vunpack.c.l.b16 %v5442
  %v5449 = vunpack.c.l.b16 %v5443
  %v5450 = vpack.c.b16 %v5448, %v5447
  %v5451 = vpack.c.b16 %v5449, %v5449
  %vm5453 = vcmask 195584
  %v5455 = vsel %vm5453, %v5346, 0
  %v5458 = vsel %vm5453, %v5347, 0
  %v5461 = vsel %vm5453, %v5348, 0
  %v5464 = vsel %vm5453, %v5349, 0
  %v5467 = vsel %vm5453, %v5350, 0
  %v5470 = vsel %vm5453, %v5351, 0
  %v5473 = vsel %vm5453, %v5352, 0
  %v5476 = vsel %vm5453, %v5353, 0
  %v5479 = vsel %vm5453, %v5354, 0
  %v5482 = vsel %vm5453, %v5355, 0
  %v5485 = vsel %vm5453, %v5356, 0
  %v5488 = vsel %vm5453, %v5357, 0
  %v5491 = vsel %vm5453, %v5358, 0
  %v5494 = vsel %vm5453, %v5359, 0
  %v5497 = vsel %vm5453, %v5360, 0
  %v5500 = vsel %vm5453, %v5438, 0
  %v5503 = vsel %vm5453, %v5362, 0
  %v5506 = vsel %vm5453, %v5363, 0
  %v5509 = vsel %vm5453, %v5364, 0
  %v5512 = vsel %vm5453, %v5365, 0
  %v5515 = vsel %vm5453, %v5366, 0
  %v5518 = vsel %vm5453, %v5367, 0
  %v5521 = vsel %vm5453, %v5368, 0
  %v5524 = vsel %vm5453, %v5369, 0
  %v5527 = vsel %vm5453, %v5370, 0
  %v5530 = vsel %vm5453, %v5371, 0
  %v5533 = vsel %vm5453, %v5372, 0
  %v5536 = vsel %vm5453, %v5373, 0
  %v5539 = vsel %vm5453, %v5374, 0
  %v5542 = vsel %vm5453, %v5375, 0
  %v5545 = vsel %vm5453, %v5376, 0
  %v5548 = vsel %vm5453, %v5439, 0
  %vm5550 = vcmask 1043456
  %v5552 = vsel %vm5550, %v5451, 0
  %5554 = vmatprep.subr.bf16.mxu0 0
  %5555 = vmatpush1.bf16.msra.mxu0 %v5450
  %5556 = vmatprep.subr.bf16.mxu0 0
  %5557 = vmatpush1.bf16.msra.mxu0 %v5552
  %5558 = vmatprep.subr.bf16.mxu0 0
  %5559 = vmatpush1.bf16.msra.mxu0 0
  %5560 = vmatprep.subr.bf16.mxu0 0
  %5561 = vmatpush1.bf16.msra.mxu0 0
  %5562 = vmatprep.subr.bf16.mxu0 0
  %5563 = vmatpush1.bf16.msra.mxu0 0
  %5564 = vmatprep.subr.bf16.mxu0 0
  %5565 = vmatpush1.bf16.msra.mxu0 0
  %5566 = vmatprep.subr.bf16.mxu0 0
  %5567 = vmatpush1.bf16.msra.mxu0 0
  %5568 = vmatprep.subr.bf16.mxu0 0
  %5569 = vmatpush1.bf16.msra.mxu0 0
  %5570 = vmatprep.subr.bf16.mxu0 0
  %5571 = vmatpush1.bf16.msra.mxu0 0
  %5572 = vmatprep.subr.bf16.mxu0 0
  %5573 = vmatpush1.bf16.msra.mxu0 0
  %5574 = vmatprep.subr.bf16.mxu0 0
  %5575 = vmatpush1.bf16.msra.mxu0 0
  %5576 = vmatprep.subr.bf16.mxu0 0
  %5577 = vmatpush1.bf16.msra.mxu0 0
  %5578 = vmatprep.subr.bf16.mxu0 0
  %5579 = vmatpush1.bf16.msra.mxu0 0
  %5580 = vmatprep.subr.bf16.mxu0 0
  %5581 = vmatpush1.bf16.msra.mxu0 0
  %5582 = vmatprep.subr.bf16.mxu0 0
  %5583 = vmatpush1.bf16.msra.mxu0 0
  %5584 = vmatprep.subr.bf16.mxu0 0
  %5585 = vmatpush1.bf16.msra.mxu0 0
  %5586 = vmatprep.mubr.bf16.mxu0 0
  %5587 = vmatmul.mubr.bf16.gmra.mrb[0].mxu0 %v5455
  %v5588 = vpop.f32.mrb[0].mxu0
  %v5589 = vadd.f32 0.0, %v5588
  %v5590 = vpop.f32.mrb[0].mxu0
  %v5591 = vpop.f32.mrb[0].mxu0
  %v5592 = vadd.f32 0.0, %v5591
  %v5593 = vpop.f32.mrb[0].mxu0
  %5594 = vmatprep.mubr.bf16.mxu0 0
  %5595 = vmatmul.mubr.bf16.gmra.mrb[0].mxu0 %v5458
  %v5596 = vpop.f32.mrb[0].mxu0
  %v5597 = vadd.f32 0.0, %v5596
  %v5598 = vpop.f32.mrb[0].mxu0
  %v5599 = vpop.f32.mrb[0].mxu0
  %v5600 = vadd.f32 0.0, %v5599
  %v5601 = vpop.f32.mrb[0].mxu0
  %5602 = vmatprep.mubr.bf16.mxu0 0
  %5603 = vmatmul.mubr.bf16.gmra.mrb[0].mxu0 %v5461
  %v5604 = vpop.f32.mrb[0].mxu0
  %v5605 = vadd.f32 0.0, %v5604
  %v5606 = vpop.f32.mrb[0].mxu0
  %v5607 = vpop.f32.mrb[0].mxu0
  %v5608 = vadd.f32 0.0, %v5607
  %v5609 = vpop.f32.mrb[0].mxu0
  %5610 = vmatprep.mubr.bf16.mxu0 0
  %5611 = vmatmul.mubr.bf16.gmra.mrb[0].mxu0 %v5464
  %v5612 = vpop.f32.mrb[0].mxu0
  %v5613 = vadd.f32 0.0, %v5612
  %v5614 = vpop.f32.mrb[0].mxu0
  %v5615 = vpop.f32.mrb[0].mxu0
  %v5616 = vadd.f32 0.0, %v5615
  %v5617 = vpop.f32.mrb[0].mxu0
  %5618 = vmatprep.mubr.bf16.mxu0 0
  %5619 = vmatmul.mubr.bf16.gmra.mrb[0].mxu0 %v5467
  %v5620 = vpop.f32.mrb[0].mxu0
  %v5621 = vadd.f32 0.0, %v5620
  %v5622 = vpop.f32.mrb[0].mxu0
  %v5623 = vpop.f32.mrb[0].mxu0
  %v5624 = vadd.f32 0.0, %v5623
  %v5625 = vpop.f32.mrb[0].mxu0
  %5626 = vmatprep.mubr.bf16.mxu0 0
  %5627 = vmatmul.mubr.bf16.gmra.mrb[0].mxu0 %v5470
  %v5628 = vpop.f32.mrb[0].mxu0
  %v5629 = vadd.f32 0.0, %v5628
  %v5630 = vpop.f32.mrb[0].mxu0
  %v5631 = vpop.f32.mrb[0].mxu0
  %v5632 = vadd.f32 0.0, %v5631
  %v5633 = vpop.f32.mrb[0].mxu0
  %5634 = vmatprep.mubr.bf16.mxu0 0
  %5635 = vmatmul.mubr.bf16.gmra.mrb[0].mxu0 %v5473
  %v5636 = vpop.f32.mrb[0].mxu0
  %v5637 = vadd.f32 0.0, %v5636
  %v5638 = vpop.f32.mrb[0].mxu0
  %v5639 = vpop.f32.mrb[0].mxu0
  %v5640 = vadd.f32 0.0, %v5639
  %v5641 = vpop.f32.mrb[0].mxu0
  %5642 = vmatprep.mubr.bf16.mxu0 0
  %5643 = vmatmul.mubr.bf16.gmra.mrb[0].mxu0 %v5476
  %v5644 = vpop.f32.mrb[0].mxu0
  %v5645 = vadd.f32 0.0, %v5644
  %v5646 = vpop.f32.mrb[0].mxu0
  %v5647 = vpop.f32.mrb[0].mxu0
  %v5648 = vadd.f32 0.0, %v5647
  %v5649 = vpop.f32.mrb[0].mxu0
  %5650 = vmatprep.mubr.bf16.mxu0 0
  %5651 = vmatmul.mubr.bf16.gmra.mrb[0].mxu0 %v5479
  %v5652 = vpop.f32.mrb[0].mxu0
  %v5653 = vadd.f32 0.0, %v5652
  %v5654 = vpop.f32.mrb[0].mxu0
  %v5655 = vpop.f32.mrb[0].mxu0
  %v5656 = vadd.f32 0.0, %v5655
  %v5657 = vpop.f32.mrb[0].mxu0
  %5658 = vmatprep.mubr.bf16.mxu0 0
  %5659 = vmatmul.mubr.bf16.gmra.mrb[0].mxu0 %v5482
  %v5660 = vpop.f32.mrb[0].mxu0
  %v5661 = vadd.f32 0.0, %v5660
  %v5662 = vpop.f32.mrb[0].mxu0
  %v5663 = vpop.f32.mrb[0].mxu0
  %v5664 = vadd.f32 0.0, %v5663
  %v5665 = vpop.f32.mrb[0].mxu0
  %5666 = vmatprep.mubr.bf16.mxu0 0
  %5667 = vmatmul.mubr.bf16.gmra.mrb[0].mxu0 %v5485
  %v5668 = vpop.f32.mrb[0].mxu0
  %v5669 = vadd.f32 0.0, %v5668
  %v5670 = vpop.f32.mrb[0].mxu0
  %v5671 = vpop.f32.mrb[0].mxu0
  %v5672 = vadd.f32 0.0, %v5671
  %v5673 = vpop.f32.mrb[0].mxu0
  %5674 = vmatprep.mubr.bf16.mxu0 0
  %5675 = vmatmul.mubr.bf16.gmra.mrb[0].mxu0 %v5488
  %v5676 = vpop.f32.mrb[0].mxu0
  %v5677 = vadd.f32 0.0, %v5676
  %v5678 = vpop.f32.mrb[0].mxu0
  %v5679 = vpop.f32.mrb[0].mxu0
  %v5680 = vadd.f32 0.0, %v5679
  %v5681 = vpop.f32.mrb[0].mxu0
  %5682 = vmatprep.mubr.bf16.mxu0 0
  %5683 = vmatmul.mubr.bf16.gmra.mrb[0].mxu0 %v5491
  %v5684 = vpop.f32.mrb[0].mxu0
  %v5685 = vadd.f32 0.0, %v5684
  %v5686 = vpop.f32.mrb[0].mxu0
  %v5687 = vpop.f32.mrb[0].mxu0
  %v5688 = vadd.f32 0.0, %v5687
  %v5689 = vpop.f32.mrb[0].mxu0
  %5690 = vmatprep.mubr.bf16.mxu0 0
  %5691 = vmatmul.mubr.bf16.gmra.mrb[0].mxu0 %v5494
  %v5692 = vpop.f32.mrb[0].mxu0
  %v5693 = vadd.f32 0.0, %v5692
  %v5694 = vpop.f32.mrb[0].mxu0
  %v5695 = vpop.f32.mrb[0].mxu0
  %v5696 = vadd.f32 0.0, %v5695
  %v5697 = vpop.f32.mrb[0].mxu0
  %5698 = vmatprep.mubr.bf16.mxu0 0
  %5699 = vmatmul.mubr.bf16.gmra.mrb[0].mxu0 %v5497
  %v5700 = vpop.f32.mrb[0].mxu0
  %v5701 = vadd.f32 0.0, %v5700
  %v5702 = vpop.f32.mrb[0].mxu0
  %v5703 = vpop.f32.mrb[0].mxu0
  %v5704 = vadd.f32 0.0, %v5703
  %v5705 = vpop.f32.mrb[0].mxu0
  %5706 = vmatprep.mubr.bf16.mxu0 0
  %5707 = vmatmul.mubr.bf16.gmra.mrb[0].mxu0 %v5500
  %v5708 = vpop.f32.mrb[0].mxu0
  %v5709 = vadd.f32 0.0, %v5708
  %v5710 = vpop.f32.mrb[0].mxu0
  %v5711 = vpop.f32.mrb[0].mxu0
  %v5712 = vadd.f32 0.0, %v5711
  %v5713 = vpop.f32.mrb[0].mxu0
  %5714 = vmatprep.mubr.bf16.mxu0 0
  %5715 = vmatmul.mubr.bf16.gmra.mrb[0].mxu0 %v5503
  %v5716 = vpop.f32.mrb[0].mxu0
  %v5717 = vadd.f32 0.0, %v5716
  %v5718 = vpop.f32.mrb[0].mxu0
  %v5719 = vpop.f32.mrb[0].mxu0
  %v5720 = vadd.f32 0.0, %v5719
  %v5721 = vpop.f32.mrb[0].mxu0
  %5722 = vmatprep.mubr.bf16.mxu0 0
  %5723 = vmatmul.mubr.bf16.gmra.mrb[0].mxu0 %v5506
  %v5724 = vpop.f32.mrb[0].mxu0
  %v5725 = vadd.f32 0.0, %v5724
  %v5726 = vpop.f32.mrb[0].mxu0
  %v5727 = vpop.f32.mrb[0].mxu0
  %v5728 = vadd.f32 0.0, %v5727
  %v5729 = vpop.f32.mrb[0].mxu0
  %5730 = vmatprep.mubr.bf16.mxu0 0
  %5731 = vmatmul.mubr.bf16.gmra.mrb[0].mxu0 %v5509
  %v5732 = vpop.f32.mrb[0].mxu0
  %v5733 = vadd.f32 0.0, %v5732
  %v5734 = vpop.f32.mrb[0].mxu0
  %v5735 = vpop.f32.mrb[0].mxu0
  %v5736 = vadd.f32 0.0, %v5735
  %v5737 = vpop.f32.mrb[0].mxu0
  %5738 = vmatprep.mubr.bf16.mxu0 0
  %5739 = vmatmul.mubr.bf16.gmra.mrb[0].mxu0 %v5512
  %v5740 = vpop.f32.mrb[0].mxu0
  %v5741 = vadd.f32 0.0, %v5740
  %v5742 = vpop.f32.mrb[0].mxu0
  %v5743 = vpop.f32.mrb[0].mxu0
  %v5744 = vadd.f32 0.0, %v5743
  %v5745 = vpop.f32.mrb[0].mxu0
  %5746 = vmatprep.mubr.bf16.mxu0 0
  %5747 = vmatmul.mubr.bf16.gmra.mrb[0].mxu0 %v5515
  %v5748 = vpop.f32.mrb[0].mxu0
  %v5749 = vadd.f32 0.0, %v5748
  %v5750 = vpop.f32.mrb[0].mxu0
  %v5751 = vpop.f32.mrb[0].mxu0
  %v5752 = vadd.f32 0.0, %v5751
  %v5753 = vpop.f32.mrb[0].mxu0
  %5754 = vmatprep.mubr.bf16.mxu0 0
  %5755 = vmatmul.mubr.bf16.gmra.mrb[0].mxu0 %v5518
  %v5756 = vpop.f32.mrb[0].mxu0
  %v5757 = vadd.f32 0.0, %v5756
  %v5758 = vpop.f32.mrb[0].mxu0
  %v5759 = vpop.f32.mrb[0].mxu0
  %v5760 = vadd.f32 0.0, %v5759
  %v5761 = vpop.f32.mrb[0].mxu0
  %5762 = vmatprep.mubr.bf16.mxu0 0
  %5763 = vmatmul.mubr.bf16.gmra.mrb[0].mxu0 %v5521
  %v5764 = vpop.f32.mrb[0].mxu0
  %v5765 = vadd.f32 0.0, %v5764
  %v5766 = vpop.f32.mrb[0].mxu0
  %v5767 = vpop.f32.mrb[0].mxu0
  %v5768 = vadd.f32 0.0, %v5767
  %v5769 = vpop.f32.mrb[0].mxu0
  %5770 = vmatprep.mubr.bf16.mxu0 0
  %5771 = vmatmul.mubr.bf16.gmra.mrb[0].mxu0 %v5524
  %v5772 = vpop.f32.mrb[0].mxu0
  %v5773 = vadd.f32 0.0, %v5772
  %v5774 = vpop.f32.mrb[0].mxu0
  %v5775 = vpop.f32.mrb[0].mxu0
  %v5776 = vadd.f32 0.0, %v5775
  %v5777 = vpop.f32.mrb[0].mxu0
  %5778 = vmatprep.mubr.bf16.mxu0 0
  %5779 = vmatmul.mubr.bf16.gmra.mrb[0].mxu0 %v5527
  %v5780 = vpop.f32.mrb[0].mxu0
  %v5781 = vadd.f32 0.0, %v5780
  %v5782 = vpop.f32.mrb[0].mxu0
  %v5783 = vpop.f32.mrb[0].mxu0
  %v5784 = vadd.f32 0.0, %v5783
  %v5785 = vpop.f32.mrb[0].mxu0
  %5786 = vmatprep.mubr.bf16.mxu0 0
  %5787 = vmatmul.mubr.bf16.gmra.mrb[0].mxu0 %v5530
  %v5788 = vpop.f32.mrb[0].mxu0
  %v5789 = vadd.f32 0.0, %v5788
  %v5790 = vpop.f32.mrb[0].mxu0
  %v5791 = vpop.f32.mrb[0].mxu0
  %v5792 = vadd.f32 0.0, %v5791
  %v5793 = vpop.f32.mrb[0].mxu0
  %5794 = vmatprep.mubr.bf16.mxu0 0
  %5795 = vmatmul.mubr.bf16.gmra.mrb[0].mxu0 %v5533
  %v5796 = vpop.f32.mrb[0].mxu0
  %v5797 = vadd.f32 0.0, %v5796
  %v5798 = vpop.f32.mrb[0].mxu0
  %v5799 = vpop.f32.mrb[0].mxu0
  %v5800 = vadd.f32 0.0, %v5799
  %v5801 = vpop.f32.mrb[0].mxu0
  %5802 = vmatprep.mubr.bf16.mxu0 0
  %5803 = vmatmul.mubr.bf16.gmra.mrb[0].mxu0 %v5536
  %v5804 = vpop.f32.mrb[0].mxu0
  %v5805 = vadd.f32 0.0, %v5804
  %v5806 = vpop.f32.mrb[0].mxu0
  %v5807 = vpop.f32.mrb[0].mxu0
  %v5808 = vadd.f32 0.0, %v5807
  %v5809 = vpop.f32.mrb[0].mxu0
  %5810 = vmatprep.mubr.bf16.mxu0 0
  %5811 = vmatmul.mubr.bf16.gmra.mrb[0].mxu0 %v5539
  %v5812 = vpop.f32.mrb[0].mxu0
  %v5813 = vadd.f32 0.0, %v5812
  %v5814 = vpop.f32.mrb[0].mxu0
  %v5815 = vpop.f32.mrb[0].mxu0
  %v5816 = vadd.f32 0.0, %v5815
  %v5817 = vpop.f32.mrb[0].mxu0
  %5818 = vmatprep.mubr.bf16.mxu0 0
  %5819 = vmatmul.mubr.bf16.gmra.mrb[0].mxu0 %v5542
  %v5820 = vpop.f32.mrb[0].mxu0
  %v5821 = vadd.f32 0.0, %v5820
  %v5822 = vpop.f32.mrb[0].mxu0
  %v5823 = vpop.f32.mrb[0].mxu0
  %v5824 = vadd.f32 0.0, %v5823
  %v5825 = vpop.f32.mrb[0].mxu0
  %5826 = vmatprep.mubr.bf16.mxu0 0
  %5827 = vmatmul.mubr.bf16.gmra.mrb[0].mxu0 %v5545
  %v5828 = vpop.f32.mrb[0].mxu0
  %v5829 = vadd.f32 0.0, %v5828
  %v5830 = vpop.f32.mrb[0].mxu0
  %v5831 = vpop.f32.mrb[0].mxu0
  %v5832 = vadd.f32 0.0, %v5831
  %v5833 = vpop.f32.mrb[0].mxu0
  %5834 = vmatprep.mubr.bf16.mxu0 0
  %5835 = vmatmul.mubr.bf16.gmra.mrb[0].mxu0 %v5548
  %v5836 = vpop.f32.mrb[0].mxu0
  %v5837 = vadd.f32 0.0, %v5836
  %v5838 = vpop.f32.mrb[0].mxu0
  %v5839 = vpop.f32.mrb[0].mxu0
  %v5840 = vadd.f32 0.0, %v5839
  %v5841 = vpop.f32.mrb[0].mxu0
  %5842 = vdwg.mxu0
  %v5846 = vunpack.c.l.b16 %v5377
  %v5847 = vunpack.c.l.b16 %v5378
  %v5848 = vunpack.c.l.b16 %v5379
  %v5849 = vpack.c.b16 %v5847, %v5846
  %v5850 = vpack.c.b16 %v5848, %v5848
  %v5853 = vsel %vm5453, %v5345, 0
  %v5856 = vsel %vm5453, %v5361, 0
  %v5859 = vsel %vm5550, %v5850, 0
  %5861 = vmatprep.subr.bf16.mxu0 0
  %5862 = vmatpush1.bf16.msra.mxu0 %v5849
  %5863 = vmatprep.subr.bf16.mxu0 0
  %5864 = vmatpush1.bf16.msra.mxu0 %v5859
  %5865 = vmatprep.subr.bf16.mxu0 0
  %5866 = vmatpush1.bf16.msra.mxu0 0
  %5867 = vmatprep.subr.bf16.mxu0 0
  %5868 = vmatpush1.bf16.msra.mxu0 0
  %5869 = vmatprep.subr.bf16.mxu0 0
  %5870 = vmatpush1.bf16.msra.mxu0 0
  %5871 = vmatprep.subr.bf16.mxu0 0
  %5872 = vmatpush1.bf16.msra.mxu0 0
  %5873 = vmatprep.subr.bf16.mxu0 0
  %5874 = vmatpush1.bf16.msra.mxu0 0
  %5875 = vmatprep.subr.bf16.mxu0 0
  %5876 = vmatpush1.bf16.msra.mxu0 0
  %5877 = vmatprep.subr.bf16.mxu0 0
  %5878 = vmatpush1.bf16.msra.mxu0 0
  %5879 = vmatprep.subr.bf16.mxu0 0
  %5880 = vmatpush1.bf16.msra.mxu0 0
  %5881 = vmatprep.subr.bf16.mxu0 0
  %5882 = vmatpush1.bf16.msra.mxu0 0
  %5883 = vmatprep.subr.bf16.mxu0 0
  %5884 = vmatpush1.bf16.msra.mxu0 0
  %5885 = vmatprep.subr.bf16.mxu0 0
  %5886 = vmatpush1.bf16.msra.mxu0 0
  %5887 = vmatprep.subr.bf16.mxu0 0
  %5888 = vmatpush1.bf16.msra.mxu0 0
  %5889 = vmatprep.subr.bf16.mxu0 0
  %5890 = vmatpush1.bf16.msra.mxu0 0
  %5891 = vmatprep.subr.bf16.mxu0 0
  %5892 = vmatpush1.bf16.msra.mxu0 0
  %5893 = vmatprep.mubr.bf16.mxu0 0
  %5894 = vmatmul.mubr.bf16.gmra.mrb[0].mxu0 %v5853
  %v5895 = vpop.f32.mrb[0].mxu0
  %v5896 = vadd.f32 %v5589, %v5895
  %v5897 = vpop.f32.mrb[0].mxu0
  %v5898 = vpop.f32.mrb[0].mxu0
  %v5899 = vadd.f32 %v5592, %v5898
  %v5900 = vpop.f32.mrb[0].mxu0
  %5901 = vmatprep.mubr.bf16.mxu0 0
  %5902 = vmatmul.mubr.bf16.gmra.mrb[0].mxu0 %v5455
  %v5903 = vpop.f32.mrb[0].mxu0
  %v5904 = vadd.f32 %v5597, %v5903
  %v5905 = vpop.f32.mrb[0].mxu0
  %v5906 = vpop.f32.mrb[0].mxu0
  %v5907 = vadd.f32 %v5600, %v5906
  %v5908 = vpop.f32.mrb[0].mxu0
  %5909 = vmatprep.mubr.bf16.mxu0 0
  %5910 = vmatmul.mubr.bf16.gmra.mrb[0].mxu0 %v5458
  %v5911 = vpop.f32.mrb[0].mxu0
  %v5912 = vadd.f32 %v5605, %v5911
  %v5913 = vpop.f32.mrb[0].mxu0
  %v5914 = vpop.f32.mrb[0].mxu0
  %v5915 = vadd.f32 %v5608, %v5914
  %v5916 = vpop.f32.mrb[0].mxu0
  %5917 = vmatprep.mubr.bf16.mxu0 0
  %5918 = vmatmul.mubr.bf16.gmra.mrb[0].mxu0 %v5461
  %v5919 = vpop.f32.mrb[0].mxu0
  %v5920 = vadd.f32 %v5613, %v5919
  %v5921 = vpop.f32.mrb[0].mxu0
  %v5922 = vpop.f32.mrb[0].mxu0
  %v5923 = vadd.f32 %v5616, %v5922
  %v5924 = vpop.f32.mrb[0].mxu0
  %5925 = vmatprep.mubr.bf16.mxu0 0
  %5926 = vmatmul.mubr.bf16.gmra.mrb[0].mxu0 %v5464
  %v5927 = vpop.f32.mrb[0].mxu0
  %v5928 = vadd.f32 %v5621, %v5927
  %v5929 = vpop.f32.mrb[0].mxu0
  %v5930 = vpop.f32.mrb[0].mxu0
  %v5931 = vadd.f32 %v5624, %v5930
  %v5932 = vpop.f32.mrb[0].mxu0
  %5933 = vmatprep.mubr.bf16.mxu0 0
  %5934 = vmatmul.mubr.bf16.gmra.mrb[0].mxu0 %v5467
  %v5935 = vpop.f32.mrb[0].mxu0
  %v5936 = vadd.f32 %v5629, %v5935
  %v5937 = vpop.f32.mrb[0].mxu0
  %v5938 = vpop.f32.mrb[0].mxu0
  %v5939 = vadd.f32 %v5632, %v5938
  %v5940 = vpop.f32.mrb[0].mxu0
  %5941 = vmatprep.mubr.bf16.mxu0 0
  %5942 = vmatmul.mubr.bf16.gmra.mrb[0].mxu0 %v5470
  %v5943 = vpop.f32.mrb[0].mxu0
  %v5944 = vadd.f32 %v5637, %v5943
  %v5945 = vpop.f32.mrb[0].mxu0
  %v5946 = vpop.f32.mrb[0].mxu0
  %v5947 = vadd.f32 %v5640, %v5946
  %v5948 = vpop.f32.mrb[0].mxu0
  %5949 = vmatprep.mubr.bf16.mxu0 0
  %5950 = vmatmul.mubr.bf16.gmra.mrb[0].mxu0 %v5473
  %v5951 = vpop.f32.mrb[0].mxu0
  %v5952 = vadd.f32 %v5645, %v5951
  %v5953 = vpop.f32.mrb[0].mxu0
  %v5954 = vpop.f32.mrb[0].mxu0
  %v5955 = vadd.f32 %v5648, %v5954
  %v5956 = vpop.f32.mrb[0].mxu0
  %5957 = vmatprep.mubr.bf16.mxu0 0
  %5958 = vmatmul.mubr.bf16.gmra.mrb[0].mxu0 %v5476
  %v5959 = vpop.f32.mrb[0].mxu0
  %v5960 = vadd.f32 %v5653, %v5959
  %v5961 = vpop.f32.mrb[0].mxu0
  %v5962 = vpop.f32.mrb[0].mxu0
  %v5963 = vadd.f32 %v5656, %v5962
  %v5964 = vpop.f32.mrb[0].mxu0
  %5965 = vmatprep.mubr.bf16.mxu0 0
  %5966 = vmatmul.mubr.bf16.gmra.mrb[0].mxu0 %v5479
  %v5967 = vpop.f32.mrb[0].mxu0
  %v5968 = vadd.f32 %v5661, %v5967
  %v5969 = vpop.f32.mrb[0].mxu0
  %v5970 = vpop.f32.mrb[0].mxu0
  %v5971 = vadd.f32 %v5664, %v5970
  %v5972 = vpop.f32.mrb[0].mxu0
  %5973 = vmatprep.mubr.bf16.mxu0 0
  %5974 = vmatmul.mubr.bf16.gmra.mrb[0].mxu0 %v5482
  %v5975 = vpop.f32.mrb[0].mxu0
  %v5976 = vadd.f32 %v5669, %v5975
  %v5977 = vpop.f32.mrb[0].mxu0
  %v5978 = vpop.f32.mrb[0].mxu0
  %v5979 = vadd.f32 %v5672, %v5978
  %v5980 = vpop.f32.mrb[0].mxu0
  %5981 = vmatprep.mubr.bf16.mxu0 0
  %5982 = vmatmul.mubr.bf16.gmra.mrb[0].mxu0 %v5485
  %v5983 = vpop.f32.mrb[0].mxu0
  %v5984 = vadd.f32 %v5677, %v5983
  %v5985 = vpop.f32.mrb[0].mxu0
  %v5986 = vpop.f32.mrb[0].mxu0
  %v5987 = vadd.f32 %v5680, %v5986
  %v5988 = vpop.f32.mrb[0].mxu0
  %5989 = vmatprep.mubr.bf16.mxu0 0
  %5990 = vmatmul.mubr.bf16.gmra.mrb[0].mxu0 %v5488
  %v5991 = vpop.f32.mrb[0].mxu0
  %v5992 = vadd.f32 %v5685, %v5991
  %v5993 = vpop.f32.mrb[0].mxu0
  %v5994 = vpop.f32.mrb[0].mxu0
  %v5995 = vadd.f32 %v5688, %v5994
  %v5996 = vpop.f32.mrb[0].mxu0
  %5997 = vmatprep.mubr.bf16.mxu0 0
  %5998 = vmatmul.mubr.bf16.gmra.mrb[0].mxu0 %v5491
  %v5999 = vpop.f32.mrb[0].mxu0
  %v6000 = vadd.f32 %v5693, %v5999
  %v6001 = vpop.f32.mrb[0].mxu0
  %v6002 = vpop.f32.mrb[0].mxu0
  %v6003 = vadd.f32 %v5696, %v6002
  %v6004 = vpop.f32.mrb[0].mxu0
  %6005 = vmatprep.mubr.bf16.mxu0 0
  %6006 = vmatmul.mubr.bf16.gmra.mrb[0].mxu0 %v5494
  %v6007 = vpop.f32.mrb[0].mxu0
  %v6008 = vadd.f32 %v5701, %v6007
  %v6009 = vpop.f32.mrb[0].mxu0
  %v6010 = vpop.f32.mrb[0].mxu0
  %v6011 = vadd.f32 %v5704, %v6010
  %v6012 = vpop.f32.mrb[0].mxu0
  %6013 = vmatprep.mubr.bf16.mxu0 0
  %6014 = vmatmul.mubr.bf16.gmra.mrb[0].mxu0 %v5497
  %v6015 = vpop.f32.mrb[0].mxu0
  %v6016 = vadd.f32 %v5709, %v6015
  %v6017 = vpop.f32.mrb[0].mxu0
  %v6018 = vpop.f32.mrb[0].mxu0
  %v6019 = vadd.f32 %v5712, %v6018
  %v6020 = vpop.f32.mrb[0].mxu0
  %6021 = vmatprep.mubr.bf16.mxu0 0
  %6022 = vmatmul.mubr.bf16.gmra.mrb[0].mxu0 %v5856
  %v6023 = vpop.f32.mrb[0].mxu0
  %v6024 = vadd.f32 %v5717, %v6023
  %v6025 = vpop.f32.mrb[0].mxu0
  %v6026 = vpop.f32.mrb[0].mxu0
  %v6027 = vadd.f32 %v5720, %v6026
  %v6028 = vpop.f32.mrb[0].mxu0
  %6029 = vmatprep.mubr.bf16.mxu0 0
  %6030 = vmatmul.mubr.bf16.gmra.mrb[0].mxu0 %v5503
  %v6031 = vpop.f32.mrb[0].mxu0
  %v6032 = vadd.f32 %v5725, %v6031
  %v6033 = vpop.f32.mrb[0].mxu0
  %v6034 = vpop.f32.mrb[0].mxu0
  %v6035 = vadd.f32 %v5728, %v6034
  %v6036 = vpop.f32.mrb[0].mxu0
  %6037 = vmatprep.mubr.bf16.mxu0 0
  %6038 = vmatmul.mubr.bf16.gmra.mrb[0].mxu0 %v5506
  %v6039 = vpop.f32.mrb[0].mxu0
  %v6040 = vadd.f32 %v5733, %v6039
  %v6041 = vpop.f32.mrb[0].mxu0
  %v6042 = vpop.f32.mrb[0].mxu0
  %v6043 = vadd.f32 %v5736, %v6042
  %v6044 = vpop.f32.mrb[0].mxu0
  %6045 = vmatprep.mubr.bf16.mxu0 0
  %6046 = vmatmul.mubr.bf16.gmra.mrb[0].mxu0 %v5509
  %v6047 = vpop.f32.mrb[0].mxu0
  %v6048 = vadd.f32 %v5741, %v6047
  %v6049 = vpop.f32.mrb[0].mxu0
  %v6050 = vpop.f32.mrb[0].mxu0
  %v6051 = vadd.f32 %v5744, %v6050
  %v6052 = vpop.f32.mrb[0].mxu0
  %6053 = vmatprep.mubr.bf16.mxu0 0
  %6054 = vmatmul.mubr.bf16.gmra.mrb[0].mxu0 %v5512
  %v6055 = vpop.f32.mrb[0].mxu0
  %v6056 = vadd.f32 %v5749, %v6055
  %v6057 = vpop.f32.mrb[0].mxu0
  %v6058 = vpop.f32.mrb[0].mxu0
  %v6059 = vadd.f32 %v5752, %v6058
  %v6060 = vpop.f32.mrb[0].mxu0
  %6061 = vmatprep.mubr.bf16.mxu0 0
  %6062 = vmatmul.mubr.bf16.gmra.mrb[0].mxu0 %v5515
  %v6063 = vpop.f32.mrb[0].mxu0
  %v6064 = vadd.f32 %v5757, %v6063
  %v6065 = vpop.f32.mrb[0].mxu0
  %v6066 = vpop.f32.mrb[0].mxu0
  %v6067 = vadd.f32 %v5760, %v6066
  %v6068 = vpop.f32.mrb[0].mxu0
  %6069 = vmatprep.mubr.bf16.mxu0 0
  %6070 = vmatmul.mubr.bf16.gmra.mrb[0].mxu0 %v5518
  %v6071 = vpop.f32.mrb[0].mxu0
  %v6072 = vadd.f32 %v5765, %v6071
  %v6073 = vpop.f32.mrb[0].mxu0
  %v6074 = vpop.f32.mrb[0].mxu0
  %v6075 = vadd.f32 %v5768, %v6074
  %v6076 = vpop.f32.mrb[0].mxu0
  %6077 = vmatprep.mubr.bf16.mxu0 0
  %6078 = vmatmul.mubr.bf16.gmra.mrb[0].mxu0 %v5521
  %v6079 = vpop.f32.mrb[0].mxu0
  %v6080 = vadd.f32 %v5773, %v6079
  %v6081 = vpop.f32.mrb[0].mxu0
  %v6082 = vpop.f32.mrb[0].mxu0
  %v6083 = vadd.f32 %v5776, %v6082
  %v6084 = vpop.f32.mrb[0].mxu0
  %6085 = vmatprep.mubr.bf16.mxu0 0
  %6086 = vmatmul.mubr.bf16.gmra.mrb[0].mxu0 %v5524
  %v6087 = vpop.f32.mrb[0].mxu0
  %v6088 = vadd.f32 %v5781, %v6087
  %v6089 = vpop.f32.mrb[0].mxu0
  %v6090 = vpop.f32.mrb[0].mxu0
  %v6091 = vadd.f32 %v5784, %v6090
  %v6092 = vpop.f32.mrb[0].mxu0
  %6093 = vmatprep.mubr.bf16.mxu0 0
  %6094 = vmatmul.mubr.bf16.gmra.mrb[0].mxu0 %v5527
  %v6095 = vpop.f32.mrb[0].mxu0
  %v6096 = vadd.f32 %v5789, %v6095
  %v6097 = vpop.f32.mrb[0].mxu0
  %v6098 = vpop.f32.mrb[0].mxu0
  %v6099 = vadd.f32 %v5792, %v6098
  %v6100 = vpop.f32.mrb[0].mxu0
  %6101 = vmatprep.mubr.bf16.mxu0 0
  %6102 = vmatmul.mubr.bf16.gmra.mrb[0].mxu0 %v5530
  %v6103 = vpop.f32.mrb[0].mxu0
  %v6104 = vadd.f32 %v5797, %v6103
  %v6105 = vpop.f32.mrb[0].mxu0
  %v6106 = vpop.f32.mrb[0].mxu0
  %v6107 = vadd.f32 %v5800, %v6106
  %v6108 = vpop.f32.mrb[0].mxu0
  %6109 = vmatprep.mubr.bf16.mxu0 0
  %6110 = vmatmul.mubr.bf16.gmra.mrb[0].mxu0 %v5533
  %v6111 = vpop.f32.mrb[0].mxu0
  %v6112 = vadd.f32 %v5805, %v6111
  %v6113 = vpop.f32.mrb[0].mxu0
  %v6114 = vpop.f32.mrb[0].mxu0
  %v6115 = vadd.f32 %v5808, %v6114
  %v6116 = vpop.f32.mrb[0].mxu0
  %6117 = vmatprep.mubr.bf16.mxu0 0
  %6118 = vmatmul.mubr.bf16.gmra.mrb[0].mxu0 %v5536
  %v6119 = vpop.f32.mrb[0].mxu0
  %v6120 = vadd.f32 %v5813, %v6119
  %v6121 = vpop.f32.mrb[0].mxu0
  %v6122 = vpop.f32.mrb[0].mxu0
  %v6123 = vadd.f32 %v5816, %v6122
  %v6124 = vpop.f32.mrb[0].mxu0
  %6125 = vmatprep.mubr.bf16.mxu0 0
  %6126 = vmatmul.mubr.bf16.gmra.mrb[0].mxu0 %v5539
  %v6127 = vpop.f32.mrb[0].mxu0
  %v6128 = vadd.f32 %v5821, %v6127
  %v6129 = vpop.f32.mrb[0].mxu0
  %v6130 = vpop.f32.mrb[0].mxu0
  %v6131 = vadd.f32 %v5824, %v6130
  %v6132 = vpop.f32.mrb[0].mxu0
  %6133 = vmatprep.mubr.bf16.mxu0 0
  %6134 = vmatmul.mubr.bf16.gmra.mrb[0].mxu0 %v5542
  %v6135 = vpop.f32.mrb[0].mxu0
  %v6136 = vadd.f32 %v5829, %v6135
  %v6137 = vpop.f32.mrb[0].mxu0
  %v6138 = vpop.f32.mrb[0].mxu0
  %v6139 = vadd.f32 %v5832, %v6138
  %v6140 = vpop.f32.mrb[0].mxu0
  %6141 = vmatprep.mubr.bf16.mxu0 0
  %6142 = vmatmul.mubr.bf16.gmra.mrb[0].mxu0 %v5545
  %v6143 = vpop.f32.mrb[0].mxu0
  %v6144 = vadd.f32 %v5837, %v6143
  %v6145 = vpop.f32.mrb[0].mxu0
  %v6146 = vpop.f32.mrb[0].mxu0
  %v6147 = vadd.f32 %v5840, %v6146
  %v6148 = vpop.f32.mrb[0].mxu0
  %6149 = vdwg.mxu0
  %v6156 = vrot.slane %v4359, 1
  %v6157 = vrot.slane %v4360, 1
  %v6158 = vsel %vm474, %v6156, %v6157
  %v6159 = vrot.slane %v4361, 1
  %v6160 = vsel %vm474, %v6157, %v6159
  %v6161 = vrot.slane %v4413, 1
  %v6162 = vrot.slane %v4414, 1
  %v6163 = vsel %vm474, %v6161, %v6162
  %v6164 = vrot.slane %v4415, 1
  %v6165 = vsel %vm474, %v6162, %v6164
  %6166 = vrot.lane.b32.xlu0 %v6158, 8
  %v6167 = vpop.permute.xlu0 %6166
  %6168 = vrot.lane.b32.xlu0 %v6160, 8
  %v6169 = vpop.permute.xlu0 %6168
  %6170 = vrot.lane.b32.xlu0 %v6163, 8
  %v6171 = vpop.permute.xlu0 %6170
  %6172 = vrot.lane.b32.xlu0 %v6165, 8
  %v6173 = vpop.permute.xlu0 %6172
  %v6178 = vrot.slane %v4359, 2
  %v6179 = vrot.slane %v4360, 2
  %v6180 = vsel %vm827, %v6178, %v6179
  %v6181 = vrot.slane %v4361, 2
  %v6182 = vsel %vm827, %v6179, %v6181
  %v6183 = vrot.slane %v4413, 2
  %v6184 = vrot.slane %v4414, 2
  %v6185 = vsel %vm827, %v6183, %v6184
  %v6186 = vrot.slane %v4415, 2
  %v6187 = vsel %vm827, %v6184, %v6186
  %6188 = vrot.lane.b32.xlu0 %v6180, 16
  %v6189 = vpop.permute.xlu0 %6188
  %6190 = vrot.lane.b32.xlu0 %v6182, 16
  %v6191 = vpop.permute.xlu0 %6190
  %6192 = vrot.lane.b32.xlu0 %v6185, 16
  %v6193 = vpop.permute.xlu0 %6192
  %6194 = vrot.lane.b32.xlu0 %v6187, 16
  %v6195 = vpop.permute.xlu0 %6194
  %v6200 = vsel %vm1244, %v4359, %v6167
  %v6201 = vsel %vm1244, %v4360, %v6169
  %v6202 = vsel %vm1244, %v4413, %v6171
  %v6203 = vsel %vm1244, %v4414, %v6173
  %v6204 = vsel %vm5280, %v6200, %v6189
  %v6205 = vsel %vm5280, %v6201, %v6191
  %v6206 = vsel %vm5280, %v6202, %v6193
  %v6207 = vsel %vm5280, %v6203, %v6195
  %v6208 = vpack.c.bf16 %v6205, %v6204
  %v6209 = vpack.c.bf16 %v6207, %v6206
  %s6210 = scalar_lea.vmem %s7, 24
  %v6211 = vld [vmem:[%s6210] sm:$0xf]
  %v6212 = vld [vmem:[%s6210 + $0x4] sm:$0xf]
  %v6213 = vld [vmem:[%s6210 + $0x8] sm:$0xf]
  %v6217 = vunpack.c.l.b16 %v6211
  %v6218 = vunpack.c.l.b16 %v6212
  %v6219 = vunpack.c.l.b16 %v6213
  %v6220 = vpack.c.b16 %v6218, %v6217
  %v6221 = vpack.c.b16 %v6219, %v6219
  %v6224 = vsel %vm5453, %v6208, 0
  %v6227 = vsel %vm5453, %v6209, 0
  %v6230 = vsel %vm5550, %v6221, 0
  %6232 = vmatprep.subr.bf16.mxu0 0
  %6233 = vmatpush1.bf16.msra.mxu0 %v6220
  %6234 = vmatprep.subr.bf16.mxu0 0
  %6235 = vmatpush1.bf16.msra.mxu0 %v6230
  %6236 = vmatprep.subr.bf16.mxu0 0
  %6237 = vmatpush1.bf16.msra.mxu0 0
  %6238 = vmatprep.subr.bf16.mxu0 0
  %6239 = vmatpush1.bf16.msra.mxu0 0
  %6240 = vmatprep.subr.bf16.mxu0 0
  %6241 = vmatpush1.bf16.msra.mxu0 0
  %6242 = vmatprep.subr.bf16.mxu0 0
  %6243 = vmatpush1.bf16.msra.mxu0 0
  %6244 = vmatprep.subr.bf16.mxu0 0
  %6245 = vmatpush1.bf16.msra.mxu0 0
  %6246 = vmatprep.subr.bf16.mxu0 0
  %6247 = vmatpush1.bf16.msra.mxu0 0
  %6248 = vmatprep.subr.bf16.mxu0 0
  %6249 = vmatpush1.bf16.msra.mxu0 0
  %6250 = vmatprep.subr.bf16.mxu0 0
  %6251 = vmatpush1.bf16.msra.mxu0 0
  %6252 = vmatprep.subr.bf16.mxu0 0
  %6253 = vmatpush1.bf16.msra.mxu0 0
  %6254 = vmatprep.subr.bf16.mxu0 0
  %6255 = vmatpush1.bf16.msra.mxu0 0
  %6256 = vmatprep.subr.bf16.mxu0 0
  %6257 = vmatpush1.bf16.msra.mxu0 0
  %6258 = vmatprep.subr.bf16.mxu0 0
  %6259 = vmatpush1.bf16.msra.mxu0 0
  %6260 = vmatprep.subr.bf16.mxu0 0
  %6261 = vmatpush1.bf16.msra.mxu0 0
  %6262 = vmatprep.subr.bf16.mxu0 0
  %6263 = vmatpush1.bf16.msra.mxu0 0
  %6264 = vmatprep.mubr.bf16.mxu0 0
  %6265 = vmatmul.mubr.bf16.gmra.mrb[0].mxu0 %v5458
  %v6266 = vpop.f32.mrb[0].mxu0
  %v6267 = vadd.f32 0.0, %v6266
  %v6268 = vpop.f32.mrb[0].mxu0
  %v6269 = vpop.f32.mrb[0].mxu0
  %v6270 = vadd.f32 0.0, %v6269
  %v6271 = vpop.f32.mrb[0].mxu0
  %6272 = vmatprep.mubr.bf16.mxu0 0
  %6273 = vmatmul.mubr.bf16.gmra.mrb[0].mxu0 %v5461
  %v6274 = vpop.f32.mrb[0].mxu0
  %v6275 = vadd.f32 0.0, %v6274
  %v6276 = vpop.f32.mrb[0].mxu0
  %v6277 = vpop.f32.mrb[0].mxu0
  %v6278 = vadd.f32 0.0, %v6277
  %v6279 = vpop.f32.mrb[0].mxu0
  %6280 = vmatprep.mubr.bf16.mxu0 0
  %6281 = vmatmul.mubr.bf16.gmra.mrb[0].mxu0 %v5464
  %v6282 = vpop.f32.mrb[0].mxu0
  %v6283 = vadd.f32 0.0, %v6282
  %v6284 = vpop.f32.mrb[0].mxu0
  %v6285 = vpop.f32.mrb[0].mxu0
  %v6286 = vadd.f32 0.0, %v6285
  %v6287 = vpop.f32.mrb[0].mxu0
  %6288 = vmatprep.mubr.bf16.mxu0 0
  %6289 = vmatmul.mubr.bf16.gmra.mrb[0].mxu0 %v5467
  %v6290 = vpop.f32.mrb[0].mxu0
  %v6291 = vadd.f32 0.0, %v6290
  %v6292 = vpop.f32.mrb[0].mxu0
  %v6293 = vpop.f32.mrb[0].mxu0
  %v6294 = vadd.f32 0.0, %v6293
  %v6295 = vpop.f32.mrb[0].mxu0
  %6296 = vmatprep.mubr.bf16.mxu0 0
  %6297 = vmatmul.mubr.bf16.gmra.mrb[0].mxu0 %v5470
  %v6298 = vpop.f32.mrb[0].mxu0
  %v6299 = vadd.f32 0.0, %v6298
  %v6300 = vpop.f32.mrb[0].mxu0
  %v6301 = vpop.f32.mrb[0].mxu0
  %v6302 = vadd.f32 0.0, %v6301
  %v6303 = vpop.f32.mrb[0].mxu0
  %6304 = vmatprep.mubr.bf16.mxu0 0
  %6305 = vmatmul.mubr.bf16.gmra.mrb[0].mxu0 %v5473
  %v6306 = vpop.f32.mrb[0].mxu0
  %v6307 = vadd.f32 0.0, %v6306
  %v6308 = vpop.f32.mrb[0].mxu0
  %v6309 = vpop.f32.mrb[0].mxu0
  %v6310 = vadd.f32 0.0, %v6309
  %v6311 = vpop.f32.mrb[0].mxu0
  %6312 = vmatprep.mubr.bf16.mxu0 0
  %6313 = vmatmul.mubr.bf16.gmra.mrb[0].mxu0 %v5476
  %v6314 = vpop.f32.mrb[0].mxu0
  %v6315 = vadd.f32 0.0, %v6314
  %v6316 = vpop.f32.mrb[0].mxu0
  %v6317 = vpop.f32.mrb[0].mxu0
  %v6318 = vadd.f32 0.0, %v6317
  %v6319 = vpop.f32.mrb[0].mxu0
  %6320 = vmatprep.mubr.bf16.mxu0 0
  %6321 = vmatmul.mubr.bf16.gmra.mrb[0].mxu0 %v5479
  %v6322 = vpop.f32.mrb[0].mxu0
  %v6323 = vadd.f32 0.0, %v6322
  %v6324 = vpop.f32.mrb[0].mxu0
  %v6325 = vpop.f32.mrb[0].mxu0
  %v6326 = vadd.f32 0.0, %v6325
  %v6327 = vpop.f32.mrb[0].mxu0
  %6328 = vmatprep.mubr.bf16.mxu0 0
  %6329 = vmatmul.mubr.bf16.gmra.mrb[0].mxu0 %v5482
  %v6330 = vpop.f32.mrb[0].mxu0
  %v6331 = vadd.f32 0.0, %v6330
  %v6332 = vpop.f32.mrb[0].mxu0
  %v6333 = vpop.f32.mrb[0].mxu0
  %v6334 = vadd.f32 0.0, %v6333
  %v6335 = vpop.f32.mrb[0].mxu0
  %6336 = vmatprep.mubr.bf16.mxu0 0
  %6337 = vmatmul.mubr.bf16.gmra.mrb[0].mxu0 %v5485
  %v6338 = vpop.f32.mrb[0].mxu0
  %v6339 = vadd.f32 0.0, %v6338
  %v6340 = vpop.f32.mrb[0].mxu0
  %v6341 = vpop.f32.mrb[0].mxu0
  %v6342 = vadd.f32 0.0, %v6341
  %v6343 = vpop.f32.mrb[0].mxu0
  %6344 = vmatprep.mubr.bf16.mxu0 0
  %6345 = vmatmul.mubr.bf16.gmra.mrb[0].mxu0 %v5488
  %v6346 = vpop.f32.mrb[0].mxu0
  %v6347 = vadd.f32 0.0, %v6346
  %v6348 = vpop.f32.mrb[0].mxu0
  %v6349 = vpop.f32.mrb[0].mxu0
  %v6350 = vadd.f32 0.0, %v6349
  %v6351 = vpop.f32.mrb[0].mxu0
  %6352 = vmatprep.mubr.bf16.mxu0 0
  %6353 = vmatmul.mubr.bf16.gmra.mrb[0].mxu0 %v5491
  %v6354 = vpop.f32.mrb[0].mxu0
  %v6355 = vadd.f32 0.0, %v6354
  %v6356 = vpop.f32.mrb[0].mxu0
  %v6357 = vpop.f32.mrb[0].mxu0
  %v6358 = vadd.f32 0.0, %v6357
  %v6359 = vpop.f32.mrb[0].mxu0
  %6360 = vmatprep.mubr.bf16.mxu0 0
  %6361 = vmatmul.mubr.bf16.gmra.mrb[0].mxu0 %v5494
  %v6362 = vpop.f32.mrb[0].mxu0
  %v6363 = vadd.f32 0.0, %v6362
  %v6364 = vpop.f32.mrb[0].mxu0
  %v6365 = vpop.f32.mrb[0].mxu0
  %v6366 = vadd.f32 0.0, %v6365
  %v6367 = vpop.f32.mrb[0].mxu0
  %6368 = vmatprep.mubr.bf16.mxu0 0
  %6369 = vmatmul.mubr.bf16.gmra.mrb[0].mxu0 %v5497
  %v6370 = vpop.f32.mrb[0].mxu0
  %v6371 = vadd.f32 0.0, %v6370
  %v6372 = vpop.f32.mrb[0].mxu0
  %v6373 = vpop.f32.mrb[0].mxu0
  %v6374 = vadd.f32 0.0, %v6373
  %v6375 = vpop.f32.mrb[0].mxu0
  %6376 = vmatprep.mubr.bf16.mxu0 0
  %6377 = vmatmul.mubr.bf16.gmra.mrb[0].mxu0 %v5500
  %v6378 = vpop.f32.mrb[0].mxu0
  %v6379 = vadd.f32 0.0, %v6378
  %v6380 = vpop.f32.mrb[0].mxu0
  %v6381 = vpop.f32.mrb[0].mxu0
  %v6382 = vadd.f32 0.0, %v6381
  %v6383 = vpop.f32.mrb[0].mxu0
  %6384 = vmatprep.mubr.bf16.mxu0 0
  %6385 = vmatmul.mubr.bf16.gmra.mrb[0].mxu0 %v6224
  %v6386 = vpop.f32.mrb[0].mxu0
  %v6387 = vadd.f32 0.0, %v6386
  %v6388 = vpop.f32.mrb[0].mxu0
  %v6389 = vpop.f32.mrb[0].mxu0
  %v6390 = vadd.f32 0.0, %v6389
  %v6391 = vpop.f32.mrb[0].mxu0
  %6392 = vmatprep.mubr.bf16.mxu0 0
  %6393 = vmatmul.mubr.bf16.gmra.mrb[0].mxu0 %v5506
  %v6394 = vpop.f32.mrb[0].mxu0
  %v6395 = vadd.f32 0.0, %v6394
  %v6396 = vpop.f32.mrb[0].mxu0
  %v6397 = vpop.f32.mrb[0].mxu0
  %v6398 = vadd.f32 0.0, %v6397
  %v6399 = vpop.f32.mrb[0].mxu0
  %6400 = vmatprep.mubr.bf16.mxu0 0
  %6401 = vmatmul.mubr.bf16.gmra.mrb[0].mxu0 %v5509
  %v6402 = vpop.f32.mrb[0].mxu0
  %v6403 = vadd.f32 0.0, %v6402
  %v6404 = vpop.f32.mrb[0].mxu0
  %v6405 = vpop.f32.mrb[0].mxu0
  %v6406 = vadd.f32 0.0, %v6405
  %v6407 = vpop.f32.mrb[0].mxu0
  %6408 = vmatprep.mubr.bf16.mxu0 0
  %6409 = vmatmul.mubr.bf16.gmra.mrb[0].mxu0 %v5512
  %v6410 = vpop.f32.mrb[0].mxu0
  %v6411 = vadd.f32 0.0, %v6410
  %v6412 = vpop.f32.mrb[0].mxu0
  %v6413 = vpop.f32.mrb[0].mxu0
  %v6414 = vadd.f32 0.0, %v6413
  %v6415 = vpop.f32.mrb[0].mxu0
  %6416 = vmatprep.mubr.bf16.mxu0 0
  %6417 = vmatmul.mubr.bf16.gmra.mrb[0].mxu0 %v5515
  %v6418 = vpop.f32.mrb[0].mxu0
  %v6419 = vadd.f32 0.0, %v6418
  %v6420 = vpop.f32.mrb[0].mxu0
  %v6421 = vpop.f32.mrb[0].mxu0
  %v6422 = vadd.f32 0.0, %v6421
  %v6423 = vpop.f32.mrb[0].mxu0
  %6424 = vmatprep.mubr.bf16.mxu0 0
  %6425 = vmatmul.mubr.bf16.gmra.mrb[0].mxu0 %v5518
  %v6426 = vpop.f32.mrb[0].mxu0
  %v6427 = vadd.f32 0.0, %v6426
  %v6428 = vpop.f32.mrb[0].mxu0
  %v6429 = vpop.f32.mrb[0].mxu0
  %v6430 = vadd.f32 0.0, %v6429
  %v6431 = vpop.f32.mrb[0].mxu0
  %6432 = vmatprep.mubr.bf16.mxu0 0
  %6433 = vmatmul.mubr.bf16.gmra.mrb[0].mxu0 %v5521
  %v6434 = vpop.f32.mrb[0].mxu0
  %v6435 = vadd.f32 0.0, %v6434
  %v6436 = vpop.f32.mrb[0].mxu0
  %v6437 = vpop.f32.mrb[0].mxu0
  %v6438 = vadd.f32 0.0, %v6437
  %v6439 = vpop.f32.mrb[0].mxu0
  %6440 = vmatprep.mubr.bf16.mxu0 0
  %6441 = vmatmul.mubr.bf16.gmra.mrb[0].mxu0 %v5524
  %v6442 = vpop.f32.mrb[0].mxu0
  %v6443 = vadd.f32 0.0, %v6442
  %v6444 = vpop.f32.mrb[0].mxu0
  %v6445 = vpop.f32.mrb[0].mxu0
  %v6446 = vadd.f32 0.0, %v6445
  %v6447 = vpop.f32.mrb[0].mxu0
  %6448 = vmatprep.mubr.bf16.mxu0 0
  %6449 = vmatmul.mubr.bf16.gmra.mrb[0].mxu0 %v5527
  %v6450 = vpop.f32.mrb[0].mxu0
  %v6451 = vadd.f32 0.0, %v6450
  %v6452 = vpop.f32.mrb[0].mxu0
  %v6453 = vpop.f32.mrb[0].mxu0
  %v6454 = vadd.f32 0.0, %v6453
  %v6455 = vpop.f32.mrb[0].mxu0
  %6456 = vmatprep.mubr.bf16.mxu0 0
  %6457 = vmatmul.mubr.bf16.gmra.mrb[0].mxu0 %v5530
  %v6458 = vpop.f32.mrb[0].mxu0
  %v6459 = vadd.f32 0.0, %v6458
  %v6460 = vpop.f32.mrb[0].mxu0
  %v6461 = vpop.f32.mrb[0].mxu0
  %v6462 = vadd.f32 0.0, %v6461
  %v6463 = vpop.f32.mrb[0].mxu0
  %6464 = vmatprep.mubr.bf16.mxu0 0
  %6465 = vmatmul.mubr.bf16.gmra.mrb[0].mxu0 %v5533
  %v6466 = vpop.f32.mrb[0].mxu0
  %v6467 = vadd.f32 0.0, %v6466
  %v6468 = vpop.f32.mrb[0].mxu0
  %v6469 = vpop.f32.mrb[0].mxu0
  %v6470 = vadd.f32 0.0, %v6469
  %v6471 = vpop.f32.mrb[0].mxu0
  %6472 = vmatprep.mubr.bf16.mxu0 0
  %6473 = vmatmul.mubr.bf16.gmra.mrb[0].mxu0 %v5536
  %v6474 = vpop.f32.mrb[0].mxu0
  %v6475 = vadd.f32 0.0, %v6474
  %v6476 = vpop.f32.mrb[0].mxu0
  %v6477 = vpop.f32.mrb[0].mxu0
  %v6478 = vadd.f32 0.0, %v6477
  %v6479 = vpop.f32.mrb[0].mxu0
  %6480 = vmatprep.mubr.bf16.mxu0 0
  %6481 = vmatmul.mubr.bf16.gmra.mrb[0].mxu0 %v5539
  %v6482 = vpop.f32.mrb[0].mxu0
  %v6483 = vadd.f32 0.0, %v6482
  %v6484 = vpop.f32.mrb[0].mxu0
  %v6485 = vpop.f32.mrb[0].mxu0
  %v6486 = vadd.f32 0.0, %v6485
  %v6487 = vpop.f32.mrb[0].mxu0
  %6488 = vmatprep.mubr.bf16.mxu0 0
  %6489 = vmatmul.mubr.bf16.gmra.mrb[0].mxu0 %v5542
  %v6490 = vpop.f32.mrb[0].mxu0
  %v6491 = vadd.f32 0.0, %v6490
  %v6492 = vpop.f32.mrb[0].mxu0
  %v6493 = vpop.f32.mrb[0].mxu0
  %v6494 = vadd.f32 0.0, %v6493
  %v6495 = vpop.f32.mrb[0].mxu0
  %6496 = vmatprep.mubr.bf16.mxu0 0
  %6497 = vmatmul.mubr.bf16.gmra.mrb[0].mxu0 %v5545
  %v6498 = vpop.f32.mrb[0].mxu0
  %v6499 = vadd.f32 0.0, %v6498
  %v6500 = vpop.f32.mrb[0].mxu0
  %v6501 = vpop.f32.mrb[0].mxu0
  %v6502 = vadd.f32 0.0, %v6501
  %v6503 = vpop.f32.mrb[0].mxu0
  %6504 = vmatprep.mubr.bf16.mxu0 0
  %6505 = vmatmul.mubr.bf16.gmra.mrb[0].mxu0 %v5548
  %v6506 = vpop.f32.mrb[0].mxu0
  %v6507 = vadd.f32 0.0, %v6506
  %v6508 = vpop.f32.mrb[0].mxu0
  %v6509 = vpop.f32.mrb[0].mxu0
  %v6510 = vadd.f32 0.0, %v6509
  %v6511 = vpop.f32.mrb[0].mxu0
  %6512 = vmatprep.mubr.bf16.mxu0 0
  %6513 = vmatmul.mubr.bf16.gmra.mrb[0].mxu0 %v6227
  %v6514 = vpop.f32.mrb[0].mxu0
  %v6515 = vadd.f32 0.0, %v6514
  %v6516 = vpop.f32.mrb[0].mxu0
  %v6517 = vpop.f32.mrb[0].mxu0
  %v6518 = vadd.f32 0.0, %v6517
  %v6519 = vpop.f32.mrb[0].mxu0
  %6520 = vdwg.mxu0
  %v6521 = vadd.f32 %v5896, %v6267
  %v6522 = vadd.f32 %v5899, %v6270
  %v6523 = vadd.f32 %v5904, %v6275
  %v6524 = vadd.f32 %v5907, %v6278
  %v6525 = vadd.f32 %v5912, %v6283
  %v6526 = vadd.f32 %v5915, %v6286
  %v6527 = vadd.f32 %v5920, %v6291
  %v6528 = vadd.f32 %v5923, %v6294
  %v6529 = vadd.f32 %v5928, %v6299
  %v6530 = vadd.f32 %v5931, %v6302
  %v6531 = vadd.f32 %v5936, %v6307
  %v6532 = vadd.f32 %v5939, %v6310
  %v6533 = vadd.f32 %v5944, %v6315
  %v6534 = vadd.f32 %v5947, %v6318
  %v6535 = vadd.f32 %v5952, %v6323
  %v6536 = vadd.f32 %v5955, %v6326
  %v6537 = vadd.f32 %v5960, %v6331
  %v6538 = vadd.f32 %v5963, %v6334
  %v6539 = vadd.f32 %v5968, %v6339
  %v6540 = vadd.f32 %v5971, %v6342
  %v6541 = vadd.f32 %v5976, %v6347
  %v6542 = vadd.f32 %v5979, %v6350
  %v6543 = vadd.f32 %v5984, %v6355
  %v6544 = vadd.f32 %v5987, %v6358
  %v6545 = vadd.f32 %v5992, %v6363
  %v6546 = vadd.f32 %v5995, %v6366
  %v6547 = vadd.f32 %v6000, %v6371
  %v6548 = vadd.f32 %v6003, %v6374
  %v6549 = vadd.f32 %v6008, %v6379
  %v6550 = vadd.f32 %v6011, %v6382
  %v6551 = vadd.f32 %v6016, %v6387
  %v6552 = vadd.f32 %v6019, %v6390
  %v6553 = vadd.f32 %v6024, %v6395
  %v6554 = vadd.f32 %v6027, %v6398
  %v6555 = vadd.f32 %v6032, %v6403
  %v6556 = vadd.f32 %v6035, %v6406
  %v6557 = vadd.f32 %v6040, %v6411
  %v6558 = vadd.f32 %v6043, %v6414
  %v6559 = vadd.f32 %v6048, %v6419
  %v6560 = vadd.f32 %v6051, %v6422
  %v6561 = vadd.f32 %v6056, %v6427
  %v6562 = vadd.f32 %v6059, %v6430
  %v6563 = vadd.f32 %v6064, %v6435
  %v6564 = vadd.f32 %v6067, %v6438
  %v6565 = vadd.f32 %v6072, %v6443
  %v6566 = vadd.f32 %v6075, %v6446
  %v6567 = vadd.f32 %v6080, %v6451
  %v6568 = vadd.f32 %v6083, %v6454
  %v6569 = vadd.f32 %v6088, %v6459
  %v6570 = vadd.f32 %v6091, %v6462
  %v6571 = vadd.f32 %v6096, %v6467
  %v6572 = vadd.f32 %v6099, %v6470
  %v6573 = vadd.f32 %v6104, %v6475
  %v6574 = vadd.f32 %v6107, %v6478
  %v6575 = vadd.f32 %v6112, %v6483
  %v6576 = vadd.f32 %v6115, %v6486
  %v6577 = vadd.f32 %v6120, %v6491
  %v6578 = vadd.f32 %v6123, %v6494
  %v6579 = vadd.f32 %v6128, %v6499
  %v6580 = vadd.f32 %v6131, %v6502
  %v6581 = vadd.f32 %v6136, %v6507
  %v6582 = vadd.f32 %v6139, %v6510
  %v6583 = vadd.f32 %v6144, %v6515
  %v6584 = vadd.f32 %v6147, %v6518
  %v6585 = vld [vmem:[%s0] sm:$0xff]
  %v6586 = vld [vmem:[%s0 + $0x8] sm:$0xff]
  %v6587 = vld [vmem:[%s0 + $0x10] sm:$0xff]
  %v6588 = vld [vmem:[%s0 + $0x18] sm:$0xff]
  %v6589 = vld [vmem:[%s0 + $0x20] sm:$0xff]
  %v6590 = vld [vmem:[%s0 + $0x28] sm:$0xff]
  %v6591 = vld [vmem:[%s0 + $0x30] sm:$0xff]
  %v6592 = vld [vmem:[%s0 + $0x38] sm:$0xff]
  %v6593 = vld [vmem:[%s0 + $0x40] sm:$0xff]
  %v6594 = vld [vmem:[%s0 + $0x48] sm:$0xff]
  %v6595 = vld [vmem:[%s0 + $0x50] sm:$0xff]
  %v6596 = vld [vmem:[%s0 + $0x58] sm:$0xff]
  %v6597 = vld [vmem:[%s0 + $0x60] sm:$0xff]
  %v6598 = vld [vmem:[%s0 + $0x68] sm:$0xff]
  %v6599 = vld [vmem:[%s0 + $0x70] sm:$0xff]
  %v6600 = vld [vmem:[%s0 + $0x78] sm:$0xff]
  %v6601 = vld [vmem:[%s0 + $0x80] sm:$0xff]
  %v6602 = vld [vmem:[%s0 + $0x88] sm:$0xff]
  %v6603 = vld [vmem:[%s0 + $0x90] sm:$0xff]
  %v6604 = vld [vmem:[%s0 + $0x98] sm:$0xff]
  %v6605 = vld [vmem:[%s0 + $0xa0] sm:$0xff]
  %v6606 = vld [vmem:[%s0 + $0xa8] sm:$0xff]
  %v6607 = vld [vmem:[%s0 + $0xb0] sm:$0xff]
  %v6608 = vld [vmem:[%s0 + $0xb8] sm:$0xff]
  %v6609 = vld [vmem:[%s0 + $0xc0] sm:$0xff]
  %v6610 = vld [vmem:[%s0 + $0xc8] sm:$0xff]
  %v6611 = vld [vmem:[%s0 + $0xd0] sm:$0xff]
  %v6612 = vld [vmem:[%s0 + $0xd8] sm:$0xff]
  %v6613 = vld [vmem:[%s0 + $0xe0] sm:$0xff]
  %v6614 = vld [vmem:[%s0 + $0xe8] sm:$0xff]
  %v6615 = vld [vmem:[%s0 + $0xf0] sm:$0xff]
  %v6616 = vld [vmem:[%s0 + $0xf8] sm:$0xff]
  %v6617 = vld [vmem:[%s0 + $0x100] sm:$0xff]
  %v6618 = vld [vmem:[%s0 + $0x108] sm:$0xff]
  %v6619 = vld [vmem:[%s0 + $0x110] sm:$0xff]
  %v6620 = vld [vmem:[%s0 + $0x118] sm:$0xff]
  %v6621 = vld [vmem:[%s0 + $0x120] sm:$0xff]
  %v6622 = vld [vmem:[%s0 + $0x128] sm:$0xff]
  %v6623 = vld [vmem:[%s0 + $0x130] sm:$0xff]
  %v6624 = vld [vmem:[%s0 + $0x138] sm:$0xff]
  %v6625 = vld [vmem:[%s0 + $0x140] sm:$0xff]
  %v6626 = vld [vmem:[%s0 + $0x148] sm:$0xff]
  %v6627 = vld [vmem:[%s0 + $0x150] sm:$0xff]
  %v6628 = vld [vmem:[%s0 + $0x158] sm:$0xff]
  %v6629 = vld [vmem:[%s0 + $0x160] sm:$0xff]
  %v6630 = vld [vmem:[%s0 + $0x168] sm:$0xff]
  %v6631 = vld [vmem:[%s0 + $0x170] sm:$0xff]
  %v6632 = vld [vmem:[%s0 + $0x178] sm:$0xff]
  %v6633 = vld [vmem:[%s0 + $0x180] sm:$0xff]
  %v6634 = vld [vmem:[%s0 + $0x188] sm:$0xff]
  %v6635 = vld [vmem:[%s0 + $0x190] sm:$0xff]
  %v6636 = vld [vmem:[%s0 + $0x198] sm:$0xff]
  %v6637 = vld [vmem:[%s0 + $0x1a0] sm:$0xff]
  %v6638 = vld [vmem:[%s0 + $0x1a8] sm:$0xff]
  %v6639 = vld [vmem:[%s0 + $0x1b0] sm:$0xff]
  %v6640 = vld [vmem:[%s0 + $0x1b8] sm:$0xff]
  %v6641 = vld [vmem:[%s0 + $0x1c0] sm:$0xff]
  %v6642 = vld [vmem:[%s0 + $0x1c8] sm:$0xff]
  %v6643 = vld [vmem:[%s0 + $0x1d0] sm:$0xff]
  %v6644 = vld [vmem:[%s0 + $0x1d8] sm:$0xff]
  %v6645 = vld [vmem:[%s0 + $0x1e0] sm:$0xff]
  %v6646 = vld [vmem:[%s0 + $0x1e8] sm:$0xff]
  %v6647 = vld [vmem:[%s0 + $0x1f0] sm:$0xff]
  %v6648 = vld [vmem:[%s0 + $0x1f8] sm:$0xff]
  %v6649 = vpack.c.bf16 %v6586, %v6585
  %v6650 = vpack.c.bf16 %v6588, %v6587
  %v6651 = vpack.c.bf16 %v6590, %v6589
  %v6652 = vpack.c.bf16 %v6592, %v6591
  %v6653 = vpack.c.bf16 %v6594, %v6593
  %v6654 = vpack.c.bf16 %v6596, %v6595
  %v6655 = vpack.c.bf16 %v6598, %v6597
  %v6656 = vpack.c.bf16 %v6600, %v6599
  %v6657 = vpack.c.bf16 %v6602, %v6601
  %v6658 = vpack.c.bf16 %v6604, %v6603
  %v6659 = vpack.c.bf16 %v6606, %v6605
  %v6660 = vpack.c.bf16 %v6608, %v6607
  %v6661 = vpack.c.bf16 %v6610, %v6609
  %v6662 = vpack.c.bf16 %v6612, %v6611
  %v6663 = vpack.c.bf16 %v6614, %v6613
  %v6664 = vpack.c.bf16 %v6616, %v6615
  %v6665 = vpack.c.bf16 %v6618, %v6617
  %v6666 = vpack.c.bf16 %v6620, %v6619
  %v6667 = vpack.c.bf16 %v6622, %v6621
  %v6668 = vpack.c.bf16 %v6624, %v6623
  %v6669 = vpack.c.bf16 %v6626, %v6625
  %v6670 = vpack.c.bf16 %v6628, %v6627
  %v6671 = vpack.c.bf16 %v6630, %v6629
  %v6672 = vpack.c.bf16 %v6632, %v6631
  %v6673 = vpack.c.bf16 %v6634, %v6633
  %v6674 = vpack.c.bf16 %v6636, %v6635
  %v6675 = vpack.c.bf16 %v6638, %v6637
  %v6676 = vpack.c.bf16 %v6640, %v6639
  %v6677 = vpack.c.bf16 %v6642, %v6641
  %v6678 = vpack.c.bf16 %v6644, %v6643
  %v6679 = vpack.c.bf16 %v6646, %v6645
  %v6680 = vpack.c.bf16 %v6648, %v6647
  %v6681 = vld [vmem:[%s13] sm:$0x3]
  %v6682 = vld [vmem:[%s14] sm:$0x1]
  %v6684 = vlaneseq
  %v6685 = vshrl.u32 %v6684, 7
  %v6686 = vsub.s32 0, %v6685
  %v6687 = vrot.slane %v6682, %v6686
  %v6690 = vsel %vm53, %v6649, 0
  %v6693 = vsel %vm53, %v6650, 0
  %v6696 = vsel %vm53, %v6651, 0
  %v6699 = vsel %vm53, %v6652, 0
  %v6702 = vsel %vm53, %v6653, 0
  %v6705 = vsel %vm53, %v6654, 0
  %v6708 = vsel %vm53, %v6655, 0
  %v6711 = vsel %vm53, %v6656, 0
  %v6714 = vsel %vm53, %v6657, 0
  %v6717 = vsel %vm53, %v6658, 0
  %v6720 = vsel %vm53, %v6659, 0
  %v6723 = vsel %vm53, %v6660, 0
  %v6726 = vsel %vm53, %v6661, 0
  %v6729 = vsel %vm53, %v6662, 0
  %v6732 = vsel %vm53, %v6663, 0
  %v6735 = vsel %vm53, %v6664, 0
  %v6738 = vsel %vm53, %v6665, 0
  %v6741 = vsel %vm53, %v6666, 0
  %v6744 = vsel %vm53, %v6667, 0
  %v6747 = vsel %vm53, %v6668, 0
  %v6750 = vsel %vm53, %v6669, 0
  %v6753 = vsel %vm53, %v6670, 0
  %v6756 = vsel %vm53, %v6671, 0
  %v6759 = vsel %vm53, %v6672, 0
  %v6762 = vsel %vm53, %v6673, 0
  %v6765 = vsel %vm53, %v6674, 0
  %v6768 = vsel %vm53, %v6675, 0
  %v6771 = vsel %vm53, %v6676, 0
  %v6774 = vsel %vm53, %v6677, 0
  %v6777 = vsel %vm53, %v6678, 0
  %v6780 = vsel %vm53, %v6679, 0
  %v6783 = vsel %vm53, %v6680, 0
  %vm6785 = vcmask 1041408
  %v6787 = vsel %vm6785, %v6681, 0
  %6789 = vmatprep.subr.bf16.mxu0 0
  %6790 = vmatpush1.bf16.msra.mxu0 %v6787
  %6791 = vmatprep.subr.bf16.mxu0 0
  %6792 = vmatpush1.bf16.msra.mxu0 0
  %6793 = vmatprep.subr.bf16.mxu0 0
  %6794 = vmatpush1.bf16.msra.mxu0 0
  %6795 = vmatprep.subr.bf16.mxu0 0
  %6796 = vmatpush1.bf16.msra.mxu0 0
  %6797 = vmatprep.subr.bf16.mxu0 0
  %6798 = vmatpush1.bf16.msra.mxu0 0
  %6799 = vmatprep.subr.bf16.mxu0 0
  %6800 = vmatpush1.bf16.msra.mxu0 0
  %6801 = vmatprep.subr.bf16.mxu0 0
  %6802 = vmatpush1.bf16.msra.mxu0 0
  %6803 = vmatprep.subr.bf16.mxu0 0
  %6804 = vmatpush1.bf16.msra.mxu0 0
  %6805 = vmatprep.subr.bf16.mxu0 0
  %6806 = vmatpush1.bf16.msra.mxu0 0
  %6807 = vmatprep.subr.bf16.mxu0 0
  %6808 = vmatpush1.bf16.msra.mxu0 0
  %6809 = vmatprep.subr.bf16.mxu0 0
  %6810 = vmatpush1.bf16.msra.mxu0 0
  %6811 = vmatprep.subr.bf16.mxu0 0
  %6812 = vmatpush1.bf16.msra.mxu0 0
  %6813 = vmatprep.subr.bf16.mxu0 0
  %6814 = vmatpush1.bf16.msra.mxu0 0
  %6815 = vmatprep.subr.bf16.mxu0 0
  %6816 = vmatpush1.bf16.msra.mxu0 0
  %6817 = vmatprep.subr.bf16.mxu0 0
  %6818 = vmatpush1.bf16.msra.mxu0 0
  %6819 = vmatprep.subr.bf16.mxu0 0
  %6820 = vmatpush1.bf16.msra.mxu0 0
  %6821 = vmatprep.mubr.bf16.mxu0 0
  %6822 = vmatmul.mubr.bf16.gmra.mrb[0].mxu0 %v6690
  %v6823 = vpop.f32.mrb[0].mxu0
  %v6824 = vadd.f32 %v6687, %v6823
  %v6825 = vpop.f32.mrb[0].mxu0
  %v6826 = vpop.f32.mrb[0].mxu0
  %v6827 = vadd.f32 %v6687, %v6826
  %v6828 = vpop.f32.mrb[0].mxu0
  %6829 = vmatprep.mubr.bf16.mxu0 0
  %6830 = vmatmul.mubr.bf16.gmra.mrb[0].mxu0 %v6693
  %v6831 = vpop.f32.mrb[0].mxu0
  %v6832 = vadd.f32 %v6687, %v6831
  %v6833 = vpop.f32.mrb[0].mxu0
  %v6834 = vpop.f32.mrb[0].mxu0
  %v6835 = vadd.f32 %v6687, %v6834
  %v6836 = vpop.f32.mrb[0].mxu0
  %6837 = vmatprep.mubr.bf16.mxu0 0
  %6838 = vmatmul.mubr.bf16.gmra.mrb[0].mxu0 %v6696
  %v6839 = vpop.f32.mrb[0].mxu0
  %v6840 = vadd.f32 %v6687, %v6839
  %v6841 = vpop.f32.mrb[0].mxu0
  %v6842 = vpop.f32.mrb[0].mxu0
  %v6843 = vadd.f32 %v6687, %v6842
  %v6844 = vpop.f32.mrb[0].mxu0
  %6845 = vmatprep.mubr.bf16.mxu0 0
  %6846 = vmatmul.mubr.bf16.gmra.mrb[0].mxu0 %v6699
  %v6847 = vpop.f32.mrb[0].mxu0
  %v6848 = vadd.f32 %v6687, %v6847
  %v6849 = vpop.f32.mrb[0].mxu0
  %v6850 = vpop.f32.mrb[0].mxu0
  %v6851 = vadd.f32 %v6687, %v6850
  %v6852 = vpop.f32.mrb[0].mxu0
  %6853 = vmatprep.mubr.bf16.mxu0 0
  %6854 = vmatmul.mubr.bf16.gmra.mrb[0].mxu0 %v6702
  %v6855 = vpop.f32.mrb[0].mxu0
  %v6856 = vadd.f32 %v6687, %v6855
  %v6857 = vpop.f32.mrb[0].mxu0
  %v6858 = vpop.f32.mrb[0].mxu0
  %v6859 = vadd.f32 %v6687, %v6858
  %v6860 = vpop.f32.mrb[0].mxu0
  %6861 = vmatprep.mubr.bf16.mxu0 0
  %6862 = vmatmul.mubr.bf16.gmra.mrb[0].mxu0 %v6705
  %v6863 = vpop.f32.mrb[0].mxu0
  %v6864 = vadd.f32 %v6687, %v6863
  %v6865 = vpop.f32.mrb[0].mxu0
  %v6866 = vpop.f32.mrb[0].mxu0
  %v6867 = vadd.f32 %v6687, %v6866
  %v6868 = vpop.f32.mrb[0].mxu0
  %6869 = vmatprep.mubr.bf16.mxu0 0
  %6870 = vmatmul.mubr.bf16.gmra.mrb[0].mxu0 %v6708
  %v6871 = vpop.f32.mrb[0].mxu0
  %v6872 = vadd.f32 %v6687, %v6871
  %v6873 = vpop.f32.mrb[0].mxu0
  %v6874 = vpop.f32.mrb[0].mxu0
  %v6875 = vadd.f32 %v6687, %v6874
  %v6876 = vpop.f32.mrb[0].mxu0
  %6877 = vmatprep.mubr.bf16.mxu0 0
  %6878 = vmatmul.mubr.bf16.gmra.mrb[0].mxu0 %v6711
  %v6879 = vpop.f32.mrb[0].mxu0
  %v6880 = vadd.f32 %v6687, %v6879
  %v6881 = vpop.f32.mrb[0].mxu0
  %v6882 = vpop.f32.mrb[0].mxu0
  %v6883 = vadd.f32 %v6687, %v6882
  %v6884 = vpop.f32.mrb[0].mxu0
  %6885 = vmatprep.mubr.bf16.mxu0 0
  %6886 = vmatmul.mubr.bf16.gmra.mrb[0].mxu0 %v6714
  %v6887 = vpop.f32.mrb[0].mxu0
  %v6888 = vadd.f32 %v6687, %v6887
  %v6889 = vpop.f32.mrb[0].mxu0
  %v6890 = vpop.f32.mrb[0].mxu0
  %v6891 = vadd.f32 %v6687, %v6890
  %v6892 = vpop.f32.mrb[0].mxu0
  %6893 = vmatprep.mubr.bf16.mxu0 0
  %6894 = vmatmul.mubr.bf16.gmra.mrb[0].mxu0 %v6717
  %v6895 = vpop.f32.mrb[0].mxu0
  %v6896 = vadd.f32 %v6687, %v6895
  %v6897 = vpop.f32.mrb[0].mxu0
  %v6898 = vpop.f32.mrb[0].mxu0
  %v6899 = vadd.f32 %v6687, %v6898
  %v6900 = vpop.f32.mrb[0].mxu0
  %6901 = vmatprep.mubr.bf16.mxu0 0
  %6902 = vmatmul.mubr.bf16.gmra.mrb[0].mxu0 %v6720
  %v6903 = vpop.f32.mrb[0].mxu0
  %v6904 = vadd.f32 %v6687, %v6903
  %v6905 = vpop.f32.mrb[0].mxu0
  %v6906 = vpop.f32.mrb[0].mxu0
  %v6907 = vadd.f32 %v6687, %v6906
  %v6908 = vpop.f32.mrb[0].mxu0
  %6909 = vmatprep.mubr.bf16.mxu0 0
  %6910 = vmatmul.mubr.bf16.gmra.mrb[0].mxu0 %v6723
  %v6911 = vpop.f32.mrb[0].mxu0
  %v6912 = vadd.f32 %v6687, %v6911
  %v6913 = vpop.f32.mrb[0].mxu0
  %v6914 = vpop.f32.mrb[0].mxu0
  %v6915 = vadd.f32 %v6687, %v6914
  %v6916 = vpop.f32.mrb[0].mxu0
  %6917 = vmatprep.mubr.bf16.mxu0 0
  %6918 = vmatmul.mubr.bf16.gmra.mrb[0].mxu0 %v6726
  %v6919 = vpop.f32.mrb[0].mxu0
  %v6920 = vadd.f32 %v6687, %v6919
  %v6921 = vpop.f32.mrb[0].mxu0
  %v6922 = vpop.f32.mrb[0].mxu0
  %v6923 = vadd.f32 %v6687, %v6922
  %v6924 = vpop.f32.mrb[0].mxu0
  %6925 = vmatprep.mubr.bf16.mxu0 0
  %6926 = vmatmul.mubr.bf16.gmra.mrb[0].mxu0 %v6729
  %v6927 = vpop.f32.mrb[0].mxu0
  %v6928 = vadd.f32 %v6687, %v6927
  %v6929 = vpop.f32.mrb[0].mxu0
  %v6930 = vpop.f32.mrb[0].mxu0
  %v6931 = vadd.f32 %v6687, %v6930
  %v6932 = vpop.f32.mrb[0].mxu0
  %6933 = vmatprep.mubr.bf16.mxu0 0
  %6934 = vmatmul.mubr.bf16.gmra.mrb[0].mxu0 %v6732
  %v6935 = vpop.f32.mrb[0].mxu0
  %v6936 = vadd.f32 %v6687, %v6935
  %v6937 = vpop.f32.mrb[0].mxu0
  %v6938 = vpop.f32.mrb[0].mxu0
  %v6939 = vadd.f32 %v6687, %v6938
  %v6940 = vpop.f32.mrb[0].mxu0
  %6941 = vmatprep.mubr.bf16.mxu0 0
  %6942 = vmatmul.mubr.bf16.gmra.mrb[0].mxu0 %v6735
  %v6943 = vpop.f32.mrb[0].mxu0
  %v6944 = vadd.f32 %v6687, %v6943
  %v6945 = vpop.f32.mrb[0].mxu0
  %v6946 = vpop.f32.mrb[0].mxu0
  %v6947 = vadd.f32 %v6687, %v6946
  %v6948 = vpop.f32.mrb[0].mxu0
  %6949 = vmatprep.mubr.bf16.mxu0 0
  %6950 = vmatmul.mubr.bf16.gmra.mrb[0].mxu0 %v6738
  %v6951 = vpop.f32.mrb[0].mxu0
  %v6952 = vadd.f32 %v6687, %v6951
  %v6953 = vpop.f32.mrb[0].mxu0
  %v6954 = vpop.f32.mrb[0].mxu0
  %v6955 = vadd.f32 %v6687, %v6954
  %v6956 = vpop.f32.mrb[0].mxu0
  %6957 = vmatprep.mubr.bf16.mxu0 0
  %6958 = vmatmul.mubr.bf16.gmra.mrb[0].mxu0 %v6741
  %v6959 = vpop.f32.mrb[0].mxu0
  %v6960 = vadd.f32 %v6687, %v6959
  %v6961 = vpop.f32.mrb[0].mxu0
  %v6962 = vpop.f32.mrb[0].mxu0
  %v6963 = vadd.f32 %v6687, %v6962
  %v6964 = vpop.f32.mrb[0].mxu0
  %6965 = vmatprep.mubr.bf16.mxu0 0
  %6966 = vmatmul.mubr.bf16.gmra.mrb[0].mxu0 %v6744
  %v6967 = vpop.f32.mrb[0].mxu0
  %v6968 = vadd.f32 %v6687, %v6967
  %v6969 = vpop.f32.mrb[0].mxu0
  %v6970 = vpop.f32.mrb[0].mxu0
  %v6971 = vadd.f32 %v6687, %v6970
  %v6972 = vpop.f32.mrb[0].mxu0
  %6973 = vmatprep.mubr.bf16.mxu0 0
  %6974 = vmatmul.mubr.bf16.gmra.mrb[0].mxu0 %v6747
  %v6975 = vpop.f32.mrb[0].mxu0
  %v6976 = vadd.f32 %v6687, %v6975
  %v6977 = vpop.f32.mrb[0].mxu0
  %v6978 = vpop.f32.mrb[0].mxu0
  %v6979 = vadd.f32 %v6687, %v6978
  %v6980 = vpop.f32.mrb[0].mxu0
  %6981 = vmatprep.mubr.bf16.mxu0 0
  %6982 = vmatmul.mubr.bf16.gmra.mrb[0].mxu0 %v6750
  %v6983 = vpop.f32.mrb[0].mxu0
  %v6984 = vadd.f32 %v6687, %v6983
  %v6985 = vpop.f32.mrb[0].mxu0
  %v6986 = vpop.f32.mrb[0].mxu0
  %v6987 = vadd.f32 %v6687, %v6986
  %v6988 = vpop.f32.mrb[0].mxu0
  %6989 = vmatprep.mubr.bf16.mxu0 0
  %6990 = vmatmul.mubr.bf16.gmra.mrb[0].mxu0 %v6753
  %v6991 = vpop.f32.mrb[0].mxu0
  %v6992 = vadd.f32 %v6687, %v6991
  %v6993 = vpop.f32.mrb[0].mxu0
  %v6994 = vpop.f32.mrb[0].mxu0
  %v6995 = vadd.f32 %v6687, %v6994
  %v6996 = vpop.f32.mrb[0].mxu0
  %6997 = vmatprep.mubr.bf16.mxu0 0
  %6998 = vmatmul.mubr.bf16.gmra.mrb[0].mxu0 %v6756
  %v6999 = vpop.f32.mrb[0].mxu0
  %v7000 = vadd.f32 %v6687, %v6999
  %v7001 = vpop.f32.mrb[0].mxu0
  %v7002 = vpop.f32.mrb[0].mxu0
  %v7003 = vadd.f32 %v6687, %v7002
  %v7004 = vpop.f32.mrb[0].mxu0
  %7005 = vmatprep.mubr.bf16.mxu0 0
  %7006 = vmatmul.mubr.bf16.gmra.mrb[0].mxu0 %v6759
  %v7007 = vpop.f32.mrb[0].mxu0
  %v7008 = vadd.f32 %v6687, %v7007
  %v7009 = vpop.f32.mrb[0].mxu0
  %v7010 = vpop.f32.mrb[0].mxu0
  %v7011 = vadd.f32 %v6687, %v7010
  %v7012 = vpop.f32.mrb[0].mxu0
  %7013 = vmatprep.mubr.bf16.mxu0 0
  %7014 = vmatmul.mubr.bf16.gmra.mrb[0].mxu0 %v6762
  %v7015 = vpop.f32.mrb[0].mxu0
  %v7016 = vadd.f32 %v6687, %v7015
  %v7017 = vpop.f32.mrb[0].mxu0
  %v7018 = vpop.f32.mrb[0].mxu0
  %v7019 = vadd.f32 %v6687, %v7018
  %v7020 = vpop.f32.mrb[0].mxu0
  %7021 = vmatprep.mubr.bf16.mxu0 0
  %7022 = vmatmul.mubr.bf16.gmra.mrb[0].mxu0 %v6765
  %v7023 = vpop.f32.mrb[0].mxu0
  %v7024 = vadd.f32 %v6687, %v7023
  %v7025 = vpop.f32.mrb[0].mxu0
  %v7026 = vpop.f32.mrb[0].mxu0
  %v7027 = vadd.f32 %v6687, %v7026
  %v7028 = vpop.f32.mrb[0].mxu0
  %7029 = vmatprep.mubr.bf16.mxu0 0
  %7030 = vmatmul.mubr.bf16.gmra.mrb[0].mxu0 %v6768
  %v7031 = vpop.f32.mrb[0].mxu0
  %v7032 = vadd.f32 %v6687, %v7031
  %v7033 = vpop.f32.mrb[0].mxu0
  %v7034 = vpop.f32.mrb[0].mxu0
  %v7035 = vadd.f32 %v6687, %v7034
  %v7036 = vpop.f32.mrb[0].mxu0
  %7037 = vmatprep.mubr.bf16.mxu0 0
  %7038 = vmatmul.mubr.bf16.gmra.mrb[0].mxu0 %v6771
  %v7039 = vpop.f32.mrb[0].mxu0
  %v7040 = vadd.f32 %v6687, %v7039
  %v7041 = vpop.f32.mrb[0].mxu0
  %v7042 = vpop.f32.mrb[0].mxu0
  %v7043 = vadd.f32 %v6687, %v7042
  %v7044 = vpop.f32.mrb[0].mxu0
  %7045 = vmatprep.mubr.bf16.mxu0 0
  %7046 = vmatmul.mubr.bf16.gmra.mrb[0].mxu0 %v6774
  %v7047 = vpop.f32.mrb[0].mxu0
  %v7048 = vadd.f32 %v6687, %v7047
  %v7049 = vpop.f32.mrb[0].mxu0
  %v7050 = vpop.f32.mrb[0].mxu0
  %v7051 = vadd.f32 %v6687, %v7050
  %v7052 = vpop.f32.mrb[0].mxu0
  %7053 = vmatprep.mubr.bf16.mxu0 0
  %7054 = vmatmul.mubr.bf16.gmra.mrb[0].mxu0 %v6777
  %v7055 = vpop.f32.mrb[0].mxu0
  %v7056 = vadd.f32 %v6687, %v7055
  %v7057 = vpop.f32.mrb[0].mxu0
  %v7058 = vpop.f32.mrb[0].mxu0
  %v7059 = vadd.f32 %v6687, %v7058
  %v7060 = vpop.f32.mrb[0].mxu0
  %7061 = vmatprep.mubr.bf16.mxu0 0
  %7062 = vmatmul.mubr.bf16.gmra.mrb[0].mxu0 %v6780
  %v7063 = vpop.f32.mrb[0].mxu0
  %v7064 = vadd.f32 %v6687, %v7063
  %v7065 = vpop.f32.mrb[0].mxu0
  %v7066 = vpop.f32.mrb[0].mxu0
  %v7067 = vadd.f32 %v6687, %v7066
  %v7068 = vpop.f32.mrb[0].mxu0
  %7069 = vmatprep.mubr.bf16.mxu0 0
  %7070 = vmatmul.mubr.bf16.gmra.mrb[0].mxu0 %v6783
  %v7071 = vpop.f32.mrb[0].mxu0
  %v7072 = vadd.f32 %v6687, %v7071
  %v7073 = vpop.f32.mrb[0].mxu0
  %v7074 = vpop.f32.mrb[0].mxu0
  %v7075 = vadd.f32 %v6687, %v7074
  %v7076 = vpop.f32.mrb[0].mxu0
  %7077 = vdwg.mxu0
  %v7078 = vld [vmem:[%s8] sm:$0x1]
  %v7079 = vld [vmem:[%s9] sm:$0x1]
  %v7080 = vld [vmem:[%s10] sm:$0x1]
  %v7081 = vsel %vm1244, %v6521, 0.0
  %v7082 = vsel %vm1244, %v6522, 0.0
  %v7083 = vadd.f32 %v7081, %v7082
  %v7084 = vsel %vm1244, %v6523, 0.0
  %v7085 = vadd.f32 %v7083, %v7084
  %v7086 = vsel %vm1244, %v6524, 0.0
  %v7087 = vadd.f32 %v7085, %v7086
  %v7088 = vsel %vm1244, %v6525, 0.0
  %v7089 = vadd.f32 %v7087, %v7088
  %v7090 = vsel %vm1244, %v6526, 0.0
  %v7091 = vadd.f32 %v7089, %v7090
  %v7092 = vsel %vm1244, %v6527, 0.0
  %v7093 = vadd.f32 %v7091, %v7092
  %v7094 = vsel %vm1244, %v6528, 0.0
  %v7095 = vadd.f32 %v7093, %v7094
  %v7096 = vsel %vm1244, %v6529, 0.0
  %v7097 = vadd.f32 %v7095, %v7096
  %v7098 = vsel %vm1244, %v6530, 0.0
  %v7099 = vadd.f32 %v7097, %v7098
  %v7100 = vsel %vm1244, %v6531, 0.0
  %v7101 = vadd.f32 %v7099, %v7100
  %v7102 = vsel %vm1244, %v6532, 0.0
  %v7103 = vadd.f32 %v7101, %v7102
  %v7104 = vsel %vm1244, %v6533, 0.0
  %v7105 = vadd.f32 %v7103, %v7104
  %v7106 = vsel %vm1244, %v6534, 0.0
  %v7107 = vadd.f32 %v7105, %v7106
  %v7108 = vsel %vm1244, %v6535, 0.0
  %v7109 = vadd.f32 %v7107, %v7108
  %v7110 = vsel %vm1244, %v6536, 0.0
  %v7111 = vadd.f32 %v7109, %v7110
  %v7112 = vsel %vm1244, %v6537, 0.0
  %v7113 = vadd.f32 %v7111, %v7112
  %v7114 = vsel %vm1244, %v6538, 0.0
  %v7115 = vadd.f32 %v7113, %v7114
  %v7116 = vsel %vm1244, %v6539, 0.0
  %v7117 = vadd.f32 %v7115, %v7116
  %v7118 = vsel %vm1244, %v6540, 0.0
  %v7119 = vadd.f32 %v7117, %v7118
  %v7120 = vsel %vm1244, %v6541, 0.0
  %v7121 = vadd.f32 %v7119, %v7120
  %v7122 = vsel %vm1244, %v6542, 0.0
  %v7123 = vadd.f32 %v7121, %v7122
  %v7124 = vsel %vm1244, %v6543, 0.0
  %v7125 = vadd.f32 %v7123, %v7124
  %v7126 = vsel %vm1244, %v6544, 0.0
  %v7127 = vadd.f32 %v7125, %v7126
  %v7128 = vsel %vm1244, %v6545, 0.0
  %v7129 = vadd.f32 %v7127, %v7128
  %v7130 = vsel %vm1244, %v6546, 0.0
  %v7131 = vadd.f32 %v7129, %v7130
  %v7132 = vsel %vm1244, %v6547, 0.0
  %v7133 = vadd.f32 %v7131, %v7132
  %v7134 = vsel %vm1244, %v6548, 0.0
  %v7135 = vadd.f32 %v7133, %v7134
  %v7136 = vsel %vm1244, %v6549, 0.0
  %v7137 = vadd.f32 %v7135, %v7136
  %v7138 = vsel %vm1244, %v6550, 0.0
  %v7139 = vadd.f32 %v7137, %v7138
  %v7140 = vsel %vm1244, %v6551, 0.0
  %v7141 = vadd.f32 %v7139, %v7140
  %v7142 = vsel %vm1244, %v6552, 0.0
  %v7143 = vadd.f32 %v7141, %v7142
  %v7144 = vrot.slane %v7143, 4
  %v7145 = vadd.f32 %v7143, %v7144
  %v7146 = vrot.slane %v7145, 2
  %v7147 = vadd.f32 %v7145, %v7146
  %v7148 = vrot.slane %v7147, 1
  %v7149 = vadd.f32 %v7147, %v7148
  %v7150 = vmul.f32 %v7149, %v2696
  %v7151 = vadd.f32 %v7150, %v7078
  %v7153 = vsel %vm1244, %v7151, 0
  %7155 = vmatprep.subr.mxu0 0.0
  %7156 = vmatpush1.msra.mxu0 %v51
  %7157 = vmatprep.subr.mxu0 0.0
  %7158 = vmatpush1.msra.mxu0 0.0
  %7159 = vmatprep.subr.mxu0 0.0
  %7160 = vmatpush1.msra.mxu0 0.0
  %7161 = vmatprep.subr.mxu0 0.0
  %7162 = vmatpush1.msra.mxu0 0.0
  %7163 = vmatprep.subr.mxu0 0.0
  %7164 = vmatpush1.msra.mxu0 0.0
  %7165 = vmatprep.subr.mxu0 0.0
  %7166 = vmatpush1.msra.mxu0 0.0
  %7167 = vmatprep.subr.mxu0 0.0
  %7168 = vmatpush1.msra.mxu0 0.0
  %7169 = vmatprep.subr.mxu0 0.0
  %7170 = vmatpush1.msra.mxu0 0.0
  %7171 = vmatprep.subr.mxu0 0.0
  %7172 = vmatpush1.msra.mxu0 0.0
  %7173 = vmatprep.subr.mxu0 0.0
  %7174 = vmatpush1.msra.mxu0 0.0
  %7175 = vmatprep.subr.mxu0 0.0
  %7176 = vmatpush1.msra.mxu0 0.0
  %7177 = vmatprep.subr.mxu0 0.0
  %7178 = vmatpush1.msra.mxu0 0.0
  %7179 = vmatprep.subr.mxu0 0.0
  %7180 = vmatpush1.msra.mxu0 0.0
  %7181 = vmatprep.subr.mxu0 0.0
  %7182 = vmatpush1.msra.mxu0 0.0
  %7183 = vmatprep.subr.mxu0 0.0
  %7184 = vmatpush1.msra.mxu0 0.0
  %7185 = vmatprep.subr.mxu0 0.0
  %7186 = vmatpush1.msra.mxu0 0.0
  %7187 = vmatprep.subr.mxu0 0.0
  %7188 = vmatpush1.msra.mxu0 0.0
  %7189 = vmatprep.subr.mxu0 0.0
  %7190 = vmatpush1.msra.mxu0 0.0
  %7191 = vmatprep.subr.mxu0 0.0
  %7192 = vmatpush1.msra.mxu0 0.0
  %7193 = vmatprep.subr.mxu0 0.0
  %7194 = vmatpush1.msra.mxu0 0.0
  %7195 = vmatprep.subr.mxu0 0.0
  %7196 = vmatpush1.msra.mxu0 0.0
  %7197 = vmatprep.subr.mxu0 0.0
  %7198 = vmatpush1.msra.mxu0 0.0
  %7199 = vmatprep.subr.mxu0 0.0
  %7200 = vmatpush1.msra.mxu0 0.0
  %7201 = vmatprep.subr.mxu0 0.0
  %7202 = vmatpush1.msra.mxu0 0.0
  %7203 = vmatprep.subr.mxu0 0.0
  %7204 = vmatpush1.msra.mxu0 0.0
  %7205 = vmatprep.subr.mxu0 0.0
  %7206 = vmatpush1.msra.mxu0 0.0
  %7207 = vmatprep.subr.mxu0 0.0
  %7208 = vmatpush1.msra.mxu0 0.0
  %7209 = vmatprep.subr.mxu0 0.0
  %7210 = vmatpush1.msra.mxu0 0.0
  %7211 = vmatprep.subr.mxu0 0.0
  %7212 = vmatpush1.msra.mxu0 0.0
  %7213 = vmatprep.subr.mxu0 0.0
  %7214 = vmatpush1.msra.mxu0 0.0
  %7215 = vmatprep.subr.mxu0 0.0
  %7216 = vmatpush1.msra.mxu0 0.0
  %7217 = vmatprep.subr.mxu0 0.0
  %7218 = vmatpush1.msra.mxu0 0.0
  %7219 = vmatprep.mubr.f32.mxu0 0.0
  %7220 = vmatmul.mubr.f32.gmra.mrb[0].mxu0 %v7153
  %v7221 = vpop.f32.mrb[0].mxu0
  %v7222 = vadd.f32 0.0, %v7221
  %v7223 = vpop.f32.mrb[0].mxu0
  %7224 = vdwg.mxu0
  %v7226 = vsel %vm1244, %v7222, 0
  %7228 = vmatprep.subr.mxu0 0.0
  %7229 = vmatpush1.msra.mxu0 %v52
  %7230 = vmatprep.subr.mxu0 0.0
  %7231 = vmatpush1.msra.mxu0 0.0
  %7232 = vmatprep.subr.mxu0 0.0
  %7233 = vmatpush1.msra.mxu0 0.0
  %7234 = vmatprep.subr.mxu0 0.0
  %7235 = vmatpush1.msra.mxu0 0.0
  %7236 = vmatprep.subr.mxu0 0.0
  %7237 = vmatpush1.msra.mxu0 0.0
  %7238 = vmatprep.subr.mxu0 0.0
  %7239 = vmatpush1.msra.mxu0 0.0
  %7240 = vmatprep.subr.mxu0 0.0
  %7241 = vmatpush1.msra.mxu0 0.0
  %7242 = vmatprep.subr.mxu0 0.0
  %7243 = vmatpush1.msra.mxu0 0.0
  %7244 = vmatprep.subr.mxu0 0.0
  %7245 = vmatpush1.msra.mxu0 0.0
  %7246 = vmatprep.subr.mxu0 0.0
  %7247 = vmatpush1.msra.mxu0 0.0
  %7248 = vmatprep.subr.mxu0 0.0
  %7249 = vmatpush1.msra.mxu0 0.0
  %7250 = vmatprep.subr.mxu0 0.0
  %7251 = vmatpush1.msra.mxu0 0.0
  %7252 = vmatprep.subr.mxu0 0.0
  %7253 = vmatpush1.msra.mxu0 0.0
  %7254 = vmatprep.subr.mxu0 0.0
  %7255 = vmatpush1.msra.mxu0 0.0
  %7256 = vmatprep.subr.mxu0 0.0
  %7257 = vmatpush1.msra.mxu0 0.0
  %7258 = vmatprep.subr.mxu0 0.0
  %7259 = vmatpush1.msra.mxu0 0.0
  %7260 = vmatprep.subr.mxu0 0.0
  %7261 = vmatpush1.msra.mxu0 0.0
  %7262 = vmatprep.subr.mxu0 0.0
  %7263 = vmatpush1.msra.mxu0 0.0
  %7264 = vmatprep.subr.mxu0 0.0
  %7265 = vmatpush1.msra.mxu0 0.0
  %7266 = vmatprep.subr.mxu0 0.0
  %7267 = vmatpush1.msra.mxu0 0.0
  %7268 = vmatprep.subr.mxu0 0.0
  %7269 = vmatpush1.msra.mxu0 0.0
  %7270 = vmatprep.subr.mxu0 0.0
  %7271 = vmatpush1.msra.mxu0 0.0
  %7272 = vmatprep.subr.mxu0 0.0
  %7273 = vmatpush1.msra.mxu0 0.0
  %7274 = vmatprep.subr.mxu0 0.0
  %7275 = vmatpush1.msra.mxu0 0.0
  %7276 = vmatprep.subr.mxu0 0.0
  %7277 = vmatpush1.msra.mxu0 0.0
  %7278 = vmatprep.subr.mxu0 0.0
  %7279 = vmatpush1.msra.mxu0 0.0
  %7280 = vmatprep.subr.mxu0 0.0
  %7281 = vmatpush1.msra.mxu0 0.0
  %7282 = vmatprep.subr.mxu0 0.0
  %7283 = vmatpush1.msra.mxu0 0.0
  %7284 = vmatprep.subr.mxu0 0.0
  %7285 = vmatpush1.msra.mxu0 0.0
  %7286 = vmatprep.subr.mxu0 0.0
  %7287 = vmatpush1.msra.mxu0 0.0
  %7288 = vmatprep.subr.mxu0 0.0
  %7289 = vmatpush1.msra.mxu0 0.0
  %7290 = vmatprep.subr.mxu0 0.0
  %7291 = vmatpush1.msra.mxu0 0.0
  %7292 = vmatprep.mubr.f32.mxu0 0.0
  %7293 = vmatmul.mubr.f32.gmra.mrb[0].mxu0 %v7226
  %v7294 = vpop.f32.mrb[0].mxu0
  %v7295 = vadd.f32 0.0, %v7294
  %v7296 = vpop.f32.mrb[0].mxu0
  %7297 = vdwg.mxu0
  %v7298 = vsub.f32 %v7078, %v7295
  %v7300 = vlaneseq
  %v7301 = vshrl.u32 %v7300, 7
  %v7302 = vsub.s32 0, %v7301
  %v7303 = vrot.slane %v7298, %v7302
  %v7305 = vadd.f32 %v6521, %v7303
  %v7306 = vadd.f32 %v6522, %v7303
  %v7307 = vadd.f32 %v6523, %v7303
  %v7308 = vadd.f32 %v6524, %v7303
  %v7309 = vadd.f32 %v6525, %v7303
  %v7310 = vadd.f32 %v6526, %v7303
  %v7311 = vadd.f32 %v6527, %v7303
  %v7312 = vadd.f32 %v6528, %v7303
  %v7313 = vadd.f32 %v6529, %v7303
  %v7314 = vadd.f32 %v6530, %v7303
  %v7315 = vadd.f32 %v6531, %v7303
  %v7316 = vadd.f32 %v6532, %v7303
  %v7317 = vadd.f32 %v6533, %v7303
  %v7318 = vadd.f32 %v6534, %v7303
  %v7319 = vadd.f32 %v6535, %v7303
  %v7320 = vadd.f32 %v6536, %v7303
  %v7321 = vadd.f32 %v6537, %v7303
  %v7322 = vadd.f32 %v6538, %v7303
  %v7323 = vadd.f32 %v6539, %v7303
  %v7324 = vadd.f32 %v6540, %v7303
  %v7325 = vadd.f32 %v6541, %v7303
  %v7326 = vadd.f32 %v6542, %v7303
  %v7327 = vadd.f32 %v6543, %v7303
  %v7328 = vadd.f32 %v6544, %v7303
  %v7329 = vadd.f32 %v6545, %v7303
  %v7330 = vadd.f32 %v6546, %v7303
  %v7331 = vadd.f32 %v6547, %v7303
  %v7332 = vadd.f32 %v6548, %v7303
  %v7333 = vadd.f32 %v6549, %v7303
  %v7334 = vadd.f32 %v6550, %v7303
  %v7335 = vadd.f32 %v6551, %v7303
  %v7336 = vadd.f32 %v6552, %v7303
  %v7337 = vmul.f32 %v7305, %v7305
  %v7338 = vmul.f32 %v7306, %v7306
  %v7339 = vmul.f32 %v7307, %v7307
  %v7340 = vmul.f32 %v7308, %v7308
  %v7341 = vmul.f32 %v7309, %v7309
  %v7342 = vmul.f32 %v7310, %v7310
  %v7343 = vmul.f32 %v7311, %v7311
  %v7344 = vmul.f32 %v7312, %v7312
  %v7345 = vmul.f32 %v7313, %v7313
  %v7346 = vmul.f32 %v7314, %v7314
  %v7347 = vmul.f32 %v7315, %v7315
  %v7348 = vmul.f32 %v7316, %v7316
  %v7349 = vmul.f32 %v7317, %v7317
  %v7350 = vmul.f32 %v7318, %v7318
  %v7351 = vmul.f32 %v7319, %v7319
  %v7352 = vmul.f32 %v7320, %v7320
  %v7353 = vmul.f32 %v7321, %v7321
  %v7354 = vmul.f32 %v7322, %v7322
  %v7355 = vmul.f32 %v7323, %v7323
  %v7356 = vmul.f32 %v7324, %v7324
  %v7357 = vmul.f32 %v7325, %v7325
  %v7358 = vmul.f32 %v7326, %v7326
  %v7359 = vmul.f32 %v7327, %v7327
  %v7360 = vmul.f32 %v7328, %v7328
  %v7361 = vmul.f32 %v7329, %v7329
  %v7362 = vmul.f32 %v7330, %v7330
  %v7363 = vmul.f32 %v7331, %v7331
  %v7364 = vmul.f32 %v7332, %v7332
  %v7365 = vmul.f32 %v7333, %v7333
  %v7366 = vmul.f32 %v7334, %v7334
  %v7367 = vmul.f32 %v7335, %v7335
  %v7368 = vmul.f32 %v7336, %v7336
  %v7369 = vsel %vm1244, %v7337, 0.0
  %v7370 = vsel %vm1244, %v7338, 0.0
  %v7371 = vadd.f32 %v7369, %v7370
  %v7372 = vsel %vm1244, %v7339, 0.0
  %v7373 = vadd.f32 %v7371, %v7372
  %v7374 = vsel %vm1244, %v7340, 0.0
  %v7375 = vadd.f32 %v7373, %v7374
  %v7376 = vsel %vm1244, %v7341, 0.0
  %v7377 = vadd.f32 %v7375, %v7376
  %v7378 = vsel %vm1244, %v7342, 0.0
  %v7379 = vadd.f32 %v7377, %v7378
  %v7380 = vsel %vm1244, %v7343, 0.0
  %v7381 = vadd.f32 %v7379, %v7380
  %v7382 = vsel %vm1244, %v7344, 0.0
  %v7383 = vadd.f32 %v7381, %v7382
  %v7384 = vsel %vm1244, %v7345, 0.0
  %v7385 = vadd.f32 %v7383, %v7384
  %v7386 = vsel %vm1244, %v7346, 0.0
  %v7387 = vadd.f32 %v7385, %v7386
  %v7388 = vsel %vm1244, %v7347, 0.0
  %v7389 = vadd.f32 %v7387, %v7388
  %v7390 = vsel %vm1244, %v7348, 0.0
  %v7391 = vadd.f32 %v7389, %v7390
  %v7392 = vsel %vm1244, %v7349, 0.0
  %v7393 = vadd.f32 %v7391, %v7392
  %v7394 = vsel %vm1244, %v7350, 0.0
  %v7395 = vadd.f32 %v7393, %v7394
  %v7396 = vsel %vm1244, %v7351, 0.0
  %v7397 = vadd.f32 %v7395, %v7396
  %v7398 = vsel %vm1244, %v7352, 0.0
  %v7399 = vadd.f32 %v7397, %v7398
  %v7400 = vsel %vm1244, %v7353, 0.0
  %v7401 = vadd.f32 %v7399, %v7400
  %v7402 = vsel %vm1244, %v7354, 0.0
  %v7403 = vadd.f32 %v7401, %v7402
  %v7404 = vsel %vm1244, %v7355, 0.0
  %v7405 = vadd.f32 %v7403, %v7404
  %v7406 = vsel %vm1244, %v7356, 0.0
  %v7407 = vadd.f32 %v7405, %v7406
  %v7408 = vsel %vm1244, %v7357, 0.0
  %v7409 = vadd.f32 %v7407, %v7408
  %v7410 = vsel %vm1244, %v7358, 0.0
  %v7411 = vadd.f32 %v7409, %v7410
  %v7412 = vsel %vm1244, %v7359, 0.0
  %v7413 = vadd.f32 %v7411, %v7412
  %v7414 = vsel %vm1244, %v7360, 0.0
  %v7415 = vadd.f32 %v7413, %v7414
  %v7416 = vsel %vm1244, %v7361, 0.0
  %v7417 = vadd.f32 %v7415, %v7416
  %v7418 = vsel %vm1244, %v7362, 0.0
  %v7419 = vadd.f32 %v7417, %v7418
  %v7420 = vsel %vm1244, %v7363, 0.0
  %v7421 = vadd.f32 %v7419, %v7420
  %v7422 = vsel %vm1244, %v7364, 0.0
  %v7423 = vadd.f32 %v7421, %v7422
  %v7424 = vsel %vm1244, %v7365, 0.0
  %v7425 = vadd.f32 %v7423, %v7424
  %v7426 = vsel %vm1244, %v7366, 0.0
  %v7427 = vadd.f32 %v7425, %v7426
  %v7428 = vsel %vm1244, %v7367, 0.0
  %v7429 = vadd.f32 %v7427, %v7428
  %v7430 = vsel %vm1244, %v7368, 0.0
  %v7431 = vadd.f32 %v7429, %v7430
  %v7432 = vrot.slane %v7431, 4
  %v7433 = vadd.f32 %v7431, %v7432
  %v7434 = vrot.slane %v7433, 2
  %v7435 = vadd.f32 %v7433, %v7434
  %v7436 = vrot.slane %v7435, 1
  %v7437 = vadd.f32 %v7435, %v7436
  %v7438 = vmul.f32 %v7437, %v2696
  %v7440 = vsel %vm1244, %v7438, 0
  %7442 = vmatprep.subr.mxu0 0.0
  %7443 = vmatpush1.msra.mxu0 %v51
  %7444 = vmatprep.subr.mxu0 0.0
  %7445 = vmatpush1.msra.mxu0 0.0
  %7446 = vmatprep.subr.mxu0 0.0
  %7447 = vmatpush1.msra.mxu0 0.0
  %7448 = vmatprep.subr.mxu0 0.0
  %7449 = vmatpush1.msra.mxu0 0.0
  %7450 = vmatprep.subr.mxu0 0.0
  %7451 = vmatpush1.msra.mxu0 0.0
  %7452 = vmatprep.subr.mxu0 0.0
  %7453 = vmatpush1.msra.mxu0 0.0
  %7454 = vmatprep.subr.mxu0 0.0
  %7455 = vmatpush1.msra.mxu0 0.0
  %7456 = vmatprep.subr.mxu0 0.0
  %7457 = vmatpush1.msra.mxu0 0.0
  %7458 = vmatprep.subr.mxu0 0.0
  %7459 = vmatpush1.msra.mxu0 0.0
  %7460 = vmatprep.subr.mxu0 0.0
  %7461 = vmatpush1.msra.mxu0 0.0
  %7462 = vmatprep.subr.mxu0 0.0
  %7463 = vmatpush1.msra.mxu0 0.0
  %7464 = vmatprep.subr.mxu0 0.0
  %7465 = vmatpush1.msra.mxu0 0.0
  %7466 = vmatprep.subr.mxu0 0.0
  %7467 = vmatpush1.msra.mxu0 0.0
  %7468 = vmatprep.subr.mxu0 0.0
  %7469 = vmatpush1.msra.mxu0 0.0
  %7470 = vmatprep.subr.mxu0 0.0
  %7471 = vmatpush1.msra.mxu0 0.0
  %7472 = vmatprep.subr.mxu0 0.0
  %7473 = vmatpush1.msra.mxu0 0.0
  %7474 = vmatprep.subr.mxu0 0.0
  %7475 = vmatpush1.msra.mxu0 0.0
  %7476 = vmatprep.subr.mxu0 0.0
  %7477 = vmatpush1.msra.mxu0 0.0
  %7478 = vmatprep.subr.mxu0 0.0
  %7479 = vmatpush1.msra.mxu0 0.0
  %7480 = vmatprep.subr.mxu0 0.0
  %7481 = vmatpush1.msra.mxu0 0.0
  %7482 = vmatprep.subr.mxu0 0.0
  %7483 = vmatpush1.msra.mxu0 0.0
  %7484 = vmatprep.subr.mxu0 0.0
  %7485 = vmatpush1.msra.mxu0 0.0
  %7486 = vmatprep.subr.mxu0 0.0
  %7487 = vmatpush1.msra.mxu0 0.0
  %7488 = vmatprep.subr.mxu0 0.0
  %7489 = vmatpush1.msra.mxu0 0.0
  %7490 = vmatprep.subr.mxu0 0.0
  %7491 = vmatpush1.msra.mxu0 0.0
  %7492 = vmatprep.subr.mxu0 0.0
  %7493 = vmatpush1.msra.mxu0 0.0
  %7494 = vmatprep.subr.mxu0 0.0
  %7495 = vmatpush1.msra.mxu0 0.0
  %7496 = vmatprep.subr.mxu0 0.0
  %7497 = vmatpush1.msra.mxu0 0.0
  %7498 = vmatprep.subr.mxu0 0.0
  %7499 = vmatpush1.msra.mxu0 0.0
  %7500 = vmatprep.subr.mxu0 0.0
  %7501 = vmatpush1.msra.mxu0 0.0
  %7502 = vmatprep.subr.mxu0 0.0
  %7503 = vmatpush1.msra.mxu0 0.0
  %7504 = vmatprep.subr.mxu0 0.0
  %7505 = vmatpush1.msra.mxu0 0.0
  %7506 = vmatprep.mubr.f32.mxu0 0.0
  %7507 = vmatmul.mubr.f32.gmra.mrb[0].mxu0 %v7440
  %v7508 = vpop.f32.mrb[0].mxu0
  %v7509 = vadd.f32 0.0, %v7508
  %v7510 = vpop.f32.mrb[0].mxu0
  %7511 = vdwg.mxu0
  %v7513 = vsel %vm1244, %v7509, 0
  %7515 = vmatprep.subr.mxu0 0.0
  %7516 = vmatpush1.msra.mxu0 %v52
  %7517 = vmatprep.subr.mxu0 0.0
  %7518 = vmatpush1.msra.mxu0 0.0
  %7519 = vmatprep.subr.mxu0 0.0
  %7520 = vmatpush1.msra.mxu0 0.0
  %7521 = vmatprep.subr.mxu0 0.0
  %7522 = vmatpush1.msra.mxu0 0.0
  %7523 = vmatprep.subr.mxu0 0.0
  %7524 = vmatpush1.msra.mxu0 0.0
  %7525 = vmatprep.subr.mxu0 0.0
  %7526 = vmatpush1.msra.mxu0 0.0
  %7527 = vmatprep.subr.mxu0 0.0
  %7528 = vmatpush1.msra.mxu0 0.0
  %7529 = vmatprep.subr.mxu0 0.0
  %7530 = vmatpush1.msra.mxu0 0.0
  %7531 = vmatprep.subr.mxu0 0.0
  %7532 = vmatpush1.msra.mxu0 0.0
  %7533 = vmatprep.subr.mxu0 0.0
  %7534 = vmatpush1.msra.mxu0 0.0
  %7535 = vmatprep.subr.mxu0 0.0
  %7536 = vmatpush1.msra.mxu0 0.0
  %7537 = vmatprep.subr.mxu0 0.0
  %7538 = vmatpush1.msra.mxu0 0.0
  %7539 = vmatprep.subr.mxu0 0.0
  %7540 = vmatpush1.msra.mxu0 0.0
  %7541 = vmatprep.subr.mxu0 0.0
  %7542 = vmatpush1.msra.mxu0 0.0
  %7543 = vmatprep.subr.mxu0 0.0
  %7544 = vmatpush1.msra.mxu0 0.0
  %7545 = vmatprep.subr.mxu0 0.0
  %7546 = vmatpush1.msra.mxu0 0.0
  %7547 = vmatprep.subr.mxu0 0.0
  %7548 = vmatpush1.msra.mxu0 0.0
  %7549 = vmatprep.subr.mxu0 0.0
  %7550 = vmatpush1.msra.mxu0 0.0
  %7551 = vmatprep.subr.mxu0 0.0
  %7552 = vmatpush1.msra.mxu0 0.0
  %7553 = vmatprep.subr.mxu0 0.0
  %7554 = vmatpush1.msra.mxu0 0.0
  %7555 = vmatprep.subr.mxu0 0.0
  %7556 = vmatpush1.msra.mxu0 0.0
  %7557 = vmatprep.subr.mxu0 0.0
  %7558 = vmatpush1.msra.mxu0 0.0
  %7559 = vmatprep.subr.mxu0 0.0
  %7560 = vmatpush1.msra.mxu0 0.0
  %7561 = vmatprep.subr.mxu0 0.0
  %7562 = vmatpush1.msra.mxu0 0.0
  %7563 = vmatprep.subr.mxu0 0.0
  %7564 = vmatpush1.msra.mxu0 0.0
  %7565 = vmatprep.subr.mxu0 0.0
  %7566 = vmatpush1.msra.mxu0 0.0
  %7567 = vmatprep.subr.mxu0 0.0
  %7568 = vmatpush1.msra.mxu0 0.0
  %7569 = vmatprep.subr.mxu0 0.0
  %7570 = vmatpush1.msra.mxu0 0.0
  %7571 = vmatprep.subr.mxu0 0.0
  %7572 = vmatpush1.msra.mxu0 0.0
  %7573 = vmatprep.subr.mxu0 0.0
  %7574 = vmatpush1.msra.mxu0 0.0
  %7575 = vmatprep.subr.mxu0 0.0
  %7576 = vmatpush1.msra.mxu0 0.0
  %7577 = vmatprep.subr.mxu0 0.0
  %7578 = vmatpush1.msra.mxu0 0.0
  %7579 = vmatprep.mubr.f32.mxu0 0.0
  %7580 = vmatmul.mubr.f32.gmra.mrb[0].mxu0 %v7513
  %v7581 = vpop.f32.mrb[0].mxu0
  %v7582 = vadd.f32 1e-05, %v7581
  %v7583 = vpop.f32.mrb[0].mxu0
  %7584 = vdwg.mxu0
  %v7585 = vrsqrt.pop %v7582
  %v7586 = vmul.f32 %v7585, %v7079
  %v7587 = vlaneseq
  %v7588 = vshrl.u32 %v7587, 7
  %v7589 = vsub.s32 0, %v7588
  %v7590 = vrot.slane %v7586, %v7589
  %v7591 = vmul.f32 %v7305, %v7590
  %v7592 = vmul.f32 %v7306, %v7590
  %v7593 = vmul.f32 %v7307, %v7590
  %v7594 = vmul.f32 %v7308, %v7590
  %v7595 = vmul.f32 %v7309, %v7590
  %v7596 = vmul.f32 %v7310, %v7590
  %v7597 = vmul.f32 %v7311, %v7590
  %v7598 = vmul.f32 %v7312, %v7590
  %v7599 = vmul.f32 %v7313, %v7590
  %v7600 = vmul.f32 %v7314, %v7590
  %v7601 = vmul.f32 %v7315, %v7590
  %v7602 = vmul.f32 %v7316, %v7590
  %v7603 = vmul.f32 %v7317, %v7590
  %v7604 = vmul.f32 %v7318, %v7590
  %v7605 = vmul.f32 %v7319, %v7590
  %v7606 = vmul.f32 %v7320, %v7590
  %v7607 = vmul.f32 %v7321, %v7590
  %v7608 = vmul.f32 %v7322, %v7590
  %v7609 = vmul.f32 %v7323, %v7590
  %v7610 = vmul.f32 %v7324, %v7590
  %v7611 = vmul.f32 %v7325, %v7590
  %v7612 = vmul.f32 %v7326, %v7590
  %v7613 = vmul.f32 %v7327, %v7590
  %v7614 = vmul.f32 %v7328, %v7590
  %v7615 = vmul.f32 %v7329, %v7590
  %v7616 = vmul.f32 %v7330, %v7590
  %v7617 = vmul.f32 %v7331, %v7590
  %v7618 = vmul.f32 %v7332, %v7590
  %v7619 = vmul.f32 %v7333, %v7590
  %v7620 = vmul.f32 %v7334, %v7590
  %v7621 = vmul.f32 %v7335, %v7590
  %v7622 = vmul.f32 %v7336, %v7590
  %v7624 = vlaneseq
  %v7625 = vshrl.u32 %v7624, 7
  %v7626 = vsub.s32 0, %v7625
  %v7627 = vrot.slane %v7080, %v7626
  %v7629 = vadd.f32 %v7591, %v7627
  %v7630 = vadd.f32 %v7592, %v7627
  %v7631 = vadd.f32 %v7593, %v7627
  %v7632 = vadd.f32 %v7594, %v7627
  %v7633 = vadd.f32 %v7595, %v7627
  %v7634 = vadd.f32 %v7596, %v7627
  %v7635 = vadd.f32 %v7597, %v7627
  %v7636 = vadd.f32 %v7598, %v7627
  %v7637 = vadd.f32 %v7599, %v7627
  %v7638 = vadd.f32 %v7600, %v7627
  %v7639 = vadd.f32 %v7601, %v7627
  %v7640 = vadd.f32 %v7602, %v7627
  %v7641 = vadd.f32 %v7603, %v7627
  %v7642 = vadd.f32 %v7604, %v7627
  %v7643 = vadd.f32 %v7605, %v7627
  %v7644 = vadd.f32 %v7606, %v7627
  %v7645 = vadd.f32 %v7607, %v7627
  %v7646 = vadd.f32 %v7608, %v7627
  %v7647 = vadd.f32 %v7609, %v7627
  %v7648 = vadd.f32 %v7610, %v7627
  %v7649 = vadd.f32 %v7611, %v7627
  %v7650 = vadd.f32 %v7612, %v7627
  %v7651 = vadd.f32 %v7613, %v7627
  %v7652 = vadd.f32 %v7614, %v7627
  %v7653 = vadd.f32 %v7615, %v7627
  %v7654 = vadd.f32 %v7616, %v7627
  %v7655 = vadd.f32 %v7617, %v7627
  %v7656 = vadd.f32 %v7618, %v7627
  %v7657 = vadd.f32 %v7619, %v7627
  %v7658 = vadd.f32 %v7620, %v7627
  %v7659 = vadd.f32 %v7621, %v7627
  %v7660 = vadd.f32 %v7622, %v7627
  %v7661 = vsub.f32 0.0, %v7629
  %v7662 = vsub.f32 0.0, %v7630
  %v7663 = vsub.f32 0.0, %v7631
  %v7664 = vsub.f32 0.0, %v7632
  %v7665 = vsub.f32 0.0, %v7633
  %v7666 = vsub.f32 0.0, %v7634
  %v7667 = vsub.f32 0.0, %v7635
  %v7668 = vsub.f32 0.0, %v7636
  %v7669 = vsub.f32 0.0, %v7637
  %v7670 = vsub.f32 0.0, %v7638
  %v7671 = vsub.f32 0.0, %v7639
  %v7672 = vsub.f32 0.0, %v7640
  %v7673 = vsub.f32 0.0, %v7641
  %v7674 = vsub.f32 0.0, %v7642
  %v7675 = vsub.f32 0.0, %v7643
  %v7676 = vsub.f32 0.0, %v7644
  %v7677 = vsub.f32 0.0, %v7645
  %v7678 = vsub.f32 0.0, %v7646
  %v7679 = vsub.f32 0.0, %v7647
  %v7680 = vsub.f32 0.0, %v7648
  %v7681 = vsub.f32 0.0, %v7649
  %v7682 = vsub.f32 0.0, %v7650
  %v7683 = vsub.f32 0.0, %v7651
  %v7684 = vsub.f32 0.0, %v7652
  %v7685 = vsub.f32 0.0, %v7653
  %v7686 = vsub.f32 0.0, %v7654
  %v7687 = vsub.f32 0.0, %v7655
  %v7688 = vsub.f32 0.0, %v7656
  %v7689 = vsub.f32 0.0, %v7657
  %v7690 = vsub.f32 0.0, %v7658
  %v7691 = vsub.f32 0.0, %v7659
  %v7692 = vsub.f32 0.0, %v7660
  %v7693 = vmul.f32 %v7661, 1.442695
  %v7694 = vpow.pop %v7693
  %v7695 = vmul.f32 %v7662, 1.442695
  %v7696 = vpow.pop %v7695
  %v7697 = vmul.f32 %v7663, 1.442695
  %v7698 = vpow.pop %v7697
  %v7699 = vmul.f32 %v7664, 1.442695
  %v7700 = vpow.pop %v7699
  %v7701 = vmul.f32 %v7665, 1.442695
  %v7702 = vpow.pop %v7701
  %v7703 = vmul.f32 %v7666, 1.442695
  %v7704 = vpow.pop %v7703
  %v7705 = vmul.f32 %v7667, 1.442695
  %v7706 = vpow.pop %v7705
  %v7707 = vmul.f32 %v7668, 1.442695
  %v7708 = vpow.pop %v7707
  %v7709 = vmul.f32 %v7669, 1.442695
  %v7710 = vpow.pop %v7709
  %v7711 = vmul.f32 %v7670, 1.442695
  %v7712 = vpow.pop %v7711
  %v7713 = vmul.f32 %v7671, 1.442695
  %v7714 = vpow.pop %v7713
  %v7715 = vmul.f32 %v7672, 1.442695
  %v7716 = vpow.pop %v7715
  %v7717 = vmul.f32 %v7673, 1.442695
  %v7718 = vpow.pop %v7717
  %v7719 = vmul.f32 %v7674, 1.442695
  %v7720 = vpow.pop %v7719
  %v7721 = vmul.f32 %v7675, 1.442695
  %v7722 = vpow.pop %v7721
  %v7723 = vmul.f32 %v7676, 1.442695
  %v7724 = vpow.pop %v7723
  %v7725 = vmul.f32 %v7677, 1.442695
  %v7726 = vpow.pop %v7725
  %v7727 = vmul.f32 %v7678, 1.442695
  %v7728 = vpow.pop %v7727
  %v7729 = vmul.f32 %v7679, 1.442695
  %v7730 = vpow.pop %v7729
  %v7731 = vmul.f32 %v7680, 1.442695
  %v7732 = vpow.pop %v7731
  %v7733 = vmul.f32 %v7681, 1.442695
  %v7734 = vpow.pop %v7733
  %v7735 = vmul.f32 %v7682, 1.442695
  %v7736 = vpow.pop %v7735
  %v7737 = vmul.f32 %v7683, 1.442695
  %v7738 = vpow.pop %v7737
  %v7739 = vmul.f32 %v7684, 1.442695
  %v7740 = vpow.pop %v7739
  %v7741 = vmul.f32 %v7685, 1.442695
  %v7742 = vpow.pop %v7741
  %v7743 = vmul.f32 %v7686, 1.442695
  %v7744 = vpow.pop %v7743
  %v7745 = vmul.f32 %v7687, 1.442695
  %v7746 = vpow.pop %v7745
  %v7747 = vmul.f32 %v7688, 1.442695
  %v7748 = vpow.pop %v7747
  %v7749 = vmul.f32 %v7689, 1.442695
  %v7750 = vpow.pop %v7749
  %v7751 = vmul.f32 %v7690, 1.442695
  %v7752 = vpow.pop %v7751
  %v7753 = vmul.f32 %v7691, 1.442695
  %v7754 = vpow.pop %v7753
  %v7755 = vmul.f32 %v7692, 1.442695
  %v7756 = vpow.pop %v7755
  %v7757 = vadd.f32 %v7694, 1.0
  %v7758 = vadd.f32 %v7696, 1.0
  %v7759 = vadd.f32 %v7698, 1.0
  %v7760 = vadd.f32 %v7700, 1.0
  %v7761 = vadd.f32 %v7702, 1.0
  %v7762 = vadd.f32 %v7704, 1.0
  %v7763 = vadd.f32 %v7706, 1.0
  %v7764 = vadd.f32 %v7708, 1.0
  %v7765 = vadd.f32 %v7710, 1.0
  %v7766 = vadd.f32 %v7712, 1.0
  %v7767 = vadd.f32 %v7714, 1.0
  %v7768 = vadd.f32 %v7716, 1.0
  %v7769 = vadd.f32 %v7718, 1.0
  %v7770 = vadd.f32 %v7720, 1.0
  %v7771 = vadd.f32 %v7722, 1.0
  %v7772 = vadd.f32 %v7724, 1.0
  %v7773 = vadd.f32 %v7726, 1.0
  %v7774 = vadd.f32 %v7728, 1.0
  %v7775 = vadd.f32 %v7730, 1.0
  %v7776 = vadd.f32 %v7732, 1.0
  %v7777 = vadd.f32 %v7734, 1.0
  %v7778 = vadd.f32 %v7736, 1.0
  %v7779 = vadd.f32 %v7738, 1.0
  %v7780 = vadd.f32 %v7740, 1.0
  %v7781 = vadd.f32 %v7742, 1.0
  %v7782 = vadd.f32 %v7744, 1.0
  %v7783 = vadd.f32 %v7746, 1.0
  %v7784 = vadd.f32 %v7748, 1.0
  %v7785 = vadd.f32 %v7750, 1.0
  %v7786 = vadd.f32 %v7752, 1.0
  %v7787 = vadd.f32 %v7754, 1.0
  %v7788 = vadd.f32 %v7756, 1.0
  %v7789 = vrcp.pop %v7757
  %v7790 = vmul.f32 1.0, %v7789
  %v7791 = vrcp.pop %v7758
  %v7792 = vmul.f32 1.0, %v7791
  %v7793 = vrcp.pop %v7759
  %v7794 = vmul.f32 1.0, %v7793
  %v7795 = vrcp.pop %v7760
  %v7796 = vmul.f32 1.0, %v7795
  %v7797 = vrcp.pop %v7761
  %v7798 = vmul.f32 1.0, %v7797
  %v7799 = vrcp.pop %v7762
  %v7800 = vmul.f32 1.0, %v7799
  %v7801 = vrcp.pop %v7763
  %v7802 = vmul.f32 1.0, %v7801
  %v7803 = vrcp.pop %v7764
  %v7804 = vmul.f32 1.0, %v7803
  %v7805 = vrcp.pop %v7765
  %v7806 = vmul.f32 1.0, %v7805
  %v7807 = vrcp.pop %v7766
  %v7808 = vmul.f32 1.0, %v7807
  %v7809 = vrcp.pop %v7767
  %v7810 = vmul.f32 1.0, %v7809
  %v7811 = vrcp.pop %v7768
  %v7812 = vmul.f32 1.0, %v7811
  %v7813 = vrcp.pop %v7769
  %v7814 = vmul.f32 1.0, %v7813
  %v7815 = vrcp.pop %v7770
  %v7816 = vmul.f32 1.0, %v7815
  %v7817 = vrcp.pop %v7771
  %v7818 = vmul.f32 1.0, %v7817
  %v7819 = vrcp.pop %v7772
  %v7820 = vmul.f32 1.0, %v7819
  %v7821 = vrcp.pop %v7773
  %v7822 = vmul.f32 1.0, %v7821
  %v7823 = vrcp.pop %v7774
  %v7824 = vmul.f32 1.0, %v7823
  %v7825 = vrcp.pop %v7775
  %v7826 = vmul.f32 1.0, %v7825
  %v7827 = vrcp.pop %v7776
  %v7828 = vmul.f32 1.0, %v7827
  %v7829 = vrcp.pop %v7777
  %v7830 = vmul.f32 1.0, %v7829
  %v7831 = vrcp.pop %v7778
  %v7832 = vmul.f32 1.0, %v7831
  %v7833 = vrcp.pop %v7779
  %v7834 = vmul.f32 1.0, %v7833
  %v7835 = vrcp.pop %v7780
  %v7836 = vmul.f32 1.0, %v7835
  %v7837 = vrcp.pop %v7781
  %v7838 = vmul.f32 1.0, %v7837
  %v7839 = vrcp.pop %v7782
  %v7840 = vmul.f32 1.0, %v7839
  %v7841 = vrcp.pop %v7783
  %v7842 = vmul.f32 1.0, %v7841
  %v7843 = vrcp.pop %v7784
  %v7844 = vmul.f32 1.0, %v7843
  %v7845 = vrcp.pop %v7785
  %v7846 = vmul.f32 1.0, %v7845
  %v7847 = vrcp.pop %v7786
  %v7848 = vmul.f32 1.0, %v7847
  %v7849 = vrcp.pop %v7787
  %v7850 = vmul.f32 1.0, %v7849
  %v7851 = vrcp.pop %v7788
  %v7852 = vmul.f32 1.0, %v7851
  %v7853 = vmul.f32 %v7629, %v7790
  %v7854 = vmul.f32 %v7630, %v7792
  %v7855 = vmul.f32 %v7631, %v7794
  %v7856 = vmul.f32 %v7632, %v7796
  %v7857 = vmul.f32 %v7633, %v7798
  %v7858 = vmul.f32 %v7634, %v7800
  %v7859 = vmul.f32 %v7635, %v7802
  %v7860 = vmul.f32 %v7636, %v7804
  %v7861 = vmul.f32 %v7637, %v7806
  %v7862 = vmul.f32 %v7638, %v7808
  %v7863 = vmul.f32 %v7639, %v7810
  %v7864 = vmul.f32 %v7640, %v7812
  %v7865 = vmul.f32 %v7641, %v7814
  %v7866 = vmul.f32 %v7642, %v7816
  %v7867 = vmul.f32 %v7643, %v7818
  %v7868 = vmul.f32 %v7644, %v7820
  %v7869 = vmul.f32 %v7645, %v7822
  %v7870 = vmul.f32 %v7646, %v7824
  %v7871 = vmul.f32 %v7647, %v7826
  %v7872 = vmul.f32 %v7648, %v7828
  %v7873 = vmul.f32 %v7649, %v7830
  %v7874 = vmul.f32 %v7650, %v7832
  %v7875 = vmul.f32 %v7651, %v7834
  %v7876 = vmul.f32 %v7652, %v7836
  %v7877 = vmul.f32 %v7653, %v7838
  %v7878 = vmul.f32 %v7654, %v7840
  %v7879 = vmul.f32 %v7655, %v7842
  %v7880 = vmul.f32 %v7656, %v7844
  %v7881 = vmul.f32 %v7657, %v7846
  %v7882 = vmul.f32 %v7658, %v7848
  %v7883 = vmul.f32 %v7659, %v7850
  %v7884 = vmul.f32 %v7660, %v7852
  %v7885 = vadd.f32 %v7853, %v6824
  %v7886 = vadd.f32 %v7854, %v6827
  %v7887 = vadd.f32 %v7855, %v6832
  %v7888 = vadd.f32 %v7856, %v6835
  %v7889 = vadd.f32 %v7857, %v6840
  %v7890 = vadd.f32 %v7858, %v6843
  %v7891 = vadd.f32 %v7859, %v6848
  %v7892 = vadd.f32 %v7860, %v6851
  %v7893 = vadd.f32 %v7861, %v6856
  %v7894 = vadd.f32 %v7862, %v6859
  %v7895 = vadd.f32 %v7863, %v6864
  %v7896 = vadd.f32 %v7864, %v6867
  %v7897 = vadd.f32 %v7865, %v6872
  %v7898 = vadd.f32 %v7866, %v6875
  %v7899 = vadd.f32 %v7867, %v6880
  %v7900 = vadd.f32 %v7868, %v6883
  %v7901 = vadd.f32 %v7869, %v6888
  %v7902 = vadd.f32 %v7870, %v6891
  %v7903 = vadd.f32 %v7871, %v6896
  %v7904 = vadd.f32 %v7872, %v6899
  %v7905 = vadd.f32 %v7873, %v6904
  %v7906 = vadd.f32 %v7874, %v6907
  %v7907 = vadd.f32 %v7875, %v6912
  %v7908 = vadd.f32 %v7876, %v6915
  %v7909 = vadd.f32 %v7877, %v6920
  %v7910 = vadd.f32 %v7878, %v6923
  %v7911 = vadd.f32 %v7879, %v6928
  %v7912 = vadd.f32 %v7880, %v6931
  %v7913 = vadd.f32 %v7881, %v6936
  %v7914 = vadd.f32 %v7882, %v6939
  %v7915 = vadd.f32 %v7883, %v6944
  %v7916 = vadd.f32 %v7884, %v6947
  %7917 = vst.msk [vmem:[%s15] sm:$0xff] %vm1244, %v7885
  %7918 = vst.msk [vmem:[%s15 + $0x8] sm:$0xff] %vm1244, %v7886
  %7919 = vst.msk [vmem:[%s15 + $0x10] sm:$0xff] %vm1244, %v7887
  %7920 = vst.msk [vmem:[%s15 + $0x18] sm:$0xff] %vm1244, %v7888
  %7921 = vst.msk [vmem:[%s15 + $0x20] sm:$0xff] %vm1244, %v7889
  %7922 = vst.msk [vmem:[%s15 + $0x28] sm:$0xff] %vm1244, %v7890
  %7923 = vst.msk [vmem:[%s15 + $0x30] sm:$0xff] %vm1244, %v7891
  %7924 = vst.msk [vmem:[%s15 + $0x38] sm:$0xff] %vm1244, %v7892
  %7925 = vst.msk [vmem:[%s15 + $0x40] sm:$0xff] %vm1244, %v7893
  %7926 = vst.msk [vmem:[%s15 + $0x48] sm:$0xff] %vm1244, %v7894
  %7927 = vst.msk [vmem:[%s15 + $0x50] sm:$0xff] %vm1244, %v7895
  %7928 = vst.msk [vmem:[%s15 + $0x58] sm:$0xff] %vm1244, %v7896
  %7929 = vst.msk [vmem:[%s15 + $0x60] sm:$0xff] %vm1244, %v7897
  %7930 = vst.msk [vmem:[%s15 + $0x68] sm:$0xff] %vm1244, %v7898
  %7931 = vst.msk [vmem:[%s15 + $0x70] sm:$0xff] %vm1244, %v7899
  %7932 = vst.msk [vmem:[%s15 + $0x78] sm:$0xff] %vm1244, %v7900
  %7933 = vst.msk [vmem:[%s15 + $0x80] sm:$0xff] %vm1244, %v7901
  %7934 = vst.msk [vmem:[%s15 + $0x88] sm:$0xff] %vm1244, %v7902
  %7935 = vst.msk [vmem:[%s15 + $0x90] sm:$0xff] %vm1244, %v7903
  %7936 = vst.msk [vmem:[%s15 + $0x98] sm:$0xff] %vm1244, %v7904
  %7937 = vst.msk [vmem:[%s15 + $0xa0] sm:$0xff] %vm1244, %v7905
  %7938 = vst.msk [vmem:[%s15 + $0xa8] sm:$0xff] %vm1244, %v7906
  %7939 = vst.msk [vmem:[%s15 + $0xb0] sm:$0xff] %vm1244, %v7907
  %7940 = vst.msk [vmem:[%s15 + $0xb8] sm:$0xff] %vm1244, %v7908
  %7941 = vst.msk [vmem:[%s15 + $0xc0] sm:$0xff] %vm1244, %v7909
  %7942 = vst.msk [vmem:[%s15 + $0xc8] sm:$0xff] %vm1244, %v7910
  %7943 = vst.msk [vmem:[%s15 + $0xd0] sm:$0xff] %vm1244, %v7911
  %7944 = vst.msk [vmem:[%s15 + $0xd8] sm:$0xff] %vm1244, %v7912
  %7945 = vst.msk [vmem:[%s15 + $0xe0] sm:$0xff] %vm1244, %v7913
  %7946 = vst.msk [vmem:[%s15 + $0xe8] sm:$0xff] %vm1244, %v7914
  %7947 = vst.msk [vmem:[%s15 + $0xf0] sm:$0xff] %vm1244, %v7915
  %7948 = vst.msk [vmem:[%s15 + $0xf8] sm:$0xff] %vm1244, %v7916
  %v7949 = vsel %vm1244, %v6553, 0.0
  %v7950 = vsel %vm1244, %v6554, 0.0
  %v7951 = vadd.f32 %v7949, %v7950
  %v7952 = vsel %vm1244, %v6555, 0.0
  %v7953 = vadd.f32 %v7951, %v7952
  %v7954 = vsel %vm1244, %v6556, 0.0
  %v7955 = vadd.f32 %v7953, %v7954
  %v7956 = vsel %vm1244, %v6557, 0.0
  %v7957 = vadd.f32 %v7955, %v7956
  %v7958 = vsel %vm1244, %v6558, 0.0
  %v7959 = vadd.f32 %v7957, %v7958
  %v7960 = vsel %vm1244, %v6559, 0.0
  %v7961 = vadd.f32 %v7959, %v7960
  %v7962 = vsel %vm1244, %v6560, 0.0
  %v7963 = vadd.f32 %v7961, %v7962
  %v7964 = vsel %vm1244, %v6561, 0.0
  %v7965 = vadd.f32 %v7963, %v7964
  %v7966 = vsel %vm1244, %v6562, 0.0
  %v7967 = vadd.f32 %v7965, %v7966
  %v7968 = vsel %vm1244, %v6563, 0.0
  %v7969 = vadd.f32 %v7967, %v7968
  %v7970 = vsel %vm1244, %v6564, 0.0
  %v7971 = vadd.f32 %v7969, %v7970
  %v7972 = vsel %vm1244, %v6565, 0.0
  %v7973 = vadd.f32 %v7971, %v7972
  %v7974 = vsel %vm1244, %v6566, 0.0
  %v7975 = vadd.f32 %v7973, %v7974
  %v7976 = vsel %vm1244, %v6567, 0.0
  %v7977 = vadd.f32 %v7975, %v7976
  %v7978 = vsel %vm1244, %v6568, 0.0
  %v7979 = vadd.f32 %v7977, %v7978
  %v7980 = vsel %vm1244, %v6569, 0.0
  %v7981 = vadd.f32 %v7979, %v7980
  %v7982 = vsel %vm1244, %v6570, 0.0
  %v7983 = vadd.f32 %v7981, %v7982
  %v7984 = vsel %vm1244, %v6571, 0.0
  %v7985 = vadd.f32 %v7983, %v7984
  %v7986 = vsel %vm1244, %v6572, 0.0
  %v7987 = vadd.f32 %v7985, %v7986
  %v7988 = vsel %vm1244, %v6573, 0.0
  %v7989 = vadd.f32 %v7987, %v7988
  %v7990 = vsel %vm1244, %v6574, 0.0
  %v7991 = vadd.f32 %v7989, %v7990
  %v7992 = vsel %vm1244, %v6575, 0.0
  %v7993 = vadd.f32 %v7991, %v7992
  %v7994 = vsel %vm1244, %v6576, 0.0
  %v7995 = vadd.f32 %v7993, %v7994
  %v7996 = vsel %vm1244, %v6577, 0.0
  %v7997 = vadd.f32 %v7995, %v7996
  %v7998 = vsel %vm1244, %v6578, 0.0
  %v7999 = vadd.f32 %v7997, %v7998
  %v8000 = vsel %vm1244, %v6579, 0.0
  %v8001 = vadd.f32 %v7999, %v8000
  %v8002 = vsel %vm1244, %v6580, 0.0
  %v8003 = vadd.f32 %v8001, %v8002
  %v8004 = vsel %vm1244, %v6581, 0.0
  %v8005 = vadd.f32 %v8003, %v8004
  %v8006 = vsel %vm1244, %v6582, 0.0
  %v8007 = vadd.f32 %v8005, %v8006
  %v8008 = vsel %vm1244, %v6583, 0.0
  %v8009 = vadd.f32 %v8007, %v8008
  %v8010 = vsel %vm1244, %v6584, 0.0
  %v8011 = vadd.f32 %v8009, %v8010
  %v8012 = vrot.slane %v8011, 4
  %v8013 = vadd.f32 %v8011, %v8012
  %v8014 = vrot.slane %v8013, 2
  %v8015 = vadd.f32 %v8013, %v8014
  %v8016 = vrot.slane %v8015, 1
  %v8017 = vadd.f32 %v8015, %v8016
  %v8018 = vmul.f32 %v8017, %v2696
  %v8019 = vadd.f32 %v8018, %v7078
  %v8021 = vsel %vm1244, %v8019, 0
  %8023 = vmatprep.subr.mxu0 0.0
  %8024 = vmatpush1.msra.mxu0 %v51
  %8025 = vmatprep.subr.mxu0 0.0
  %8026 = vmatpush1.msra.mxu0 0.0
  %8027 = vmatprep.subr.mxu0 0.0
  %8028 = vmatpush1.msra.mxu0 0.0
  %8029 = vmatprep.subr.mxu0 0.0
  %8030 = vmatpush1.msra.mxu0 0.0
  %8031 = vmatprep.subr.mxu0 0.0
  %8032 = vmatpush1.msra.mxu0 0.0
  %8033 = vmatprep.subr.mxu0 0.0
  %8034 = vmatpush1.msra.mxu0 0.0
  %8035 = vmatprep.subr.mxu0 0.0
  %8036 = vmatpush1.msra.mxu0 0.0
  %8037 = vmatprep.subr.mxu0 0.0
  %8038 = vmatpush1.msra.mxu0 0.0
  %8039 = vmatprep.subr.mxu0 0.0
  %8040 = vmatpush1.msra.mxu0 0.0
  %8041 = vmatprep.subr.mxu0 0.0
  %8042 = vmatpush1.msra.mxu0 0.0
  %8043 = vmatprep.subr.mxu0 0.0
  %8044 = vmatpush1.msra.mxu0 0.0
  %8045 = vmatprep.subr.mxu0 0.0
  %8046 = vmatpush1.msra.mxu0 0.0
  %8047 = vmatprep.subr.mxu0 0.0
  %8048 = vmatpush1.msra.mxu0 0.0
  %8049 = vmatprep.subr.mxu0 0.0
  %8050 = vmatpush1.msra.mxu0 0.0
  %8051 = vmatprep.subr.mxu0 0.0
  %8052 = vmatpush1.msra.mxu0 0.0
  %8053 = vmatprep.subr.mxu0 0.0
  %8054 = vmatpush1.msra.mxu0 0.0
  %8055 = vmatprep.subr.mxu0 0.0
  %8056 = vmatpush1.msra.mxu0 0.0
  %8057 = vmatprep.subr.mxu0 0.0
  %8058 = vmatpush1.msra.mxu0 0.0
  %8059 = vmatprep.subr.mxu0 0.0
  %8060 = vmatpush1.msra.mxu0 0.0
  %8061 = vmatprep.subr.mxu0 0.0
  %8062 = vmatpush1.msra.mxu0 0.0
  %8063 = vmatprep.subr.mxu0 0.0
  %8064 = vmatpush1.msra.mxu0 0.0
  %8065 = vmatprep.subr.mxu0 0.0
  %8066 = vmatpush1.msra.mxu0 0.0
  %8067 = vmatprep.subr.mxu0 0.0
  %8068 = vmatpush1.msra.mxu0 0.0
  %8069 = vmatprep.subr.mxu0 0.0
  %8070 = vmatpush1.msra.mxu0 0.0
  %8071 = vmatprep.subr.mxu0 0.0
  %8072 = vmatpush1.msra.mxu0 0.0
  %8073 = vmatprep.subr.mxu0 0.0
  %8074 = vmatpush1.msra.mxu0 0.0
  %8075 = vmatprep.subr.mxu0 0.0
  %8076 = vmatpush1.msra.mxu0 0.0
  %8077 = vmatprep.subr.mxu0 0.0
  %8078 = vmatpush1.msra.mxu0 0.0
  %8079 = vmatprep.subr.mxu0 0.0
  %8080 = vmatpush1.msra.mxu0 0.0
  %8081 = vmatprep.subr.mxu0 0.0
  %8082 = vmatpush1.msra.mxu0 0.0
  %8083 = vmatprep.subr.mxu0 0.0
  %8084 = vmatpush1.msra.mxu0 0.0
  %8085 = vmatprep.subr.mxu0 0.0
  %8086 = vmatpush1.msra.mxu0 0.0
  %8087 = vmatprep.mubr.f32.mxu0 0.0
  %8088 = vmatmul.mubr.f32.gmra.mrb[0].mxu0 %v8021
  %v8089 = vpop.f32.mrb[0].mxu0
  %v8090 = vadd.f32 0.0, %v8089
  %v8091 = vpop.f32.mrb[0].mxu0
  %8092 = vdwg.mxu0
  %v8094 = vsel %vm1244, %v8090, 0
  %8096 = vmatprep.subr.mxu0 0.0
  %8097 = vmatpush1.msra.mxu0 %v52
  %8098 = vmatprep.subr.mxu0 0.0
  %8099 = vmatpush1.msra.mxu0 0.0
  %8100 = vmatprep.subr.mxu0 0.0
  %8101 = vmatpush1.msra.mxu0 0.0
  %8102 = vmatprep.subr.mxu0 0.0
  %8103 = vmatpush1.msra.mxu0 0.0
  %8104 = vmatprep.subr.mxu0 0.0
  %8105 = vmatpush1.msra.mxu0 0.0
  %8106 = vmatprep.subr.mxu0 0.0
  %8107 = vmatpush1.msra.mxu0 0.0
  %8108 = vmatprep.subr.mxu0 0.0
  %8109 = vmatpush1.msra.mxu0 0.0
  %8110 = vmatprep.subr.mxu0 0.0
  %8111 = vmatpush1.msra.mxu0 0.0
  %8112 = vmatprep.subr.mxu0 0.0
  %8113 = vmatpush1.msra.mxu0 0.0
  %8114 = vmatprep.subr.mxu0 0.0
  %8115 = vmatpush1.msra.mxu0 0.0
  %8116 = vmatprep.subr.mxu0 0.0
  %8117 = vmatpush1.msra.mxu0 0.0
  %8118 = vmatprep.subr.mxu0 0.0
  %8119 = vmatpush1.msra.mxu0 0.0
  %8120 = vmatprep.subr.mxu0 0.0
  %8121 = vmatpush1.msra.mxu0 0.0
  %8122 = vmatprep.subr.mxu0 0.0
  %8123 = vmatpush1.msra.mxu0 0.0
  %8124 = vmatprep.subr.mxu0 0.0
  %8125 = vmatpush1.msra.mxu0 0.0
  %8126 = vmatprep.subr.mxu0 0.0
  %8127 = vmatpush1.msra.mxu0 0.0
  %8128 = vmatprep.subr.mxu0 0.0
  %8129 = vmatpush1.msra.mxu0 0.0
  %8130 = vmatprep.subr.mxu0 0.0
  %8131 = vmatpush1.msra.mxu0 0.0
  %8132 = vmatprep.subr.mxu0 0.0
  %8133 = vmatpush1.msra.mxu0 0.0
  %8134 = vmatprep.subr.mxu0 0.0
  %8135 = vmatpush1.msra.mxu0 0.0
  %8136 = vmatprep.subr.mxu0 0.0
  %8137 = vmatpush1.msra.mxu0 0.0
  %8138 = vmatprep.subr.mxu0 0.0
  %8139 = vmatpush1.msra.mxu0 0.0
  %8140 = vmatprep.subr.mxu0 0.0
  %8141 = vmatpush1.msra.mxu0 0.0
  %8142 = vmatprep.subr.mxu0 0.0
  %8143 = vmatpush1.msra.mxu0 0.0
  %8144 = vmatprep.subr.mxu0 0.0
  %8145 = vmatpush1.msra.mxu0 0.0
  %8146 = vmatprep.subr.mxu0 0.0
  %8147 = vmatpush1.msra.mxu0 0.0
  %8148 = vmatprep.subr.mxu0 0.0
  %8149 = vmatpush1.msra.mxu0 0.0
  %8150 = vmatprep.subr.mxu0 0.0
  %8151 = vmatpush1.msra.mxu0 0.0
  %8152 = vmatprep.subr.mxu0 0.0
  %8153 = vmatpush1.msra.mxu0 0.0
  %8154 = vmatprep.subr.mxu0 0.0
  %8155 = vmatpush1.msra.mxu0 0.0
  %8156 = vmatprep.subr.mxu0 0.0
  %8157 = vmatpush1.msra.mxu0 0.0
  %8158 = vmatprep.subr.mxu0 0.0
  %8159 = vmatpush1.msra.mxu0 0.0
  %8160 = vmatprep.mubr.f32.mxu0 0.0
  %8161 = vmatmul.mubr.f32.gmra.mrb[0].mxu0 %v8094
  %v8162 = vpop.f32.mrb[0].mxu0
  %v8163 = vadd.f32 0.0, %v8162
  %v8164 = vpop.f32.mrb[0].mxu0
  %8165 = vdwg.mxu0
  %v8166 = vsub.f32 %v7078, %v8163
  %v8168 = vlaneseq
  %v8169 = vshrl.u32 %v8168, 7
  %v8170 = vsub.s32 0, %v8169
  %v8171 = vrot.slane %v8166, %v8170
  %v8173 = vadd.f32 %v6553, %v8171
  %v8174 = vadd.f32 %v6554, %v8171
  %v8175 = vadd.f32 %v6555, %v8171
  %v8176 = vadd.f32 %v6556, %v8171
  %v8177 = vadd.f32 %v6557, %v8171
  %v8178 = vadd.f32 %v6558, %v8171
  %v8179 = vadd.f32 %v6559, %v8171
  %v8180 = vadd.f32 %v6560, %v8171
  %v8181 = vadd.f32 %v6561, %v8171
  %v8182 = vadd.f32 %v6562, %v8171
  %v8183 = vadd.f32 %v6563, %v8171
  %v8184 = vadd.f32 %v6564, %v8171
  %v8185 = vadd.f32 %v6565, %v8171
  %v8186 = vadd.f32 %v6566, %v8171
  %v8187 = vadd.f32 %v6567, %v8171
  %v8188 = vadd.f32 %v6568, %v8171
  %v8189 = vadd.f32 %v6569, %v8171
  %v8190 = vadd.f32 %v6570, %v8171
  %v8191 = vadd.f32 %v6571, %v8171
  %v8192 = vadd.f32 %v6572, %v8171
  %v8193 = vadd.f32 %v6573, %v8171
  %v8194 = vadd.f32 %v6574, %v8171
  %v8195 = vadd.f32 %v6575, %v8171
  %v8196 = vadd.f32 %v6576, %v8171
  %v8197 = vadd.f32 %v6577, %v8171
  %v8198 = vadd.f32 %v6578, %v8171
  %v8199 = vadd.f32 %v6579, %v8171
  %v8200 = vadd.f32 %v6580, %v8171
  %v8201 = vadd.f32 %v6581, %v8171
  %v8202 = vadd.f32 %v6582, %v8171
  %v8203 = vadd.f32 %v6583, %v8171
  %v8204 = vadd.f32 %v6584, %v8171
  %v8205 = vmul.f32 %v8173, %v8173
  %v8206 = vmul.f32 %v8174, %v8174
  %v8207 = vmul.f32 %v8175, %v8175
  %v8208 = vmul.f32 %v8176, %v8176
  %v8209 = vmul.f32 %v8177, %v8177
  %v8210 = vmul.f32 %v8178, %v8178
  %v8211 = vmul.f32 %v8179, %v8179
  %v8212 = vmul.f32 %v8180, %v8180
  %v8213 = vmul.f32 %v8181, %v8181
  %v8214 = vmul.f32 %v8182, %v8182
  %v8215 = vmul.f32 %v8183, %v8183
  %v8216 = vmul.f32 %v8184, %v8184
  %v8217 = vmul.f32 %v8185, %v8185
  %v8218 = vmul.f32 %v8186, %v8186
  %v8219 = vmul.f32 %v8187, %v8187
  %v8220 = vmul.f32 %v8188, %v8188
  %v8221 = vmul.f32 %v8189, %v8189
  %v8222 = vmul.f32 %v8190, %v8190
  %v8223 = vmul.f32 %v8191, %v8191
  %v8224 = vmul.f32 %v8192, %v8192
  %v8225 = vmul.f32 %v8193, %v8193
  %v8226 = vmul.f32 %v8194, %v8194
  %v8227 = vmul.f32 %v8195, %v8195
  %v8228 = vmul.f32 %v8196, %v8196
  %v8229 = vmul.f32 %v8197, %v8197
  %v8230 = vmul.f32 %v8198, %v8198
  %v8231 = vmul.f32 %v8199, %v8199
  %v8232 = vmul.f32 %v8200, %v8200
  %v8233 = vmul.f32 %v8201, %v8201
  %v8234 = vmul.f32 %v8202, %v8202
  %v8235 = vmul.f32 %v8203, %v8203
  %v8236 = vmul.f32 %v8204, %v8204
  %v8237 = vsel %vm1244, %v8205, 0.0
  %v8238 = vsel %vm1244, %v8206, 0.0
  %v8239 = vadd.f32 %v8237, %v8238
  %v8240 = vsel %vm1244, %v8207, 0.0
  %v8241 = vadd.f32 %v8239, %v8240
  %v8242 = vsel %vm1244, %v8208, 0.0
  %v8243 = vadd.f32 %v8241, %v8242
  %v8244 = vsel %vm1244, %v8209, 0.0
  %v8245 = vadd.f32 %v8243, %v8244
  %v8246 = vsel %vm1244, %v8210, 0.0
  %v8247 = vadd.f32 %v8245, %v8246
  %v8248 = vsel %vm1244, %v8211, 0.0
  %v8249 = vadd.f32 %v8247, %v8248
  %v8250 = vsel %vm1244, %v8212, 0.0
  %v8251 = vadd.f32 %v8249, %v8250
  %v8252 = vsel %vm1244, %v8213, 0.0
  %v8253 = vadd.f32 %v8251, %v8252
  %v8254 = vsel %vm1244, %v8214, 0.0
  %v8255 = vadd.f32 %v8253, %v8254
  %v8256 = vsel %vm1244, %v8215, 0.0
  %v8257 = vadd.f32 %v8255, %v8256
  %v8258 = vsel %vm1244, %v8216, 0.0
  %v8259 = vadd.f32 %v8257, %v8258
  %v8260 = vsel %vm1244, %v8217, 0.0
  %v8261 = vadd.f32 %v8259, %v8260
  %v8262 = vsel %vm1244, %v8218, 0.0
  %v8263 = vadd.f32 %v8261, %v8262
  %v8264 = vsel %vm1244, %v8219, 0.0
  %v8265 = vadd.f32 %v8263, %v8264
  %v8266 = vsel %vm1244, %v8220, 0.0
  %v8267 = vadd.f32 %v8265, %v8266
  %v8268 = vsel %vm1244, %v8221, 0.0
  %v8269 = vadd.f32 %v8267, %v8268
  %v8270 = vsel %vm1244, %v8222, 0.0
  %v8271 = vadd.f32 %v8269, %v8270
  %v8272 = vsel %vm1244, %v8223, 0.0
  %v8273 = vadd.f32 %v8271, %v8272
  %v8274 = vsel %vm1244, %v8224, 0.0
  %v8275 = vadd.f32 %v8273, %v8274
  %v8276 = vsel %vm1244, %v8225, 0.0
  %v8277 = vadd.f32 %v8275, %v8276
  %v8278 = vsel %vm1244, %v8226, 0.0
  %v8279 = vadd.f32 %v8277, %v8278
  %v8280 = vsel %vm1244, %v8227, 0.0
  %v8281 = vadd.f32 %v8279, %v8280
  %v8282 = vsel %vm1244, %v8228, 0.0
  %v8283 = vadd.f32 %v8281, %v8282
  %v8284 = vsel %vm1244, %v8229, 0.0
  %v8285 = vadd.f32 %v8283, %v8284
  %v8286 = vsel %vm1244, %v8230, 0.0
  %v8287 = vadd.f32 %v8285, %v8286
  %v8288 = vsel %vm1244, %v8231, 0.0
  %v8289 = vadd.f32 %v8287, %v8288
  %v8290 = vsel %vm1244, %v8232, 0.0
  %v8291 = vadd.f32 %v8289, %v8290
  %v8292 = vsel %vm1244, %v8233, 0.0
  %v8293 = vadd.f32 %v8291, %v8292
  %v8294 = vsel %vm1244, %v8234, 0.0
  %v8295 = vadd.f32 %v8293, %v8294
  %v8296 = vsel %vm1244, %v8235, 0.0
  %v8297 = vadd.f32 %v8295, %v8296
  %v8298 = vsel %vm1244, %v8236, 0.0
  %v8299 = vadd.f32 %v8297, %v8298
  %v8300 = vrot.slane %v8299, 4
  %v8301 = vadd.f32 %v8299, %v8300
  %v8302 = vrot.slane %v8301, 2
  %v8303 = vadd.f32 %v8301, %v8302
  %v8304 = vrot.slane %v8303, 1
  %v8305 = vadd.f32 %v8303, %v8304
  %v8306 = vmul.f32 %v8305, %v2696
  %v8308 = vsel %vm1244, %v8306, 0
  %8310 = vmatprep.subr.mxu0 0.0
  %8311 = vmatpush1.msra.mxu0 %v51
  %8312 = vmatprep.subr.mxu0 0.0
  %8313 = vmatpush1.msra.mxu0 0.0
  %8314 = vmatprep.subr.mxu0 0.0
  %8315 = vmatpush1.msra.mxu0 0.0
  %8316 = vmatprep.subr.mxu0 0.0
  %8317 = vmatpush1.msra.mxu0 0.0
  %8318 = vmatprep.subr.mxu0 0.0
  %8319 = vmatpush1.msra.mxu0 0.0
  %8320 = vmatprep.subr.mxu0 0.0
  %8321 = vmatpush1.msra.mxu0 0.0
  %8322 = vmatprep.subr.mxu0 0.0
  %8323 = vmatpush1.msra.mxu0 0.0
  %8324 = vmatprep.subr.mxu0 0.0
  %8325 = vmatpush1.msra.mxu0 0.0
  %8326 = vmatprep.subr.mxu0 0.0
  %8327 = vmatpush1.msra.mxu0 0.0
  %8328 = vmatprep.subr.mxu0 0.0
  %8329 = vmatpush1.msra.mxu0 0.0
  %8330 = vmatprep.subr.mxu0 0.0
  %8331 = vmatpush1.msra.mxu0 0.0
  %8332 = vmatprep.subr.mxu0 0.0
  %8333 = vmatpush1.msra.mxu0 0.0
  %8334 = vmatprep.subr.mxu0 0.0
  %8335 = vmatpush1.msra.mxu0 0.0
  %8336 = vmatprep.subr.mxu0 0.0
  %8337 = vmatpush1.msra.mxu0 0.0
  %8338 = vmatprep.subr.mxu0 0.0
  %8339 = vmatpush1.msra.mxu0 0.0
  %8340 = vmatprep.subr.mxu0 0.0
  %8341 = vmatpush1.msra.mxu0 0.0
  %8342 = vmatprep.subr.mxu0 0.0
  %8343 = vmatpush1.msra.mxu0 0.0
  %8344 = vmatprep.subr.mxu0 0.0
  %8345 = vmatpush1.msra.mxu0 0.0
  %8346 = vmatprep.subr.mxu0 0.0
  %8347 = vmatpush1.msra.mxu0 0.0
  %8348 = vmatprep.subr.mxu0 0.0
  %8349 = vmatpush1.msra.mxu0 0.0
  %8350 = vmatprep.subr.mxu0 0.0
  %8351 = vmatpush1.msra.mxu0 0.0
  %8352 = vmatprep.subr.mxu0 0.0
  %8353 = vmatpush1.msra.mxu0 0.0
  %8354 = vmatprep.subr.mxu0 0.0
  %8355 = vmatpush1.msra.mxu0 0.0
  %8356 = vmatprep.subr.mxu0 0.0
  %8357 = vmatpush1.msra.mxu0 0.0
  %8358 = vmatprep.subr.mxu0 0.0
  %8359 = vmatpush1.msra.mxu0 0.0
  %8360 = vmatprep.subr.mxu0 0.0
  %8361 = vmatpush1.msra.mxu0 0.0
  %8362 = vmatprep.subr.mxu0 0.0
  %8363 = vmatpush1.msra.mxu0 0.0
  %8364 = vmatprep.subr.mxu0 0.0
  %8365 = vmatpush1.msra.mxu0 0.0
  %8366 = vmatprep.subr.mxu0 0.0
  %8367 = vmatpush1.msra.mxu0 0.0
  %8368 = vmatprep.subr.mxu0 0.0
  %8369 = vmatpush1.msra.mxu0 0.0
  %8370 = vmatprep.subr.mxu0 0.0
  %8371 = vmatpush1.msra.mxu0 0.0
  %8372 = vmatprep.subr.mxu0 0.0
  %8373 = vmatpush1.msra.mxu0 0.0
  %8374 = vmatprep.mubr.f32.mxu0 0.0
  %8375 = vmatmul.mubr.f32.gmra.mrb[0].mxu0 %v8308
  %v8376 = vpop.f32.mrb[0].mxu0
  %v8377 = vadd.f32 0.0, %v8376
  %v8378 = vpop.f32.mrb[0].mxu0
  %8379 = vdwg.mxu0
  %v8381 = vsel %vm1244, %v8377, 0
  %8383 = vmatprep.subr.mxu0 0.0
  %8384 = vmatpush1.msra.mxu0 %v52
  %8385 = vmatprep.subr.mxu0 0.0
  %8386 = vmatpush1.msra.mxu0 0.0
  %8387 = vmatprep.subr.mxu0 0.0
  %8388 = vmatpush1.msra.mxu0 0.0
  %8389 = vmatprep.subr.mxu0 0.0
  %8390 = vmatpush1.msra.mxu0 0.0
  %8391 = vmatprep.subr.mxu0 0.0
  %8392 = vmatpush1.msra.mxu0 0.0
  %8393 = vmatprep.subr.mxu0 0.0
  %8394 = vmatpush1.msra.mxu0 0.0
  %8395 = vmatprep.subr.mxu0 0.0
  %8396 = vmatpush1.msra.mxu0 0.0
  %8397 = vmatprep.subr.mxu0 0.0
  %8398 = vmatpush1.msra.mxu0 0.0
  %8399 = vmatprep.subr.mxu0 0.0
  %8400 = vmatpush1.msra.mxu0 0.0
  %8401 = vmatprep.subr.mxu0 0.0
  %8402 = vmatpush1.msra.mxu0 0.0
  %8403 = vmatprep.subr.mxu0 0.0
  %8404 = vmatpush1.msra.mxu0 0.0
  %8405 = vmatprep.subr.mxu0 0.0
  %8406 = vmatpush1.msra.mxu0 0.0
  %8407 = vmatprep.subr.mxu0 0.0
  %8408 = vmatpush1.msra.mxu0 0.0
  %8409 = vmatprep.subr.mxu0 0.0
  %8410 = vmatpush1.msra.mxu0 0.0
  %8411 = vmatprep.subr.mxu0 0.0
  %8412 = vmatpush1.msra.mxu0 0.0
  %8413 = vmatprep.subr.mxu0 0.0
  %8414 = vmatpush1.msra.mxu0 0.0
  %8415 = vmatprep.subr.mxu0 0.0
  %8416 = vmatpush1.msra.mxu0 0.0
  %8417 = vmatprep.subr.mxu0 0.0
  %8418 = vmatpush1.msra.mxu0 0.0
  %8419 = vmatprep.subr.mxu0 0.0
  %8420 = vmatpush1.msra.mxu0 0.0
  %8421 = vmatprep.subr.mxu0 0.0
  %8422 = vmatpush1.msra.mxu0 0.0
  %8423 = vmatprep.subr.mxu0 0.0
  %8424 = vmatpush1.msra.mxu0 0.0
  %8425 = vmatprep.subr.mxu0 0.0
  %8426 = vmatpush1.msra.mxu0 0.0
  %8427 = vmatprep.subr.mxu0 0.0
  %8428 = vmatpush1.msra.mxu0 0.0
  %8429 = vmatprep.subr.mxu0 0.0
  %8430 = vmatpush1.msra.mxu0 0.0
  %8431 = vmatprep.subr.mxu0 0.0
  %8432 = vmatpush1.msra.mxu0 0.0
  %8433 = vmatprep.subr.mxu0 0.0
  %8434 = vmatpush1.msra.mxu0 0.0
  %8435 = vmatprep.subr.mxu0 0.0
  %8436 = vmatpush1.msra.mxu0 0.0
  %8437 = vmatprep.subr.mxu0 0.0
  %8438 = vmatpush1.msra.mxu0 0.0
  %8439 = vmatprep.subr.mxu0 0.0
  %8440 = vmatpush1.msra.mxu0 0.0
  %8441 = vmatprep.subr.mxu0 0.0
  %8442 = vmatpush1.msra.mxu0 0.0
  %8443 = vmatprep.subr.mxu0 0.0
  %8444 = vmatpush1.msra.mxu0 0.0
  %8445 = vmatprep.subr.mxu0 0.0
  %8446 = vmatpush1.msra.mxu0 0.0
  %8447 = vmatprep.mubr.f32.mxu0 0.0
  %8448 = vmatmul.mubr.f32.gmra.mrb[0].mxu0 %v8381
  %v8449 = vpop.f32.mrb[0].mxu0
  %v8450 = vadd.f32 1e-05, %v8449
  %v8451 = vpop.f32.mrb[0].mxu0
  %8452 = vdwg.mxu0
  %v8453 = vrsqrt.pop %v8450
  %v8454 = vmul.f32 %v8453, %v7079
  %v8455 = vlaneseq
  %v8456 = vshrl.u32 %v8455, 7
  %v8457 = vsub.s32 0, %v8456
  %v8458 = vrot.slane %v8454, %v8457
  %v8459 = vmul.f32 %v8173, %v8458
  %v8460 = vmul.f32 %v8174, %v8458
  %v8461 = vmul.f32 %v8175, %v8458
  %v8462 = vmul.f32 %v8176, %v8458
  %v8463 = vmul.f32 %v8177, %v8458
  %v8464 = vmul.f32 %v8178, %v8458
  %v8465 = vmul.f32 %v8179, %v8458
  %v8466 = vmul.f32 %v8180, %v8458
  %v8467 = vmul.f32 %v8181, %v8458
  %v8468 = vmul.f32 %v8182, %v8458
  %v8469 = vmul.f32 %v8183, %v8458
  %v8470 = vmul.f32 %v8184, %v8458
  %v8471 = vmul.f32 %v8185, %v8458
  %v8472 = vmul.f32 %v8186, %v8458
  %v8473 = vmul.f32 %v8187, %v8458
  %v8474 = vmul.f32 %v8188, %v8458
  %v8475 = vmul.f32 %v8189, %v8458
  %v8476 = vmul.f32 %v8190, %v8458
  %v8477 = vmul.f32 %v8191, %v8458
  %v8478 = vmul.f32 %v8192, %v8458
  %v8479 = vmul.f32 %v8193, %v8458
  %v8480 = vmul.f32 %v8194, %v8458
  %v8481 = vmul.f32 %v8195, %v8458
  %v8482 = vmul.f32 %v8196, %v8458
  %v8483 = vmul.f32 %v8197, %v8458
  %v8484 = vmul.f32 %v8198, %v8458
  %v8485 = vmul.f32 %v8199, %v8458
  %v8486 = vmul.f32 %v8200, %v8458
  %v8487 = vmul.f32 %v8201, %v8458
  %v8488 = vmul.f32 %v8202, %v8458
  %v8489 = vmul.f32 %v8203, %v8458
  %v8490 = vmul.f32 %v8204, %v8458
  %v8491 = vadd.f32 %v8459, %v7627
  %v8492 = vadd.f32 %v8460, %v7627
  %v8493 = vadd.f32 %v8461, %v7627
  %v8494 = vadd.f32 %v8462, %v7627
  %v8495 = vadd.f32 %v8463, %v7627
  %v8496 = vadd.f32 %v8464, %v7627
  %v8497 = vadd.f32 %v8465, %v7627
  %v8498 = vadd.f32 %v8466, %v7627
  %v8499 = vadd.f32 %v8467, %v7627
  %v8500 = vadd.f32 %v8468, %v7627
  %v8501 = vadd.f32 %v8469, %v7627
  %v8502 = vadd.f32 %v8470, %v7627
  %v8503 = vadd.f32 %v8471, %v7627
  %v8504 = vadd.f32 %v8472, %v7627
  %v8505 = vadd.f32 %v8473, %v7627
  %v8506 = vadd.f32 %v8474, %v7627
  %v8507 = vadd.f32 %v8475, %v7627
  %v8508 = vadd.f32 %v8476, %v7627
  %v8509 = vadd.f32 %v8477, %v7627
  %v8510 = vadd.f32 %v8478, %v7627
  %v8511 = vadd.f32 %v8479, %v7627
  %v8512 = vadd.f32 %v8480, %v7627
  %v8513 = vadd.f32 %v8481, %v7627
  %v8514 = vadd.f32 %v8482, %v7627
  %v8515 = vadd.f32 %v8483, %v7627
  %v8516 = vadd.f32 %v8484, %v7627
  %v8517 = vadd.f32 %v8485, %v7627
  %v8518 = vadd.f32 %v8486, %v7627
  %v8519 = vadd.f32 %v8487, %v7627
  %v8520 = vadd.f32 %v8488, %v7627
  %v8521 = vadd.f32 %v8489, %v7627
  %v8522 = vadd.f32 %v8490, %v7627
  %v8523 = vsub.f32 0.0, %v8491
  %v8524 = vsub.f32 0.0, %v8492
  %v8525 = vsub.f32 0.0, %v8493
  %v8526 = vsub.f32 0.0, %v8494
  %v8527 = vsub.f32 0.0, %v8495
  %v8528 = vsub.f32 0.0, %v8496
  %v8529 = vsub.f32 0.0, %v8497
  %v8530 = vsub.f32 0.0, %v8498
  %v8531 = vsub.f32 0.0, %v8499
  %v8532 = vsub.f32 0.0, %v8500
  %v8533 = vsub.f32 0.0, %v8501
  %v8534 = vsub.f32 0.0, %v8502
  %v8535 = vsub.f32 0.0, %v8503
  %v8536 = vsub.f32 0.0, %v8504
  %v8537 = vsub.f32 0.0, %v8505
  %v8538 = vsub.f32 0.0, %v8506
  %v8539 = vsub.f32 0.0, %v8507
  %v8540 = vsub.f32 0.0, %v8508
  %v8541 = vsub.f32 0.0, %v8509
  %v8542 = vsub.f32 0.0, %v8510
  %v8543 = vsub.f32 0.0, %v8511
  %v8544 = vsub.f32 0.0, %v8512
  %v8545 = vsub.f32 0.0, %v8513
  %v8546 = vsub.f32 0.0, %v8514
  %v8547 = vsub.f32 0.0, %v8515
  %v8548 = vsub.f32 0.0, %v8516
  %v8549 = vsub.f32 0.0, %v8517
  %v8550 = vsub.f32 0.0, %v8518
  %v8551 = vsub.f32 0.0, %v8519
  %v8552 = vsub.f32 0.0, %v8520
  %v8553 = vsub.f32 0.0, %v8521
  %v8554 = vsub.f32 0.0, %v8522
  %v8555 = vmul.f32 %v8523, 1.442695
  %v8556 = vpow.pop %v8555
  %v8557 = vmul.f32 %v8524, 1.442695
  %v8558 = vpow.pop %v8557
  %v8559 = vmul.f32 %v8525, 1.442695
  %v8560 = vpow.pop %v8559
  %v8561 = vmul.f32 %v8526, 1.442695
  %v8562 = vpow.pop %v8561
  %v8563 = vmul.f32 %v8527, 1.442695
  %v8564 = vpow.pop %v8563
  %v8565 = vmul.f32 %v8528, 1.442695
  %v8566 = vpow.pop %v8565
  %v8567 = vmul.f32 %v8529, 1.442695
  %v8568 = vpow.pop %v8567
  %v8569 = vmul.f32 %v8530, 1.442695
  %v8570 = vpow.pop %v8569
  %v8571 = vmul.f32 %v8531, 1.442695
  %v8572 = vpow.pop %v8571
  %v8573 = vmul.f32 %v8532, 1.442695
  %v8574 = vpow.pop %v8573
  %v8575 = vmul.f32 %v8533, 1.442695
  %v8576 = vpow.pop %v8575
  %v8577 = vmul.f32 %v8534, 1.442695
  %v8578 = vpow.pop %v8577
  %v8579 = vmul.f32 %v8535, 1.442695
  %v8580 = vpow.pop %v8579
  %v8581 = vmul.f32 %v8536, 1.442695
  %v8582 = vpow.pop %v8581
  %v8583 = vmul.f32 %v8537, 1.442695
  %v8584 = vpow.pop %v8583
  %v8585 = vmul.f32 %v8538, 1.442695
  %v8586 = vpow.pop %v8585
  %v8587 = vmul.f32 %v8539, 1.442695
  %v8588 = vpow.pop %v8587
  %v8589 = vmul.f32 %v8540, 1.442695
  %v8590 = vpow.pop %v8589
  %v8591 = vmul.f32 %v8541, 1.442695
  %v8592 = vpow.pop %v8591
  %v8593 = vmul.f32 %v8542, 1.442695
  %v8594 = vpow.pop %v8593
  %v8595 = vmul.f32 %v8543, 1.442695
  %v8596 = vpow.pop %v8595
  %v8597 = vmul.f32 %v8544, 1.442695
  %v8598 = vpow.pop %v8597
  %v8599 = vmul.f32 %v8545, 1.442695
  %v8600 = vpow.pop %v8599
  %v8601 = vmul.f32 %v8546, 1.442695
  %v8602 = vpow.pop %v8601
  %v8603 = vmul.f32 %v8547, 1.442695
  %v8604 = vpow.pop %v8603
  %v8605 = vmul.f32 %v8548, 1.442695
  %v8606 = vpow.pop %v8605
  %v8607 = vmul.f32 %v8549, 1.442695
  %v8608 = vpow.pop %v8607
  %v8609 = vmul.f32 %v8550, 1.442695
  %v8610 = vpow.pop %v8609
  %v8611 = vmul.f32 %v8551, 1.442695
  %v8612 = vpow.pop %v8611
  %v8613 = vmul.f32 %v8552, 1.442695
  %v8614 = vpow.pop %v8613
  %v8615 = vmul.f32 %v8553, 1.442695
  %v8616 = vpow.pop %v8615
  %v8617 = vmul.f32 %v8554, 1.442695
  %v8618 = vpow.pop %v8617
  %v8619 = vadd.f32 %v8556, 1.0
  %v8620 = vadd.f32 %v8558, 1.0
  %v8621 = vadd.f32 %v8560, 1.0
  %v8622 = vadd.f32 %v8562, 1.0
  %v8623 = vadd.f32 %v8564, 1.0
  %v8624 = vadd.f32 %v8566, 1.0
  %v8625 = vadd.f32 %v8568, 1.0
  %v8626 = vadd.f32 %v8570, 1.0
  %v8627 = vadd.f32 %v8572, 1.0
  %v8628 = vadd.f32 %v8574, 1.0
  %v8629 = vadd.f32 %v8576, 1.0
  %v8630 = vadd.f32 %v8578, 1.0
  %v8631 = vadd.f32 %v8580, 1.0
  %v8632 = vadd.f32 %v8582, 1.0
  %v8633 = vadd.f32 %v8584, 1.0
  %v8634 = vadd.f32 %v8586, 1.0
  %v8635 = vadd.f32 %v8588, 1.0
  %v8636 = vadd.f32 %v8590, 1.0
  %v8637 = vadd.f32 %v8592, 1.0
  %v8638 = vadd.f32 %v8594, 1.0
  %v8639 = vadd.f32 %v8596, 1.0
  %v8640 = vadd.f32 %v8598, 1.0
  %v8641 = vadd.f32 %v8600, 1.0
  %v8642 = vadd.f32 %v8602, 1.0
  %v8643 = vadd.f32 %v8604, 1.0
  %v8644 = vadd.f32 %v8606, 1.0
  %v8645 = vadd.f32 %v8608, 1.0
  %v8646 = vadd.f32 %v8610, 1.0
  %v8647 = vadd.f32 %v8612, 1.0
  %v8648 = vadd.f32 %v8614, 1.0
  %v8649 = vadd.f32 %v8616, 1.0
  %v8650 = vadd.f32 %v8618, 1.0
  %v8651 = vrcp.pop %v8619
  %v8652 = vmul.f32 1.0, %v8651
  %v8653 = vrcp.pop %v8620
  %v8654 = vmul.f32 1.0, %v8653
  %v8655 = vrcp.pop %v8621
  %v8656 = vmul.f32 1.0, %v8655
  %v8657 = vrcp.pop %v8622
  %v8658 = vmul.f32 1.0, %v8657
  %v8659 = vrcp.pop %v8623
  %v8660 = vmul.f32 1.0, %v8659
  %v8661 = vrcp.pop %v8624
  %v8662 = vmul.f32 1.0, %v8661
  %v8663 = vrcp.pop %v8625
  %v8664 = vmul.f32 1.0, %v8663
  %v8665 = vrcp.pop %v8626
  %v8666 = vmul.f32 1.0, %v8665
  %v8667 = vrcp.pop %v8627
  %v8668 = vmul.f32 1.0, %v8667
  %v8669 = vrcp.pop %v8628
  %v8670 = vmul.f32 1.0, %v8669
  %v8671 = vrcp.pop %v8629
  %v8672 = vmul.f32 1.0, %v8671
  %v8673 = vrcp.pop %v8630
  %v8674 = vmul.f32 1.0, %v8673
  %v8675 = vrcp.pop %v8631
  %v8676 = vmul.f32 1.0, %v8675
  %v8677 = vrcp.pop %v8632
  %v8678 = vmul.f32 1.0, %v8677
  %v8679 = vrcp.pop %v8633
  %v8680 = vmul.f32 1.0, %v8679
  %v8681 = vrcp.pop %v8634
  %v8682 = vmul.f32 1.0, %v8681
  %v8683 = vrcp.pop %v8635
  %v8684 = vmul.f32 1.0, %v8683
  %v8685 = vrcp.pop %v8636
  %v8686 = vmul.f32 1.0, %v8685
  %v8687 = vrcp.pop %v8637
  %v8688 = vmul.f32 1.0, %v8687
  %v8689 = vrcp.pop %v8638
  %v8690 = vmul.f32 1.0, %v8689
  %v8691 = vrcp.pop %v8639
  %v8692 = vmul.f32 1.0, %v8691
  %v8693 = vrcp.pop %v8640
  %v8694 = vmul.f32 1.0, %v8693
  %v8695 = vrcp.pop %v8641
  %v8696 = vmul.f32 1.0, %v8695
  %v8697 = vrcp.pop %v8642
  %v8698 = vmul.f32 1.0, %v8697
  %v8699 = vrcp.pop %v8643
  %v8700 = vmul.f32 1.0, %v8699
  %v8701 = vrcp.pop %v8644
  %v8702 = vmul.f32 1.0, %v8701
  %v8703 = vrcp.pop %v8645
  %v8704 = vmul.f32 1.0, %v8703
  %v8705 = vrcp.pop %v8646
  %v8706 = vmul.f32 1.0, %v8705
  %v8707 = vrcp.pop %v8647
  %v8708 = vmul.f32 1.0, %v8707
  %v8709 = vrcp.pop %v8648
  %v8710 = vmul.f32 1.0, %v8709
  %v8711 = vrcp.pop %v8649
  %v8712 = vmul.f32 1.0, %v8711
  %v8713 = vrcp.pop %v8650
  %v8714 = vmul.f32 1.0, %v8713
  %v8715 = vmul.f32 %v8491, %v8652
  %v8716 = vmul.f32 %v8492, %v8654
  %v8717 = vmul.f32 %v8493, %v8656
  %v8718 = vmul.f32 %v8494, %v8658
  %v8719 = vmul.f32 %v8495, %v8660
  %v8720 = vmul.f32 %v8496, %v8662
  %v8721 = vmul.f32 %v8497, %v8664
  %v8722 = vmul.f32 %v8498, %v8666
  %v8723 = vmul.f32 %v8499, %v8668
  %v8724 = vmul.f32 %v8500, %v8670
  %v8725 = vmul.f32 %v8501, %v8672
  %v8726 = vmul.f32 %v8502, %v8674
  %v8727 = vmul.f32 %v8503, %v8676
  %v8728 = vmul.f32 %v8504, %v8678
  %v8729 = vmul.f32 %v8505, %v8680
  %v8730 = vmul.f32 %v8506, %v8682
  %v8731 = vmul.f32 %v8507, %v8684
  %v8732 = vmul.f32 %v8508, %v8686
  %v8733 = vmul.f32 %v8509, %v8688
  %v8734 = vmul.f32 %v8510, %v8690
  %v8735 = vmul.f32 %v8511, %v8692
  %v8736 = vmul.f32 %v8512, %v8694
  %v8737 = vmul.f32 %v8513, %v8696
  %v8738 = vmul.f32 %v8514, %v8698
  %v8739 = vmul.f32 %v8515, %v8700
  %v8740 = vmul.f32 %v8516, %v8702
  %v8741 = vmul.f32 %v8517, %v8704
  %v8742 = vmul.f32 %v8518, %v8706
  %v8743 = vmul.f32 %v8519, %v8708
  %v8744 = vmul.f32 %v8520, %v8710
  %v8745 = vmul.f32 %v8521, %v8712
  %v8746 = vmul.f32 %v8522, %v8714
  %v8747 = vadd.f32 %v8715, %v6952
  %v8748 = vadd.f32 %v8716, %v6955
  %v8749 = vadd.f32 %v8717, %v6960
  %v8750 = vadd.f32 %v8718, %v6963
  %v8751 = vadd.f32 %v8719, %v6968
  %v8752 = vadd.f32 %v8720, %v6971
  %v8753 = vadd.f32 %v8721, %v6976
  %v8754 = vadd.f32 %v8722, %v6979
  %v8755 = vadd.f32 %v8723, %v6984
  %v8756 = vadd.f32 %v8724, %v6987
  %v8757 = vadd.f32 %v8725, %v6992
  %v8758 = vadd.f32 %v8726, %v6995
  %v8759 = vadd.f32 %v8727, %v7000
  %v8760 = vadd.f32 %v8728, %v7003
  %v8761 = vadd.f32 %v8729, %v7008
  %v8762 = vadd.f32 %v8730, %v7011
  %v8763 = vadd.f32 %v8731, %v7016
  %v8764 = vadd.f32 %v8732, %v7019
  %v8765 = vadd.f32 %v8733, %v7024
  %v8766 = vadd.f32 %v8734, %v7027
  %v8767 = vadd.f32 %v8735, %v7032
  %v8768 = vadd.f32 %v8736, %v7035
  %v8769 = vadd.f32 %v8737, %v7040
  %v8770 = vadd.f32 %v8738, %v7043
  %v8771 = vadd.f32 %v8739, %v7048
  %v8772 = vadd.f32 %v8740, %v7051
  %v8773 = vadd.f32 %v8741, %v7056
  %v8774 = vadd.f32 %v8742, %v7059
  %v8775 = vadd.f32 %v8743, %v7064
  %v8776 = vadd.f32 %v8744, %v7067
  %v8777 = vadd.f32 %v8745, %v7072
  %v8778 = vadd.f32 %v8746, %v7075
  %s8779 = scalar_lea.vmem %s15, 256
  %8780 = vst.msk [vmem:[%s8779] sm:$0xff] %vm1244, %v8747
  %8781 = vst.msk [vmem:[%s8779 + $0x8] sm:$0xff] %vm1244, %v8748
  %8782 = vst.msk [vmem:[%s8779 + $0x10] sm:$0xff] %vm1244, %v8749
  %8783 = vst.msk [vmem:[%s8779 + $0x18] sm:$0xff] %vm1244, %v8750
  %8784 = vst.msk [vmem:[%s8779 + $0x20] sm:$0xff] %vm1244, %v8751
  %8785 = vst.msk [vmem:[%s8779 + $0x28] sm:$0xff] %vm1244, %v8752
  %8786 = vst.msk [vmem:[%s8779 + $0x30] sm:$0xff] %vm1244, %v8753
  %8787 = vst.msk [vmem:[%s8779 + $0x38] sm:$0xff] %vm1244, %v8754
  %8788 = vst.msk [vmem:[%s8779 + $0x40] sm:$0xff] %vm1244, %v8755
  %8789 = vst.msk [vmem:[%s8779 + $0x48] sm:$0xff] %vm1244, %v8756
  %8790 = vst.msk [vmem:[%s8779 + $0x50] sm:$0xff] %vm1244, %v8757
  %8791 = vst.msk [vmem:[%s8779 + $0x58] sm:$0xff] %vm1244, %v8758
  %8792 = vst.msk [vmem:[%s8779 + $0x60] sm:$0xff] %vm1244, %v8759
  %8793 = vst.msk [vmem:[%s8779 + $0x68] sm:$0xff] %vm1244, %v8760
  %8794 = vst.msk [vmem:[%s8779 + $0x70] sm:$0xff] %vm1244, %v8761
  %8795 = vst.msk [vmem:[%s8779 + $0x78] sm:$0xff] %vm1244, %v8762
  %8796 = vst.msk [vmem:[%s8779 + $0x80] sm:$0xff] %vm1244, %v8763
  %8797 = vst.msk [vmem:[%s8779 + $0x88] sm:$0xff] %vm1244, %v8764
  %8798 = vst.msk [vmem:[%s8779 + $0x90] sm:$0xff] %vm1244, %v8765
  %8799 = vst.msk [vmem:[%s8779 + $0x98] sm:$0xff] %vm1244, %v8766
  %8800 = vst.msk [vmem:[%s8779 + $0xa0] sm:$0xff] %vm1244, %v8767
  %8801 = vst.msk [vmem:[%s8779 + $0xa8] sm:$0xff] %vm1244, %v8768
  %8802 = vst.msk [vmem:[%s8779 + $0xb0] sm:$0xff] %vm1244, %v8769
  %8803 = vst.msk [vmem:[%s8779 + $0xb8] sm:$0xff] %vm1244, %v8770
  %8804 = vst.msk [vmem:[%s8779 + $0xc0] sm:$0xff] %vm1244, %v8771
  %8805 = vst.msk [vmem:[%s8779 + $0xc8] sm:$0xff] %vm1244, %v8772
  %8806 = vst.msk [vmem:[%s8779 + $0xd0] sm:$0xff] %vm1244, %v8773
  %8807 = vst.msk [vmem:[%s8779 + $0xd8] sm:$0xff] %vm1244, %v8774
  %8808 = vst.msk [vmem:[%s8779 + $0xe0] sm:$0xff] %vm1244, %v8775
  %8809 = vst.msk [vmem:[%s8779 + $0xe8] sm:$0xff] %vm1244, %v8776
  %8810 = vst.msk [vmem:[%s8779 + $0xf0] sm:$0xff] %vm1244, %v8777
  %8811 = vst.msk [vmem:[%s8779 + $0xf8] sm:$0xff] %vm1244, %v8778
  // Predicated region
  $region62: #{tpu_custom_call.1} parent=0 // pred_check
    _
  $region63: #{tpu_custom_call.1} parent=0 // pred_check_branch
    %8813 = sbr.rel (0) target = $region65
  $region64: #{tpu_custom_call.1} parent=0 // pred_region
    _
  $region65: #{tpu_custom_call.1} parent=0 // pred_fallthru
    _
  // Predicated region
  $region66: #{tpu_custom_call.1} parent=0 // pred_check
    _
  $region67: #{tpu_custom_call.1} parent=0 // pred_check_branch
    %8815 = sbr.rel (0) target = $region69
  $region68: #{tpu_custom_call.1} parent=0 // pred_region
    _
  $region69: #{tpu_custom_call.1} parent=0 // pred_fallthru
    _

</llo_original>
